<compile_context>
chip_gen: v6e
topology: v6e:2x2x1
jax: 0.10.0
libtpu: 0.0.40
codegen_flags: <defaults>
</compile_context>

<pallas_src>
import functools

import jax
import jax.numpy as jnp
from jax.experimental import pallas as pl
from jax.experimental.pallas import tpu as pltpu

LANE = 128  # TPU lane width; all Pallas kernel outputs are padded to this.


# ----------------------------------------------------------------------------
# Pallas kernels
# ----------------------------------------------------------------------------
def _matmul_bias_kernel(x_ref, w_ref, b_ref, o_ref, *, relu):
    """o = [relu](x @ w + b); bf16 inputs, f32 accumulate, lane-dense store."""
    acc = jnp.dot(x_ref[...], w_ref[...], preferred_element_type=jnp.float32)
    acc = acc + b_ref[...]                      # (1, N) broadcasts over rows
    if relu:
        acc = jnp.maximum(acc, 0.0)
    o_ref[...] = acc.astype(o_ref.dtype)


def pallas_matmul_bias(x, w, b, *, relu, out_dtype, tm=None):
    """x: (M, K) bf16, w: (K, N) bf16, b: (1, N) f32 -> (M, N) out_dtype.

    N must be a multiple of 128 (lane dense). If `tm` divides M the call is
    gridded over rows with "parallel" semantics (pipelining + megacore split);
    otherwise a single VMEM-resident block is used.
    """
    M, K = x.shape
    N = w.shape[1]
    kernel = functools.partial(_matmul_bias_kernel, relu=relu)
    out_shape = jax.ShapeDtypeStruct((M, N), out_dtype)

    if tm is not None and M > tm and M % tm == 0:
        return pl.pallas_call(
            kernel,
            out_shape=out_shape,
            grid=(M // tm,),
            in_specs=[
                pl.BlockSpec((tm, K), lambda i: (i, 0)),
                pl.BlockSpec((K, N), lambda i: (0, 0)),
                pl.BlockSpec((1, N), lambda i: (0, 0)),
            ],
            out_specs=pl.BlockSpec((tm, N), lambda i: (i, 0)),
            compiler_params=pltpu.CompilerParams(
                dimension_semantics=("parallel",)),
        )(x, w, b)

    return pl.pallas_call(
        kernel,
        out_shape=out_shape,
        in_specs=[
            pl.BlockSpec((M, K), lambda: (0, 0)),
            pl.BlockSpec((K, N), lambda: (0, 0)),
            pl.BlockSpec((1, N), lambda: (0, 0)),
        ],
        out_specs=pl.BlockSpec((M, N), lambda: (0, 0)),
    )(x, w, b)


def _q_head_kernel(f_ref, w1_ref, b1_ref, w2_ref, b2_ref, w3_ref, b3_ref, o_ref):
    """Fused fc1+ReLU -> fc2+ReLU -> fc3; intermediates never leave VMEM."""
    h = jnp.dot(f_ref[...], w1_ref[...], preferred_element_type=jnp.float32)
    h = jnp.maximum(h + b1_ref[...], 0.0).astype(jnp.bfloat16)
    h = jnp.dot(h, w2_ref[...], preferred_element_type=jnp.float32)
    h = jnp.maximum(h + b2_ref[...], 0.0).astype(jnp.bfloat16)
    q = jnp.dot(h, w3_ref[...], preferred_element_type=jnp.float32)
    o_ref[...] = (q + b3_ref[...]).astype(o_ref.dtype)


def pallas_q_head(feat, w1, b1, w2, b2, w3, b3):
    """feat: (M, 3136) bf16 -> (M, 128) f32 padded Q (slice actions outside)."""
    M, K1 = feat.shape
    H1 = w1.shape[1]
    H2 = w2.shape[1]
    NQ = w3.shape[1]

    def full(shape):
        return pl.BlockSpec(shape, lambda: (0, 0))

    return pl.pallas_call(
        _q_head_kernel,
        out_shape=jax.ShapeDtypeStruct((M, NQ), jnp.float32),
        in_specs=[
            full((M, K1)),
            full((K1, H1)), full((1, H1)),
            full((H1, H2)), full((1, H2)),
            full((H2, NQ)), full((1, NQ)),
        ],
        out_specs=full((M, NQ)),
    )(feat, w1, b1, w2, b2, w3, b3)


# ----------------------------------------------------------------------------
# im2col glue (NHWC, channel-minor feature order, no transposes)
# ----------------------------------------------------------------------------
def _im2col_nhwc(x, kh, kw, stride):
    """x: (N, H, W, C) -> (N*OH*OW, kh*kw*C) patches, feature = (di, dj, c)."""
    N, H, W, C = x.shape
    OH = (H - kh) // stride + 1
    OW = (W - kw) // stride + 1
    cols = [x[:, di:di + stride * OH:stride, dj:dj + stride * OW:stride, :]
            for di in range(kh) for dj in range(kw)]          # each (N, OH, OW, C)
    p = jnp.stack(cols, axis=3)                               # (N, OH, OW, kh*kw, C)
    return p.reshape(N * OH * OW, kh * kw * C), OH, OW


# ----------------------------------------------------------------------------
# Parameters: PyTorch-layout init + one-time Pallas layout preparation
# ----------------------------------------------------------------------------
def init_ddqn_params(key, action_dim, input_channels=4):
    def u(k, shape, fan_in):
        bound = 1.0 / (fan_in ** 0.5)
        return jax.random.uniform(k, shape, jnp.float32, -bound, bound)

    ks = jax.random.split(key, 12)
    p = {}
    p["w1"] = u(ks[0], (32, input_channels, 8, 8), input_channels * 8 * 8)
    p["b1"] = u(ks[1], (32,), input_channels * 8 * 8)
    p["w2"] = u(ks[2], (64, 32, 4, 4), 32 * 4 * 4)
    p["b2"] = u(ks[3], (64,), 32 * 4 * 4)
    p["w3"] = u(ks[4], (64, 64, 3, 3), 64 * 3 * 3)
    p["b3"] = u(ks[5], (64,), 64 * 3 * 3)
    p["fw1"] = u(ks[6], (512, 3136), 3136)
    p["fb1"] = u(ks[7], (512,), 3136)
    p["fw2"] = u(ks[8], (256, 512), 512)
    p["fb2"] = u(ks[9], (256,), 512)
    p["fw3"] = u(ks[10], (action_dim, 256), 256)
    p["fb3"] = u(ks[11], (action_dim,), 256)
    return p


def prepare_params(raw):
    """One-time layout work (outside the jitted forward):
      * conv weights (Cout,Cin,kh,kw) -> (kh*kw*Cin, 128) bf16 in im2col/NHWC
        order, output channels zero-padded to the 128-lane width.
      * fc1 columns permuted from PyTorch NCHW flatten (c,h,w) to our NHWC
        flatten (h,w,c), stored (K, N) bf16.
      * fc2/fc3 stored (K, N) bf16; fc3 output zero-padded to 128 lanes.
      * biases f32, shape (1, N), zero-padded to match.
    """
    def conv_w(w):
        cout, cin, kh, kw = w.shape
        wm = jnp.transpose(w, (2, 3, 1, 0)).reshape(kh * kw * cin, cout)
        return jnp.pad(wm, ((0, 0), (0, LANE - cout))).astype(jnp.bfloat16)

    def conv_b(b):
        return jnp.pad(b, (0, LANE - b.shape[0])).reshape(1, LANE).astype(jnp.float32)

    a_dim = raw["fw3"].shape[0]
    fw1 = jnp.transpose(raw["fw1"].reshape(512, 64, 7, 7), (2, 3, 1, 0))
    fw1 = fw1.reshape(3136, 512)
    return {
        "cw1": conv_w(raw["w1"]), "cb1": conv_b(raw["b1"]),
        "cw2": conv_w(raw["w2"]), "cb2": conv_b(raw["b2"]),
        "cw3": conv_w(raw["w3"]), "cb3": conv_b(raw["b3"]),
        "fw1": fw1.astype(jnp.bfloat16),
        "fb1": raw["fb1"].reshape(1, 512).astype(jnp.float32),
        "fw2": raw["fw2"].T.astype(jnp.bfloat16),
        "fb2": raw["fb2"].reshape(1, 256).astype(jnp.float32),
        "fw3": jnp.pad(raw["fw3"].T, ((0, 0), (0, LANE - a_dim))).astype(jnp.bfloat16),
        "fb3": jnp.pad(raw["fb3"], (0, LANE - a_dim)).reshape(1, LANE).astype(jnp.float32),
    }


# ----------------------------------------------------------------------------
# Forward pass (mirrors DDQN.forward)
# ----------------------------------------------------------------------------
def ddqn_forward(params, x, *, action_dim):
    if x.ndim == 5:  # [batch, frames, channels, H, W] -> [batch, frames*channels, H, W]
        x = x.reshape(x.shape[0], -1, x.shape[-2], x.shape[-1])
    n = x.shape[0]
    # Single NCHW -> NHWC transpose of the (small) input; activations stay NHWC.
    x = jnp.transpose(x.astype(jnp.bfloat16), (0, 2, 3, 1))

    def conv(x, w, b, kh, kw, stride, cout, tm=None):
        patches, oh, ow = _im2col_nhwc(x, kh, kw, stride)
        y = pallas_matmul_bias(patches, w, b, relu=True,
                               out_dtype=jnp.bfloat16, tm=tm)   # (M, 128) lane dense
        return y[:, :cout].reshape(n, oh, ow, cout)             # drop lane padding

    x = conv(x, params["cw1"], params["cb1"], 8, 8, 4, 32, tm=400)  # (n, 20, 20, 32)
    x = conv(x, params["cw2"], params["cb2"], 4, 4, 2, 64)          # (n,  9,  9, 64)
    x = conv(x, params["cw3"], params["cb3"], 3, 3, 1, 64)          # (n,  7,  7, 64)

    feat = x.reshape(n, -1)        # NHWC flatten; fw1 columns were permuted to match
    q_padded = pallas_q_head(feat, params["fw1"], params["fb1"],
                             params["fw2"], params["fb2"],
                             params["fw3"], params["fb3"])          # (n, 128) f32
    return q_padded[:, :action_dim]


# ----------------------------------------------------------------------------
# Pure-JAX f32 reference (mirrors the PyTorch module exactly)
# ----------------------------------------------------------------------------
def ddqn_reference(raw, x):
    if x.ndim == 5:
        x = x.reshape(x.shape[0], -1, x.shape[-2], x.shape[-1])
    x = x.astype(jnp.float32)
    dn = ("NCHW", "OIHW", "NCHW")

    def conv(x, w, b, s):
        y = jax.lax.conv_general_dilated(x, w, (s, s), "VALID", dimension_numbers=dn)
        return jnp.maximum(y + b.reshape(1, -1, 1, 1), 0.0)

    x = conv(x, raw["w1"], raw["b1"], 4)
    x = conv(x, raw["w2"], raw["b2"], 2)
    x = conv(x, raw["w3"], raw["b3"], 1)
    f = x.reshape(x.shape[0], -1)                                   # NCHW flatten
    h = jnp.maximum(f @ raw["fw1"].T + raw["fb1"], 0.0)
    h = jnp.maximum(h @ raw["fw2"].T + raw["fb2"], 0.0)
    return h @ raw["fw3"].T + raw["fb3"]


if __name__ == "__main__":
    key = jax.random.PRNGKey(0)
    k_params, k_x = jax.random.split(key)

    action_dim = 6
    input_channels = 4
    batch = 2

    raw = init_ddqn_params(k_params, action_dim, input_channels)
    params = prepare_params(raw)             # one-time weight layout work
    # 84x84 spatial is dictated by Linear(3136, ...) in the module.
    x = jax.random.uniform(k_x, (batch, input_channels, 84, 84), jnp.float32)

    fwd = jax.jit(functools.partial(ddqn_forward, action_dim=action_dim))
    q = jax.block_until_ready(fwd(params, x))

    assert q.shape == (batch, action_dim), q.shape
    assert bool(jnp.all(jnp.isfinite(q)))

    # Numerical check vs. the f32 reference (kernel uses bf16 MXU inputs, so a
    # loose-but-meaningful tolerance; typical deviation here is ~1e-3).
    q_ref = jax.block_until_ready(jax.jit(ddqn_reference)(raw, x))
    max_err = float(jnp.max(jnp.abs(q - q_ref)))
    assert max_err < 5e-2, f"Pallas vs reference mismatch: max |diff| = {max_err}"

    print("KERNEL_OK")
</pallas_src>

<mosaic_0001>
module attributes {stable_mosaic.version = 11 : i64} {
  func.func @_matmul_bias_kernel(%arg0: i32, %arg1: memref<400x256xbf16, #tpu.memory_space<vmem>>, %arg2: memref<256x128xbf16, #tpu.memory_space<vmem>>, %arg3: memref<1x128xf32, #tpu.memory_space<vmem>>, %arg4: memref<400x128xbf16, #tpu.memory_space<vmem>>) attributes {dimension_semantics = [#tpu.dimension_semantics<parallel>], iteration_bounds = array<i64: 2>, scalar_prefetch = 0 : i64, scratch_operands = 0 : i64, tpu.core_type = #tpu.core_type<tc>, window_params = [{transform_indices = @transform_0, window_bounds = array<i64: 400, 256>}, {pipeline_mode = #tpu.pipeline_mode<synchronous>, transform_indices = @transform_1, window_bounds = array<i64: 256, 128>}, {pipeline_mode = #tpu.pipeline_mode<synchronous>, transform_indices = @transform_2, window_bounds = array<i64: 1, 128>}, {transform_indices = @transform_3, window_bounds = array<i64: 400, 128>}]} {
    %c0 = arith.constant 0 : index
    %c0_0 = arith.constant 0 : index
    %0 = vector.load %arg1[%c0, %c0_0] : memref<400x256xbf16, #tpu.memory_space<vmem>>, vector<400x256xbf16>
    %c0_1 = arith.constant 0 : index
    %c0_2 = arith.constant 0 : index
    %1 = vector.load %arg2[%c0_1, %c0_2] : memref<256x128xbf16, #tpu.memory_space<vmem>>, vector<256x128xbf16>
    %cst = arith.constant dense<0.000000e+00> : vector<400x128xf32>
    %2 = tpu.matmul %0, %1, %cst {dimension_numbers = #tpu.dot_dimension_numbers<[1], [0], [0], [1], [0, 0, 1, 1], [], []>} : vector<400x256xbf16>, vector<256x128xbf16>, vector<400x128xf32> -> vector<400x128xf32>
    %c0_3 = arith.constant 0 : index
    %c0_4 = arith.constant 0 : index
    %3 = vector.load %arg3[%c0_3, %c0_4] : memref<1x128xf32, #tpu.memory_space<vmem>>, vector<1x128xf32>
    %4 = vector.broadcast %3 : vector<1x128xf32> to vector<400x128xf32>
    %5 = arith.addf %2, %4 : vector<400x128xf32>
    %cst_5 = arith.constant 0.000000e+00 : f32
    %6 = vector.broadcast %cst_5 : f32 to vector<400x128xf32>
    %7 = arith.maximumf %5, %6 : vector<400x128xf32>
    %8 = arith.truncf %7 : vector<400x128xf32> to vector<400x128xbf16>
    %c0_6 = arith.constant 0 : index
    %c0_7 = arith.constant 0 : index
    %9 = vector.load %arg4[%c0_6, %c0_7] : memref<400x128xbf16, #tpu.memory_space<vmem>>, vector<400x128xbf16>
    tpu.vector_store %arg4[%c0_6, %c0_7], %8 {strides = array<i32>} : memref<400x128xbf16, #tpu.memory_space<vmem>>, vector<400x128xbf16>,
    return
  }
  func.func @transform_0(%arg0: i32) -> (i32, i32) {
    %c0_i32 = arith.constant 0 : i32
    %c0_i32_0 = arith.constant 0 : i32
    return %arg0, %c0_i32 : i32, i32
  }
  func.func @transform_1(%arg0: i32) -> (i32, i32) {
    %c0_i32 = arith.constant 0 : i32
    %c0_i32_0 = arith.constant 0 : i32
    %c0_i32_1 = arith.constant 0 : i32
    return %c0_i32, %c0_i32_0 : i32, i32
  }
  func.func @transform_2(%arg0: i32) -> (i32, i32) {
    %c0_i32 = arith.constant 0 : i32
    %c0_i32_0 = arith.constant 0 : i32
    %c0_i32_1 = arith.constant 0 : i32
    return %c0_i32, %c0_i32_0 : i32, i32
  }
  func.func @transform_3(%arg0: i32) -> (i32, i32) {
    %c0_i32 = arith.constant 0 : i32
    %c0_i32_0 = arith.constant 0 : i32
    return %arg0, %c0_i32 : i32, i32
  }
}

module attributes {stable_mosaic.version = 11 : i64} {
  func.func @_matmul_bias_kernel(%arg0: memref<162x512xbf16, #tpu.memory_space<vmem>>, %arg1: memref<512x128xbf16, #tpu.memory_space<vmem>>, %arg2: memref<1x128xf32, #tpu.memory_space<vmem>>, %arg3: memref<162x128xbf16, #tpu.memory_space<vmem>>) attributes {dimension_semantics = [], scalar_prefetch = 0 : i64, scratch_operands = 0 : i64, tpu.core_type = #tpu.core_type<tc>} {
    %c0 = arith.constant 0 : index
    %c0_0 = arith.constant 0 : index
    %0 = vector.load %arg0[%c0, %c0_0] : memref<162x512xbf16, #tpu.memory_space<vmem>>, vector<162x512xbf16>
    %c0_1 = arith.constant 0 : index
    %c0_2 = arith.constant 0 : index
    %1 = vector.load %arg1[%c0_1, %c0_2] : memref<512x128xbf16, #tpu.memory_space<vmem>>, vector<512x128xbf16>
    %cst = arith.constant dense<0.000000e+00> : vector<162x128xf32>
    %2 = tpu.matmul %0, %1, %cst {dimension_numbers = #tpu.dot_dimension_numbers<[1], [0], [0], [1], [0, 0, 1, 1], [], []>} : vector<162x512xbf16>, vector<512x128xbf16>, vector<162x128xf32> -> vector<162x128xf32>
    %c0_3 = arith.constant 0 : index
    %c0_4 = arith.constant 0 : index
    %3 = vector.load %arg2[%c0_3, %c0_4] : memref<1x128xf32, #tpu.memory_space<vmem>>, vector<1x128xf32>
    %4 = vector.broadcast %3 : vector<1x128xf32> to vector<162x128xf32>
    %5 = arith.addf %2, %4 : vector<162x128xf32>
    %cst_5 = arith.constant 0.000000e+00 : f32
    %6 = vector.broadcast %cst_5 : f32 to vector<162x128xf32>
    %7 = arith.maximumf %5, %6 : vector<162x128xf32>
    %8 = arith.truncf %7 : vector<162x128xf32> to vector<162x128xbf16>
    %c0_6 = arith.constant 0 : index
    %c0_7 = arith.constant 0 : index
    %9 = vector.load %arg3[%c0_6, %c0_7] : memref<162x128xbf16, #tpu.memory_space<vmem>>, vector<162x128xbf16>
    tpu.vector_store %arg3[%c0_6, %c0_7], %8 {strides = array<i32>} : memref<162x128xbf16, #tpu.memory_space<vmem>>, vector<162x128xbf16>,
    return
  }
}

module attributes {stable_mosaic.version = 11 : i64} {
  func.func @_matmul_bias_kernel(%arg0: memref<98x576xbf16, #tpu.memory_space<vmem>>, %arg1: memref<576x128xbf16, #tpu.memory_space<vmem>>, %arg2: memref<1x128xf32, #tpu.memory_space<vmem>>, %arg3: memref<98x128xbf16, #tpu.memory_space<vmem>>) attributes {dimension_semantics = [], scalar_prefetch = 0 : i64, scratch_operands = 0 : i64, tpu.core_type = #tpu.core_type<tc>} {
    %c0 = arith.constant 0 : index
    %c0_0 = arith.constant 0 : index
    %0 = vector.load %arg0[%c0, %c0_0] : memref<98x576xbf16, #tpu.memory_space<vmem>>, vector<98x576xbf16>
    %c0_1 = arith.constant 0 : index
    %c0_2 = arith.constant 0 : index
    %1 = vector.load %arg1[%c0_1, %c0_2] : memref<576x128xbf16, #tpu.memory_space<vmem>>, vector<576x128xbf16>
    %cst = arith.constant dense<0.000000e+00> : vector<98x128xf32>
    %2 = tpu.matmul %0, %1, %cst {dimension_numbers = #tpu.dot_dimension_numbers<[1], [0], [0], [1], [0, 0, 1, 1], [], []>} : vector<98x576xbf16>, vector<576x128xbf16>, vector<98x128xf32> -> vector<98x128xf32>
    %c0_3 = arith.constant 0 : index
    %c0_4 = arith.constant 0 : index
    %3 = vector.load %arg2[%c0_3, %c0_4] : memref<1x128xf32, #tpu.memory_space<vmem>>, vector<1x128xf32>
    %4 = vector.broadcast %3 : vector<1x128xf32> to vector<98x128xf32>
    %5 = arith.addf %2, %4 : vector<98x128xf32>
    %cst_5 = arith.constant 0.000000e+00 : f32
    %6 = vector.broadcast %cst_5 : f32 to vector<98x128xf32>
    %7 = arith.maximumf %5, %6 : vector<98x128xf32>
    %8 = arith.truncf %7 : vector<98x128xf32> to vector<98x128xbf16>
    %c0_6 = arith.constant 0 : index
    %c0_7 = arith.constant 0 : index
    %9 = vector.load %arg3[%c0_6, %c0_7] : memref<98x128xbf16, #tpu.memory_space<vmem>>, vector<98x128xbf16>
    tpu.vector_store %arg3[%c0_6, %c0_7], %8 {strides = array<i32>} : memref<98x128xbf16, #tpu.memory_space<vmem>>, vector<98x128xbf16>,
    return
  }
}

module attributes {stable_mosaic.version = 11 : i64} {
  func.func @_q_head_kernel(%arg0: memref<2x3136xbf16, #tpu.memory_space<vmem>>, %arg1: memref<3136x512xbf16, #tpu.memory_space<vmem>>, %arg2: memref<1x512xf32, #tpu.memory_space<vmem>>, %arg3: memref<512x256xbf16, #tpu.memory_space<vmem>>, %arg4: memref<1x256xf32, #tpu.memory_space<vmem>>, %arg5: memref<256x128xbf16, #tpu.memory_space<vmem>>, %arg6: memref<1x128xf32, #tpu.memory_space<vmem>>, %arg7: memref<2x128xf32, #tpu.memory_space<vmem>>) attributes {dimension_semantics = [], scalar_prefetch = 0 : i64, scratch_operands = 0 : i64, tpu.core_type = #tpu.core_type<tc>} {
    %c0 = arith.constant 0 : index
    %c0_0 = arith.constant 0 : index
    %0 = vector.load %arg0[%c0, %c0_0] : memref<2x3136xbf16, #tpu.memory_space<vmem>>, vector<2x3136xbf16>
    %c0_1 = arith.constant 0 : index
    %c0_2 = arith.constant 0 : index
    %1 = vector.load %arg1[%c0_1, %c0_2] : memref<3136x512xbf16, #tpu.memory_space<vmem>>, vector<3136x512xbf16>
    %cst = arith.constant dense<0.000000e+00> : vector<2x512xf32>
    %2 = tpu.matmul %0, %1, %cst {dimension_numbers = #tpu.dot_dimension_numbers<[1], [0], [0], [1], [0, 0, 1, 1], [], []>} : vector<2x3136xbf16>, vector<3136x512xbf16>, vector<2x512xf32> -> vector<2x512xf32>
    %c0_3 = arith.constant 0 : index
    %c0_4 = arith.constant 0 : index
    %3 = vector.load %arg2[%c0_3, %c0_4] : memref<1x512xf32, #tpu.memory_space<vmem>>, vector<1x512xf32>
    %4 = vector.broadcast %3 : vector<1x512xf32> to vector<2x512xf32>
    %5 = arith.addf %2, %4 : vector<2x512xf32>
    %cst_5 = arith.constant 0.000000e+00 : f32
    %6 = vector.broadcast %cst_5 : f32 to vector<2x512xf32>
    %7 = arith.maximumf %5, %6 : vector<2x512xf32>
    %8 = arith.truncf %7 : vector<2x512xf32> to vector<2x512xbf16>
    %c0_6 = arith.constant 0 : index
    %c0_7 = arith.constant 0 : index
    %9 = vector.load %arg3[%c0_6, %c0_7] : memref<512x256xbf16, #tpu.memory_space<vmem>>, vector<512x256xbf16>
    %cst_8 = arith.constant dense<0.000000e+00> : vector<2x256xf32>
    %10 = tpu.matmul %8, %9, %cst_8 {dimension_numbers = #tpu.dot_dimension_numbers<[1], [0], [0], [1], [0, 0, 1, 1], [], []>} : vector<2x512xbf16>, vector<512x256xbf16>, vector<2x256xf32> -> vector<2x256xf32>
    %c0_9 = arith.constant 0 : index
    %c0_10 = arith.constant 0 : index
    %11 = vector.load %arg4[%c0_9, %c0_10] : memref<1x256xf32, #tpu.memory_space<vmem>>, vector<1x256xf32>
    %12 = vector.broadcast %11 : vector<1x256xf32> to vector<2x256xf32>
    %13 = arith.addf %10, %12 : vector<2x256xf32>
    %cst_11 = arith.constant 0.000000e+00 : f32
    %14 = vector.broadcast %cst_11 : f32 to vector<2x256xf32>
    %15 = arith.maximumf %13, %14 : vector<2x256xf32>
    %16 = arith.truncf %15 : vector<2x256xf32> to vector<2x256xbf16>
    %c0_12 = arith.constant 0 : index
    %c0_13 = arith.constant 0 : index
    %17 = vector.load %arg5[%c0_12, %c0_13] : memref<256x128xbf16, #tpu.memory_space<vmem>>, vector<256x128xbf16>
    %cst_14 = arith.constant dense<0.000000e+00> : vector<2x128xf32>
    %18 = tpu.matmul %16, %17, %cst_14 {dimension_numbers = #tpu.dot_dimension_numbers<[1], [0], [0], [1], [0, 0, 1, 1], [], []>} : vector<2x256xbf16>, vector<256x128xbf16>, vector<2x128xf32> -> vector<2x128xf32>
    %c0_15 = arith.constant 0 : index
    %c0_16 = arith.constant 0 : index
    %19 = vector.load %arg6[%c0_15, %c0_16] : memref<1x128xf32, #tpu.memory_space<vmem>>, vector<1x128xf32>
    %20 = vector.broadcast %19 : vector<1x128xf32> to vector<2x128xf32>
    %21 = arith.addf %18, %20 : vector<2x128xf32>
    %c0_17 = arith.constant 0 : index
    %c0_18 = arith.constant 0 : index
    %22 = vector.load %arg7[%c0_17, %c0_18] : memref<2x128xf32, #tpu.memory_space<vmem>>, vector<2x128xf32>
    tpu.vector_store %arg7[%c0_17, %c0_18], %21 {strides = array<i32>} : memref<2x128xf32, #tpu.memory_space<vmem>>, vector<2x128xf32>,
    return
  }
}

</mosaic_0001>

<llo_original>
// kernel: ddqn_forward.4
$region0: #{ddqn_forward.4}
  #allocation0 [shape = 'u32[]', space=smem, size = 0x4, offset = 0x4, fixed_abs, tag = 'smem constant byte address 0x4 - core index']
  #allocation1 [shape = 'u32[144,128]{1,0:T(1,128)}', space=vmem, size = 0x12000, scoped, tag = 'internal scratch']
  %s0 = inlined_call_operand.vmem [shape: bf16[800,256], index: 0, kind: input, shape index: {}]
  %s1 = inlined_call_operand.vmem [shape: bf16[256,128], index: 1, kind: input, shape index: {}]
  %s2 = inlined_call_operand.vmem [shape: f32[1,128], index: 2, kind: input, shape index: {}]
  %s3 = inlined_call_operand.vmem [shape: bf16[800,128], index: 3, kind: output, shape index: {}]
  %s4 = sld [smem:[#allocation0]]
  $region45: #{ddqn_forward.4} parent=0
    _
  %s6 = ssub.s32 1, %s4
  %s7 = scalar_select 0, %s6, %s4
  loop: start=0, step=1, limit=4
  $region2: #{ddqn_forward.4} parent=0 // loop_pre_header
    _
  $region3: #{ddqn_forward.4} parent=0 // loop_header
    %s9 = sphi 0, %s13
    %p10 = scmp.ge.s32.totalorder %s9, 4
    %s19 = sphi 0, %s21
    %s22 = sphi 0, %s19
    %s23 = sphi 0, %s22
    %s39 = sphi 0, %s23
    %s43 = sphi 0, %s43
    %s45 = sphi 0, %s43
    %s46 = sphi 0, %s45
    %s60 = sphi 0, %s46
    %s64 = sphi 0, %s64
    %s66 = sphi 0, %s64
    %s67 = sphi 0, %s66
    %s81 = sphi 0, %s67
    %s87 = sphi 0, %s89
    %s90 = sphi 0, %s87
    %s91 = sphi 0, %s90
    %s107 = sphi 0, %s91
  $region4: #{ddqn_forward.4} parent=0 // loop_header_branch
    %12 = sbr.rel (%p10) target = $region8
  $region5: #{ddqn_forward.4} parent=0 // loop_body
    %s14 = ssub.s32 %s9, 1
    %s15 = ssub.s32 %s9, 2
    %s16 = sadd.s32 %s9, 1
    %s17 = ssub.s32 %s9, %s16
    %p18 = scmp.eq.s32.totalorder %s17, 0
    %s20 = sadd.s32 %s19, 1
    %s21 = scalar_select %p18, %s19, %s20
    %p24 = pneg %p18
    %p25 = scmp.eq.s32.totalorder %s9, 1
    %p26 = por %p24, %p25
    %p27 = scmp.ne.s32.totalorder %s19, %s22
    %p28 = scmp.eq.s32.totalorder %s9, 0
    %p29 = por %p27, %p28
    %p30 = scmp.ne.s32.totalorder %s19, %s22
    %p31 = scmp.eq.s32.totalorder %s14, 1
    %p32 = por %p30, %p31
    %p33 = scmp.ne.s32.totalorder %s22, %s23
    %p34 = scmp.eq.s32.totalorder %s14, 0
    %p35 = por %p33, %p34
    %p36 = scmp.ne.s32.totalorder %s22, %s23
    %p37 = scmp.eq.s32.totalorder %s15, 1
    %p38 = por %p36, %p37
    %p40 = scmp.ne.s32.totalorder %s23, %s39
    %p41 = scmp.eq.s32.totalorder %s15, 0
    %p42 = por %p40, %p41
    %s44 = sadd.s32 %s43, 1
    %p47 = scmp.eq.s32.totalorder %s9, 1
    %p48 = scmp.ne.s32.totalorder %s43, %s45
    %p49 = scmp.eq.s32.totalorder %s9, 0
    %p50 = por %p48, %p49
    %p51 = scmp.ne.s32.totalorder %s43, %s45
    %p52 = scmp.eq.s32.totalorder %s14, 1
    %p53 = por %p51, %p52
    %p54 = scmp.ne.s32.totalorder %s45, %s46
    %p55 = scmp.eq.s32.totalorder %s14, 0
    %p56 = por %p54, %p55
    %p57 = scmp.ne.s32.totalorder %s45, %s46
    %p58 = scmp.eq.s32.totalorder %s15, 1
    %p59 = por %p57, %p58
    %p61 = scmp.ne.s32.totalorder %s46, %s60
    %p62 = scmp.eq.s32.totalorder %s15, 0
    %p63 = por %p61, %p62
    %s65 = sadd.s32 %s64, 1
    %p68 = scmp.eq.s32.totalorder %s9, 1
    %p69 = scmp.ne.s32.totalorder %s64, %s66
    %p70 = scmp.eq.s32.totalorder %s9, 0
    %p71 = por %p69, %p70
    %p72 = scmp.ne.s32.totalorder %s64, %s66
    %p73 = scmp.eq.s32.totalorder %s14, 1
    %p74 = por %p72, %p73
    %p75 = scmp.ne.s32.totalorder %s66, %s67
    %p76 = scmp.eq.s32.totalorder %s14, 0
    %p77 = por %p75, %p76
    %p78 = scmp.ne.s32.totalorder %s66, %s67
    %p79 = scmp.eq.s32.totalorder %s15, 1
    %p80 = por %p78, %p79
    %p82 = scmp.ne.s32.totalorder %s67, %s81
    %p83 = scmp.eq.s32.totalorder %s15, 0
    %p84 = por %p82, %p83
    %s85 = ssub.s32 %s9, %s16
    %p86 = scmp.eq.s32.totalorder %s85, 0
    %s88 = sadd.s32 %s87, 1
    %s89 = scalar_select %p86, %s87, %s88
    %p92 = pneg %p86
    %p93 = scmp.eq.s32.totalorder %s9, 1
    %p94 = por %p92, %p93
    %p95 = scmp.ne.s32.totalorder %s87, %s90
    %p96 = scmp.eq.s32.totalorder %s9, 0
    %p97 = por %p95, %p96
    %p98 = scmp.ne.s32.totalorder %s87, %s90
    %p99 = scmp.eq.s32.totalorder %s14, 1
    %p100 = por %p98, %p99
    %p101 = scmp.ne.s32.totalorder %s90, %s91
    %p102 = scmp.eq.s32.totalorder %s14, 0
    %p103 = por %p101, %p102
    %p104 = scmp.ne.s32.totalorder %s90, %s91
    %p105 = scmp.eq.s32.totalorder %s15, 1
    %p106 = por %p104, %p105
    %p108 = scmp.ne.s32.totalorder %s91, %s107
    %p109 = scmp.eq.s32.totalorder %s15, 0
    %p110 = por %p108, %p109
    %p111 = scmp.le.s32.totalorder 1, %s9
    %p112 = scmp.lt.s32.totalorder %s9, 3
    %p113 = pnand %p111, %p112
    %p114 = pneg %p113
    // Predicated region
    $region9: #{ddqn_forward.4} parent=5 // pred_check
      _
    $region10: #{ddqn_forward.4} parent=5 // pred_check_branch
      %116 = sbr.rel (%p113) target = $region12
    $region11: #{ddqn_forward.4} parent=5 // pred_region
      %s117 = ssub.s32 %s9, 1
      // Predicated region
      $region13: #{ddqn_forward.4} parent=11 // pred_check
        %p118 = pneg %p56
      $region14: #{ddqn_forward.4} parent=11 // pred_check_branch
        %120 = sbr.rel (%p118) target = $region16
      $region15: #{ddqn_forward.4} parent=11 // pred_region
        _
      $region16: #{ddqn_forward.4} parent=11 // pred_fallthru
        _
      // Predicated region
      $region17: #{ddqn_forward.4} parent=11 // pred_check
        %p121 = pneg %p77
      $region18: #{ddqn_forward.4} parent=11 // pred_check_branch
        %123 = sbr.rel (%p121) target = $region20
      $region19: #{ddqn_forward.4} parent=11 // pred_region
        _
      $region20: #{ddqn_forward.4} parent=11 // pred_fallthru
        _
    $region12: #{ddqn_forward.4} parent=5 // pred_fallthru
      _
    %p124 = scmp.lt.s32.totalorder %s9, 2
    // Predicated region
    $region21: #{ddqn_forward.4} parent=5 // pred_check
      %p125 = pneg %p124
    $region22: #{ddqn_forward.4} parent=5 // pred_check_branch
      %127 = sbr.rel (%p125) target = $region24
    $region23: #{ddqn_forward.4} parent=5 // pred_region
      // Predicated region
      $region25: #{ddqn_forward.4} parent=23 // pred_check
        %p128 = pneg %p29
      $region26: #{ddqn_forward.4} parent=23 // pred_check_branch
        %130 = sbr.rel (%p128) target = $region28
      $region27: #{ddqn_forward.4} parent=23 // pred_region
        %s131 = smul.u32 50, %s9
        %p132 = scmp.lt.s32.totalorder %s131, 99
        %s133 = scalar_select %p132, %s131, 99
        %s134 = smul.addr %s133, 2
        %s135 = smul.addr %s134, 4
        %s136 = scalar_lea.vmem %s0, %s135
        %s137 = smul.u32 50, %s9
      $region28: #{ddqn_forward.4} parent=23 // pred_fallthru
        _
    $region24: #{ddqn_forward.4} parent=5 // pred_fallthru
      _
    %p138 = scmp.le.s32.totalorder 1, %s9
    %p139 = scmp.lt.s32.totalorder %s9, 3
    %p140 = pnand %p138, %p139
    %p141 = pneg %p140
    // Predicated region
    $region29: #{ddqn_forward.4} parent=5 // pred_check
      _
    $region30: #{ddqn_forward.4} parent=5 // pred_check_branch
      %143 = sbr.rel (%p140) target = $region32
    $region31: #{ddqn_forward.4} parent=5 // pred_region
      %s144 = ssub.s32 %s9, 1
      %s145 = smul.u32 50, %s14
      %p146 = scmp.lt.s32.totalorder %s145, 99
      %s147 = scalar_select %p146, %s145, 99
      %s148 = smul.addr %s147, 2
      %s149 = smul.addr %s148, 4
      %s150 = scalar_lea.vmem %s0, %s149
      %p151 = pneg %p35
      %p152 = pneg %p32
      %p153 = pneg %p56
      %p154 = pneg %p53
      %p155 = pneg %p77
      %p156 = pneg %p74
      %p157 = pneg %p103
      %p158 = pneg %p100
      %s159 = smul.u32 50, %s14
      %p160 = scmp.lt.s32.totalorder %s159, 99
      %s161 = scalar_select %p160, %s159, 99
      %s162 = smul.addr %s161, 4
      %s163 = scalar_lea.vmem %s3, %s162
      %s164 = smul.u32 50, %s14
      %p165 = scmp.lt.s32.totalorder %s164, 99
      %s166 = scalar_select %p165, %s164, 99
      %s167 = smul.addr %s166, 2
      %s168 = smul.addr %s167, 4
      %s169 = scalar_lea.vmem %s0, %s168
      %s170 = smul.u32 50, %s14
      %s171 = smul.u32 50, %s14
      %p172 = scmp.lt.s32.totalorder %s171, 99
      %s173 = scalar_select %p172, %s171, 99
      %s174 = smul.addr %s173, 4
      %s175 = scalar_lea.vmem %s3, %s174
      %s176 = smul.u32 50, %s14
      %v178 = vld [vmem:[%s169] sm:$0xff]
      %v179 = vld [vmem:[%s169 + $0x8] sm:$0xff]
      %v180 = vld [vmem:[%s169 + $0x10] sm:$0xff]
      %v181 = vld [vmem:[%s169 + $0x18] sm:$0xff]
      %v182 = vld [vmem:[%s169 + $0x20] sm:$0xff]
      %v183 = vld [vmem:[%s169 + $0x28] sm:$0xff]
      %v184 = vld [vmem:[%s169 + $0x30] sm:$0xff]
      %v185 = vld [vmem:[%s169 + $0x38] sm:$0xff]
      %v186 = vld [vmem:[%s169 + $0x40] sm:$0xff]
      %v187 = vld [vmem:[%s169 + $0x48] sm:$0xff]
      %v188 = vld [vmem:[%s169 + $0x50] sm:$0xff]
      %v189 = vld [vmem:[%s169 + $0x58] sm:$0xff]
      %v190 = vld [vmem:[%s169 + $0x60] sm:$0xff]
      %v191 = vld [vmem:[%s169 + $0x68] sm:$0xff]
      %v192 = vld [vmem:[%s169 + $0x70] sm:$0xff]
      %v193 = vld [vmem:[%s169 + $0x78] sm:$0xff]
      %v194 = vld [vmem:[%s169 + $0x80] sm:$0xff]
      %v195 = vld [vmem:[%s169 + $0x88] sm:$0xff]
      %v196 = vld [vmem:[%s169 + $0x90] sm:$0xff]
      %v197 = vld [vmem:[%s169 + $0x98] sm:$0xff]
      %v198 = vld [vmem:[%s169 + $0xa0] sm:$0xff]
      %v199 = vld [vmem:[%s169 + $0xa8] sm:$0xff]
      %v200 = vld [vmem:[%s169 + $0xb0] sm:$0xff]
      %v201 = vld [vmem:[%s169 + $0xb8] sm:$0xff]
      %v202 = vld [vmem:[%s169 + $0xc0] sm:$0xff]
      %v203 = vld [vmem:[%s169 + $0xc8] sm:$0xff]
      %v204 = vld [vmem:[%s169 + $0xd0] sm:$0xff]
      %v205 = vld [vmem:[%s169 + $0xd8] sm:$0xff]
      %v206 = vld [vmem:[%s169 + $0xe0] sm:$0xff]
      %v207 = vld [vmem:[%s169 + $0xe8] sm:$0xff]
      %v208 = vld [vmem:[%s169 + $0xf0] sm:$0xff]
      %v209 = vld [vmem:[%s169 + $0xf8] sm:$0xff]
      %v210 = vld [vmem:[%s169 + $0x100] sm:$0xff]
      %v211 = vld [vmem:[%s169 + $0x108] sm:$0xff]
      %v212 = vld [vmem:[%s169 + $0x110] sm:$0xff]
      %v213 = vld [vmem:[%s169 + $0x118] sm:$0xff]
      %v214 = vld [vmem:[%s169 + $0x120] sm:$0xff]
      %v215 = vld [vmem:[%s169 + $0x128] sm:$0xff]
      %v216 = vld [vmem:[%s169 + $0x130] sm:$0xff]
      %v217 = vld [vmem:[%s169 + $0x138] sm:$0xff]
      %v218 = vld [vmem:[%s169 + $0x140] sm:$0xff]
      %v219 = vld [vmem:[%s169 + $0x148] sm:$0xff]
      %v220 = vld [vmem:[%s169 + $0x150] sm:$0xff]
      %v221 = vld [vmem:[%s169 + $0x158] sm:$0xff]
      %v222 = vld [vmem:[%s169 + $0x160] sm:$0xff]
      %v223 = vld [vmem:[%s169 + $0x168] sm:$0xff]
      %v224 = vld [vmem:[%s169 + $0x170] sm:$0xff]
      %v225 = vld [vmem:[%s169 + $0x178] sm:$0xff]
      %v226 = vld [vmem:[%s169 + $0x180] sm:$0xff]
      %v227 = vld [vmem:[%s169 + $0x188] sm:$0xff]
      %v228 = vld [vmem:[%s1] sm:$0xf]
      %v229 = vld [vmem:[%s1 + $0x4] sm:$0xf]
      %v230 = vld [vmem:[%s1 + $0x8] sm:$0xf]
      %v231 = vld [vmem:[%s1 + $0xc] sm:$0xf]
      %v232 = vld [vmem:[%s1 + $0x10] sm:$0xf]
      %v233 = vld [vmem:[%s1 + $0x14] sm:$0xf]
      %v234 = vld [vmem:[%s1 + $0x18] sm:$0xf]
      %v235 = vld [vmem:[%s1 + $0x1c] sm:$0xf]
      %v236 = vld [vmem:[%s1 + $0x20] sm:$0xf]
      %v237 = vld [vmem:[%s1 + $0x24] sm:$0xf]
      %v238 = vld [vmem:[%s1 + $0x28] sm:$0xf]
      %v239 = vld [vmem:[%s1 + $0x2c] sm:$0xf]
      %v240 = vld [vmem:[%s1 + $0x30] sm:$0xf]
      %v241 = vld [vmem:[%s1 + $0x34] sm:$0xf]
      %v242 = vld [vmem:[%s1 + $0x38] sm:$0xf]
      %v243 = vld [vmem:[%s1 + $0x3c] sm:$0xf]
      %v244 = vld [vmem:[%s1 + $0x40] sm:$0xf]
      %v245 = vld [vmem:[%s1 + $0x44] sm:$0xf]
      %v246 = vld [vmem:[%s1 + $0x48] sm:$0xf]
      %v247 = vld [vmem:[%s1 + $0x4c] sm:$0xf]
      %v248 = vld [vmem:[%s1 + $0x50] sm:$0xf]
      %v249 = vld [vmem:[%s1 + $0x54] sm:$0xf]
      %v250 = vld [vmem:[%s1 + $0x58] sm:$0xf]
      %v251 = vld [vmem:[%s1 + $0x5c] sm:$0xf]
      %v252 = vld [vmem:[%s1 + $0x60] sm:$0xf]
      %v253 = vld [vmem:[%s1 + $0x64] sm:$0xf]
      %v254 = vld [vmem:[%s1 + $0x68] sm:$0xf]
      %v255 = vld [vmem:[%s1 + $0x6c] sm:$0xf]
      %v256 = vld [vmem:[%s1 + $0x70] sm:$0xf]
      %v257 = vld [vmem:[%s1 + $0x74] sm:$0xf]
      %v258 = vld [vmem:[%s1 + $0x78] sm:$0xf]
      %v259 = vld [vmem:[%s1 + $0x7c] sm:$0xf]
      %v260 = vld [vmem:[%s2] sm:$0x1]
      %v262 = vlaneseq
      %v263 = vshrl.u32 %v262, 7
      %v264 = vsub.s32 0, %v263
      %v265 = vrot.slane %v260, %v264
      %v317 = vunpack.c.l.b16 %v178
      %v318 = vunpack.c.h.b16 %v178
      %v319 = vunpack.c.l.b16 %v179
      %v320 = vunpack.c.h.b16 %v179
      %v321 = vunpack.c.l.b16 %v180
      %v322 = vunpack.c.h.b16 %v180
      %v323 = vunpack.c.l.b16 %v181
      %v324 = vunpack.c.h.b16 %v181
      %v325 = vunpack.c.l.b16 %v182
      %v326 = vunpack.c.h.b16 %v182
      %v327 = vunpack.c.l.b16 %v183
      %v328 = vunpack.c.h.b16 %v183
      %v329 = vunpack.c.l.b16 %v184
      %v330 = vunpack.c.h.b16 %v184
      %v331 = vunpack.c.l.b16 %v185
      %v332 = vunpack.c.h.b16 %v185
      %v333 = vunpack.c.l.b16 %v186
      %v334 = vunpack.c.h.b16 %v186
      %v335 = vunpack.c.l.b16 %v187
      %v336 = vunpack.c.h.b16 %v187
      %v337 = vunpack.c.l.b16 %v188
      %v338 = vunpack.c.h.b16 %v188
      %v339 = vunpack.c.l.b16 %v189
      %v340 = vunpack.c.h.b16 %v189
      %v341 = vunpack.c.l.b16 %v190
      %v342 = vunpack.c.h.b16 %v190
      %v343 = vunpack.c.l.b16 %v191
      %v344 = vunpack.c.h.b16 %v191
      %v345 = vunpack.c.l.b16 %v192
      %v346 = vunpack.c.h.b16 %v192
      %v347 = vunpack.c.l.b16 %v193
      %v348 = vunpack.c.h.b16 %v193
      %v349 = vunpack.c.l.b16 %v194
      %v350 = vunpack.c.h.b16 %v194
      %v351 = vunpack.c.l.b16 %v195
      %v352 = vunpack.c.h.b16 %v195
      %v353 = vunpack.c.l.b16 %v196
      %v354 = vunpack.c.h.b16 %v196
      %v355 = vunpack.c.l.b16 %v197
      %v356 = vunpack.c.h.b16 %v197
      %v357 = vunpack.c.l.b16 %v198
      %v358 = vunpack.c.h.b16 %v198
      %v359 = vunpack.c.l.b16 %v199
      %v360 = vunpack.c.h.b16 %v199
      %v361 = vunpack.c.l.b16 %v200
      %v362 = vunpack.c.h.b16 %v200
      %v363 = vunpack.c.l.b16 %v201
      %v364 = vunpack.c.h.b16 %v201
      %v365 = vunpack.c.l.b16 %v202
      %v366 = vunpack.c.h.b16 %v202
      %v367 = vunpack.c.l.b16 %v203
      %v368 = vunpack.c.h.b16 %v203
      %v369 = vunpack.c.l.b16 %v204
      %v370 = vunpack.c.h.b16 %v204
      %v371 = vunpack.c.l.b16 %v205
      %v372 = vunpack.c.h.b16 %v205
      %v373 = vunpack.c.l.b16 %v206
      %v374 = vunpack.c.h.b16 %v206
      %v375 = vunpack.c.l.b16 %v207
      %v376 = vunpack.c.h.b16 %v207
      %v377 = vunpack.c.l.b16 %v208
      %v378 = vunpack.c.h.b16 %v208
      %v379 = vunpack.c.l.b16 %v209
      %v380 = vunpack.c.h.b16 %v209
      %v381 = vunpack.c.l.b16 %v210
      %v382 = vunpack.c.h.b16 %v210
      %v383 = vunpack.c.l.b16 %v211
      %v384 = vunpack.c.h.b16 %v211
      %v385 = vunpack.c.l.b16 %v212
      %v386 = vunpack.c.h.b16 %v212
      %v387 = vunpack.c.l.b16 %v213
      %v388 = vunpack.c.h.b16 %v213
      %v389 = vunpack.c.l.b16 %v214
      %v390 = vunpack.c.h.b16 %v214
      %v391 = vunpack.c.l.b16 %v215
      %v392 = vunpack.c.h.b16 %v215
      %v393 = vunpack.c.l.b16 %v216
      %v394 = vunpack.c.h.b16 %v216
      %v395 = vunpack.c.l.b16 %v217
      %v396 = vunpack.c.h.b16 %v217
      %v397 = vunpack.c.l.b16 %v218
      %v398 = vunpack.c.h.b16 %v218
      %v399 = vunpack.c.l.b16 %v219
      %v400 = vunpack.c.h.b16 %v219
      %v401 = vunpack.c.l.b16 %v220
      %v402 = vunpack.c.h.b16 %v220
      %v403 = vunpack.c.l.b16 %v221
      %v404 = vunpack.c.h.b16 %v221
      %v405 = vunpack.c.l.b16 %v222
      %v406 = vunpack.c.h.b16 %v222
      %v407 = vunpack.c.l.b16 %v223
      %v408 = vunpack.c.h.b16 %v223
      %v409 = vunpack.c.l.b16 %v224
      %v410 = vunpack.c.h.b16 %v224
      %v411 = vunpack.c.l.b16 %v225
      %v412 = vunpack.c.h.b16 %v225
      %v413 = vunpack.c.l.b16 %v226
      %v414 = vunpack.c.h.b16 %v226
      %v415 = vunpack.c.l.b16 %v227
      %v416 = vunpack.c.h.b16 %v227
      %v417 = vpack.c.b16 %v319, %v317
      %v418 = vpack.c.b16 %v320, %v318
      %v419 = vpack.c.b16 %v323, %v321
      %v420 = vpack.c.b16 %v324, %v322
      %v421 = vpack.c.b16 %v327, %v325
      %v422 = vpack.c.b16 %v328, %v326
      %v423 = vpack.c.b16 %v331, %v329
      %v424 = vpack.c.b16 %v332, %v330
      %v425 = vpack.c.b16 %v335, %v333
      %v426 = vpack.c.b16 %v336, %v334
      %v427 = vpack.c.b16 %v339, %v337
      %v428 = vpack.c.b16 %v340, %v338
      %v429 = vpack.c.b16 %v343, %v341
      %v430 = vpack.c.b16 %v344, %v342
      %v431 = vpack.c.b16 %v347, %v345
      %v432 = vpack.c.b16 %v348, %v346
      %v433 = vpack.c.b16 %v351, %v349
      %v434 = vpack.c.b16 %v352, %v350
      %v435 = vpack.c.b16 %v355, %v353
      %v436 = vpack.c.b16 %v356, %v354
      %v437 = vpack.c.b16 %v359, %v357
      %v438 = vpack.c.b16 %v360, %v358
      %v439 = vpack.c.b16 %v363, %v361
      %v440 = vpack.c.b16 %v364, %v362
      %v441 = vpack.c.b16 %v367, %v365
      %v442 = vpack.c.b16 %v368, %v366
      %v443 = vpack.c.b16 %v371, %v369
      %v444 = vpack.c.b16 %v372, %v370
      %v445 = vpack.c.b16 %v375, %v373
      %v446 = vpack.c.b16 %v376, %v374
      %v447 = vpack.c.b16 %v379, %v377
      %v448 = vpack.c.b16 %v380, %v378
      %v449 = vpack.c.b16 %v383, %v381
      %v450 = vpack.c.b16 %v384, %v382
      %v451 = vpack.c.b16 %v387, %v385
      %v452 = vpack.c.b16 %v388, %v386
      %v453 = vpack.c.b16 %v391, %v389
      %v454 = vpack.c.b16 %v392, %v390
      %v455 = vpack.c.b16 %v395, %v393
      %v456 = vpack.c.b16 %v396, %v394
      %v457 = vpack.c.b16 %v399, %v397
      %v458 = vpack.c.b16 %v400, %v398
      %v459 = vpack.c.b16 %v403, %v401
      %v460 = vpack.c.b16 %v404, %v402
      %v461 = vpack.c.b16 %v407, %v405
      %v462 = vpack.c.b16 %v408, %v406
      %v463 = vpack.c.b16 %v411, %v409
      %v464 = vpack.c.b16 %v412, %v410
      %v465 = vpack.c.b16 %v415, %v413
      %v466 = vpack.c.b16 %v416, %v414
      %v549 = vunpack.c.l.b16 %v228
      %v550 = vunpack.c.l.b16 %v229
      %v551 = vunpack.c.l.b16 %v230
      %v552 = vunpack.c.l.b16 %v231
      %v553 = vunpack.c.l.b16 %v232
      %v554 = vunpack.c.l.b16 %v233
      %v555 = vunpack.c.l.b16 %v234
      %v556 = vunpack.c.l.b16 %v235
      %v557 = vunpack.c.l.b16 %v236
      %v558 = vunpack.c.l.b16 %v237
      %v559 = vunpack.c.l.b16 %v238
      %v560 = vunpack.c.l.b16 %v239
      %v561 = vunpack.c.l.b16 %v240
      %v562 = vunpack.c.l.b16 %v241
      %v563 = vunpack.c.l.b16 %v242
      %v564 = vunpack.c.l.b16 %v243
      %v565 = vunpack.c.l.b16 %v244
      %v566 = vunpack.c.l.b16 %v245
      %v567 = vunpack.c.l.b16 %v246
      %v568 = vunpack.c.l.b16 %v247
      %v569 = vunpack.c.l.b16 %v248
      %v570 = vunpack.c.l.b16 %v249
      %v571 = vunpack.c.l.b16 %v250
      %v572 = vunpack.c.l.b16 %v251
      %v573 = vunpack.c.l.b16 %v252
      %v574 = vunpack.c.l.b16 %v253
      %v575 = vunpack.c.l.b16 %v254
      %v576 = vunpack.c.l.b16 %v255
      %v577 = vunpack.c.l.b16 %v256
      %v578 = vunpack.c.l.b16 %v257
      %v579 = vunpack.c.l.b16 %v258
      %v580 = vunpack.c.l.b16 %v259
      %v581 = vpack.c.b16 %v550, %v549
      %v582 = vpack.c.b16 %v552, %v551
      %v583 = vpack.c.b16 %v554, %v553
      %v584 = vpack.c.b16 %v556, %v555
      %v585 = vpack.c.b16 %v558, %v557
      %v586 = vpack.c.b16 %v560, %v559
      %v587 = vpack.c.b16 %v562, %v561
      %v588 = vpack.c.b16 %v564, %v563
      %v589 = vpack.c.b16 %v566, %v565
      %v590 = vpack.c.b16 %v568, %v567
      %v591 = vpack.c.b16 %v570, %v569
      %v592 = vpack.c.b16 %v572, %v571
      %v593 = vpack.c.b16 %v574, %v573
      %v594 = vpack.c.b16 %v576, %v575
      %v595 = vpack.c.b16 %v578, %v577
      %v596 = vpack.c.b16 %v580, %v579
      %613 = vmatprep.subr.bf16.mxu0 0
      %614 = vmatpush1.bf16.msra.mxu0 %v588
      %615 = vmatprep.subr.bf16.mxu0 0
      %616 = vmatpush1.bf16.msra.mxu0 %v587
      %617 = vmatprep.subr.bf16.mxu0 0
      %618 = vmatpush1.bf16.msra.mxu0 %v586
      %619 = vmatprep.subr.bf16.mxu0 0
      %620 = vmatpush1.bf16.msra.mxu0 %v585
      %621 = vmatprep.subr.bf16.mxu0 0
      %622 = vmatpush1.bf16.msra.mxu0 %v584
      %623 = vmatprep.subr.bf16.mxu0 0
      %624 = vmatpush1.bf16.msra.mxu0 %v583
      %625 = vmatprep.subr.bf16.mxu0 0
      %626 = vmatpush1.bf16.msra.mxu0 %v582
      %627 = vmatprep.subr.bf16.mxu0 0
      %628 = vmatpush1.bf16.msra.mxu0 %v581
      %629 = vmatprep.subr.bf16.mxu0 0
      %630 = vmatpush2.bf16.msra.mxu0 %v596
      %631 = vmatprep.subr.bf16.mxu0 0
      %632 = vmatpush2.bf16.msra.mxu0 %v595
      %633 = vmatprep.subr.bf16.mxu0 0
      %634 = vmatpush2.bf16.msra.mxu0 %v594
      %635 = vmatprep.subr.bf16.mxu0 0
      %636 = vmatpush2.bf16.msra.mxu0 %v593
      %637 = vmatprep.subr.bf16.mxu0 0
      %638 = vmatpush2.bf16.msra.mxu0 %v592
      %639 = vmatprep.subr.bf16.mxu0 0
      %640 = vmatpush2.bf16.msra.mxu0 %v591
      %641 = vmatprep.subr.bf16.mxu0 0
      %642 = vmatpush2.bf16.msra.mxu0 %v590
      %643 = vmatprep.subr.bf16.mxu0 0
      %644 = vmatpush2.bf16.msra.mxu0 %v589
      %645 = vmatprep.mubr.bf16.mxu0 %v418
      %646 = vmatmul.mubr.bf16.gmra.mxu0 %v417
      %v647 = vpop.f32.mrf.mxu0
      %v648 = vadd.f32 %v265, %v647
      %v649 = vpop.f32.mrf.mxu0
      %v650 = vpop.f32.mrf.mxu0
      %v651 = vadd.f32 %v265, %v650
      %v652 = vpop.f32.mrf.mxu0
      %653 = vmatprep.mubr.bf16.mxu0 %v420
      %654 = vmatmul.mubr.bf16.gmra.mxu0 %v419
      %v655 = vpop.f32.mrf.mxu0
      %v656 = vadd.f32 %v265, %v655
      %v657 = vpop.f32.mrf.mxu0
      %v658 = vpop.f32.mrf.mxu0
      %v659 = vadd.f32 %v265, %v658
      %v660 = vpop.f32.mrf.mxu0
      %661 = vmatprep.mubr.bf16.mxu0 %v422
      %662 = vmatmul.mubr.bf16.gmra.mxu0 %v421
      %v663 = vpop.f32.mrf.mxu0
      %v664 = vadd.f32 %v265, %v663
      %v665 = vpop.f32.mrf.mxu0
      %v666 = vpop.f32.mrf.mxu0
      %v667 = vadd.f32 %v265, %v666
      %v668 = vpop.f32.mrf.mxu0
      %669 = vmatprep.mubr.bf16.mxu0 %v424
      %670 = vmatmul.mubr.bf16.gmra.mxu0 %v423
      %v671 = vpop.f32.mrf.mxu0
      %v672 = vadd.f32 %v265, %v671
      %v673 = vpop.f32.mrf.mxu0
      %v674 = vpop.f32.mrf.mxu0
      %v675 = vadd.f32 %v265, %v674
      %v676 = vpop.f32.mrf.mxu0
      %677 = vmatprep.mubr.bf16.mxu0 %v426
      %678 = vmatmul.mubr.bf16.gmra.mxu0 %v425
      %v679 = vpop.f32.mrf.mxu0
      %v680 = vadd.f32 %v265, %v679
      %v681 = vpop.f32.mrf.mxu0
      %v682 = vpop.f32.mrf.mxu0
      %v683 = vadd.f32 %v265, %v682
      %v684 = vpop.f32.mrf.mxu0
      %685 = vmatprep.mubr.bf16.mxu0 %v428
      %686 = vmatmul.mubr.bf16.gmra.mxu0 %v427
      %v687 = vpop.f32.mrf.mxu0
      %v688 = vadd.f32 %v265, %v687
      %v689 = vpop.f32.mrf.mxu0
      %v690 = vpop.f32.mrf.mxu0
      %v691 = vadd.f32 %v265, %v690
      %v692 = vpop.f32.mrf.mxu0
      %693 = vmatprep.mubr.bf16.mxu0 %v430
      %694 = vmatmul.mubr.bf16.gmra.mxu0 %v429
      %v695 = vpop.f32.mrf.mxu0
      %v696 = vadd.f32 %v265, %v695
      %v697 = vpop.f32.mrf.mxu0
      %v698 = vpop.f32.mrf.mxu0
      %v699 = vadd.f32 %v265, %v698
      %v700 = vpop.f32.mrf.mxu0
      %701 = vmatprep.mubr.bf16.mxu0 %v432
      %702 = vmatmul.mubr.bf16.gmra.mxu0 %v431
      %v703 = vpop.f32.mrf.mxu0
      %v704 = vadd.f32 %v265, %v703
      %v705 = vpop.f32.mrf.mxu0
      %v706 = vpop.f32.mrf.mxu0
      %v707 = vadd.f32 %v265, %v706
      %v708 = vpop.f32.mrf.mxu0
      %709 = vmatprep.mubr.bf16.mxu0 %v434
      %710 = vmatmul.mubr.bf16.gmra.mxu0 %v433
      %v711 = vpop.f32.mrf.mxu0
      %v712 = vadd.f32 %v265, %v711
      %v713 = vpop.f32.mrf.mxu0
      %v714 = vpop.f32.mrf.mxu0
      %v715 = vadd.f32 %v265, %v714
      %v716 = vpop.f32.mrf.mxu0
      %717 = vmatprep.mubr.bf16.mxu0 %v436
      %718 = vmatmul.mubr.bf16.gmra.mxu0 %v435
      %v719 = vpop.f32.mrf.mxu0
      %v720 = vadd.f32 %v265, %v719
      %v721 = vpop.f32.mrf.mxu0
      %v722 = vpop.f32.mrf.mxu0
      %v723 = vadd.f32 %v265, %v722
      %v724 = vpop.f32.mrf.mxu0
      %725 = vmatprep.mubr.bf16.mxu0 %v438
      %726 = vmatmul.mubr.bf16.gmra.mxu0 %v437
      %v727 = vpop.f32.mrf.mxu0
      %v728 = vadd.f32 %v265, %v727
      %v729 = vpop.f32.mrf.mxu0
      %v730 = vpop.f32.mrf.mxu0
      %v731 = vadd.f32 %v265, %v730
      %v732 = vpop.f32.mrf.mxu0
      %733 = vmatprep.mubr.bf16.mxu0 %v440
      %734 = vmatmul.mubr.bf16.gmra.mxu0 %v439
      %v735 = vpop.f32.mrf.mxu0
      %v736 = vadd.f32 %v265, %v735
      %v737 = vpop.f32.mrf.mxu0
      %v738 = vpop.f32.mrf.mxu0
      %v739 = vadd.f32 %v265, %v738
      %v740 = vpop.f32.mrf.mxu0
      %741 = vmatprep.mubr.bf16.mxu0 %v442
      %742 = vmatmul.mubr.bf16.gmra.mxu0 %v441
      %v743 = vpop.f32.mrf.mxu0
      %v744 = vadd.f32 %v265, %v743
      %v745 = vpop.f32.mrf.mxu0
      %v746 = vpop.f32.mrf.mxu0
      %v747 = vadd.f32 %v265, %v746
      %v748 = vpop.f32.mrf.mxu0
      %749 = vmatprep.mubr.bf16.mxu0 %v444
      %750 = vmatmul.mubr.bf16.gmra.mxu0 %v443
      %v751 = vpop.f32.mrf.mxu0
      %v752 = vadd.f32 %v265, %v751
      %v753 = vpop.f32.mrf.mxu0
      %v754 = vpop.f32.mrf.mxu0
      %v755 = vadd.f32 %v265, %v754
      %v756 = vpop.f32.mrf.mxu0
      %757 = vmatprep.mubr.bf16.mxu0 %v446
      %758 = vmatmul.mubr.bf16.gmra.mxu0 %v445
      %v759 = vpop.f32.mrf.mxu0
      %v760 = vadd.f32 %v265, %v759
      %v761 = vpop.f32.mrf.mxu0
      %v762 = vpop.f32.mrf.mxu0
      %v763 = vadd.f32 %v265, %v762
      %v764 = vpop.f32.mrf.mxu0
      %765 = vmatprep.mubr.bf16.mxu0 %v448
      %766 = vmatmul.mubr.bf16.gmra.mxu0 %v447
      %v767 = vpop.f32.mrf.mxu0
      %v768 = vadd.f32 %v265, %v767
      %v769 = vpop.f32.mrf.mxu0
      %v770 = vpop.f32.mrf.mxu0
      %v771 = vadd.f32 %v265, %v770
      %v772 = vpop.f32.mrf.mxu0
      %773 = vmatprep.mubr.bf16.mxu0 %v450
      %774 = vmatmul.mubr.bf16.gmra.mxu0 %v449
      %v775 = vpop.f32.mrf.mxu0
      %v776 = vadd.f32 %v265, %v775
      %v777 = vpop.f32.mrf.mxu0
      %v778 = vpop.f32.mrf.mxu0
      %v779 = vadd.f32 %v265, %v778
      %v780 = vpop.f32.mrf.mxu0
      %781 = vmatprep.mubr.bf16.mxu0 %v452
      %782 = vmatmul.mubr.bf16.gmra.mxu0 %v451
      %v783 = vpop.f32.mrf.mxu0
      %v784 = vadd.f32 %v265, %v783
      %v785 = vpop.f32.mrf.mxu0
      %v786 = vpop.f32.mrf.mxu0
      %v787 = vadd.f32 %v265, %v786
      %v788 = vpop.f32.mrf.mxu0
      %789 = vmatprep.mubr.bf16.mxu0 %v454
      %790 = vmatmul.mubr.bf16.gmra.mxu0 %v453
      %v791 = vpop.f32.mrf.mxu0
      %v792 = vadd.f32 %v265, %v791
      %v793 = vpop.f32.mrf.mxu0
      %v794 = vpop.f32.mrf.mxu0
      %v795 = vadd.f32 %v265, %v794
      %v796 = vpop.f32.mrf.mxu0
      %797 = vmatprep.mubr.bf16.mxu0 %v456
      %798 = vmatmul.mubr.bf16.gmra.mxu0 %v455
      %v799 = vpop.f32.mrf.mxu0
      %v800 = vadd.f32 %v265, %v799
      %v801 = vpop.f32.mrf.mxu0
      %v802 = vpop.f32.mrf.mxu0
      %v803 = vadd.f32 %v265, %v802
      %v804 = vpop.f32.mrf.mxu0
      %805 = vmatprep.mubr.bf16.mxu0 %v458
      %806 = vmatmul.mubr.bf16.gmra.mxu0 %v457
      %v807 = vpop.f32.mrf.mxu0
      %v808 = vadd.f32 %v265, %v807
      %v809 = vpop.f32.mrf.mxu0
      %v810 = vpop.f32.mrf.mxu0
      %v811 = vadd.f32 %v265, %v810
      %v812 = vpop.f32.mrf.mxu0
      %813 = vmatprep.mubr.bf16.mxu0 %v460
      %814 = vmatmul.mubr.bf16.gmra.mxu0 %v459
      %v815 = vpop.f32.mrf.mxu0
      %v816 = vadd.f32 %v265, %v815
      %v817 = vpop.f32.mrf.mxu0
      %v818 = vpop.f32.mrf.mxu0
      %v819 = vadd.f32 %v265, %v818
      %v820 = vpop.f32.mrf.mxu0
      %821 = vmatprep.mubr.bf16.mxu0 %v462
      %822 = vmatmul.mubr.bf16.gmra.mxu0 %v461
      %v823 = vpop.f32.mrf.mxu0
      %v824 = vadd.f32 %v265, %v823
      %v825 = vpop.f32.mrf.mxu0
      %v826 = vpop.f32.mrf.mxu0
      %v827 = vadd.f32 %v265, %v826
      %v828 = vpop.f32.mrf.mxu0
      %829 = vmatprep.mubr.bf16.mxu0 %v464
      %830 = vmatmul.mubr.bf16.gmra.mxu0 %v463
      %v831 = vpop.f32.mrf.mxu0
      %v832 = vadd.f32 %v265, %v831
      %v833 = vpop.f32.mrf.mxu0
      %v834 = vpop.f32.mrf.mxu0
      %v835 = vadd.f32 %v265, %v834
      %v836 = vpop.f32.mrf.mxu0
      %837 = vmatprep.mubr.bf16.mxu0 %v466
      %838 = vmatmul.mubr.bf16.gmra.mxu0 %v465
      %v839 = vpop.f32.mrf.mxu0
      %v840 = vadd.f32 %v265, %v839
      %v841 = vpop.f32.mrf.mxu0
      %v842 = vpop.f32.mrf.mxu0
      %v843 = vadd.f32 %v265, %v842
      %v844 = vpop.f32.mrf.mxu0
      %845 = vdwg.mxu0
      %v846 = vmax.f32 %v648, 0.0
      %v847 = vmax.f32 %v651, 0.0
      %v848 = vmax.f32 %v656, 0.0
      %v849 = vmax.f32 %v659, 0.0
      %v850 = vmax.f32 %v664, 0.0
      %v851 = vmax.f32 %v667, 0.0
      %v852 = vmax.f32 %v672, 0.0
      %v853 = vmax.f32 %v675, 0.0
      %v854 = vmax.f32 %v680, 0.0
      %v855 = vmax.f32 %v683, 0.0
      %v856 = vmax.f32 %v688, 0.0
      %v857 = vmax.f32 %v691, 0.0
      %v858 = vmax.f32 %v696, 0.0
      %v859 = vmax.f32 %v699, 0.0
      %v860 = vmax.f32 %v704, 0.0
      %v861 = vmax.f32 %v707, 0.0
      %v862 = vmax.f32 %v712, 0.0
      %v863 = vmax.f32 %v715, 0.0
      %v864 = vmax.f32 %v720, 0.0
      %v865 = vmax.f32 %v723, 0.0
      %v866 = vmax.f32 %v728, 0.0
      %v867 = vmax.f32 %v731, 0.0
      %v868 = vmax.f32 %v736, 0.0
      %v869 = vmax.f32 %v739, 0.0
      %v870 = vmax.f32 %v744, 0.0
      %v871 = vmax.f32 %v747, 0.0
      %v872 = vmax.f32 %v752, 0.0
      %v873 = vmax.f32 %v755, 0.0
      %v874 = vmax.f32 %v760, 0.0
      %v875 = vmax.f32 %v763, 0.0
      %v876 = vmax.f32 %v768, 0.0
      %v877 = vmax.f32 %v771, 0.0
      %v878 = vmax.f32 %v776, 0.0
      %v879 = vmax.f32 %v779, 0.0
      %v880 = vmax.f32 %v784, 0.0
      %v881 = vmax.f32 %v787, 0.0
      %v882 = vmax.f32 %v792, 0.0
      %v883 = vmax.f32 %v795, 0.0
      %v884 = vmax.f32 %v800, 0.0
      %v885 = vmax.f32 %v803, 0.0
      %v886 = vmax.f32 %v808, 0.0
      %v887 = vmax.f32 %v811, 0.0
      %v888 = vmax.f32 %v816, 0.0
      %v889 = vmax.f32 %v819, 0.0
      %v890 = vmax.f32 %v824, 0.0
      %v891 = vmax.f32 %v827, 0.0
      %v892 = vmax.f32 %v832, 0.0
      %v893 = vmax.f32 %v835, 0.0
      %v894 = vmax.f32 %v840, 0.0
      %v895 = vmax.f32 %v843, 0.0
      %v896 = vpack.c.bf16 %v847, %v846
      %v897 = vpack.c.bf16 %v849, %v848
      %v898 = vpack.c.bf16 %v851, %v850
      %v899 = vpack.c.bf16 %v853, %v852
      %v900 = vpack.c.bf16 %v855, %v854
      %v901 = vpack.c.bf16 %v857, %v856
      %v902 = vpack.c.bf16 %v859, %v858
      %v903 = vpack.c.bf16 %v861, %v860
      %v904 = vpack.c.bf16 %v863, %v862
      %v905 = vpack.c.bf16 %v865, %v864
      %v906 = vpack.c.bf16 %v867, %v866
      %v907 = vpack.c.bf16 %v869, %v868
      %v908 = vpack.c.bf16 %v871, %v870
      %v909 = vpack.c.bf16 %v873, %v872
      %v910 = vpack.c.bf16 %v875, %v874
      %v911 = vpack.c.bf16 %v877, %v876
      %v912 = vpack.c.bf16 %v879, %v878
      %v913 = vpack.c.bf16 %v881, %v880
      %v914 = vpack.c.bf16 %v883, %v882
      %v915 = vpack.c.bf16 %v885, %v884
      %v916 = vpack.c.bf16 %v887, %v886
      %v917 = vpack.c.bf16 %v889, %v888
      %v918 = vpack.c.bf16 %v891, %v890
      %v919 = vpack.c.bf16 %v893, %v892
      %v920 = vpack.c.bf16 %v895, %v894
      %v946 = vunpack.c.l.b16 %v896
      %v947 = vunpack.c.h.b16 %v896
      %v948 = vunpack.c.l.b16 %v897
      %v949 = vunpack.c.h.b16 %v897
      %v950 = vunpack.c.l.b16 %v898
      %v951 = vunpack.c.h.b16 %v898
      %v952 = vunpack.c.l.b16 %v899
      %v953 = vunpack.c.h.b16 %v899
      %v954 = vunpack.c.l.b16 %v900
      %v955 = vunpack.c.h.b16 %v900
      %v956 = vunpack.c.l.b16 %v901
      %v957 = vunpack.c.h.b16 %v901
      %v958 = vunpack.c.l.b16 %v902
      %v959 = vunpack.c.h.b16 %v902
      %v960 = vunpack.c.l.b16 %v903
      %v961 = vunpack.c.h.b16 %v903
      %v962 = vunpack.c.l.b16 %v904
      %v963 = vunpack.c.h.b16 %v904
      %v964 = vunpack.c.l.b16 %v905
      %v965 = vunpack.c.h.b16 %v905
      %v966 = vunpack.c.l.b16 %v906
      %v967 = vunpack.c.h.b16 %v906
      %v968 = vunpack.c.l.b16 %v907
      %v969 = vunpack.c.h.b16 %v907
      %v970 = vunpack.c.l.b16 %v908
      %v971 = vunpack.c.h.b16 %v908
      %v972 = vunpack.c.l.b16 %v909
      %v973 = vunpack.c.h.b16 %v909
      %v974 = vunpack.c.l.b16 %v910
      %v975 = vunpack.c.h.b16 %v910
      %v976 = vunpack.c.l.b16 %v911
      %v977 = vunpack.c.h.b16 %v911
      %v978 = vunpack.c.l.b16 %v912
      %v979 = vunpack.c.h.b16 %v912
      %v980 = vunpack.c.l.b16 %v913
      %v981 = vunpack.c.h.b16 %v913
      %v982 = vunpack.c.l.b16 %v914
      %v983 = vunpack.c.h.b16 %v914
      %v984 = vunpack.c.l.b16 %v915
      %v985 = vunpack.c.h.b16 %v915
      %v986 = vunpack.c.l.b16 %v916
      %v987 = vunpack.c.h.b16 %v916
      %v988 = vunpack.c.l.b16 %v917
      %v989 = vunpack.c.h.b16 %v917
      %v990 = vunpack.c.l.b16 %v918
      %v991 = vunpack.c.h.b16 %v918
      %v992 = vunpack.c.l.b16 %v919
      %v993 = vunpack.c.h.b16 %v919
      %v994 = vunpack.c.l.b16 %v920
      %v995 = vunpack.c.h.b16 %v920
      %v996 = vpack.c.b16 %v946, %v946
      %v997 = vpack.c.b16 %v947, %v947
      %v998 = vpack.c.b16 %v948, %v948
      %v999 = vpack.c.b16 %v949, %v949
      %v1000 = vpack.c.b16 %v950, %v950
      %v1001 = vpack.c.b16 %v951, %v951
      %v1002 = vpack.c.b16 %v952, %v952
      %v1003 = vpack.c.b16 %v953, %v953
      %v1004 = vpack.c.b16 %v954, %v954
      %v1005 = vpack.c.b16 %v955, %v955
      %v1006 = vpack.c.b16 %v956, %v956
      %v1007 = vpack.c.b16 %v957, %v957
      %v1008 = vpack.c.b16 %v958, %v958
      %v1009 = vpack.c.b16 %v959, %v959
      %v1010 = vpack.c.b16 %v960, %v960
      %v1011 = vpack.c.b16 %v961, %v961
      %v1012 = vpack.c.b16 %v962, %v962
      %v1013 = vpack.c.b16 %v963, %v963
      %v1014 = vpack.c.b16 %v964, %v964
      %v1015 = vpack.c.b16 %v965, %v965
      %v1016 = vpack.c.b16 %v966, %v966
      %v1017 = vpack.c.b16 %v967, %v967
      %v1018 = vpack.c.b16 %v968, %v968
      %v1019 = vpack.c.b16 %v969, %v969
      %v1020 = vpack.c.b16 %v970, %v970
      %v1021 = vpack.c.b16 %v971, %v971
      %v1022 = vpack.c.b16 %v972, %v972
      %v1023 = vpack.c.b16 %v973, %v973
      %v1024 = vpack.c.b16 %v974, %v974
      %v1025 = vpack.c.b16 %v975, %v975
      %v1026 = vpack.c.b16 %v976, %v976
      %v1027 = vpack.c.b16 %v977, %v977
      %v1028 = vpack.c.b16 %v978, %v978
      %v1029 = vpack.c.b16 %v979, %v979
      %v1030 = vpack.c.b16 %v980, %v980
      %v1031 = vpack.c.b16 %v981, %v981
      %v1032 = vpack.c.b16 %v982, %v982
      %v1033 = vpack.c.b16 %v983, %v983
      %v1034 = vpack.c.b16 %v984, %v984
      %v1035 = vpack.c.b16 %v985, %v985
      %v1036 = vpack.c.b16 %v986, %v986
      %v1037 = vpack.c.b16 %v987, %v987
      %v1038 = vpack.c.b16 %v988, %v988
      %v1039 = vpack.c.b16 %v989, %v989
      %v1040 = vpack.c.b16 %v990, %v990
      %v1041 = vpack.c.b16 %v991, %v991
      %v1042 = vpack.c.b16 %v992, %v992
      %v1043 = vpack.c.b16 %v993, %v993
      %v1044 = vpack.c.b16 %v994, %v994
      %v1045 = vpack.c.b16 %v995, %v995
      %1096 = vst [vmem:[%s175] sm:$0xf] %v996
      %1097 = vst [vmem:[%s175 + $0x4] sm:$0xf] %v997
      %1098 = vst [vmem:[%s175 + $0x8] sm:$0xf] %v998
      %1099 = vst [vmem:[%s175 + $0xc] sm:$0xf] %v999
      %1100 = vst [vmem:[%s175 + $0x10] sm:$0xf] %v1000
      %1101 = vst [vmem:[%s175 + $0x14] sm:$0xf] %v1001
      %1102 = vst [vmem:[%s175 + $0x18] sm:$0xf] %v1002
      %1103 = vst [vmem:[%s175 + $0x1c] sm:$0xf] %v1003
      %1104 = vst [vmem:[%s175 + $0x20] sm:$0xf] %v1004
      %1105 = vst [vmem:[%s175 + $0x24] sm:$0xf] %v1005
      %1106 = vst [vmem:[%s175 + $0x28] sm:$0xf] %v1006
      %1107 = vst [vmem:[%s175 + $0x2c] sm:$0xf] %v1007
      %1108 = vst [vmem:[%s175 + $0x30] sm:$0xf] %v1008
      %1109 = vst [vmem:[%s175 + $0x34] sm:$0xf] %v1009
      %1110 = vst [vmem:[%s175 + $0x38] sm:$0xf] %v1010
      %1111 = vst [vmem:[%s175 + $0x3c] sm:$0xf] %v1011
      %1112 = vst [vmem:[%s175 + $0x40] sm:$0xf] %v1012
      %1113 = vst [vmem:[%s175 + $0x44] sm:$0xf] %v1013
      %1114 = vst [vmem:[%s175 + $0x48] sm:$0xf] %v1014
      %1115 = vst [vmem:[%s175 + $0x4c] sm:$0xf] %v1015
      %1116 = vst [vmem:[%s175 + $0x50] sm:$0xf] %v1016
      %1117 = vst [vmem:[%s175 + $0x54] sm:$0xf] %v1017
      %1118 = vst [vmem:[%s175 + $0x58] sm:$0xf] %v1018
      %1119 = vst [vmem:[%s175 + $0x5c] sm:$0xf] %v1019
      %1120 = vst [vmem:[%s175 + $0x60] sm:$0xf] %v1020
      %1121 = vst [vmem:[%s175 + $0x64] sm:$0xf] %v1021
      %1122 = vst [vmem:[%s175 + $0x68] sm:$0xf] %v1022
      %1123 = vst [vmem:[%s175 + $0x6c] sm:$0xf] %v1023
      %1124 = vst [vmem:[%s175 + $0x70] sm:$0xf] %v1024
      %1125 = vst [vmem:[%s175 + $0x74] sm:$0xf] %v1025
      %1126 = vst [vmem:[%s175 + $0x78] sm:$0xf] %v1026
      %1127 = vst [vmem:[%s175 + $0x7c] sm:$0xf] %v1027
      %1128 = vst [vmem:[%s175 + $0x80] sm:$0xf] %v1028
      %1129 = vst [vmem:[%s175 + $0x84] sm:$0xf] %v1029
      %1130 = vst [vmem:[%s175 + $0x88] sm:$0xf] %v1030
      %1131 = vst [vmem:[%s175 + $0x8c] sm:$0xf] %v1031
      %1132 = vst [vmem:[%s175 + $0x90] sm:$0xf] %v1032
      %1133 = vst [vmem:[%s175 + $0x94] sm:$0xf] %v1033
      %1134 = vst [vmem:[%s175 + $0x98] sm:$0xf] %v1034
      %1135 = vst [vmem:[%s175 + $0x9c] sm:$0xf] %v1035
      %1136 = vst [vmem:[%s175 + $0xa0] sm:$0xf] %v1036
      %1137 = vst [vmem:[%s175 + $0xa4] sm:$0xf] %v1037
      %1138 = vst [vmem:[%s175 + $0xa8] sm:$0xf] %v1038
      %1139 = vst [vmem:[%s175 + $0xac] sm:$0xf] %v1039
      %1140 = vst [vmem:[%s175 + $0xb0] sm:$0xf] %v1040
      %1141 = vst [vmem:[%s175 + $0xb4] sm:$0xf] %v1041
      %1142 = vst [vmem:[%s175 + $0xb8] sm:$0xf] %v1042
      %1143 = vst [vmem:[%s175 + $0xbc] sm:$0xf] %v1043
      %1144 = vst [vmem:[%s175 + $0xc0] sm:$0xf] %v1044
      %1145 = vst [vmem:[%s175 + $0xc4] sm:$0xf] %v1045
      %s1146 = smul.u32 50, %s14
      %p1147 = scmp.lt.s32.totalorder %s1146, 99
      %s1148 = scalar_select %p1147, %s1146, 99
      %s1149 = smul.addr %s1148, 4
      %s1150 = scalar_lea.vmem %s3, %s1149
      // Predicated region
      $region33: #{ddqn_forward.4} parent=31 // pred_check
        %p1151 = pneg %p100
      $region34: #{ddqn_forward.4} parent=31 // pred_check_branch
        %1153 = sbr.rel (%p1151) target = $region36
      $region35: #{ddqn_forward.4} parent=31 // pred_region
        %s1154 = smul.u32 50, %s14
      $region36: #{ddqn_forward.4} parent=31 // pred_fallthru
        _
    $region32: #{ddqn_forward.4} parent=5 // pred_fallthru
      _
    %p1155 = scmp.le.s32.totalorder 2, %s9
    // Predicated region
    $region37: #{ddqn_forward.4} parent=5 // pred_check
      %p1156 = pneg %p1155
    $region38: #{ddqn_forward.4} parent=5 // pred_check_branch
      %1158 = sbr.rel (%p1156) target = $region40
    $region39: #{ddqn_forward.4} parent=5 // pred_region
      %s1159 = ssub.s32 %s9, 2
      // Predicated region
      $region41: #{ddqn_forward.4} parent=39 // pred_check
        %p1160 = pneg %p106
      $region42: #{ddqn_forward.4} parent=39 // pred_check_branch
        %1162 = sbr.rel (%p1160) target = $region44
      $region43: #{ddqn_forward.4} parent=39 // pred_region
        %s1163 = smul.u32 50, %s15
        %p1164 = scmp.lt.s32.totalorder %s1163, 99
        %s1165 = scalar_select %p1164, %s1163, 99
        %s1166 = smul.addr %s1165, 4
        %s1167 = scalar_lea.vmem %s3, %s1166
      $region44: #{ddqn_forward.4} parent=39 // pred_fallthru
        _
    $region40: #{ddqn_forward.4} parent=5 // pred_fallthru
      _
  $region6: #{ddqn_forward.4} parent=0 // loop_footer
    %s13 = sadd.s32 1, %s9
  $region7: #{ddqn_forward.4} parent=0 // loop_footer_branch
    %8 = sbr.rel target = $region3
  $region8: #{ddqn_forward.4} parent=0 // loop_exit
    _

// kernel: ddqn_forward.5
$region0: #{ddqn_forward.5}
  #allocation0 [shape = 'u32[]', space=smem, size = 0x4, offset = 0x4, fixed_abs, tag = 'smem constant byte address 0x4 - core index']
  #allocation1 [shape = 'u32[144,128]{1,0:T(1,128)}', space=vmem, size = 0x12000, scoped, tag = 'internal scratch']
  %s0 = inlined_call_operand.vmem [shape: bf16[162,512], index: 0, kind: input, shape index: {}]
  %s1 = inlined_call_operand.vmem [shape: bf16[512,128], index: 1, kind: input, shape index: {}]
  %s2 = inlined_call_operand.vmem [shape: f32[1,128], index: 2, kind: input, shape index: {}]
  %s3 = inlined_call_operand.vmem [shape: bf16[162,128], index: 3, kind: output, shape index: {}]
  %s4 = sld [smem:[#allocation0]]
  $region22: #{ddqn_forward.5} parent=0
    _
  %s6 = ssub.s32 1, %s4
  %s7 = scalar_select 0, %s6, %s4
  // Predicated region
  $region2: #{ddqn_forward.5} parent=0 // pred_check
    _
  $region3: #{ddqn_forward.5} parent=0 // pred_check_branch
    %9 = sbr.rel (0) target = $region5
  $region4: #{ddqn_forward.5} parent=0 // pred_region
    _
  $region5: #{ddqn_forward.5} parent=0 // pred_fallthru
    _
  // Predicated region
  $region6: #{ddqn_forward.5} parent=0 // pred_check
    _
  $region7: #{ddqn_forward.5} parent=0 // pred_check_branch
    %11 = sbr.rel (0) target = $region9
  $region8: #{ddqn_forward.5} parent=0 // pred_region
    _
  $region9: #{ddqn_forward.5} parent=0 // pred_fallthru
    _
  // Predicated region
  $region10: #{ddqn_forward.5} parent=0 // pred_check
    _
  $region11: #{ddqn_forward.5} parent=0 // pred_check_branch
    %13 = sbr.rel (0) target = $region13
  $region12: #{ddqn_forward.5} parent=0 // pred_region
    _
  $region13: #{ddqn_forward.5} parent=0 // pred_fallthru
    _
  %v15 = vld [vmem:[%s0] sm:$0xff]
  %v16 = vld [vmem:[%s0 + $0x8] sm:$0xff]
  %v17 = vld [vmem:[%s0 + $0x10] sm:$0xff]
  %v18 = vld [vmem:[%s0 + $0x18] sm:$0xff]
  %v19 = vld [vmem:[%s0 + $0x20] sm:$0xff]
  %v20 = vld [vmem:[%s0 + $0x28] sm:$0xff]
  %v21 = vld [vmem:[%s0 + $0x30] sm:$0xff]
  %v22 = vld [vmem:[%s0 + $0x38] sm:$0xff]
  %v23 = vld [vmem:[%s0 + $0x40] sm:$0xff]
  %v24 = vld [vmem:[%s0 + $0x48] sm:$0xff]
  %v25 = vld [vmem:[%s0 + $0x50] sm:$0xff]
  %v26 = vld [vmem:[%s0 + $0x58] sm:$0xff]
  %v27 = vld [vmem:[%s0 + $0x60] sm:$0xff]
  %v28 = vld [vmem:[%s0 + $0x68] sm:$0xff]
  %v29 = vld [vmem:[%s0 + $0x70] sm:$0xff]
  %v30 = vld [vmem:[%s0 + $0x78] sm:$0xff]
  %v31 = vld [vmem:[%s0 + $0x80] sm:$0xff]
  %v32 = vld [vmem:[%s0 + $0x88] sm:$0xff]
  %v33 = vld [vmem:[%s0 + $0x90] sm:$0xff]
  %v34 = vld [vmem:[%s0 + $0x98] sm:$0xff]
  %v35 = vld [vmem:[%s0 + $0xa0] sm:$0xff]
  %v36 = vld [vmem:[%s0 + $0xa8] sm:$0xff]
  %v37 = vld [vmem:[%s0 + $0xb0] sm:$0xff]
  %v38 = vld [vmem:[%s0 + $0xb8] sm:$0xff]
  %v39 = vld [vmem:[%s0 + $0xc0] sm:$0xff]
  %v40 = vld [vmem:[%s0 + $0xc8] sm:$0xff]
  %v41 = vld [vmem:[%s0 + $0xd0] sm:$0xff]
  %v42 = vld [vmem:[%s0 + $0xd8] sm:$0xff]
  %v43 = vld [vmem:[%s0 + $0xe0] sm:$0xff]
  %v44 = vld [vmem:[%s0 + $0xe8] sm:$0xff]
  %v45 = vld [vmem:[%s0 + $0xf0] sm:$0xff]
  %v46 = vld [vmem:[%s0 + $0xf8] sm:$0xff]
  %v47 = vld [vmem:[%s0 + $0x100] sm:$0xff]
  %v48 = vld [vmem:[%s0 + $0x108] sm:$0xff]
  %v49 = vld [vmem:[%s0 + $0x110] sm:$0xff]
  %v50 = vld [vmem:[%s0 + $0x118] sm:$0xff]
  %v51 = vld [vmem:[%s0 + $0x120] sm:$0xff]
  %v52 = vld [vmem:[%s0 + $0x128] sm:$0xff]
  %v53 = vld [vmem:[%s0 + $0x130] sm:$0xff]
  %v54 = vld [vmem:[%s0 + $0x138] sm:$0xff]
  %v55 = vld [vmem:[%s0 + $0x140] sm:$0x11]
  %v56 = vld [vmem:[%s0 + $0x148] sm:$0x11]
  %v57 = vld [vmem:[%s1] sm:$0xf]
  %v58 = vld [vmem:[%s1 + $0x4] sm:$0xf]
  %v59 = vld [vmem:[%s1 + $0x8] sm:$0xf]
  %v60 = vld [vmem:[%s1 + $0xc] sm:$0xf]
  %v61 = vld [vmem:[%s1 + $0x10] sm:$0xf]
  %v62 = vld [vmem:[%s1 + $0x14] sm:$0xf]
  %v63 = vld [vmem:[%s1 + $0x18] sm:$0xf]
  %v64 = vld [vmem:[%s1 + $0x1c] sm:$0xf]
  %v65 = vld [vmem:[%s1 + $0x20] sm:$0xf]
  %v66 = vld [vmem:[%s1 + $0x24] sm:$0xf]
  %v67 = vld [vmem:[%s1 + $0x28] sm:$0xf]
  %v68 = vld [vmem:[%s1 + $0x2c] sm:$0xf]
  %v69 = vld [vmem:[%s1 + $0x30] sm:$0xf]
  %v70 = vld [vmem:[%s1 + $0x34] sm:$0xf]
  %v71 = vld [vmem:[%s1 + $0x38] sm:$0xf]
  %v72 = vld [vmem:[%s1 + $0x3c] sm:$0xf]
  %v73 = vld [vmem:[%s1 + $0x40] sm:$0xf]
  %v74 = vld [vmem:[%s1 + $0x44] sm:$0xf]
  %v75 = vld [vmem:[%s1 + $0x48] sm:$0xf]
  %v76 = vld [vmem:[%s1 + $0x4c] sm:$0xf]
  %v77 = vld [vmem:[%s1 + $0x50] sm:$0xf]
  %v78 = vld [vmem:[%s1 + $0x54] sm:$0xf]
  %v79 = vld [vmem:[%s1 + $0x58] sm:$0xf]
  %v80 = vld [vmem:[%s1 + $0x5c] sm:$0xf]
  %v81 = vld [vmem:[%s1 + $0x60] sm:$0xf]
  %v82 = vld [vmem:[%s1 + $0x64] sm:$0xf]
  %v83 = vld [vmem:[%s1 + $0x68] sm:$0xf]
  %v84 = vld [vmem:[%s1 + $0x6c] sm:$0xf]
  %v85 = vld [vmem:[%s1 + $0x70] sm:$0xf]
  %v86 = vld [vmem:[%s1 + $0x74] sm:$0xf]
  %v87 = vld [vmem:[%s1 + $0x78] sm:$0xf]
  %v88 = vld [vmem:[%s1 + $0x7c] sm:$0xf]
  %v89 = vld [vmem:[%s1 + $0x80] sm:$0xf]
  %v90 = vld [vmem:[%s1 + $0x84] sm:$0xf]
  %v91 = vld [vmem:[%s1 + $0x88] sm:$0xf]
  %v92 = vld [vmem:[%s1 + $0x8c] sm:$0xf]
  %v93 = vld [vmem:[%s1 + $0x90] sm:$0xf]
  %v94 = vld [vmem:[%s1 + $0x94] sm:$0xf]
  %v95 = vld [vmem:[%s1 + $0x98] sm:$0xf]
  %v96 = vld [vmem:[%s1 + $0x9c] sm:$0xf]
  %v97 = vld [vmem:[%s1 + $0xa0] sm:$0xf]
  %v98 = vld [vmem:[%s1 + $0xa4] sm:$0xf]
  %v99 = vld [vmem:[%s1 + $0xa8] sm:$0xf]
  %v100 = vld [vmem:[%s1 + $0xac] sm:$0xf]
  %v101 = vld [vmem:[%s1 + $0xb0] sm:$0xf]
  %v102 = vld [vmem:[%s1 + $0xb4] sm:$0xf]
  %v103 = vld [vmem:[%s1 + $0xb8] sm:$0xf]
  %v104 = vld [vmem:[%s1 + $0xbc] sm:$0xf]
  %v105 = vld [vmem:[%s1 + $0xc0] sm:$0xf]
  %v106 = vld [vmem:[%s1 + $0xc4] sm:$0xf]
  %v107 = vld [vmem:[%s1 + $0xc8] sm:$0xf]
  %v108 = vld [vmem:[%s1 + $0xcc] sm:$0xf]
  %v109 = vld [vmem:[%s1 + $0xd0] sm:$0xf]
  %v110 = vld [vmem:[%s1 + $0xd4] sm:$0xf]
  %v111 = vld [vmem:[%s1 + $0xd8] sm:$0xf]
  %v112 = vld [vmem:[%s1 + $0xdc] sm:$0xf]
  %v113 = vld [vmem:[%s1 + $0xe0] sm:$0xf]
  %v114 = vld [vmem:[%s1 + $0xe4] sm:$0xf]
  %v115 = vld [vmem:[%s1 + $0xe8] sm:$0xf]
  %v116 = vld [vmem:[%s1 + $0xec] sm:$0xf]
  %v117 = vld [vmem:[%s1 + $0xf0] sm:$0xf]
  %v118 = vld [vmem:[%s1 + $0xf4] sm:$0xf]
  %v119 = vld [vmem:[%s1 + $0xf8] sm:$0xf]
  %v120 = vld [vmem:[%s1 + $0xfc] sm:$0xf]
  %v121 = vld [vmem:[%s2] sm:$0x1]
  %v123 = vlaneseq
  %v124 = vshrl.u32 %v123, 7
  %v125 = vsub.s32 0, %v124
  %v126 = vrot.slane %v121, %v125
  %v170 = vunpack.c.l.b16 %v15
  %v171 = vunpack.c.h.b16 %v15
  %v172 = vunpack.c.l.b16 %v16
  %v173 = vunpack.c.h.b16 %v16
  %v174 = vunpack.c.l.b16 %v17
  %v175 = vunpack.c.h.b16 %v17
  %v176 = vunpack.c.l.b16 %v18
  %v177 = vunpack.c.h.b16 %v18
  %v178 = vunpack.c.l.b16 %v19
  %v179 = vunpack.c.h.b16 %v19
  %v180 = vunpack.c.l.b16 %v20
  %v181 = vunpack.c.h.b16 %v20
  %v182 = vunpack.c.l.b16 %v21
  %v183 = vunpack.c.h.b16 %v21
  %v184 = vunpack.c.l.b16 %v22
  %v185 = vunpack.c.h.b16 %v22
  %v186 = vunpack.c.l.b16 %v23
  %v187 = vunpack.c.h.b16 %v23
  %v188 = vunpack.c.l.b16 %v24
  %v189 = vunpack.c.h.b16 %v24
  %v190 = vunpack.c.l.b16 %v25
  %v191 = vunpack.c.h.b16 %v25
  %v192 = vunpack.c.l.b16 %v26
  %v193 = vunpack.c.h.b16 %v26
  %v194 = vunpack.c.l.b16 %v27
  %v195 = vunpack.c.h.b16 %v27
  %v196 = vunpack.c.l.b16 %v28
  %v197 = vunpack.c.h.b16 %v28
  %v198 = vunpack.c.l.b16 %v29
  %v199 = vunpack.c.h.b16 %v29
  %v200 = vunpack.c.l.b16 %v30
  %v201 = vunpack.c.h.b16 %v30
  %v202 = vunpack.c.l.b16 %v31
  %v203 = vunpack.c.h.b16 %v31
  %v204 = vunpack.c.l.b16 %v32
  %v205 = vunpack.c.h.b16 %v32
  %v206 = vunpack.c.l.b16 %v33
  %v207 = vunpack.c.h.b16 %v33
  %v208 = vunpack.c.l.b16 %v34
  %v209 = vunpack.c.h.b16 %v34
  %v210 = vunpack.c.l.b16 %v35
  %v211 = vunpack.c.h.b16 %v35
  %v212 = vunpack.c.l.b16 %v36
  %v213 = vunpack.c.h.b16 %v36
  %v214 = vunpack.c.l.b16 %v37
  %v215 = vunpack.c.h.b16 %v37
  %v216 = vunpack.c.l.b16 %v38
  %v217 = vunpack.c.h.b16 %v38
  %v218 = vunpack.c.l.b16 %v39
  %v219 = vunpack.c.h.b16 %v39
  %v220 = vunpack.c.l.b16 %v40
  %v221 = vunpack.c.h.b16 %v40
  %v222 = vunpack.c.l.b16 %v41
  %v223 = vunpack.c.h.b16 %v41
  %v224 = vunpack.c.l.b16 %v42
  %v225 = vunpack.c.h.b16 %v42
  %v226 = vunpack.c.l.b16 %v43
  %v227 = vunpack.c.h.b16 %v43
  %v228 = vunpack.c.l.b16 %v44
  %v229 = vunpack.c.h.b16 %v44
  %v230 = vunpack.c.l.b16 %v45
  %v231 = vunpack.c.h.b16 %v45
  %v232 = vunpack.c.l.b16 %v46
  %v233 = vunpack.c.h.b16 %v46
  %v234 = vunpack.c.l.b16 %v47
  %v235 = vunpack.c.h.b16 %v47
  %v236 = vunpack.c.l.b16 %v48
  %v237 = vunpack.c.h.b16 %v48
  %v238 = vunpack.c.l.b16 %v49
  %v239 = vunpack.c.h.b16 %v49
  %v240 = vunpack.c.l.b16 %v50
  %v241 = vunpack.c.h.b16 %v50
  %v242 = vunpack.c.l.b16 %v51
  %v243 = vunpack.c.h.b16 %v51
  %v244 = vunpack.c.l.b16 %v52
  %v245 = vunpack.c.h.b16 %v52
  %v246 = vunpack.c.l.b16 %v53
  %v247 = vunpack.c.h.b16 %v53
  %v248 = vunpack.c.l.b16 %v54
  %v249 = vunpack.c.h.b16 %v54
  %v250 = vunpack.c.l.b16 %v55
  %v251 = vunpack.c.h.b16 %v55
  %v252 = vunpack.c.l.b16 %v56
  %v253 = vunpack.c.h.b16 %v56
  %v254 = vpack.c.b16 %v174, %v170
  %v255 = vpack.c.b16 %v175, %v171
  %v256 = vpack.c.b16 %v176, %v172
  %v257 = vpack.c.b16 %v177, %v173
  %v258 = vpack.c.b16 %v182, %v178
  %v259 = vpack.c.b16 %v183, %v179
  %v260 = vpack.c.b16 %v184, %v180
  %v261 = vpack.c.b16 %v185, %v181
  %v262 = vpack.c.b16 %v190, %v186
  %v263 = vpack.c.b16 %v191, %v187
  %v264 = vpack.c.b16 %v192, %v188
  %v265 = vpack.c.b16 %v193, %v189
  %v266 = vpack.c.b16 %v198, %v194
  %v267 = vpack.c.b16 %v199, %v195
  %v268 = vpack.c.b16 %v200, %v196
  %v269 = vpack.c.b16 %v201, %v197
  %v270 = vpack.c.b16 %v206, %v202
  %v271 = vpack.c.b16 %v207, %v203
  %v272 = vpack.c.b16 %v208, %v204
  %v273 = vpack.c.b16 %v209, %v205
  %v274 = vpack.c.b16 %v214, %v210
  %v275 = vpack.c.b16 %v215, %v211
  %v276 = vpack.c.b16 %v216, %v212
  %v277 = vpack.c.b16 %v217, %v213
  %v278 = vpack.c.b16 %v222, %v218
  %v279 = vpack.c.b16 %v223, %v219
  %v280 = vpack.c.b16 %v224, %v220
  %v281 = vpack.c.b16 %v225, %v221
  %v282 = vpack.c.b16 %v230, %v226
  %v283 = vpack.c.b16 %v231, %v227
  %v284 = vpack.c.b16 %v232, %v228
  %v285 = vpack.c.b16 %v233, %v229
  %v286 = vpack.c.b16 %v238, %v234
  %v287 = vpack.c.b16 %v239, %v235
  %v288 = vpack.c.b16 %v240, %v236
  %v289 = vpack.c.b16 %v241, %v237
  %v290 = vpack.c.b16 %v246, %v242
  %v291 = vpack.c.b16 %v247, %v243
  %v292 = vpack.c.b16 %v248, %v244
  %v293 = vpack.c.b16 %v249, %v245
  %v294 = vpack.c.b16 %v250, %v250
  %v295 = vpack.c.b16 %v251, %v251
  %v296 = vpack.c.b16 %v252, %v252
  %v297 = vpack.c.b16 %v253, %v253
  %v406 = vunpack.c.l.b16 %v57
  %v407 = vunpack.c.l.b16 %v58
  %v408 = vunpack.c.l.b16 %v59
  %v409 = vunpack.c.l.b16 %v60
  %v410 = vunpack.c.l.b16 %v61
  %v411 = vunpack.c.l.b16 %v62
  %v412 = vunpack.c.l.b16 %v63
  %v413 = vunpack.c.l.b16 %v64
  %v414 = vunpack.c.l.b16 %v65
  %v415 = vunpack.c.l.b16 %v66
  %v416 = vunpack.c.l.b16 %v67
  %v417 = vunpack.c.l.b16 %v68
  %v418 = vunpack.c.l.b16 %v69
  %v419 = vunpack.c.l.b16 %v70
  %v420 = vunpack.c.l.b16 %v71
  %v421 = vunpack.c.l.b16 %v72
  %v422 = vunpack.c.l.b16 %v73
  %v423 = vunpack.c.l.b16 %v74
  %v424 = vunpack.c.l.b16 %v75
  %v425 = vunpack.c.l.b16 %v76
  %v426 = vunpack.c.l.b16 %v77
  %v427 = vunpack.c.l.b16 %v78
  %v428 = vunpack.c.l.b16 %v79
  %v429 = vunpack.c.l.b16 %v80
  %v430 = vunpack.c.l.b16 %v81
  %v431 = vunpack.c.l.b16 %v82
  %v432 = vunpack.c.l.b16 %v83
  %v433 = vunpack.c.l.b16 %v84
  %v434 = vunpack.c.l.b16 %v85
  %v435 = vunpack.c.l.b16 %v86
  %v436 = vunpack.c.l.b16 %v87
  %v437 = vunpack.c.l.b16 %v88
  %v438 = vunpack.c.l.b16 %v89
  %v439 = vunpack.c.l.b16 %v90
  %v440 = vunpack.c.l.b16 %v91
  %v441 = vunpack.c.l.b16 %v92
  %v442 = vunpack.c.l.b16 %v93
  %v443 = vunpack.c.l.b16 %v94
  %v444 = vunpack.c.l.b16 %v95
  %v445 = vunpack.c.l.b16 %v96
  %v446 = vunpack.c.l.b16 %v97
  %v447 = vunpack.c.l.b16 %v98
  %v448 = vunpack.c.l.b16 %v99
  %v449 = vunpack.c.l.b16 %v100
  %v450 = vunpack.c.l.b16 %v101
  %v451 = vunpack.c.l.b16 %v102
  %v452 = vunpack.c.l.b16 %v103
  %v453 = vunpack.c.l.b16 %v104
  %v454 = vunpack.c.l.b16 %v105
  %v455 = vunpack.c.l.b16 %v106
  %v456 = vunpack.c.l.b16 %v107
  %v457 = vunpack.c.l.b16 %v108
  %v458 = vunpack.c.l.b16 %v109
  %v459 = vunpack.c.l.b16 %v110
  %v460 = vunpack.c.l.b16 %v111
  %v461 = vunpack.c.l.b16 %v112
  %v462 = vunpack.c.l.b16 %v113
  %v463 = vunpack.c.l.b16 %v114
  %v464 = vunpack.c.l.b16 %v115
  %v465 = vunpack.c.l.b16 %v116
  %v466 = vunpack.c.l.b16 %v117
  %v467 = vunpack.c.l.b16 %v118
  %v468 = vunpack.c.l.b16 %v119
  %v469 = vunpack.c.l.b16 %v120
  %v470 = vpack.c.b16 %v407, %v406
  %v471 = vpack.c.b16 %v409, %v408
  %v472 = vpack.c.b16 %v411, %v410
  %v473 = vpack.c.b16 %v413, %v412
  %v474 = vpack.c.b16 %v415, %v414
  %v475 = vpack.c.b16 %v417, %v416
  %v476 = vpack.c.b16 %v419, %v418
  %v477 = vpack.c.b16 %v421, %v420
  %v478 = vpack.c.b16 %v423, %v422
  %v479 = vpack.c.b16 %v425, %v424
  %v480 = vpack.c.b16 %v427, %v426
  %v481 = vpack.c.b16 %v429, %v428
  %v482 = vpack.c.b16 %v431, %v430
  %v483 = vpack.c.b16 %v433, %v432
  %v484 = vpack.c.b16 %v435, %v434
  %v485 = vpack.c.b16 %v437, %v436
  %v486 = vpack.c.b16 %v439, %v438
  %v487 = vpack.c.b16 %v441, %v440
  %v488 = vpack.c.b16 %v443, %v442
  %v489 = vpack.c.b16 %v445, %v444
  %v490 = vpack.c.b16 %v447, %v446
  %v491 = vpack.c.b16 %v449, %v448
  %v492 = vpack.c.b16 %v451, %v450
  %v493 = vpack.c.b16 %v453, %v452
  %v494 = vpack.c.b16 %v455, %v454
  %v495 = vpack.c.b16 %v457, %v456
  %v496 = vpack.c.b16 %v459, %v458
  %v497 = vpack.c.b16 %v461, %v460
  %v498 = vpack.c.b16 %v463, %v462
  %v499 = vpack.c.b16 %v465, %v464
  %v500 = vpack.c.b16 %v467, %v466
  %v501 = vpack.c.b16 %v469, %v468
  %534 = vmatprep.subr.bf16.mxu0 0
  %535 = vmatpush1.bf16.msra.mxu0 %v477
  %536 = vmatprep.subr.bf16.mxu0 0
  %537 = vmatpush1.bf16.msra.mxu0 %v476
  %538 = vmatprep.subr.bf16.mxu0 0
  %539 = vmatpush1.bf16.msra.mxu0 %v475
  %540 = vmatprep.subr.bf16.mxu0 0
  %541 = vmatpush1.bf16.msra.mxu0 %v474
  %542 = vmatprep.subr.bf16.mxu0 0
  %543 = vmatpush1.bf16.msra.mxu0 %v473
  %544 = vmatprep.subr.bf16.mxu0 0
  %545 = vmatpush1.bf16.msra.mxu0 %v472
  %546 = vmatprep.subr.bf16.mxu0 0
  %547 = vmatpush1.bf16.msra.mxu0 %v471
  %548 = vmatprep.subr.bf16.mxu0 0
  %549 = vmatpush1.bf16.msra.mxu0 %v470
  %550 = vmatprep.subr.bf16.mxu0 0
  %551 = vmatpush2.bf16.msra.mxu0 %v485
  %552 = vmatprep.subr.bf16.mxu0 0
  %553 = vmatpush2.bf16.msra.mxu0 %v484
  %554 = vmatprep.subr.bf16.mxu0 0
  %555 = vmatpush2.bf16.msra.mxu0 %v483
  %556 = vmatprep.subr.bf16.mxu0 0
  %557 = vmatpush2.bf16.msra.mxu0 %v482
  %558 = vmatprep.subr.bf16.mxu0 0
  %559 = vmatpush2.bf16.msra.mxu0 %v481
  %560 = vmatprep.subr.bf16.mxu0 0
  %561 = vmatpush2.bf16.msra.mxu0 %v480
  %562 = vmatprep.subr.bf16.mxu0 0
  %563 = vmatpush2.bf16.msra.mxu0 %v479
  %564 = vmatprep.subr.bf16.mxu0 0
  %565 = vmatpush2.bf16.msra.mxu0 %v478
  %566 = vmatprep.mubr.bf16.mxu0 %v255
  %567 = vmatmul.mubr.bf16.gmra.mxu0 %v254
  %v568 = vpop.f32.mrf.mxu0
  %v569 = vadd.f32 %v126, %v568
  %v570 = vpop.f32.mrf.mxu0
  %v571 = vpop.f32.mrf.mxu0
  %v572 = vadd.f32 %v126, %v571
  %v573 = vpop.f32.mrf.mxu0
  %574 = vmatprep.mubr.bf16.mxu0 %v259
  %575 = vmatmul.mubr.bf16.gmra.mxu0 %v258
  %v576 = vpop.f32.mrf.mxu0
  %v577 = vadd.f32 %v126, %v576
  %v578 = vpop.f32.mrf.mxu0
  %v579 = vpop.f32.mrf.mxu0
  %v580 = vadd.f32 %v126, %v579
  %v581 = vpop.f32.mrf.mxu0
  %582 = vmatprep.mubr.bf16.mxu0 %v263
  %583 = vmatmul.mubr.bf16.gmra.mxu0 %v262
  %v584 = vpop.f32.mrf.mxu0
  %v585 = vadd.f32 %v126, %v584
  %v586 = vpop.f32.mrf.mxu0
  %v587 = vpop.f32.mrf.mxu0
  %v588 = vadd.f32 %v126, %v587
  %v589 = vpop.f32.mrf.mxu0
  %590 = vmatprep.mubr.bf16.mxu0 %v267
  %591 = vmatmul.mubr.bf16.gmra.mxu0 %v266
  %v592 = vpop.f32.mrf.mxu0
  %v593 = vadd.f32 %v126, %v592
  %v594 = vpop.f32.mrf.mxu0
  %v595 = vpop.f32.mrf.mxu0
  %v596 = vadd.f32 %v126, %v595
  %v597 = vpop.f32.mrf.mxu0
  %598 = vmatprep.mubr.bf16.mxu0 %v271
  %599 = vmatmul.mubr.bf16.gmra.mxu0 %v270
  %v600 = vpop.f32.mrf.mxu0
  %v601 = vadd.f32 %v126, %v600
  %v602 = vpop.f32.mrf.mxu0
  %v603 = vpop.f32.mrf.mxu0
  %v604 = vadd.f32 %v126, %v603
  %v605 = vpop.f32.mrf.mxu0
  %606 = vmatprep.mubr.bf16.mxu0 %v275
  %607 = vmatmul.mubr.bf16.gmra.mxu0 %v274
  %v608 = vpop.f32.mrf.mxu0
  %v609 = vadd.f32 %v126, %v608
  %v610 = vpop.f32.mrf.mxu0
  %v611 = vpop.f32.mrf.mxu0
  %v612 = vadd.f32 %v126, %v611
  %v613 = vpop.f32.mrf.mxu0
  %614 = vmatprep.mubr.bf16.mxu0 %v279
  %615 = vmatmul.mubr.bf16.gmra.mxu0 %v278
  %v616 = vpop.f32.mrf.mxu0
  %v617 = vadd.f32 %v126, %v616
  %v618 = vpop.f32.mrf.mxu0
  %v619 = vpop.f32.mrf.mxu0
  %v620 = vadd.f32 %v126, %v619
  %v621 = vpop.f32.mrf.mxu0
  %622 = vmatprep.mubr.bf16.mxu0 %v283
  %623 = vmatmul.mubr.bf16.gmra.mxu0 %v282
  %v624 = vpop.f32.mrf.mxu0
  %v625 = vadd.f32 %v126, %v624
  %v626 = vpop.f32.mrf.mxu0
  %v627 = vpop.f32.mrf.mxu0
  %v628 = vadd.f32 %v126, %v627
  %v629 = vpop.f32.mrf.mxu0
  %630 = vmatprep.mubr.bf16.mxu0 %v287
  %631 = vmatmul.mubr.bf16.gmra.mxu0 %v286
  %v632 = vpop.f32.mrf.mxu0
  %v633 = vadd.f32 %v126, %v632
  %v634 = vpop.f32.mrf.mxu0
  %v635 = vpop.f32.mrf.mxu0
  %v636 = vadd.f32 %v126, %v635
  %v637 = vpop.f32.mrf.mxu0
  %638 = vmatprep.mubr.bf16.mxu0 %v291
  %639 = vmatmul.mubr.bf16.gmra.mxu0 %v290
  %v640 = vpop.f32.mrf.mxu0
  %v641 = vadd.f32 %v126, %v640
  %v642 = vpop.f32.mrf.mxu0
  %v643 = vpop.f32.mrf.mxu0
  %v644 = vadd.f32 %v126, %v643
  %v645 = vpop.f32.mrf.mxu0
  %646 = vmatprep.mubr.bf16.mxu0 %v295
  %647 = vmatmul.mubr.bf16.gmra.mxu0 %v294
  %v648 = vpop.f32.mrf.mxu0
  %v649 = vadd.f32 %v126, %v648
  %v650 = vpop.f32.mrf.mxu0
  %v651 = vpop.f32.mrf.mxu0
  %v652 = vpop.f32.mrf.mxu0
  %653 = vdwg.mxu0
  %654 = vmatprep.subr.bf16.mxu0 0
  %655 = vmatpush1.bf16.msra.mxu0 %v493
  %656 = vmatprep.subr.bf16.mxu0 0
  %657 = vmatpush1.bf16.msra.mxu0 %v492
  %658 = vmatprep.subr.bf16.mxu0 0
  %659 = vmatpush1.bf16.msra.mxu0 %v491
  %660 = vmatprep.subr.bf16.mxu0 0
  %661 = vmatpush1.bf16.msra.mxu0 %v490
  %662 = vmatprep.subr.bf16.mxu0 0
  %663 = vmatpush1.bf16.msra.mxu0 %v489
  %664 = vmatprep.subr.bf16.mxu0 0
  %665 = vmatpush1.bf16.msra.mxu0 %v488
  %666 = vmatprep.subr.bf16.mxu0 0
  %667 = vmatpush1.bf16.msra.mxu0 %v487
  %668 = vmatprep.subr.bf16.mxu0 0
  %669 = vmatpush1.bf16.msra.mxu0 %v486
  %670 = vmatprep.subr.bf16.mxu0 0
  %671 = vmatpush2.bf16.msra.mxu0 %v501
  %672 = vmatprep.subr.bf16.mxu0 0
  %673 = vmatpush2.bf16.msra.mxu0 %v500
  %674 = vmatprep.subr.bf16.mxu0 0
  %675 = vmatpush2.bf16.msra.mxu0 %v499
  %676 = vmatprep.subr.bf16.mxu0 0
  %677 = vmatpush2.bf16.msra.mxu0 %v498
  %678 = vmatprep.subr.bf16.mxu0 0
  %679 = vmatpush2.bf16.msra.mxu0 %v497
  %680 = vmatprep.subr.bf16.mxu0 0
  %681 = vmatpush2.bf16.msra.mxu0 %v496
  %682 = vmatprep.subr.bf16.mxu0 0
  %683 = vmatpush2.bf16.msra.mxu0 %v495
  %684 = vmatprep.subr.bf16.mxu0 0
  %685 = vmatpush2.bf16.msra.mxu0 %v494
  %686 = vmatprep.mubr.bf16.mxu0 %v257
  %687 = vmatmul.mubr.bf16.gmra.mxu0 %v256
  %v688 = vpop.f32.mrf.mxu0
  %v689 = vadd.f32 %v569, %v688
  %v690 = vpop.f32.mrf.mxu0
  %v691 = vpop.f32.mrf.mxu0
  %v692 = vadd.f32 %v572, %v691
  %v693 = vpop.f32.mrf.mxu0
  %694 = vmatprep.mubr.bf16.mxu0 %v261
  %695 = vmatmul.mubr.bf16.gmra.mxu0 %v260
  %v696 = vpop.f32.mrf.mxu0
  %v697 = vadd.f32 %v577, %v696
  %v698 = vpop.f32.mrf.mxu0
  %v699 = vpop.f32.mrf.mxu0
  %v700 = vadd.f32 %v580, %v699
  %v701 = vpop.f32.mrf.mxu0
  %702 = vmatprep.mubr.bf16.mxu0 %v265
  %703 = vmatmul.mubr.bf16.gmra.mxu0 %v264
  %v704 = vpop.f32.mrf.mxu0
  %v705 = vadd.f32 %v585, %v704
  %v706 = vpop.f32.mrf.mxu0
  %v707 = vpop.f32.mrf.mxu0
  %v708 = vadd.f32 %v588, %v707
  %v709 = vpop.f32.mrf.mxu0
  %710 = vmatprep.mubr.bf16.mxu0 %v269
  %711 = vmatmul.mubr.bf16.gmra.mxu0 %v268
  %v712 = vpop.f32.mrf.mxu0
  %v713 = vadd.f32 %v593, %v712
  %v714 = vpop.f32.mrf.mxu0
  %v715 = vpop.f32.mrf.mxu0
  %v716 = vadd.f32 %v596, %v715
  %v717 = vpop.f32.mrf.mxu0
  %718 = vmatprep.mubr.bf16.mxu0 %v273
  %719 = vmatmul.mubr.bf16.gmra.mxu0 %v272
  %v720 = vpop.f32.mrf.mxu0
  %v721 = vadd.f32 %v601, %v720
  %v722 = vpop.f32.mrf.mxu0
  %v723 = vpop.f32.mrf.mxu0
  %v724 = vadd.f32 %v604, %v723
  %v725 = vpop.f32.mrf.mxu0
  %726 = vmatprep.mubr.bf16.mxu0 %v277
  %727 = vmatmul.mubr.bf16.gmra.mxu0 %v276
  %v728 = vpop.f32.mrf.mxu0
  %v729 = vadd.f32 %v609, %v728
  %v730 = vpop.f32.mrf.mxu0
  %v731 = vpop.f32.mrf.mxu0
  %v732 = vadd.f32 %v612, %v731
  %v733 = vpop.f32.mrf.mxu0
  %734 = vmatprep.mubr.bf16.mxu0 %v281
  %735 = vmatmul.mubr.bf16.gmra.mxu0 %v280
  %v736 = vpop.f32.mrf.mxu0
  %v737 = vadd.f32 %v617, %v736
  %v738 = vpop.f32.mrf.mxu0
  %v739 = vpop.f32.mrf.mxu0
  %v740 = vadd.f32 %v620, %v739
  %v741 = vpop.f32.mrf.mxu0
  %742 = vmatprep.mubr.bf16.mxu0 %v285
  %743 = vmatmul.mubr.bf16.gmra.mxu0 %v284
  %v744 = vpop.f32.mrf.mxu0
  %v745 = vadd.f32 %v625, %v744
  %v746 = vpop.f32.mrf.mxu0
  %v747 = vpop.f32.mrf.mxu0
  %v748 = vadd.f32 %v628, %v747
  %v749 = vpop.f32.mrf.mxu0
  %750 = vmatprep.mubr.bf16.mxu0 %v289
  %751 = vmatmul.mubr.bf16.gmra.mxu0 %v288
  %v752 = vpop.f32.mrf.mxu0
  %v753 = vadd.f32 %v633, %v752
  %v754 = vpop.f32.mrf.mxu0
  %v755 = vpop.f32.mrf.mxu0
  %v756 = vadd.f32 %v636, %v755
  %v757 = vpop.f32.mrf.mxu0
  %758 = vmatprep.mubr.bf16.mxu0 %v293
  %759 = vmatmul.mubr.bf16.gmra.mxu0 %v292
  %v760 = vpop.f32.mrf.mxu0
  %v761 = vadd.f32 %v641, %v760
  %v762 = vpop.f32.mrf.mxu0
  %v763 = vpop.f32.mrf.mxu0
  %v764 = vadd.f32 %v644, %v763
  %v765 = vpop.f32.mrf.mxu0
  %766 = vmatprep.mubr.bf16.mxu0 %v297
  %767 = vmatmul.mubr.bf16.gmra.mxu0 %v296
  %v768 = vpop.f32.mrf.mxu0
  %v769 = vadd.f32 %v649, %v768
  %v770 = vpop.f32.mrf.mxu0
  %v771 = vpop.f32.mrf.mxu0
  %v772 = vpop.f32.mrf.mxu0
  %773 = vdwg.mxu0
  %v774 = vmax.f32 %v689, 0.0
  %v775 = vmax.f32 %v692, 0.0
  %v776 = vmax.f32 %v697, 0.0
  %v777 = vmax.f32 %v700, 0.0
  %v778 = vmax.f32 %v705, 0.0
  %v779 = vmax.f32 %v708, 0.0
  %v780 = vmax.f32 %v713, 0.0
  %v781 = vmax.f32 %v716, 0.0
  %v782 = vmax.f32 %v721, 0.0
  %v783 = vmax.f32 %v724, 0.0
  %v784 = vmax.f32 %v729, 0.0
  %v785 = vmax.f32 %v732, 0.0
  %v786 = vmax.f32 %v737, 0.0
  %v787 = vmax.f32 %v740, 0.0
  %v788 = vmax.f32 %v745, 0.0
  %v789 = vmax.f32 %v748, 0.0
  %v790 = vmax.f32 %v753, 0.0
  %v791 = vmax.f32 %v756, 0.0
  %v792 = vmax.f32 %v761, 0.0
  %v793 = vmax.f32 %v764, 0.0
  %v794 = vmax.f32 %v769, 0.0
  %v795 = vpack.c.bf16 %v775, %v774
  %v796 = vpack.c.bf16 %v777, %v776
  %v797 = vpack.c.bf16 %v779, %v778
  %v798 = vpack.c.bf16 %v781, %v780
  %v799 = vpack.c.bf16 %v783, %v782
  %v800 = vpack.c.bf16 %v785, %v784
  %v801 = vpack.c.bf16 %v787, %v786
  %v802 = vpack.c.bf16 %v789, %v788
  %v803 = vpack.c.bf16 %v791, %v790
  %v804 = vpack.c.bf16 %v793, %v792
  %v805 = vpack.c.bf16 %v794, %v794
  %v817 = vunpack.c.l.b16 %v795
  %v818 = vunpack.c.h.b16 %v795
  %v819 = vunpack.c.l.b16 %v796
  %v820 = vunpack.c.h.b16 %v796
  %v821 = vunpack.c.l.b16 %v797
  %v822 = vunpack.c.h.b16 %v797
  %v823 = vunpack.c.l.b16 %v798
  %v824 = vunpack.c.h.b16 %v798
  %v825 = vunpack.c.l.b16 %v799
  %v826 = vunpack.c.h.b16 %v799
  %v827 = vunpack.c.l.b16 %v800
  %v828 = vunpack.c.h.b16 %v800
  %v829 = vunpack.c.l.b16 %v801
  %v830 = vunpack.c.h.b16 %v801
  %v831 = vunpack.c.l.b16 %v802
  %v832 = vunpack.c.h.b16 %v802
  %v833 = vunpack.c.l.b16 %v803
  %v834 = vunpack.c.h.b16 %v803
  %v835 = vunpack.c.l.b16 %v804
  %v836 = vunpack.c.h.b16 %v804
  %v837 = vunpack.c.l.b16 %v805
  %v838 = vpack.c.b16 %v817, %v817
  %v839 = vpack.c.b16 %v818, %v818
  %v840 = vpack.c.b16 %v819, %v819
  %v841 = vpack.c.b16 %v820, %v820
  %v842 = vpack.c.b16 %v821, %v821
  %v843 = vpack.c.b16 %v822, %v822
  %v844 = vpack.c.b16 %v823, %v823
  %v845 = vpack.c.b16 %v824, %v824
  %v846 = vpack.c.b16 %v825, %v825
  %v847 = vpack.c.b16 %v826, %v826
  %v848 = vpack.c.b16 %v827, %v827
  %v849 = vpack.c.b16 %v828, %v828
  %v850 = vpack.c.b16 %v829, %v829
  %v851 = vpack.c.b16 %v830, %v830
  %v852 = vpack.c.b16 %v831, %v831
  %v853 = vpack.c.b16 %v832, %v832
  %v854 = vpack.c.b16 %v833, %v833
  %v855 = vpack.c.b16 %v834, %v834
  %v856 = vpack.c.b16 %v835, %v835
  %v857 = vpack.c.b16 %v836, %v836
  %v858 = vpack.c.b16 %v837, %v837
  %880 = vst [vmem:[%s3] sm:$0xf] %v838
  %881 = vst [vmem:[%s3 + $0x4] sm:$0xf] %v839
  %882 = vst [vmem:[%s3 + $0x8] sm:$0xf] %v840
  %883 = vst [vmem:[%s3 + $0xc] sm:$0xf] %v841
  %884 = vst [vmem:[%s3 + $0x10] sm:$0xf] %v842
  %885 = vst [vmem:[%s3 + $0x14] sm:$0xf] %v843
  %886 = vst [vmem:[%s3 + $0x18] sm:$0xf] %v844
  %887 = vst [vmem:[%s3 + $0x1c] sm:$0xf] %v845
  %888 = vst [vmem:[%s3 + $0x20] sm:$0xf] %v846
  %889 = vst [vmem:[%s3 + $0x24] sm:$0xf] %v847
  %890 = vst [vmem:[%s3 + $0x28] sm:$0xf] %v848
  %891 = vst [vmem:[%s3 + $0x2c] sm:$0xf] %v849
  %892 = vst [vmem:[%s3 + $0x30] sm:$0xf] %v850
  %893 = vst [vmem:[%s3 + $0x34] sm:$0xf] %v851
  %894 = vst [vmem:[%s3 + $0x38] sm:$0xf] %v852
  %895 = vst [vmem:[%s3 + $0x3c] sm:$0xf] %v853
  %896 = vst [vmem:[%s3 + $0x40] sm:$0xf] %v854
  %897 = vst [vmem:[%s3 + $0x44] sm:$0xf] %v855
  %898 = vst [vmem:[%s3 + $0x48] sm:$0xf] %v856
  %899 = vst [vmem:[%s3 + $0x4c] sm:$0xf] %v857
  %900 = vst [vmem:[%s3 + $0x50] sm:$0x1] %v858
  // Predicated region
  $region14: #{ddqn_forward.5} parent=0 // pred_check
    _
  $region15: #{ddqn_forward.5} parent=0 // pred_check_branch
    %902 = sbr.rel (0) target = $region17
  $region16: #{ddqn_forward.5} parent=0 // pred_region
    _
  $region17: #{ddqn_forward.5} parent=0 // pred_fallthru
    _
  // Predicated region
  $region18: #{ddqn_forward.5} parent=0 // pred_check
    _
  $region19: #{ddqn_forward.5} parent=0 // pred_check_branch
    %904 = sbr.rel (0) target = $region21
  $region20: #{ddqn_forward.5} parent=0 // pred_region
    _
  $region21: #{ddqn_forward.5} parent=0 // pred_fallthru
    _

// kernel: ddqn_forward.6
$region0: #{ddqn_forward.6}
  #allocation0 [shape = 'u32[]', space=smem, size = 0x4, offset = 0x4, fixed_abs, tag = 'smem constant byte address 0x4 - core index']
  #allocation1 [shape = 'u32[144,128]{1,0:T(1,128)}', space=vmem, size = 0x12000, scoped, tag = 'internal scratch']
  %s0 = inlined_call_operand.vmem [shape: bf16[98,576], index: 0, kind: input, shape index: {}]
  %s1 = inlined_call_operand.vmem [shape: bf16[576,128], index: 1, kind: input, shape index: {}]
  %s2 = inlined_call_operand.vmem [shape: f32[1,128], index: 2, kind: input, shape index: {}]
  %s3 = inlined_call_operand.vmem [shape: bf16[98,128], index: 3, kind: output, shape index: {}]
  %s4 = sld [smem:[#allocation0]]
  $region22: #{ddqn_forward.6} parent=0
    _
  %s6 = ssub.s32 1, %s4
  %s7 = scalar_select 0, %s6, %s4
  // Predicated region
  $region2: #{ddqn_forward.6} parent=0 // pred_check
    _
  $region3: #{ddqn_forward.6} parent=0 // pred_check_branch
    %9 = sbr.rel (0) target = $region5
  $region4: #{ddqn_forward.6} parent=0 // pred_region
    _
  $region5: #{ddqn_forward.6} parent=0 // pred_fallthru
    _
  // Predicated region
  $region6: #{ddqn_forward.6} parent=0 // pred_check
    _
  $region7: #{ddqn_forward.6} parent=0 // pred_check_branch
    %11 = sbr.rel (0) target = $region9
  $region8: #{ddqn_forward.6} parent=0 // pred_region
    _
  $region9: #{ddqn_forward.6} parent=0 // pred_fallthru
    _
  // Predicated region
  $region10: #{ddqn_forward.6} parent=0 // pred_check
    _
  $region11: #{ddqn_forward.6} parent=0 // pred_check_branch
    %13 = sbr.rel (0) target = $region13
  $region12: #{ddqn_forward.6} parent=0 // pred_region
    _
  $region13: #{ddqn_forward.6} parent=0 // pred_fallthru
    _
  %v15 = vld [vmem:[%s0] sm:$0xff]
  %v16 = vld [vmem:[%s0 + $0x8] sm:$0xff]
  %v17 = vld [vmem:[%s0 + $0x10] sm:$0xf]
  %v18 = vld [vmem:[%s0 + $0x14] sm:$0xff]
  %v19 = vld [vmem:[%s0 + $0x1c] sm:$0xff]
  %v20 = vld [vmem:[%s0 + $0x24] sm:$0xf]
  %v21 = vld [vmem:[%s0 + $0x28] sm:$0xff]
  %v22 = vld [vmem:[%s0 + $0x30] sm:$0xff]
  %v23 = vld [vmem:[%s0 + $0x38] sm:$0xf]
  %v24 = vld [vmem:[%s0 + $0x3c] sm:$0xff]
  %v25 = vld [vmem:[%s0 + $0x44] sm:$0xff]
  %v26 = vld [vmem:[%s0 + $0x4c] sm:$0xf]
  %v27 = vld [vmem:[%s0 + $0x50] sm:$0xff]
  %v28 = vld [vmem:[%s0 + $0x58] sm:$0xff]
  %v29 = vld [vmem:[%s0 + $0x60] sm:$0xf]
  %v30 = vld [vmem:[%s0 + $0x64] sm:$0xff]
  %v31 = vld [vmem:[%s0 + $0x6c] sm:$0xff]
  %v32 = vld [vmem:[%s0 + $0x74] sm:$0xf]
  %v33 = vld [vmem:[%s0 + $0x78] sm:$0xff]
  %v34 = vld [vmem:[%s0 + $0x80] sm:$0xff]
  %v35 = vld [vmem:[%s0 + $0x88] sm:$0xf]
  %v36 = vld [vmem:[%s0 + $0x8c] sm:$0xff]
  %v37 = vld [vmem:[%s0 + $0x94] sm:$0xff]
  %v38 = vld [vmem:[%s0 + $0x9c] sm:$0xf]
  %v39 = vld [vmem:[%s0 + $0xa0] sm:$0xff]
  %v40 = vld [vmem:[%s0 + $0xa8] sm:$0xff]
  %v41 = vld [vmem:[%s0 + $0xb0] sm:$0xf]
  %v42 = vld [vmem:[%s0 + $0xb4] sm:$0xff]
  %v43 = vld [vmem:[%s0 + $0xbc] sm:$0xff]
  %v44 = vld [vmem:[%s0 + $0xc4] sm:$0xf]
  %v45 = vld [vmem:[%s0 + $0xc8] sm:$0xff]
  %v46 = vld [vmem:[%s0 + $0xd0] sm:$0xff]
  %v47 = vld [vmem:[%s0 + $0xd8] sm:$0xf]
  %v48 = vld [vmem:[%s0 + $0xdc] sm:$0xff]
  %v49 = vld [vmem:[%s0 + $0xe4] sm:$0xff]
  %v50 = vld [vmem:[%s0 + $0xec] sm:$0xf]
  %v51 = vld [vmem:[%s0 + $0xf0] sm:$0x11]
  %v52 = vld [vmem:[%s0 + $0xf8] sm:$0x11]
  %v53 = vld [vmem:[%s0 + $0x100] sm:$0x1]
  %v54 = vld [vmem:[%s1] sm:$0xf]
  %v55 = vld [vmem:[%s1 + $0x4] sm:$0xf]
  %v56 = vld [vmem:[%s1 + $0x8] sm:$0xf]
  %v57 = vld [vmem:[%s1 + $0xc] sm:$0xf]
  %v58 = vld [vmem:[%s1 + $0x10] sm:$0xf]
  %v59 = vld [vmem:[%s1 + $0x14] sm:$0xf]
  %v60 = vld [vmem:[%s1 + $0x18] sm:$0xf]
  %v61 = vld [vmem:[%s1 + $0x1c] sm:$0xf]
  %v62 = vld [vmem:[%s1 + $0x20] sm:$0xf]
  %v63 = vld [vmem:[%s1 + $0x24] sm:$0xf]
  %v64 = vld [vmem:[%s1 + $0x28] sm:$0xf]
  %v65 = vld [vmem:[%s1 + $0x2c] sm:$0xf]
  %v66 = vld [vmem:[%s1 + $0x30] sm:$0xf]
  %v67 = vld [vmem:[%s1 + $0x34] sm:$0xf]
  %v68 = vld [vmem:[%s1 + $0x38] sm:$0xf]
  %v69 = vld [vmem:[%s1 + $0x3c] sm:$0xf]
  %v70 = vld [vmem:[%s1 + $0x40] sm:$0xf]
  %v71 = vld [vmem:[%s1 + $0x44] sm:$0xf]
  %v72 = vld [vmem:[%s1 + $0x48] sm:$0xf]
  %v73 = vld [vmem:[%s1 + $0x4c] sm:$0xf]
  %v74 = vld [vmem:[%s1 + $0x50] sm:$0xf]
  %v75 = vld [vmem:[%s1 + $0x54] sm:$0xf]
  %v76 = vld [vmem:[%s1 + $0x58] sm:$0xf]
  %v77 = vld [vmem:[%s1 + $0x5c] sm:$0xf]
  %v78 = vld [vmem:[%s1 + $0x60] sm:$0xf]
  %v79 = vld [vmem:[%s1 + $0x64] sm:$0xf]
  %v80 = vld [vmem:[%s1 + $0x68] sm:$0xf]
  %v81 = vld [vmem:[%s1 + $0x6c] sm:$0xf]
  %v82 = vld [vmem:[%s1 + $0x70] sm:$0xf]
  %v83 = vld [vmem:[%s1 + $0x74] sm:$0xf]
  %v84 = vld [vmem:[%s1 + $0x78] sm:$0xf]
  %v85 = vld [vmem:[%s1 + $0x7c] sm:$0xf]
  %v86 = vld [vmem:[%s1 + $0x80] sm:$0xf]
  %v87 = vld [vmem:[%s1 + $0x84] sm:$0xf]
  %v88 = vld [vmem:[%s1 + $0x88] sm:$0xf]
  %v89 = vld [vmem:[%s1 + $0x8c] sm:$0xf]
  %v90 = vld [vmem:[%s1 + $0x90] sm:$0xf]
  %v91 = vld [vmem:[%s1 + $0x94] sm:$0xf]
  %v92 = vld [vmem:[%s1 + $0x98] sm:$0xf]
  %v93 = vld [vmem:[%s1 + $0x9c] sm:$0xf]
  %v94 = vld [vmem:[%s1 + $0xa0] sm:$0xf]
  %v95 = vld [vmem:[%s1 + $0xa4] sm:$0xf]
  %v96 = vld [vmem:[%s1 + $0xa8] sm:$0xf]
  %v97 = vld [vmem:[%s1 + $0xac] sm:$0xf]
  %v98 = vld [vmem:[%s1 + $0xb0] sm:$0xf]
  %v99 = vld [vmem:[%s1 + $0xb4] sm:$0xf]
  %v100 = vld [vmem:[%s1 + $0xb8] sm:$0xf]
  %v101 = vld [vmem:[%s1 + $0xbc] sm:$0xf]
  %v102 = vld [vmem:[%s1 + $0xc0] sm:$0xf]
  %v103 = vld [vmem:[%s1 + $0xc4] sm:$0xf]
  %v104 = vld [vmem:[%s1 + $0xc8] sm:$0xf]
  %v105 = vld [vmem:[%s1 + $0xcc] sm:$0xf]
  %v106 = vld [vmem:[%s1 + $0xd0] sm:$0xf]
  %v107 = vld [vmem:[%s1 + $0xd4] sm:$0xf]
  %v108 = vld [vmem:[%s1 + $0xd8] sm:$0xf]
  %v109 = vld [vmem:[%s1 + $0xdc] sm:$0xf]
  %v110 = vld [vmem:[%s1 + $0xe0] sm:$0xf]
  %v111 = vld [vmem:[%s1 + $0xe4] sm:$0xf]
  %v112 = vld [vmem:[%s1 + $0xe8] sm:$0xf]
  %v113 = vld [vmem:[%s1 + $0xec] sm:$0xf]
  %v114 = vld [vmem:[%s1 + $0xf0] sm:$0xf]
  %v115 = vld [vmem:[%s1 + $0xf4] sm:$0xf]
  %v116 = vld [vmem:[%s1 + $0xf8] sm:$0xf]
  %v117 = vld [vmem:[%s1 + $0xfc] sm:$0xf]
  %v118 = vld [vmem:[%s1 + $0x100] sm:$0xf]
  %v119 = vld [vmem:[%s1 + $0x104] sm:$0xf]
  %v120 = vld [vmem:[%s1 + $0x108] sm:$0xf]
  %v121 = vld [vmem:[%s1 + $0x10c] sm:$0xf]
  %v122 = vld [vmem:[%s1 + $0x110] sm:$0xf]
  %v123 = vld [vmem:[%s1 + $0x114] sm:$0xf]
  %v124 = vld [vmem:[%s1 + $0x118] sm:$0xf]
  %v125 = vld [vmem:[%s1 + $0x11c] sm:$0xf]
  %v126 = vld [vmem:[%s2] sm:$0x1]
  %v128 = vlaneseq
  %v129 = vshrl.u32 %v128, 7
  %v130 = vsub.s32 0, %v129
  %v131 = vrot.slane %v126, %v130
  %v172 = vunpack.c.l.b16 %v15
  %v173 = vunpack.c.h.b16 %v15
  %v174 = vunpack.c.l.b16 %v16
  %v175 = vunpack.c.h.b16 %v16
  %v176 = vunpack.c.l.b16 %v17
  %v177 = vunpack.c.l.b16 %v18
  %v178 = vunpack.c.h.b16 %v18
  %v179 = vunpack.c.l.b16 %v19
  %v180 = vunpack.c.h.b16 %v19
  %v181 = vunpack.c.l.b16 %v20
  %v182 = vunpack.c.l.b16 %v21
  %v183 = vunpack.c.h.b16 %v21
  %v184 = vunpack.c.l.b16 %v22
  %v185 = vunpack.c.h.b16 %v22
  %v186 = vunpack.c.l.b16 %v23
  %v187 = vunpack.c.l.b16 %v24
  %v188 = vunpack.c.h.b16 %v24
  %v189 = vunpack.c.l.b16 %v25
  %v190 = vunpack.c.h.b16 %v25
  %v191 = vunpack.c.l.b16 %v26
  %v192 = vunpack.c.l.b16 %v27
  %v193 = vunpack.c.h.b16 %v27
  %v194 = vunpack.c.l.b16 %v28
  %v195 = vunpack.c.h.b16 %v28
  %v196 = vunpack.c.l.b16 %v29
  %v197 = vunpack.c.l.b16 %v30
  %v198 = vunpack.c.h.b16 %v30
  %v199 = vunpack.c.l.b16 %v31
  %v200 = vunpack.c.h.b16 %v31
  %v201 = vunpack.c.l.b16 %v32
  %v202 = vunpack.c.l.b16 %v33
  %v203 = vunpack.c.h.b16 %v33
  %v204 = vunpack.c.l.b16 %v34
  %v205 = vunpack.c.h.b16 %v34
  %v206 = vunpack.c.l.b16 %v35
  %v207 = vunpack.c.l.b16 %v36
  %v208 = vunpack.c.h.b16 %v36
  %v209 = vunpack.c.l.b16 %v37
  %v210 = vunpack.c.h.b16 %v37
  %v211 = vunpack.c.l.b16 %v38
  %v212 = vunpack.c.l.b16 %v39
  %v213 = vunpack.c.h.b16 %v39
  %v214 = vunpack.c.l.b16 %v40
  %v215 = vunpack.c.h.b16 %v40
  %v216 = vunpack.c.l.b16 %v41
  %v217 = vunpack.c.l.b16 %v42
  %v218 = vunpack.c.h.b16 %v42
  %v219 = vunpack.c.l.b16 %v43
  %v220 = vunpack.c.h.b16 %v43
  %v221 = vunpack.c.l.b16 %v44
  %v222 = vunpack.c.l.b16 %v45
  %v223 = vunpack.c.h.b16 %v45
  %v224 = vunpack.c.l.b16 %v46
  %v225 = vunpack.c.h.b16 %v46
  %v226 = vunpack.c.l.b16 %v47
  %v227 = vunpack.c.l.b16 %v48
  %v228 = vunpack.c.h.b16 %v48
  %v229 = vunpack.c.l.b16 %v49
  %v230 = vunpack.c.h.b16 %v49
  %v231 = vunpack.c.l.b16 %v50
  %v232 = vunpack.c.l.b16 %v51
  %v233 = vunpack.c.h.b16 %v51
  %v234 = vunpack.c.l.b16 %v52
  %v235 = vunpack.c.h.b16 %v52
  %v236 = vunpack.c.l.b16 %v53
  %v237 = vpack.c.b16 %v177, %v172
  %v238 = vpack.c.b16 %v178, %v173
  %v239 = vpack.c.b16 %v179, %v174
  %v240 = vpack.c.b16 %v180, %v175
  %v241 = vpack.c.b16 %v181, %v176
  %v242 = vpack.c.b16 %v187, %v182
  %v243 = vpack.c.b16 %v188, %v183
  %v244 = vpack.c.b16 %v189, %v184
  %v245 = vpack.c.b16 %v190, %v185
  %v246 = vpack.c.b16 %v191, %v186
  %v247 = vpack.c.b16 %v197, %v192
  %v248 = vpack.c.b16 %v198, %v193
  %v249 = vpack.c.b16 %v199, %v194
  %v250 = vpack.c.b16 %v200, %v195
  %v251 = vpack.c.b16 %v201, %v196
  %v252 = vpack.c.b16 %v207, %v202
  %v253 = vpack.c.b16 %v208, %v203
  %v254 = vpack.c.b16 %v209, %v204
  %v255 = vpack.c.b16 %v210, %v205
  %v256 = vpack.c.b16 %v211, %v206
  %v257 = vpack.c.b16 %v217, %v212
  %v258 = vpack.c.b16 %v218, %v213
  %v259 = vpack.c.b16 %v219, %v214
  %v260 = vpack.c.b16 %v220, %v215
  %v261 = vpack.c.b16 %v221, %v216
  %v262 = vpack.c.b16 %v227, %v222
  %v263 = vpack.c.b16 %v228, %v223
  %v264 = vpack.c.b16 %v229, %v224
  %v265 = vpack.c.b16 %v230, %v225
  %v266 = vpack.c.b16 %v231, %v226
  %v267 = vpack.c.b16 %v232, %v232
  %v268 = vpack.c.b16 %v233, %v233
  %v269 = vpack.c.b16 %v234, %v234
  %v270 = vpack.c.b16 %v235, %v235
  %v271 = vpack.c.b16 %v236, %v236
  %v372 = vunpack.c.l.b16 %v54
  %v373 = vunpack.c.l.b16 %v55
  %v374 = vunpack.c.l.b16 %v56
  %v375 = vunpack.c.l.b16 %v57
  %v376 = vunpack.c.l.b16 %v58
  %v377 = vunpack.c.l.b16 %v59
  %v378 = vunpack.c.l.b16 %v60
  %v379 = vunpack.c.l.b16 %v61
  %v380 = vunpack.c.l.b16 %v62
  %v381 = vunpack.c.l.b16 %v63
  %v382 = vunpack.c.l.b16 %v64
  %v383 = vunpack.c.l.b16 %v65
  %v384 = vunpack.c.l.b16 %v66
  %v385 = vunpack.c.l.b16 %v67
  %v386 = vunpack.c.l.b16 %v68
  %v387 = vunpack.c.l.b16 %v69
  %v388 = vunpack.c.l.b16 %v70
  %v389 = vunpack.c.l.b16 %v71
  %v390 = vunpack.c.l.b16 %v72
  %v391 = vunpack.c.l.b16 %v73
  %v392 = vunpack.c.l.b16 %v74
  %v393 = vunpack.c.l.b16 %v75
  %v394 = vunpack.c.l.b16 %v76
  %v395 = vunpack.c.l.b16 %v77
  %v396 = vunpack.c.l.b16 %v78
  %v397 = vunpack.c.l.b16 %v79
  %v398 = vunpack.c.l.b16 %v80
  %v399 = vunpack.c.l.b16 %v81
  %v400 = vunpack.c.l.b16 %v82
  %v401 = vunpack.c.l.b16 %v83
  %v402 = vunpack.c.l.b16 %v84
  %v403 = vunpack.c.l.b16 %v85
  %v404 = vunpack.c.l.b16 %v86
  %v405 = vunpack.c.l.b16 %v87
  %v406 = vunpack.c.l.b16 %v88
  %v407 = vunpack.c.l.b16 %v89
  %v408 = vunpack.c.l.b16 %v90
  %v409 = vunpack.c.l.b16 %v91
  %v410 = vunpack.c.l.b16 %v92
  %v411 = vunpack.c.l.b16 %v93
  %v412 = vunpack.c.l.b16 %v94
  %v413 = vunpack.c.l.b16 %v95
  %v414 = vunpack.c.l.b16 %v96
  %v415 = vunpack.c.l.b16 %v97
  %v416 = vunpack.c.l.b16 %v98
  %v417 = vunpack.c.l.b16 %v99
  %v418 = vunpack.c.l.b16 %v100
  %v419 = vunpack.c.l.b16 %v101
  %v420 = vunpack.c.l.b16 %v102
  %v421 = vunpack.c.l.b16 %v103
  %v422 = vunpack.c.l.b16 %v104
  %v423 = vunpack.c.l.b16 %v105
  %v424 = vunpack.c.l.b16 %v106
  %v425 = vunpack.c.l.b16 %v107
  %v426 = vunpack.c.l.b16 %v108
  %v427 = vunpack.c.l.b16 %v109
  %v428 = vunpack.c.l.b16 %v110
  %v429 = vunpack.c.l.b16 %v111
  %v430 = vunpack.c.l.b16 %v112
  %v431 = vunpack.c.l.b16 %v113
  %v432 = vunpack.c.l.b16 %v114
  %v433 = vunpack.c.l.b16 %v115
  %v434 = vunpack.c.l.b16 %v116
  %v435 = vunpack.c.l.b16 %v117
  %v436 = vunpack.c.l.b16 %v118
  %v437 = vunpack.c.l.b16 %v119
  %v438 = vunpack.c.l.b16 %v120
  %v439 = vunpack.c.l.b16 %v121
  %v440 = vunpack.c.l.b16 %v122
  %v441 = vunpack.c.l.b16 %v123
  %v442 = vunpack.c.l.b16 %v124
  %v443 = vunpack.c.l.b16 %v125
  %v444 = vpack.c.b16 %v373, %v372
  %v445 = vpack.c.b16 %v375, %v374
  %v446 = vpack.c.b16 %v377, %v376
  %v447 = vpack.c.b16 %v379, %v378
  %v448 = vpack.c.b16 %v381, %v380
  %v449 = vpack.c.b16 %v383, %v382
  %v450 = vpack.c.b16 %v385, %v384
  %v451 = vpack.c.b16 %v387, %v386
  %v452 = vpack.c.b16 %v389, %v388
  %v453 = vpack.c.b16 %v391, %v390
  %v454 = vpack.c.b16 %v393, %v392
  %v455 = vpack.c.b16 %v395, %v394
  %v456 = vpack.c.b16 %v397, %v396
  %v457 = vpack.c.b16 %v399, %v398
  %v458 = vpack.c.b16 %v401, %v400
  %v459 = vpack.c.b16 %v403, %v402
  %v460 = vpack.c.b16 %v405, %v404
  %v461 = vpack.c.b16 %v407, %v406
  %v462 = vpack.c.b16 %v409, %v408
  %v463 = vpack.c.b16 %v411, %v410
  %v464 = vpack.c.b16 %v413, %v412
  %v465 = vpack.c.b16 %v415, %v414
  %v466 = vpack.c.b16 %v417, %v416
  %v467 = vpack.c.b16 %v419, %v418
  %v468 = vpack.c.b16 %v421, %v420
  %v469 = vpack.c.b16 %v423, %v422
  %v470 = vpack.c.b16 %v425, %v424
  %v471 = vpack.c.b16 %v427, %v426
  %v472 = vpack.c.b16 %v429, %v428
  %v473 = vpack.c.b16 %v431, %v430
  %v474 = vpack.c.b16 %v433, %v432
  %v475 = vpack.c.b16 %v435, %v434
  %v476 = vpack.c.b16 %v437, %v436
  %v477 = vpack.c.b16 %v439, %v438
  %v478 = vpack.c.b16 %v441, %v440
  %v479 = vpack.c.b16 %v443, %v442
  %vm516 = vcmask 523264
  %v518 = vsel %vm516, %v241, 0
  %v521 = vsel %vm516, %v246, 0
  %v524 = vsel %vm516, %v251, 0
  %v527 = vsel %vm516, %v256, 0
  %v530 = vsel %vm516, %v261, 0
  %v533 = vsel %vm516, %v266, 0
  %v536 = vsel %vm516, %v271, 0
  %538 = vmatprep.subr.bf16.mxu0 0
  %539 = vmatpush1.bf16.msra.mxu0 %v451
  %540 = vmatprep.subr.bf16.mxu0 0
  %541 = vmatpush1.bf16.msra.mxu0 %v450
  %542 = vmatprep.subr.bf16.mxu0 0
  %543 = vmatpush1.bf16.msra.mxu0 %v449
  %544 = vmatprep.subr.bf16.mxu0 0
  %545 = vmatpush1.bf16.msra.mxu0 %v448
  %546 = vmatprep.subr.bf16.mxu0 0
  %547 = vmatpush1.bf16.msra.mxu0 %v447
  %548 = vmatprep.subr.bf16.mxu0 0
  %549 = vmatpush1.bf16.msra.mxu0 %v446
  %550 = vmatprep.subr.bf16.mxu0 0
  %551 = vmatpush1.bf16.msra.mxu0 %v445
  %552 = vmatprep.subr.bf16.mxu0 0
  %553 = vmatpush1.bf16.msra.mxu0 %v444
  %554 = vmatprep.subr.bf16.mxu0 0
  %555 = vmatpush2.bf16.msra.mxu0 %v459
  %556 = vmatprep.subr.bf16.mxu0 0
  %557 = vmatpush2.bf16.msra.mxu0 %v458
  %558 = vmatprep.subr.bf16.mxu0 0
  %559 = vmatpush2.bf16.msra.mxu0 %v457
  %560 = vmatprep.subr.bf16.mxu0 0
  %561 = vmatpush2.bf16.msra.mxu0 %v456
  %562 = vmatprep.subr.bf16.mxu0 0
  %563 = vmatpush2.bf16.msra.mxu0 %v455
  %564 = vmatprep.subr.bf16.mxu0 0
  %565 = vmatpush2.bf16.msra.mxu0 %v454
  %566 = vmatprep.subr.bf16.mxu0 0
  %567 = vmatpush2.bf16.msra.mxu0 %v453
  %568 = vmatprep.subr.bf16.mxu0 0
  %569 = vmatpush2.bf16.msra.mxu0 %v452
  %570 = vmatprep.mubr.bf16.mxu0 %v238
  %571 = vmatmul.mubr.bf16.gmra.mxu0 %v237
  %v572 = vpop.f32.mrf.mxu0
  %v573 = vadd.f32 %v131, %v572
  %v574 = vpop.f32.mrf.mxu0
  %v575 = vpop.f32.mrf.mxu0
  %v576 = vadd.f32 %v131, %v575
  %v577 = vpop.f32.mrf.mxu0
  %578 = vmatprep.mubr.bf16.mxu0 %v243
  %579 = vmatmul.mubr.bf16.gmra.mxu0 %v242
  %v580 = vpop.f32.mrf.mxu0
  %v581 = vadd.f32 %v131, %v580
  %v582 = vpop.f32.mrf.mxu0
  %v583 = vpop.f32.mrf.mxu0
  %v584 = vadd.f32 %v131, %v583
  %v585 = vpop.f32.mrf.mxu0
  %586 = vmatprep.mubr.bf16.mxu0 %v248
  %587 = vmatmul.mubr.bf16.gmra.mxu0 %v247
  %v588 = vpop.f32.mrf.mxu0
  %v589 = vadd.f32 %v131, %v588
  %v590 = vpop.f32.mrf.mxu0
  %v591 = vpop.f32.mrf.mxu0
  %v592 = vadd.f32 %v131, %v591
  %v593 = vpop.f32.mrf.mxu0
  %594 = vmatprep.mubr.bf16.mxu0 %v253
  %595 = vmatmul.mubr.bf16.gmra.mxu0 %v252
  %v596 = vpop.f32.mrf.mxu0
  %v597 = vadd.f32 %v131, %v596
  %v598 = vpop.f32.mrf.mxu0
  %v599 = vpop.f32.mrf.mxu0
  %v600 = vadd.f32 %v131, %v599
  %v601 = vpop.f32.mrf.mxu0
  %602 = vmatprep.mubr.bf16.mxu0 %v258
  %603 = vmatmul.mubr.bf16.gmra.mxu0 %v257
  %v604 = vpop.f32.mrf.mxu0
  %v605 = vadd.f32 %v131, %v604
  %v606 = vpop.f32.mrf.mxu0
  %v607 = vpop.f32.mrf.mxu0
  %v608 = vadd.f32 %v131, %v607
  %v609 = vpop.f32.mrf.mxu0
  %610 = vmatprep.mubr.bf16.mxu0 %v263
  %611 = vmatmul.mubr.bf16.gmra.mxu0 %v262
  %v612 = vpop.f32.mrf.mxu0
  %v613 = vadd.f32 %v131, %v612
  %v614 = vpop.f32.mrf.mxu0
  %v615 = vpop.f32.mrf.mxu0
  %v616 = vadd.f32 %v131, %v615
  %v617 = vpop.f32.mrf.mxu0
  %618 = vmatprep.mubr.bf16.mxu0 %v268
  %619 = vmatmul.mubr.bf16.gmra.mxu0 %v267
  %v620 = vpop.f32.mrf.mxu0
  %v621 = vadd.f32 %v131, %v620
  %v622 = vpop.f32.mrf.mxu0
  %v623 = vpop.f32.mrf.mxu0
  %v624 = vpop.f32.mrf.mxu0
  %625 = vdwg.mxu0
  %626 = vmatprep.subr.bf16.mxu0 0
  %627 = vmatpush1.bf16.msra.mxu0 %v467
  %628 = vmatprep.subr.bf16.mxu0 0
  %629 = vmatpush1.bf16.msra.mxu0 %v466
  %630 = vmatprep.subr.bf16.mxu0 0
  %631 = vmatpush1.bf16.msra.mxu0 %v465
  %632 = vmatprep.subr.bf16.mxu0 0
  %633 = vmatpush1.bf16.msra.mxu0 %v464
  %634 = vmatprep.subr.bf16.mxu0 0
  %635 = vmatpush1.bf16.msra.mxu0 %v463
  %636 = vmatprep.subr.bf16.mxu0 0
  %637 = vmatpush1.bf16.msra.mxu0 %v462
  %638 = vmatprep.subr.bf16.mxu0 0
  %639 = vmatpush1.bf16.msra.mxu0 %v461
  %640 = vmatprep.subr.bf16.mxu0 0
  %641 = vmatpush1.bf16.msra.mxu0 %v460
  %642 = vmatprep.subr.bf16.mxu0 0
  %643 = vmatpush2.bf16.msra.mxu0 %v475
  %644 = vmatprep.subr.bf16.mxu0 0
  %645 = vmatpush2.bf16.msra.mxu0 %v474
  %646 = vmatprep.subr.bf16.mxu0 0
  %647 = vmatpush2.bf16.msra.mxu0 %v473
  %648 = vmatprep.subr.bf16.mxu0 0
  %649 = vmatpush2.bf16.msra.mxu0 %v472
  %650 = vmatprep.subr.bf16.mxu0 0
  %651 = vmatpush2.bf16.msra.mxu0 %v471
  %652 = vmatprep.subr.bf16.mxu0 0
  %653 = vmatpush2.bf16.msra.mxu0 %v470
  %654 = vmatprep.subr.bf16.mxu0 0
  %655 = vmatpush2.bf16.msra.mxu0 %v469
  %656 = vmatprep.subr.bf16.mxu0 0
  %657 = vmatpush2.bf16.msra.mxu0 %v468
  %658 = vmatprep.mubr.bf16.mxu0 %v240
  %659 = vmatmul.mubr.bf16.gmra.mxu0 %v239
  %v660 = vpop.f32.mrf.mxu0
  %v661 = vadd.f32 %v573, %v660
  %v662 = vpop.f32.mrf.mxu0
  %v663 = vpop.f32.mrf.mxu0
  %v664 = vadd.f32 %v576, %v663
  %v665 = vpop.f32.mrf.mxu0
  %666 = vmatprep.mubr.bf16.mxu0 %v245
  %667 = vmatmul.mubr.bf16.gmra.mxu0 %v244
  %v668 = vpop.f32.mrf.mxu0
  %v669 = vadd.f32 %v581, %v668
  %v670 = vpop.f32.mrf.mxu0
  %v671 = vpop.f32.mrf.mxu0
  %v672 = vadd.f32 %v584, %v671
  %v673 = vpop.f32.mrf.mxu0
  %674 = vmatprep.mubr.bf16.mxu0 %v250
  %675 = vmatmul.mubr.bf16.gmra.mxu0 %v249
  %v676 = vpop.f32.mrf.mxu0
  %v677 = vadd.f32 %v589, %v676
  %v678 = vpop.f32.mrf.mxu0
  %v679 = vpop.f32.mrf.mxu0
  %v680 = vadd.f32 %v592, %v679
  %v681 = vpop.f32.mrf.mxu0
  %682 = vmatprep.mubr.bf16.mxu0 %v255
  %683 = vmatmul.mubr.bf16.gmra.mxu0 %v254
  %v684 = vpop.f32.mrf.mxu0
  %v685 = vadd.f32 %v597, %v684
  %v686 = vpop.f32.mrf.mxu0
  %v687 = vpop.f32.mrf.mxu0
  %v688 = vadd.f32 %v600, %v687
  %v689 = vpop.f32.mrf.mxu0
  %690 = vmatprep.mubr.bf16.mxu0 %v260
  %691 = vmatmul.mubr.bf16.gmra.mxu0 %v259
  %v692 = vpop.f32.mrf.mxu0
  %v693 = vadd.f32 %v605, %v692
  %v694 = vpop.f32.mrf.mxu0
  %v695 = vpop.f32.mrf.mxu0
  %v696 = vadd.f32 %v608, %v695
  %v697 = vpop.f32.mrf.mxu0
  %698 = vmatprep.mubr.bf16.mxu0 %v265
  %699 = vmatmul.mubr.bf16.gmra.mxu0 %v264
  %v700 = vpop.f32.mrf.mxu0
  %v701 = vadd.f32 %v613, %v700
  %v702 = vpop.f32.mrf.mxu0
  %v703 = vpop.f32.mrf.mxu0
  %v704 = vadd.f32 %v616, %v703
  %v705 = vpop.f32.mrf.mxu0
  %706 = vmatprep.mubr.bf16.mxu0 %v270
  %707 = vmatmul.mubr.bf16.gmra.mxu0 %v269
  %v708 = vpop.f32.mrf.mxu0
  %v709 = vadd.f32 %v621, %v708
  %v710 = vpop.f32.mrf.mxu0
  %v711 = vpop.f32.mrf.mxu0
  %v712 = vpop.f32.mrf.mxu0
  %713 = vdwg.mxu0
  %714 = vmatprep.subr.bf16.mxu0 0
  %715 = vmatpush1.bf16.msra.mxu0 0
  %716 = vmatprep.subr.bf16.mxu0 0
  %717 = vmatpush1.bf16.msra.mxu0 0
  %718 = vmatprep.subr.bf16.mxu0 0
  %719 = vmatpush1.bf16.msra.mxu0 0
  %720 = vmatprep.subr.bf16.mxu0 0
  %721 = vmatpush1.bf16.msra.mxu0 0
  %722 = vmatprep.subr.bf16.mxu0 0
  %723 = vmatpush1.bf16.msra.mxu0 %v479
  %724 = vmatprep.subr.bf16.mxu0 0
  %725 = vmatpush1.bf16.msra.mxu0 %v478
  %726 = vmatprep.subr.bf16.mxu0 0
  %727 = vmatpush1.bf16.msra.mxu0 %v477
  %728 = vmatprep.subr.bf16.mxu0 0
  %729 = vmatpush1.bf16.msra.mxu0 %v476
  %730 = vmatprep.subr.bf16.mxu0 0
  %731 = vmatpush2.bf16.msra.mxu0 0
  %732 = vmatprep.subr.bf16.mxu0 0
  %733 = vmatpush2.bf16.msra.mxu0 0
  %734 = vmatprep.subr.bf16.mxu0 0
  %735 = vmatpush2.bf16.msra.mxu0 0
  %736 = vmatprep.subr.bf16.mxu0 0
  %737 = vmatpush2.bf16.msra.mxu0 0
  %738 = vmatprep.subr.bf16.mxu0 0
  %739 = vmatpush2.bf16.msra.mxu0 0
  %740 = vmatprep.subr.bf16.mxu0 0
  %741 = vmatpush2.bf16.msra.mxu0 0
  %742 = vmatprep.subr.bf16.mxu0 0
  %743 = vmatpush2.bf16.msra.mxu0 0
  %744 = vmatprep.subr.bf16.mxu0 0
  %745 = vmatpush2.bf16.msra.mxu0 0
  %746 = vmatprep.mubr.bf16.mxu0 0
  %747 = vmatmul.mubr.bf16.gmra.mxu0 %v518
  %v748 = vpop.f32.mrf.mxu0
  %v749 = vadd.f32 %v661, %v748
  %v750 = vpop.f32.mrf.mxu0
  %v751 = vpop.f32.mrf.mxu0
  %v752 = vadd.f32 %v664, %v751
  %v753 = vpop.f32.mrf.mxu0
  %754 = vmatprep.mubr.bf16.mxu0 0
  %755 = vmatmul.mubr.bf16.gmra.mxu0 %v521
  %v756 = vpop.f32.mrf.mxu0
  %v757 = vadd.f32 %v669, %v756
  %v758 = vpop.f32.mrf.mxu0
  %v759 = vpop.f32.mrf.mxu0
  %v760 = vadd.f32 %v672, %v759
  %v761 = vpop.f32.mrf.mxu0
  %762 = vmatprep.mubr.bf16.mxu0 0
  %763 = vmatmul.mubr.bf16.gmra.mxu0 %v524
  %v764 = vpop.f32.mrf.mxu0
  %v765 = vadd.f32 %v677, %v764
  %v766 = vpop.f32.mrf.mxu0
  %v767 = vpop.f32.mrf.mxu0
  %v768 = vadd.f32 %v680, %v767
  %v769 = vpop.f32.mrf.mxu0
  %770 = vmatprep.mubr.bf16.mxu0 0
  %771 = vmatmul.mubr.bf16.gmra.mxu0 %v527
  %v772 = vpop.f32.mrf.mxu0
  %v773 = vadd.f32 %v685, %v772
  %v774 = vpop.f32.mrf.mxu0
  %v775 = vpop.f32.mrf.mxu0
  %v776 = vadd.f32 %v688, %v775
  %v777 = vpop.f32.mrf.mxu0
  %778 = vmatprep.mubr.bf16.mxu0 0
  %779 = vmatmul.mubr.bf16.gmra.mxu0 %v530
  %v780 = vpop.f32.mrf.mxu0
  %v781 = vadd.f32 %v693, %v780
  %v782 = vpop.f32.mrf.mxu0
  %v783 = vpop.f32.mrf.mxu0
  %v784 = vadd.f32 %v696, %v783
  %v785 = vpop.f32.mrf.mxu0
  %786 = vmatprep.mubr.bf16.mxu0 0
  %787 = vmatmul.mubr.bf16.gmra.mxu0 %v533
  %v788 = vpop.f32.mrf.mxu0
  %v789 = vadd.f32 %v701, %v788
  %v790 = vpop.f32.mrf.mxu0
  %v791 = vpop.f32.mrf.mxu0
  %v792 = vadd.f32 %v704, %v791
  %v793 = vpop.f32.mrf.mxu0
  %794 = vmatprep.mubr.bf16.mxu0 0
  %795 = vmatmul.mubr.bf16.gmra.mxu0 %v536
  %v796 = vpop.f32.mrf.mxu0
  %v797 = vadd.f32 %v709, %v796
  %v798 = vpop.f32.mrf.mxu0
  %v799 = vpop.f32.mrf.mxu0
  %v800 = vpop.f32.mrf.mxu0
  %801 = vdwg.mxu0
  %v802 = vmax.f32 %v749, 0.0
  %v803 = vmax.f32 %v752, 0.0
  %v804 = vmax.f32 %v757, 0.0
  %v805 = vmax.f32 %v760, 0.0
  %v806 = vmax.f32 %v765, 0.0
  %v807 = vmax.f32 %v768, 0.0
  %v808 = vmax.f32 %v773, 0.0
  %v809 = vmax.f32 %v776, 0.0
  %v810 = vmax.f32 %v781, 0.0
  %v811 = vmax.f32 %v784, 0.0
  %v812 = vmax.f32 %v789, 0.0
  %v813 = vmax.f32 %v792, 0.0
  %v814 = vmax.f32 %v797, 0.0
  %v815 = vpack.c.bf16 %v803, %v802
  %v816 = vpack.c.bf16 %v805, %v804
  %v817 = vpack.c.bf16 %v807, %v806
  %v818 = vpack.c.bf16 %v809, %v808
  %v819 = vpack.c.bf16 %v811, %v810
  %v820 = vpack.c.bf16 %v813, %v812
  %v821 = vpack.c.bf16 %v814, %v814
  %v829 = vunpack.c.l.b16 %v815
  %v830 = vunpack.c.h.b16 %v815
  %v831 = vunpack.c.l.b16 %v816
  %v832 = vunpack.c.h.b16 %v816
  %v833 = vunpack.c.l.b16 %v817
  %v834 = vunpack.c.h.b16 %v817
  %v835 = vunpack.c.l.b16 %v818
  %v836 = vunpack.c.h.b16 %v818
  %v837 = vunpack.c.l.b16 %v819
  %v838 = vunpack.c.h.b16 %v819
  %v839 = vunpack.c.l.b16 %v820
  %v840 = vunpack.c.h.b16 %v820
  %v841 = vunpack.c.l.b16 %v821
  %v842 = vpack.c.b16 %v829, %v829
  %v843 = vpack.c.b16 %v830, %v830
  %v844 = vpack.c.b16 %v831, %v831
  %v845 = vpack.c.b16 %v832, %v832
  %v846 = vpack.c.b16 %v833, %v833
  %v847 = vpack.c.b16 %v834, %v834
  %v848 = vpack.c.b16 %v835, %v835
  %v849 = vpack.c.b16 %v836, %v836
  %v850 = vpack.c.b16 %v837, %v837
  %v851 = vpack.c.b16 %v838, %v838
  %v852 = vpack.c.b16 %v839, %v839
  %v853 = vpack.c.b16 %v840, %v840
  %v854 = vpack.c.b16 %v841, %v841
  %868 = vst [vmem:[%s3] sm:$0xf] %v842
  %869 = vst [vmem:[%s3 + $0x4] sm:$0xf] %v843
  %870 = vst [vmem:[%s3 + $0x8] sm:$0xf] %v844
  %871 = vst [vmem:[%s3 + $0xc] sm:$0xf] %v845
  %872 = vst [vmem:[%s3 + $0x10] sm:$0xf] %v846
  %873 = vst [vmem:[%s3 + $0x14] sm:$0xf] %v847
  %874 = vst [vmem:[%s3 + $0x18] sm:$0xf] %v848
  %875 = vst [vmem:[%s3 + $0x1c] sm:$0xf] %v849
  %876 = vst [vmem:[%s3 + $0x20] sm:$0xf] %v850
  %877 = vst [vmem:[%s3 + $0x24] sm:$0xf] %v851
  %878 = vst [vmem:[%s3 + $0x28] sm:$0xf] %v852
  %879 = vst [vmem:[%s3 + $0x2c] sm:$0xf] %v853
  %880 = vst [vmem:[%s3 + $0x30] sm:$0x1] %v854
  // Predicated region
  $region14: #{ddqn_forward.6} parent=0 // pred_check
    _
  $region15: #{ddqn_forward.6} parent=0 // pred_check_branch
    %882 = sbr.rel (0) target = $region17
  $region16: #{ddqn_forward.6} parent=0 // pred_region
    _
  $region17: #{ddqn_forward.6} parent=0 // pred_fallthru
    _
  // Predicated region
  $region18: #{ddqn_forward.6} parent=0 // pred_check
    _
  $region19: #{ddqn_forward.6} parent=0 // pred_check_branch
    %884 = sbr.rel (0) target = $region21
  $region20: #{ddqn_forward.6} parent=0 // pred_region
    _
  $region21: #{ddqn_forward.6} parent=0 // pred_fallthru
    _

// kernel: ddqn_forward.7
$region0: #{ddqn_forward.7}
  #allocation0 [shape = 'u32[]', space=smem, size = 0x4, offset = 0x4, fixed_abs, tag = 'smem constant byte address 0x4 - core index']
  #allocation1 [shape = 'u32[144,128]{1,0:T(1,128)}', space=vmem, size = 0x12000, scoped, tag = 'internal scratch']
  %s0 = inlined_call_operand.vmem [shape: bf16[2,3136], index: 0, kind: input, shape index: {}]
  %s1 = inlined_call_operand.vmem [shape: bf16[3136,512], index: 1, kind: input, shape index: {}]
  %s2 = inlined_call_operand.vmem [shape: f32[1,512], index: 2, kind: input, shape index: {}]
  %s3 = inlined_call_operand.vmem [shape: bf16[512,256], index: 3, kind: input, shape index: {}]
  %s4 = inlined_call_operand.vmem [shape: f32[1,256], index: 4, kind: input, shape index: {}]
  %s5 = inlined_call_operand.vmem [shape: bf16[256,128], index: 5, kind: input, shape index: {}]
  %s6 = inlined_call_operand.vmem [shape: f32[1,128], index: 6, kind: input, shape index: {}]
  %s7 = inlined_call_operand.hbm [shape: f32[2,128], index: 7, kind: output, shape index: {}]
  %s8 = sld [smem:[#allocation0]]
  $region38: #{ddqn_forward.7} parent=0
    _
  %s10 = ssub.s32 1, %s8
  %s11 = scalar_select 0, %s10, %s8
  $region1: #{ddqn_forward.7} parent=0
    #allocation2 [shape = 'u8[1024]{0}', space=vmem, size = 0x400, scoped, tag = 'output window, operand 0, single buffered']
    #allocation3 [shape = 's32[1]{0}', space=sflag, size = 0x4, scoped, tag = 'scoped memory for ddqn_forward.7']
    %12 = vsyncpa [#allocation3], 0
    // Predicated region
    $region2: #{ddqn_forward.7} parent=1 // pred_check
      _
    $region3: #{ddqn_forward.7} parent=1 // pred_check_branch
      %14 = sbr.rel (0) target = $region5
    $region4: #{ddqn_forward.7} parent=1 // pred_region
      _
    $region5: #{ddqn_forward.7} parent=1 // pred_fallthru
      _
    // Predicated region
    $region6: #{ddqn_forward.7} parent=1 // pred_check
      _
    $region7: #{ddqn_forward.7} parent=1 // pred_check_branch
      %16 = sbr.rel (0) target = $region9
    $region8: #{ddqn_forward.7} parent=1 // pred_region
      _
    $region9: #{ddqn_forward.7} parent=1 // pred_fallthru
      _
    // Predicated region
    $region10: #{ddqn_forward.7} parent=1 // pred_check
      _
    $region11: #{ddqn_forward.7} parent=1 // pred_check_branch
      %18 = sbr.rel (0) target = $region13
    $region12: #{ddqn_forward.7} parent=1 // pred_region
      _
    $region13: #{ddqn_forward.7} parent=1 // pred_fallthru
      _
    // Predicated region
    $region14: #{ddqn_forward.7} parent=1 // pred_check
      _
    $region15: #{ddqn_forward.7} parent=1 // pred_check_branch
      %20 = sbr.rel (0) target = $region17
    $region16: #{ddqn_forward.7} parent=1 // pred_region
      _
    $region17: #{ddqn_forward.7} parent=1 // pred_fallthru
      _
    // Predicated region
    $region18: #{ddqn_forward.7} parent=1 // pred_check
      _
    $region19: #{ddqn_forward.7} parent=1 // pred_check_branch
      %22 = sbr.rel (0) target = $region21
    $region20: #{ddqn_forward.7} parent=1 // pred_region
      _
    $region21: #{ddqn_forward.7} parent=1 // pred_fallthru
      _
    // Predicated region
    $region22: #{ddqn_forward.7} parent=1 // pred_check
      _
    $region23: #{ddqn_forward.7} parent=1 // pred_check_branch
      %24 = sbr.rel (0) target = $region25
    $region24: #{ddqn_forward.7} parent=1 // pred_region
      _
    $region25: #{ddqn_forward.7} parent=1 // pred_fallthru
      _
    // Predicated region
    $region26: #{ddqn_forward.7} parent=1 // pred_check
      _
    $region27: #{ddqn_forward.7} parent=1 // pred_check_branch
      %26 = sbr.rel (0) target = $region29
    $region28: #{ddqn_forward.7} parent=1 // pred_region
      _
    $region29: #{ddqn_forward.7} parent=1 // pred_fallthru
      _
    %v28 = vld [vmem:[%s0] sm:$0xff]
    %v29 = vld [vmem:[%s0 + $0x8] sm:$0xff]
    %v30 = vld [vmem:[%s0 + $0x10] sm:$0xff]
    %v31 = vld [vmem:[%s0 + $0x18] sm:$0x1]
    %v32 = vld [vmem:[%s1] sm:$0xff]
    %v33 = vld [vmem:[%s1 + $0x8] sm:$0xff]
    %v34 = vld [vmem:[%s1 + $0x10] sm:$0xff]
    %v35 = vld [vmem:[%s1 + $0x18] sm:$0xff]
    %v36 = vld [vmem:[%s1 + $0x20] sm:$0xff]
    %v37 = vld [vmem:[%s1 + $0x28] sm:$0xff]
    %v38 = vld [vmem:[%s1 + $0x30] sm:$0xff]
    %v39 = vld [vmem:[%s1 + $0x38] sm:$0xff]
    %v40 = vld [vmem:[%s1 + $0x40] sm:$0xff]
    %v41 = vld [vmem:[%s1 + $0x48] sm:$0xff]
    %v42 = vld [vmem:[%s1 + $0x50] sm:$0xff]
    %v43 = vld [vmem:[%s1 + $0x58] sm:$0xff]
    %v44 = vld [vmem:[%s1 + $0x60] sm:$0xff]
    %v45 = vld [vmem:[%s1 + $0x68] sm:$0xff]
    %v46 = vld [vmem:[%s1 + $0x70] sm:$0xff]
    %v47 = vld [vmem:[%s1 + $0x78] sm:$0xff]
    %v48 = vld [vmem:[%s1 + $0x80] sm:$0xff]
    %v49 = vld [vmem:[%s1 + $0x88] sm:$0xff]
    %v50 = vld [vmem:[%s1 + $0x90] sm:$0xff]
    %v51 = vld [vmem:[%s1 + $0x98] sm:$0xff]
    %v52 = vld [vmem:[%s1 + $0xa0] sm:$0xff]
    %v53 = vld [vmem:[%s1 + $0xa8] sm:$0xff]
    %v54 = vld [vmem:[%s1 + $0xb0] sm:$0xff]
    %v55 = vld [vmem:[%s1 + $0xb8] sm:$0xff]
    %v56 = vld [vmem:[%s1 + $0xc0] sm:$0xff]
    %v57 = vld [vmem:[%s1 + $0xc8] sm:$0xff]
    %v58 = vld [vmem:[%s1 + $0xd0] sm:$0xff]
    %v59 = vld [vmem:[%s1 + $0xd8] sm:$0xff]
    %v60 = vld [vmem:[%s1 + $0xe0] sm:$0xff]
    %v61 = vld [vmem:[%s1 + $0xe8] sm:$0xff]
    %v62 = vld [vmem:[%s1 + $0xf0] sm:$0xff]
    %v63 = vld [vmem:[%s1 + $0xf8] sm:$0xff]
    %v64 = vld [vmem:[%s1 + $0x100] sm:$0xff]
    %v65 = vld [vmem:[%s1 + $0x108] sm:$0xff]
    %v66 = vld [vmem:[%s1 + $0x110] sm:$0xff]
    %v67 = vld [vmem:[%s1 + $0x118] sm:$0xff]
    %v68 = vld [vmem:[%s1 + $0x120] sm:$0xff]
    %v69 = vld [vmem:[%s1 + $0x128] sm:$0xff]
    %v70 = vld [vmem:[%s1 + $0x130] sm:$0xff]
    %v71 = vld [vmem:[%s1 + $0x138] sm:$0xff]
    %v72 = vld [vmem:[%s1 + $0x140] sm:$0xff]
    %v73 = vld [vmem:[%s1 + $0x148] sm:$0xff]
    %v74 = vld [vmem:[%s1 + $0x150] sm:$0xff]
    %v75 = vld [vmem:[%s1 + $0x158] sm:$0xff]
    %v76 = vld [vmem:[%s1 + $0x160] sm:$0xff]
    %v77 = vld [vmem:[%s1 + $0x168] sm:$0xff]
    %v78 = vld [vmem:[%s1 + $0x170] sm:$0xff]
    %v79 = vld [vmem:[%s1 + $0x178] sm:$0xff]
    %v80 = vld [vmem:[%s1 + $0x180] sm:$0xff]
    %v81 = vld [vmem:[%s1 + $0x188] sm:$0xff]
    %v82 = vld [vmem:[%s1 + $0x190] sm:$0xff]
    %v83 = vld [vmem:[%s1 + $0x198] sm:$0xff]
    %v84 = vld [vmem:[%s1 + $0x1a0] sm:$0xff]
    %v85 = vld [vmem:[%s1 + $0x1a8] sm:$0xff]
    %v86 = vld [vmem:[%s1 + $0x1b0] sm:$0xff]
    %v87 = vld [vmem:[%s1 + $0x1b8] sm:$0xff]
    %v88 = vld [vmem:[%s1 + $0x1c0] sm:$0xff]
    %v89 = vld [vmem:[%s1 + $0x1c8] sm:$0xff]
    %v90 = vld [vmem:[%s1 + $0x1d0] sm:$0xff]
    %v91 = vld [vmem:[%s1 + $0x1d8] sm:$0xff]
    %v92 = vld [vmem:[%s1 + $0x1e0] sm:$0xff]
    %v93 = vld [vmem:[%s1 + $0x1e8] sm:$0xff]
    %v94 = vld [vmem:[%s1 + $0x1f0] sm:$0xff]
    %v95 = vld [vmem:[%s1 + $0x1f8] sm:$0xff]
    %v96 = vld [vmem:[%s1 + $0x200] sm:$0xff]
    %v97 = vld [vmem:[%s1 + $0x208] sm:$0xff]
    %v98 = vld [vmem:[%s1 + $0x210] sm:$0xff]
    %v99 = vld [vmem:[%s1 + $0x218] sm:$0xff]
    %v100 = vld [vmem:[%s1 + $0x220] sm:$0xff]
    %v101 = vld [vmem:[%s1 + $0x228] sm:$0xff]
    %v102 = vld [vmem:[%s1 + $0x230] sm:$0xff]
    %v103 = vld [vmem:[%s1 + $0x238] sm:$0xff]
    %v104 = vld [vmem:[%s1 + $0x240] sm:$0xff]
    %v105 = vld [vmem:[%s1 + $0x248] sm:$0xff]
    %v106 = vld [vmem:[%s1 + $0x250] sm:$0xff]
    %v107 = vld [vmem:[%s1 + $0x258] sm:$0xff]
    %v108 = vld [vmem:[%s1 + $0x260] sm:$0xff]
    %v109 = vld [vmem:[%s1 + $0x268] sm:$0xff]
    %v110 = vld [vmem:[%s1 + $0x270] sm:$0xff]
    %v111 = vld [vmem:[%s1 + $0x278] sm:$0xff]
    %v112 = vld [vmem:[%s1 + $0x280] sm:$0xff]
    %v113 = vld [vmem:[%s1 + $0x288] sm:$0xff]
    %v114 = vld [vmem:[%s1 + $0x290] sm:$0xff]
    %v115 = vld [vmem:[%s1 + $0x298] sm:$0xff]
    %v116 = vld [vmem:[%s1 + $0x2a0] sm:$0xff]
    %v117 = vld [vmem:[%s1 + $0x2a8] sm:$0xff]
    %v118 = vld [vmem:[%s1 + $0x2b0] sm:$0xff]
    %v119 = vld [vmem:[%s1 + $0x2b8] sm:$0xff]
    %v120 = vld [vmem:[%s1 + $0x2c0] sm:$0xff]
    %v121 = vld [vmem:[%s1 + $0x2c8] sm:$0xff]
    %v122 = vld [vmem:[%s1 + $0x2d0] sm:$0xff]
    %v123 = vld [vmem:[%s1 + $0x2d8] sm:$0xff]
    %v124 = vld [vmem:[%s1 + $0x2e0] sm:$0xff]
    %v125 = vld [vmem:[%s1 + $0x2e8] sm:$0xff]
    %v126 = vld [vmem:[%s1 + $0x2f0] sm:$0xff]
    %v127 = vld [vmem:[%s1 + $0x2f8] sm:$0xff]
    %v128 = vld [vmem:[%s1 + $0x300] sm:$0xff]
    %v129 = vld [vmem:[%s1 + $0x308] sm:$0xff]
    %v130 = vld [vmem:[%s1 + $0x310] sm:$0xff]
    %v131 = vld [vmem:[%s1 + $0x318] sm:$0xff]
    %v132 = vld [vmem:[%s1 + $0x320] sm:$0xff]
    %v133 = vld [vmem:[%s1 + $0x328] sm:$0xff]
    %v134 = vld [vmem:[%s1 + $0x330] sm:$0xff]
    %v135 = vld [vmem:[%s1 + $0x338] sm:$0xff]
    %v136 = vld [vmem:[%s1 + $0x340] sm:$0xff]
    %v137 = vld [vmem:[%s1 + $0x348] sm:$0xff]
    %v138 = vld [vmem:[%s1 + $0x350] sm:$0xff]
    %v139 = vld [vmem:[%s1 + $0x358] sm:$0xff]
    %v140 = vld [vmem:[%s1 + $0x360] sm:$0xff]
    %v141 = vld [vmem:[%s1 + $0x368] sm:$0xff]
    %v142 = vld [vmem:[%s1 + $0x370] sm:$0xff]
    %v143 = vld [vmem:[%s1 + $0x378] sm:$0xff]
    %v144 = vld [vmem:[%s1 + $0x380] sm:$0xff]
    %v145 = vld [vmem:[%s1 + $0x388] sm:$0xff]
    %v146 = vld [vmem:[%s1 + $0x390] sm:$0xff]
    %v147 = vld [vmem:[%s1 + $0x398] sm:$0xff]
    %v148 = vld [vmem:[%s1 + $0x3a0] sm:$0xff]
    %v149 = vld [vmem:[%s1 + $0x3a8] sm:$0xff]
    %v150 = vld [vmem:[%s1 + $0x3b0] sm:$0xff]
    %v151 = vld [vmem:[%s1 + $0x3b8] sm:$0xff]
    %v152 = vld [vmem:[%s1 + $0x3c0] sm:$0xff]
    %v153 = vld [vmem:[%s1 + $0x3c8] sm:$0xff]
    %v154 = vld [vmem:[%s1 + $0x3d0] sm:$0xff]
    %v155 = vld [vmem:[%s1 + $0x3d8] sm:$0xff]
    %v156 = vld [vmem:[%s1 + $0x3e0] sm:$0xff]
    %v157 = vld [vmem:[%s1 + $0x3e8] sm:$0xff]
    %v158 = vld [vmem:[%s1 + $0x3f0] sm:$0xff]
    %v159 = vld [vmem:[%s1 + $0x3f8] sm:$0xff]
    %v160 = vld [vmem:[%s1 + $0x400] sm:$0xff]
    %v161 = vld [vmem:[%s1 + $0x408] sm:$0xff]
    %v162 = vld [vmem:[%s1 + $0x410] sm:$0xff]
    %v163 = vld [vmem:[%s1 + $0x418] sm:$0xff]
    %v164 = vld [vmem:[%s1 + $0x420] sm:$0xff]
    %v165 = vld [vmem:[%s1 + $0x428] sm:$0xff]
    %v166 = vld [vmem:[%s1 + $0x430] sm:$0xff]
    %v167 = vld [vmem:[%s1 + $0x438] sm:$0xff]
    %v168 = vld [vmem:[%s1 + $0x440] sm:$0xff]
    %v169 = vld [vmem:[%s1 + $0x448] sm:$0xff]
    %v170 = vld [vmem:[%s1 + $0x450] sm:$0xff]
    %v171 = vld [vmem:[%s1 + $0x458] sm:$0xff]
    %v172 = vld [vmem:[%s1 + $0x460] sm:$0xff]
    %v173 = vld [vmem:[%s1 + $0x468] sm:$0xff]
    %v174 = vld [vmem:[%s1 + $0x470] sm:$0xff]
    %v175 = vld [vmem:[%s1 + $0x478] sm:$0xff]
    %v176 = vld [vmem:[%s1 + $0x480] sm:$0xff]
    %v177 = vld [vmem:[%s1 + $0x488] sm:$0xff]
    %v178 = vld [vmem:[%s1 + $0x490] sm:$0xff]
    %v179 = vld [vmem:[%s1 + $0x498] sm:$0xff]
    %v180 = vld [vmem:[%s1 + $0x4a0] sm:$0xff]
    %v181 = vld [vmem:[%s1 + $0x4a8] sm:$0xff]
    %v182 = vld [vmem:[%s1 + $0x4b0] sm:$0xff]
    %v183 = vld [vmem:[%s1 + $0x4b8] sm:$0xff]
    %v184 = vld [vmem:[%s1 + $0x4c0] sm:$0xff]
    %v185 = vld [vmem:[%s1 + $0x4c8] sm:$0xff]
    %v186 = vld [vmem:[%s1 + $0x4d0] sm:$0xff]
    %v187 = vld [vmem:[%s1 + $0x4d8] sm:$0xff]
    %v188 = vld [vmem:[%s1 + $0x4e0] sm:$0xff]
    %v189 = vld [vmem:[%s1 + $0x4e8] sm:$0xff]
    %v190 = vld [vmem:[%s1 + $0x4f0] sm:$0xff]
    %v191 = vld [vmem:[%s1 + $0x4f8] sm:$0xff]
    %v192 = vld [vmem:[%s1 + $0x500] sm:$0xff]
    %v193 = vld [vmem:[%s1 + $0x508] sm:$0xff]
    %v194 = vld [vmem:[%s1 + $0x510] sm:$0xff]
    %v195 = vld [vmem:[%s1 + $0x518] sm:$0xff]
    %v196 = vld [vmem:[%s1 + $0x520] sm:$0xff]
    %v197 = vld [vmem:[%s1 + $0x528] sm:$0xff]
    %v198 = vld [vmem:[%s1 + $0x530] sm:$0xff]
    %v199 = vld [vmem:[%s1 + $0x538] sm:$0xff]
    %v200 = vld [vmem:[%s1 + $0x540] sm:$0xff]
    %v201 = vld [vmem:[%s1 + $0x548] sm:$0xff]
    %v202 = vld [vmem:[%s1 + $0x550] sm:$0xff]
    %v203 = vld [vmem:[%s1 + $0x558] sm:$0xff]
    %v204 = vld [vmem:[%s1 + $0x560] sm:$0xff]
    %v205 = vld [vmem:[%s1 + $0x568] sm:$0xff]
    %v206 = vld [vmem:[%s1 + $0x570] sm:$0xff]
    %v207 = vld [vmem:[%s1 + $0x578] sm:$0xff]
    %v208 = vld [vmem:[%s1 + $0x580] sm:$0xff]
    %v209 = vld [vmem:[%s1 + $0x588] sm:$0xff]
    %v210 = vld [vmem:[%s1 + $0x590] sm:$0xff]
    %v211 = vld [vmem:[%s1 + $0x598] sm:$0xff]
    %v212 = vld [vmem:[%s1 + $0x5a0] sm:$0xff]
    %v213 = vld [vmem:[%s1 + $0x5a8] sm:$0xff]
    %v214 = vld [vmem:[%s1 + $0x5b0] sm:$0xff]
    %v215 = vld [vmem:[%s1 + $0x5b8] sm:$0xff]
    %v216 = vld [vmem:[%s1 + $0x5c0] sm:$0xff]
    %v217 = vld [vmem:[%s1 + $0x5c8] sm:$0xff]
    %v218 = vld [vmem:[%s1 + $0x5d0] sm:$0xff]
    %v219 = vld [vmem:[%s1 + $0x5d8] sm:$0xff]
    %v220 = vld [vmem:[%s1 + $0x5e0] sm:$0xff]
    %v221 = vld [vmem:[%s1 + $0x5e8] sm:$0xff]
    %v222 = vld [vmem:[%s1 + $0x5f0] sm:$0xff]
    %v223 = vld [vmem:[%s1 + $0x5f8] sm:$0xff]
    %v224 = vld [vmem:[%s1 + $0x600] sm:$0xff]
    %v225 = vld [vmem:[%s1 + $0x608] sm:$0xff]
    %v226 = vld [vmem:[%s1 + $0x610] sm:$0xff]
    %v227 = vld [vmem:[%s1 + $0x618] sm:$0xff]
    %v228 = vld [vmem:[%s1 + $0x620] sm:$0xff]
    %v229 = vld [vmem:[%s1 + $0x628] sm:$0xff]
    %v230 = vld [vmem:[%s1 + $0x630] sm:$0xff]
    %v231 = vld [vmem:[%s1 + $0x638] sm:$0xff]
    %v232 = vld [vmem:[%s1 + $0x640] sm:$0xff]
    %v233 = vld [vmem:[%s1 + $0x648] sm:$0xff]
    %v234 = vld [vmem:[%s1 + $0x650] sm:$0xff]
    %v235 = vld [vmem:[%s1 + $0x658] sm:$0xff]
    %v236 = vld [vmem:[%s1 + $0x660] sm:$0xff]
    %v237 = vld [vmem:[%s1 + $0x668] sm:$0xff]
    %v238 = vld [vmem:[%s1 + $0x670] sm:$0xff]
    %v239 = vld [vmem:[%s1 + $0x678] sm:$0xff]
    %v240 = vld [vmem:[%s1 + $0x680] sm:$0xff]
    %v241 = vld [vmem:[%s1 + $0x688] sm:$0xff]
    %v242 = vld [vmem:[%s1 + $0x690] sm:$0xff]
    %v243 = vld [vmem:[%s1 + $0x698] sm:$0xff]
    %v244 = vld [vmem:[%s1 + $0x6a0] sm:$0xff]
    %v245 = vld [vmem:[%s1 + $0x6a8] sm:$0xff]
    %v246 = vld [vmem:[%s1 + $0x6b0] sm:$0xff]
    %v247 = vld [vmem:[%s1 + $0x6b8] sm:$0xff]
    %v248 = vld [vmem:[%s1 + $0x6c0] sm:$0xff]
    %v249 = vld [vmem:[%s1 + $0x6c8] sm:$0xff]
    %v250 = vld [vmem:[%s1 + $0x6d0] sm:$0xff]
    %v251 = vld [vmem:[%s1 + $0x6d8] sm:$0xff]
    %v252 = vld [vmem:[%s1 + $0x6e0] sm:$0xff]
    %v253 = vld [vmem:[%s1 + $0x6e8] sm:$0xff]
    %v254 = vld [vmem:[%s1 + $0x6f0] sm:$0xff]
    %v255 = vld [vmem:[%s1 + $0x6f8] sm:$0xff]
    %v256 = vld [vmem:[%s1 + $0x700] sm:$0xff]
    %v257 = vld [vmem:[%s1 + $0x708] sm:$0xff]
    %v258 = vld [vmem:[%s1 + $0x710] sm:$0xff]
    %v259 = vld [vmem:[%s1 + $0x718] sm:$0xff]
    %v260 = vld [vmem:[%s1 + $0x720] sm:$0xff]
    %v261 = vld [vmem:[%s1 + $0x728] sm:$0xff]
    %v262 = vld [vmem:[%s1 + $0x730] sm:$0xff]
    %v263 = vld [vmem:[%s1 + $0x738] sm:$0xff]
    %v264 = vld [vmem:[%s1 + $0x740] sm:$0xff]
    %v265 = vld [vmem:[%s1 + $0x748] sm:$0xff]
    %v266 = vld [vmem:[%s1 + $0x750] sm:$0xff]
    %v267 = vld [vmem:[%s1 + $0x758] sm:$0xff]
    %v268 = vld [vmem:[%s1 + $0x760] sm:$0xff]
    %v269 = vld [vmem:[%s1 + $0x768] sm:$0xff]
    %v270 = vld [vmem:[%s1 + $0x770] sm:$0xff]
    %v271 = vld [vmem:[%s1 + $0x778] sm:$0xff]
    %v272 = vld [vmem:[%s1 + $0x780] sm:$0xff]
    %v273 = vld [vmem:[%s1 + $0x788] sm:$0xff]
    %v274 = vld [vmem:[%s1 + $0x790] sm:$0xff]
    %v275 = vld [vmem:[%s1 + $0x798] sm:$0xff]
    %v276 = vld [vmem:[%s1 + $0x7a0] sm:$0xff]
    %v277 = vld [vmem:[%s1 + $0x7a8] sm:$0xff]
    %v278 = vld [vmem:[%s1 + $0x7b0] sm:$0xff]
    %v279 = vld [vmem:[%s1 + $0x7b8] sm:$0xff]
    %v280 = vld [vmem:[%s1 + $0x7c0] sm:$0xff]
    %v281 = vld [vmem:[%s1 + $0x7c8] sm:$0xff]
    %v282 = vld [vmem:[%s1 + $0x7d0] sm:$0xff]
    %v283 = vld [vmem:[%s1 + $0x7d8] sm:$0xff]
    %v284 = vld [vmem:[%s1 + $0x7e0] sm:$0xff]
    %v285 = vld [vmem:[%s1 + $0x7e8] sm:$0xff]
    %v286 = vld [vmem:[%s1 + $0x7f0] sm:$0xff]
    %v287 = vld [vmem:[%s1 + $0x7f8] sm:$0xff]
    %v288 = vld [vmem:[%s1 + $0x800] sm:$0xff]
    %v289 = vld [vmem:[%s1 + $0x808] sm:$0xff]
    %v290 = vld [vmem:[%s1 + $0x810] sm:$0xff]
    %v291 = vld [vmem:[%s1 + $0x818] sm:$0xff]
    %v292 = vld [vmem:[%s1 + $0x820] sm:$0xff]
    %v293 = vld [vmem:[%s1 + $0x828] sm:$0xff]
    %v294 = vld [vmem:[%s1 + $0x830] sm:$0xff]
    %v295 = vld [vmem:[%s1 + $0x838] sm:$0xff]
    %v296 = vld [vmem:[%s1 + $0x840] sm:$0xff]
    %v297 = vld [vmem:[%s1 + $0x848] sm:$0xff]
    %v298 = vld [vmem:[%s1 + $0x850] sm:$0xff]
    %v299 = vld [vmem:[%s1 + $0x858] sm:$0xff]
    %v300 = vld [vmem:[%s1 + $0x860] sm:$0xff]
    %v301 = vld [vmem:[%s1 + $0x868] sm:$0xff]
    %v302 = vld [vmem:[%s1 + $0x870] sm:$0xff]
    %v303 = vld [vmem:[%s1 + $0x878] sm:$0xff]
    %v304 = vld [vmem:[%s1 + $0x880] sm:$0xff]
    %v305 = vld [vmem:[%s1 + $0x888] sm:$0xff]
    %v306 = vld [vmem:[%s1 + $0x890] sm:$0xff]
    %v307 = vld [vmem:[%s1 + $0x898] sm:$0xff]
    %v308 = vld [vmem:[%s1 + $0x8a0] sm:$0xff]
    %v309 = vld [vmem:[%s1 + $0x8a8] sm:$0xff]
    %v310 = vld [vmem:[%s1 + $0x8b0] sm:$0xff]
    %v311 = vld [vmem:[%s1 + $0x8b8] sm:$0xff]
    %v312 = vld [vmem:[%s1 + $0x8c0] sm:$0xff]
    %v313 = vld [vmem:[%s1 + $0x8c8] sm:$0xff]
    %v314 = vld [vmem:[%s1 + $0x8d0] sm:$0xff]
    %v315 = vld [vmem:[%s1 + $0x8d8] sm:$0xff]
    %v316 = vld [vmem:[%s1 + $0x8e0] sm:$0xff]
    %v317 = vld [vmem:[%s1 + $0x8e8] sm:$0xff]
    %v318 = vld [vmem:[%s1 + $0x8f0] sm:$0xff]
    %v319 = vld [vmem:[%s1 + $0x8f8] sm:$0xff]
    %v320 = vld [vmem:[%s1 + $0x900] sm:$0xff]
    %v321 = vld [vmem:[%s1 + $0x908] sm:$0xff]
    %v322 = vld [vmem:[%s1 + $0x910] sm:$0xff]
    %v323 = vld [vmem:[%s1 + $0x918] sm:$0xff]
    %v324 = vld [vmem:[%s1 + $0x920] sm:$0xff]
    %v325 = vld [vmem:[%s1 + $0x928] sm:$0xff]
    %v326 = vld [vmem:[%s1 + $0x930] sm:$0xff]
    %v327 = vld [vmem:[%s1 + $0x938] sm:$0xff]
    %v328 = vld [vmem:[%s1 + $0x940] sm:$0xff]
    %v329 = vld [vmem:[%s1 + $0x948] sm:$0xff]
    %v330 = vld [vmem:[%s1 + $0x950] sm:$0xff]
    %v331 = vld [vmem:[%s1 + $0x958] sm:$0xff]
    %v332 = vld [vmem:[%s1 + $0x960] sm:$0xff]
    %v333 = vld [vmem:[%s1 + $0x968] sm:$0xff]
    %v334 = vld [vmem:[%s1 + $0x970] sm:$0xff]
    %v335 = vld [vmem:[%s1 + $0x978] sm:$0xff]
    %v336 = vld [vmem:[%s1 + $0x980] sm:$0xff]
    %v337 = vld [vmem:[%s1 + $0x988] sm:$0xff]
    %v338 = vld [vmem:[%s1 + $0x990] sm:$0xff]
    %v339 = vld [vmem:[%s1 + $0x998] sm:$0xff]
    %v340 = vld [vmem:[%s1 + $0x9a0] sm:$0xff]
    %v341 = vld [vmem:[%s1 + $0x9a8] sm:$0xff]
    %v342 = vld [vmem:[%s1 + $0x9b0] sm:$0xff]
    %v343 = vld [vmem:[%s1 + $0x9b8] sm:$0xff]
    %v344 = vld [vmem:[%s1 + $0x9c0] sm:$0xff]
    %v345 = vld [vmem:[%s1 + $0x9c8] sm:$0xff]
    %v346 = vld [vmem:[%s1 + $0x9d0] sm:$0xff]
    %v347 = vld [vmem:[%s1 + $0x9d8] sm:$0xff]
    %v348 = vld [vmem:[%s1 + $0x9e0] sm:$0xff]
    %v349 = vld [vmem:[%s1 + $0x9e8] sm:$0xff]
    %v350 = vld [vmem:[%s1 + $0x9f0] sm:$0xff]
    %v351 = vld [vmem:[%s1 + $0x9f8] sm:$0xff]
    %v352 = vld [vmem:[%s1 + $0xa00] sm:$0xff]
    %v353 = vld [vmem:[%s1 + $0xa08] sm:$0xff]
    %v354 = vld [vmem:[%s1 + $0xa10] sm:$0xff]
    %v355 = vld [vmem:[%s1 + $0xa18] sm:$0xff]
    %v356 = vld [vmem:[%s1 + $0xa20] sm:$0xff]
    %v357 = vld [vmem:[%s1 + $0xa28] sm:$0xff]
    %v358 = vld [vmem:[%s1 + $0xa30] sm:$0xff]
    %v359 = vld [vmem:[%s1 + $0xa38] sm:$0xff]
    %v360 = vld [vmem:[%s1 + $0xa40] sm:$0xff]
    %v361 = vld [vmem:[%s1 + $0xa48] sm:$0xff]
    %v362 = vld [vmem:[%s1 + $0xa50] sm:$0xff]
    %v363 = vld [vmem:[%s1 + $0xa58] sm:$0xff]
    %v364 = vld [vmem:[%s1 + $0xa60] sm:$0xff]
    %v365 = vld [vmem:[%s1 + $0xa68] sm:$0xff]
    %v366 = vld [vmem:[%s1 + $0xa70] sm:$0xff]
    %v367 = vld [vmem:[%s1 + $0xa78] sm:$0xff]
    %v368 = vld [vmem:[%s1 + $0xa80] sm:$0xff]
    %v369 = vld [vmem:[%s1 + $0xa88] sm:$0xff]
    %v370 = vld [vmem:[%s1 + $0xa90] sm:$0xff]
    %v371 = vld [vmem:[%s1 + $0xa98] sm:$0xff]
    %v372 = vld [vmem:[%s1 + $0xaa0] sm:$0xff]
    %v373 = vld [vmem:[%s1 + $0xaa8] sm:$0xff]
    %v374 = vld [vmem:[%s1 + $0xab0] sm:$0xff]
    %v375 = vld [vmem:[%s1 + $0xab8] sm:$0xff]
    %v376 = vld [vmem:[%s1 + $0xac0] sm:$0xff]
    %v377 = vld [vmem:[%s1 + $0xac8] sm:$0xff]
    %v378 = vld [vmem:[%s1 + $0xad0] sm:$0xff]
    %v379 = vld [vmem:[%s1 + $0xad8] sm:$0xff]
    %v380 = vld [vmem:[%s1 + $0xae0] sm:$0xff]
    %v381 = vld [vmem:[%s1 + $0xae8] sm:$0xff]
    %v382 = vld [vmem:[%s1 + $0xaf0] sm:$0xff]
    %v383 = vld [vmem:[%s1 + $0xaf8] sm:$0xff]
    %v384 = vld [vmem:[%s1 + $0xb00] sm:$0xff]
    %v385 = vld [vmem:[%s1 + $0xb08] sm:$0xff]
    %v386 = vld [vmem:[%s1 + $0xb10] sm:$0xff]
    %v387 = vld [vmem:[%s1 + $0xb18] sm:$0xff]
    %v388 = vld [vmem:[%s1 + $0xb20] sm:$0xff]
    %v389 = vld [vmem:[%s1 + $0xb28] sm:$0xff]
    %v390 = vld [vmem:[%s1 + $0xb30] sm:$0xff]
    %v391 = vld [vmem:[%s1 + $0xb38] sm:$0xff]
    %v392 = vld [vmem:[%s1 + $0xb40] sm:$0xff]
    %v393 = vld [vmem:[%s1 + $0xb48] sm:$0xff]
    %v394 = vld [vmem:[%s1 + $0xb50] sm:$0xff]
    %v395 = vld [vmem:[%s1 + $0xb58] sm:$0xff]
    %v396 = vld [vmem:[%s1 + $0xb60] sm:$0xff]
    %v397 = vld [vmem:[%s1 + $0xb68] sm:$0xff]
    %v398 = vld [vmem:[%s1 + $0xb70] sm:$0xff]
    %v399 = vld [vmem:[%s1 + $0xb78] sm:$0xff]
    %v400 = vld [vmem:[%s1 + $0xb80] sm:$0xff]
    %v401 = vld [vmem:[%s1 + $0xb88] sm:$0xff]
    %v402 = vld [vmem:[%s1 + $0xb90] sm:$0xff]
    %v403 = vld [vmem:[%s1 + $0xb98] sm:$0xff]
    %v404 = vld [vmem:[%s1 + $0xba0] sm:$0xff]
    %v405 = vld [vmem:[%s1 + $0xba8] sm:$0xff]
    %v406 = vld [vmem:[%s1 + $0xbb0] sm:$0xff]
    %v407 = vld [vmem:[%s1 + $0xbb8] sm:$0xff]
    %v408 = vld [vmem:[%s1 + $0xbc0] sm:$0xff]
    %v409 = vld [vmem:[%s1 + $0xbc8] sm:$0xff]
    %v410 = vld [vmem:[%s1 + $0xbd0] sm:$0xff]
    %v411 = vld [vmem:[%s1 + $0xbd8] sm:$0xff]
    %v412 = vld [vmem:[%s1 + $0xbe0] sm:$0xff]
    %v413 = vld [vmem:[%s1 + $0xbe8] sm:$0xff]
    %v414 = vld [vmem:[%s1 + $0xbf0] sm:$0xff]
    %v415 = vld [vmem:[%s1 + $0xbf8] sm:$0xff]
    %v416 = vld [vmem:[%s1 + $0xc00] sm:$0xff]
    %v417 = vld [vmem:[%s1 + $0xc08] sm:$0xff]
    %v418 = vld [vmem:[%s1 + $0xc10] sm:$0xff]
    %v419 = vld [vmem:[%s1 + $0xc18] sm:$0xff]
    %v420 = vld [vmem:[%s1 + $0xc20] sm:$0xff]
    %v421 = vld [vmem:[%s1 + $0xc28] sm:$0xff]
    %v422 = vld [vmem:[%s1 + $0xc30] sm:$0xff]
    %v423 = vld [vmem:[%s1 + $0xc38] sm:$0xff]
    %v424 = vld [vmem:[%s1 + $0xc40] sm:$0xff]
    %v425 = vld [vmem:[%s1 + $0xc48] sm:$0xff]
    %v426 = vld [vmem:[%s1 + $0xc50] sm:$0xff]
    %v427 = vld [vmem:[%s1 + $0xc58] sm:$0xff]
    %v428 = vld [vmem:[%s1 + $0xc60] sm:$0xff]
    %v429 = vld [vmem:[%s1 + $0xc68] sm:$0xff]
    %v430 = vld [vmem:[%s1 + $0xc70] sm:$0xff]
    %v431 = vld [vmem:[%s1 + $0xc78] sm:$0xff]
    %v432 = vld [vmem:[%s1 + $0xc80] sm:$0xff]
    %v433 = vld [vmem:[%s1 + $0xc88] sm:$0xff]
    %v434 = vld [vmem:[%s1 + $0xc90] sm:$0xff]
    %v435 = vld [vmem:[%s1 + $0xc98] sm:$0xff]
    %v436 = vld [vmem:[%s1 + $0xca0] sm:$0xff]
    %v437 = vld [vmem:[%s1 + $0xca8] sm:$0xff]
    %v438 = vld [vmem:[%s1 + $0xcb0] sm:$0xff]
    %v439 = vld [vmem:[%s1 + $0xcb8] sm:$0xff]
    %v440 = vld [vmem:[%s1 + $0xcc0] sm:$0xff]
    %v441 = vld [vmem:[%s1 + $0xcc8] sm:$0xff]
    %v442 = vld [vmem:[%s1 + $0xcd0] sm:$0xff]
    %v443 = vld [vmem:[%s1 + $0xcd8] sm:$0xff]
    %v444 = vld [vmem:[%s1 + $0xce0] sm:$0xff]
    %v445 = vld [vmem:[%s1 + $0xce8] sm:$0xff]
    %v446 = vld [vmem:[%s1 + $0xcf0] sm:$0xff]
    %v447 = vld [vmem:[%s1 + $0xcf8] sm:$0xff]
    %v448 = vld [vmem:[%s1 + $0xd00] sm:$0xff]
    %v449 = vld [vmem:[%s1 + $0xd08] sm:$0xff]
    %v450 = vld [vmem:[%s1 + $0xd10] sm:$0xff]
    %v451 = vld [vmem:[%s1 + $0xd18] sm:$0xff]
    %v452 = vld [vmem:[%s1 + $0xd20] sm:$0xff]
    %v453 = vld [vmem:[%s1 + $0xd28] sm:$0xff]
    %v454 = vld [vmem:[%s1 + $0xd30] sm:$0xff]
    %v455 = vld [vmem:[%s1 + $0xd38] sm:$0xff]
    %v456 = vld [vmem:[%s1 + $0xd40] sm:$0xff]
    %v457 = vld [vmem:[%s1 + $0xd48] sm:$0xff]
    %v458 = vld [vmem:[%s1 + $0xd50] sm:$0xff]
    %v459 = vld [vmem:[%s1 + $0xd58] sm:$0xff]
    %v460 = vld [vmem:[%s1 + $0xd60] sm:$0xff]
    %v461 = vld [vmem:[%s1 + $0xd68] sm:$0xff]
    %v462 = vld [vmem:[%s1 + $0xd70] sm:$0xff]
    %v463 = vld [vmem:[%s1 + $0xd78] sm:$0xff]
    %v464 = vld [vmem:[%s1 + $0xd80] sm:$0xff]
    %v465 = vld [vmem:[%s1 + $0xd88] sm:$0xff]
    %v466 = vld [vmem:[%s1 + $0xd90] sm:$0xff]
    %v467 = vld [vmem:[%s1 + $0xd98] sm:$0xff]
    %v468 = vld [vmem:[%s1 + $0xda0] sm:$0xff]
    %v469 = vld [vmem:[%s1 + $0xda8] sm:$0xff]
    %v470 = vld [vmem:[%s1 + $0xdb0] sm:$0xff]
    %v471 = vld [vmem:[%s1 + $0xdb8] sm:$0xff]
    %v472 = vld [vmem:[%s1 + $0xdc0] sm:$0xff]
    %v473 = vld [vmem:[%s1 + $0xdc8] sm:$0xff]
    %v474 = vld [vmem:[%s1 + $0xdd0] sm:$0xff]
    %v475 = vld [vmem:[%s1 + $0xdd8] sm:$0xff]
    %v476 = vld [vmem:[%s1 + $0xde0] sm:$0xff]
    %v477 = vld [vmem:[%s1 + $0xde8] sm:$0xff]
    %v478 = vld [vmem:[%s1 + $0xdf0] sm:$0xff]
    %v479 = vld [vmem:[%s1 + $0xdf8] sm:$0xff]
    %v480 = vld [vmem:[%s1 + $0xe00] sm:$0xff]
    %v481 = vld [vmem:[%s1 + $0xe08] sm:$0xff]
    %v482 = vld [vmem:[%s1 + $0xe10] sm:$0xff]
    %v483 = vld [vmem:[%s1 + $0xe18] sm:$0xff]
    %v484 = vld [vmem:[%s1 + $0xe20] sm:$0xff]
    %v485 = vld [vmem:[%s1 + $0xe28] sm:$0xff]
    %v486 = vld [vmem:[%s1 + $0xe30] sm:$0xff]
    %v487 = vld [vmem:[%s1 + $0xe38] sm:$0xff]
    %v488 = vld [vmem:[%s1 + $0xe40] sm:$0xff]
    %v489 = vld [vmem:[%s1 + $0xe48] sm:$0xff]
    %v490 = vld [vmem:[%s1 + $0xe50] sm:$0xff]
    %v491 = vld [vmem:[%s1 + $0xe58] sm:$0xff]
    %v492 = vld [vmem:[%s1 + $0xe60] sm:$0xff]
    %v493 = vld [vmem:[%s1 + $0xe68] sm:$0xff]
    %v494 = vld [vmem:[%s1 + $0xe70] sm:$0xff]
    %v495 = vld [vmem:[%s1 + $0xe78] sm:$0xff]
    %v496 = vld [vmem:[%s1 + $0xe80] sm:$0xff]
    %v497 = vld [vmem:[%s1 + $0xe88] sm:$0xff]
    %v498 = vld [vmem:[%s1 + $0xe90] sm:$0xff]
    %v499 = vld [vmem:[%s1 + $0xe98] sm:$0xff]
    %v500 = vld [vmem:[%s1 + $0xea0] sm:$0xff]
    %v501 = vld [vmem:[%s1 + $0xea8] sm:$0xff]
    %v502 = vld [vmem:[%s1 + $0xeb0] sm:$0xff]
    %v503 = vld [vmem:[%s1 + $0xeb8] sm:$0xff]
    %v504 = vld [vmem:[%s1 + $0xec0] sm:$0xff]
    %v505 = vld [vmem:[%s1 + $0xec8] sm:$0xff]
    %v506 = vld [vmem:[%s1 + $0xed0] sm:$0xff]
    %v507 = vld [vmem:[%s1 + $0xed8] sm:$0xff]
    %v508 = vld [vmem:[%s1 + $0xee0] sm:$0xff]
    %v509 = vld [vmem:[%s1 + $0xee8] sm:$0xff]
    %v510 = vld [vmem:[%s1 + $0xef0] sm:$0xff]
    %v511 = vld [vmem:[%s1 + $0xef8] sm:$0xff]
    %v512 = vld [vmem:[%s1 + $0xf00] sm:$0xff]
    %v513 = vld [vmem:[%s1 + $0xf08] sm:$0xff]
    %v514 = vld [vmem:[%s1 + $0xf10] sm:$0xff]
    %v515 = vld [vmem:[%s1 + $0xf18] sm:$0xff]
    %v516 = vld [vmem:[%s1 + $0xf20] sm:$0xff]
    %v517 = vld [vmem:[%s1 + $0xf28] sm:$0xff]
    %v518 = vld [vmem:[%s1 + $0xf30] sm:$0xff]
    %v519 = vld [vmem:[%s1 + $0xf38] sm:$0xff]
    %v520 = vld [vmem:[%s1 + $0xf40] sm:$0xff]
    %v521 = vld [vmem:[%s1 + $0xf48] sm:$0xff]
    %v522 = vld [vmem:[%s1 + $0xf50] sm:$0xff]
    %v523 = vld [vmem:[%s1 + $0xf58] sm:$0xff]
    %v524 = vld [vmem:[%s1 + $0xf60] sm:$0xff]
    %v525 = vld [vmem:[%s1 + $0xf68] sm:$0xff]
    %v526 = vld [vmem:[%s1 + $0xf70] sm:$0xff]
    %v527 = vld [vmem:[%s1 + $0xf78] sm:$0xff]
    %v528 = vld [vmem:[%s1 + $0xf80] sm:$0xff]
    %v529 = vld [vmem:[%s1 + $0xf88] sm:$0xff]
    %v530 = vld [vmem:[%s1 + $0xf90] sm:$0xff]
    %v531 = vld [vmem:[%s1 + $0xf98] sm:$0xff]
    %v532 = vld [vmem:[%s1 + $0xfa0] sm:$0xff]
    %v533 = vld [vmem:[%s1 + $0xfa8] sm:$0xff]
    %v534 = vld [vmem:[%s1 + $0xfb0] sm:$0xff]
    %v535 = vld [vmem:[%s1 + $0xfb8] sm:$0xff]
    %v536 = vld [vmem:[%s1 + $0xfc0] sm:$0xff]
    %v537 = vld [vmem:[%s1 + $0xfc8] sm:$0xff]
    %v538 = vld [vmem:[%s1 + $0xfd0] sm:$0xff]
    %v539 = vld [vmem:[%s1 + $0xfd8] sm:$0xff]
    %v540 = vld [vmem:[%s1 + $0xfe0] sm:$0xff]
    %v541 = vld [vmem:[%s1 + $0xfe8] sm:$0xff]
    %v542 = vld [vmem:[%s1 + $0xff0] sm:$0xff]
    %v543 = vld [vmem:[%s1 + $0xff8] sm:$0xff]
    %v544 = vld [vmem:[%s1 + $0x1000] sm:$0xff]
    %v545 = vld [vmem:[%s1 + $0x1008] sm:$0xff]
    %v546 = vld [vmem:[%s1 + $0x1010] sm:$0xff]
    %v547 = vld [vmem:[%s1 + $0x1018] sm:$0xff]
    %v548 = vld [vmem:[%s1 + $0x1020] sm:$0xff]
    %v549 = vld [vmem:[%s1 + $0x1028] sm:$0xff]
    %v550 = vld [vmem:[%s1 + $0x1030] sm:$0xff]
    %v551 = vld [vmem:[%s1 + $0x1038] sm:$0xff]
    %v552 = vld [vmem:[%s1 + $0x1040] sm:$0xff]
    %v553 = vld [vmem:[%s1 + $0x1048] sm:$0xff]
    %v554 = vld [vmem:[%s1 + $0x1050] sm:$0xff]
    %v555 = vld [vmem:[%s1 + $0x1058] sm:$0xff]
    %v556 = vld [vmem:[%s1 + $0x1060] sm:$0xff]
    %v557 = vld [vmem:[%s1 + $0x1068] sm:$0xff]
    %v558 = vld [vmem:[%s1 + $0x1070] sm:$0xff]
    %v559 = vld [vmem:[%s1 + $0x1078] sm:$0xff]
    %v560 = vld [vmem:[%s1 + $0x1080] sm:$0xff]
    %v561 = vld [vmem:[%s1 + $0x1088] sm:$0xff]
    %v562 = vld [vmem:[%s1 + $0x1090] sm:$0xff]
    %v563 = vld [vmem:[%s1 + $0x1098] sm:$0xff]
    %v564 = vld [vmem:[%s1 + $0x10a0] sm:$0xff]
    %v565 = vld [vmem:[%s1 + $0x10a8] sm:$0xff]
    %v566 = vld [vmem:[%s1 + $0x10b0] sm:$0xff]
    %v567 = vld [vmem:[%s1 + $0x10b8] sm:$0xff]
    %v568 = vld [vmem:[%s1 + $0x10c0] sm:$0xff]
    %v569 = vld [vmem:[%s1 + $0x10c8] sm:$0xff]
    %v570 = vld [vmem:[%s1 + $0x10d0] sm:$0xff]
    %v571 = vld [vmem:[%s1 + $0x10d8] sm:$0xff]
    %v572 = vld [vmem:[%s1 + $0x10e0] sm:$0xff]
    %v573 = vld [vmem:[%s1 + $0x10e8] sm:$0xff]
    %v574 = vld [vmem:[%s1 + $0x10f0] sm:$0xff]
    %v575 = vld [vmem:[%s1 + $0x10f8] sm:$0xff]
    %v576 = vld [vmem:[%s1 + $0x1100] sm:$0xff]
    %v577 = vld [vmem:[%s1 + $0x1108] sm:$0xff]
    %v578 = vld [vmem:[%s1 + $0x1110] sm:$0xff]
    %v579 = vld [vmem:[%s1 + $0x1118] sm:$0xff]
    %v580 = vld [vmem:[%s1 + $0x1120] sm:$0xff]
    %v581 = vld [vmem:[%s1 + $0x1128] sm:$0xff]
    %v582 = vld [vmem:[%s1 + $0x1130] sm:$0xff]
    %v583 = vld [vmem:[%s1 + $0x1138] sm:$0xff]
    %v584 = vld [vmem:[%s1 + $0x1140] sm:$0xff]
    %v585 = vld [vmem:[%s1 + $0x1148] sm:$0xff]
    %v586 = vld [vmem:[%s1 + $0x1150] sm:$0xff]
    %v587 = vld [vmem:[%s1 + $0x1158] sm:$0xff]
    %v588 = vld [vmem:[%s1 + $0x1160] sm:$0xff]
    %v589 = vld [vmem:[%s1 + $0x1168] sm:$0xff]
    %v590 = vld [vmem:[%s1 + $0x1170] sm:$0xff]
    %v591 = vld [vmem:[%s1 + $0x1178] sm:$0xff]
    %v592 = vld [vmem:[%s1 + $0x1180] sm:$0xff]
    %v593 = vld [vmem:[%s1 + $0x1188] sm:$0xff]
    %v594 = vld [vmem:[%s1 + $0x1190] sm:$0xff]
    %v595 = vld [vmem:[%s1 + $0x1198] sm:$0xff]
    %v596 = vld [vmem:[%s1 + $0x11a0] sm:$0xff]
    %v597 = vld [vmem:[%s1 + $0x11a8] sm:$0xff]
    %v598 = vld [vmem:[%s1 + $0x11b0] sm:$0xff]
    %v599 = vld [vmem:[%s1 + $0x11b8] sm:$0xff]
    %v600 = vld [vmem:[%s1 + $0x11c0] sm:$0xff]
    %v601 = vld [vmem:[%s1 + $0x11c8] sm:$0xff]
    %v602 = vld [vmem:[%s1 + $0x11d0] sm:$0xff]
    %v603 = vld [vmem:[%s1 + $0x11d8] sm:$0xff]
    %v604 = vld [vmem:[%s1 + $0x11e0] sm:$0xff]
    %v605 = vld [vmem:[%s1 + $0x11e8] sm:$0xff]
    %v606 = vld [vmem:[%s1 + $0x11f0] sm:$0xff]
    %v607 = vld [vmem:[%s1 + $0x11f8] sm:$0xff]
    %v608 = vld [vmem:[%s1 + $0x1200] sm:$0xff]
    %v609 = vld [vmem:[%s1 + $0x1208] sm:$0xff]
    %v610 = vld [vmem:[%s1 + $0x1210] sm:$0xff]
    %v611 = vld [vmem:[%s1 + $0x1218] sm:$0xff]
    %v612 = vld [vmem:[%s1 + $0x1220] sm:$0xff]
    %v613 = vld [vmem:[%s1 + $0x1228] sm:$0xff]
    %v614 = vld [vmem:[%s1 + $0x1230] sm:$0xff]
    %v615 = vld [vmem:[%s1 + $0x1238] sm:$0xff]
    %v616 = vld [vmem:[%s1 + $0x1240] sm:$0xff]
    %v617 = vld [vmem:[%s1 + $0x1248] sm:$0xff]
    %v618 = vld [vmem:[%s1 + $0x1250] sm:$0xff]
    %v619 = vld [vmem:[%s1 + $0x1258] sm:$0xff]
    %v620 = vld [vmem:[%s1 + $0x1260] sm:$0xff]
    %v621 = vld [vmem:[%s1 + $0x1268] sm:$0xff]
    %v622 = vld [vmem:[%s1 + $0x1270] sm:$0xff]
    %v623 = vld [vmem:[%s1 + $0x1278] sm:$0xff]
    %v624 = vld [vmem:[%s1 + $0x1280] sm:$0xff]
    %v625 = vld [vmem:[%s1 + $0x1288] sm:$0xff]
    %v626 = vld [vmem:[%s1 + $0x1290] sm:$0xff]
    %v627 = vld [vmem:[%s1 + $0x1298] sm:$0xff]
    %v628 = vld [vmem:[%s1 + $0x12a0] sm:$0xff]
    %v629 = vld [vmem:[%s1 + $0x12a8] sm:$0xff]
    %v630 = vld [vmem:[%s1 + $0x12b0] sm:$0xff]
    %v631 = vld [vmem:[%s1 + $0x12b8] sm:$0xff]
    %v632 = vld [vmem:[%s1 + $0x12c0] sm:$0xff]
    %v633 = vld [vmem:[%s1 + $0x12c8] sm:$0xff]
    %v634 = vld [vmem:[%s1 + $0x12d0] sm:$0xff]
    %v635 = vld [vmem:[%s1 + $0x12d8] sm:$0xff]
    %v636 = vld [vmem:[%s1 + $0x12e0] sm:$0xff]
    %v637 = vld [vmem:[%s1 + $0x12e8] sm:$0xff]
    %v638 = vld [vmem:[%s1 + $0x12f0] sm:$0xff]
    %v639 = vld [vmem:[%s1 + $0x12f8] sm:$0xff]
    %v640 = vld [vmem:[%s1 + $0x1300] sm:$0xff]
    %v641 = vld [vmem:[%s1 + $0x1308] sm:$0xff]
    %v642 = vld [vmem:[%s1 + $0x1310] sm:$0xff]
    %v643 = vld [vmem:[%s1 + $0x1318] sm:$0xff]
    %v644 = vld [vmem:[%s1 + $0x1320] sm:$0xff]
    %v645 = vld [vmem:[%s1 + $0x1328] sm:$0xff]
    %v646 = vld [vmem:[%s1 + $0x1330] sm:$0xff]
    %v647 = vld [vmem:[%s1 + $0x1338] sm:$0xff]
    %v648 = vld [vmem:[%s1 + $0x1340] sm:$0xff]
    %v649 = vld [vmem:[%s1 + $0x1348] sm:$0xff]
    %v650 = vld [vmem:[%s1 + $0x1350] sm:$0xff]
    %v651 = vld [vmem:[%s1 + $0x1358] sm:$0xff]
    %v652 = vld [vmem:[%s1 + $0x1360] sm:$0xff]
    %v653 = vld [vmem:[%s1 + $0x1368] sm:$0xff]
    %v654 = vld [vmem:[%s1 + $0x1370] sm:$0xff]
    %v655 = vld [vmem:[%s1 + $0x1378] sm:$0xff]
    %v656 = vld [vmem:[%s1 + $0x1380] sm:$0xff]
    %v657 = vld [vmem:[%s1 + $0x1388] sm:$0xff]
    %v658 = vld [vmem:[%s1 + $0x1390] sm:$0xff]
    %v659 = vld [vmem:[%s1 + $0x1398] sm:$0xff]
    %v660 = vld [vmem:[%s1 + $0x13a0] sm:$0xff]
    %v661 = vld [vmem:[%s1 + $0x13a8] sm:$0xff]
    %v662 = vld [vmem:[%s1 + $0x13b0] sm:$0xff]
    %v663 = vld [vmem:[%s1 + $0x13b8] sm:$0xff]
    %v664 = vld [vmem:[%s1 + $0x13c0] sm:$0xff]
    %v665 = vld [vmem:[%s1 + $0x13c8] sm:$0xff]
    %v666 = vld [vmem:[%s1 + $0x13d0] sm:$0xff]
    %v667 = vld [vmem:[%s1 + $0x13d8] sm:$0xff]
    %v668 = vld [vmem:[%s1 + $0x13e0] sm:$0xff]
    %v669 = vld [vmem:[%s1 + $0x13e8] sm:$0xff]
    %v670 = vld [vmem:[%s1 + $0x13f0] sm:$0xff]
    %v671 = vld [vmem:[%s1 + $0x13f8] sm:$0xff]
    %v672 = vld [vmem:[%s1 + $0x1400] sm:$0xff]
    %v673 = vld [vmem:[%s1 + $0x1408] sm:$0xff]
    %v674 = vld [vmem:[%s1 + $0x1410] sm:$0xff]
    %v675 = vld [vmem:[%s1 + $0x1418] sm:$0xff]
    %v676 = vld [vmem:[%s1 + $0x1420] sm:$0xff]
    %v677 = vld [vmem:[%s1 + $0x1428] sm:$0xff]
    %v678 = vld [vmem:[%s1 + $0x1430] sm:$0xff]
    %v679 = vld [vmem:[%s1 + $0x1438] sm:$0xff]
    %v680 = vld [vmem:[%s1 + $0x1440] sm:$0xff]
    %v681 = vld [vmem:[%s1 + $0x1448] sm:$0xff]
    %v682 = vld [vmem:[%s1 + $0x1450] sm:$0xff]
    %v683 = vld [vmem:[%s1 + $0x1458] sm:$0xff]
    %v684 = vld [vmem:[%s1 + $0x1460] sm:$0xff]
    %v685 = vld [vmem:[%s1 + $0x1468] sm:$0xff]
    %v686 = vld [vmem:[%s1 + $0x1470] sm:$0xff]
    %v687 = vld [vmem:[%s1 + $0x1478] sm:$0xff]
    %v688 = vld [vmem:[%s1 + $0x1480] sm:$0xff]
    %v689 = vld [vmem:[%s1 + $0x1488] sm:$0xff]
    %v690 = vld [vmem:[%s1 + $0x1490] sm:$0xff]
    %v691 = vld [vmem:[%s1 + $0x1498] sm:$0xff]
    %v692 = vld [vmem:[%s1 + $0x14a0] sm:$0xff]
    %v693 = vld [vmem:[%s1 + $0x14a8] sm:$0xff]
    %v694 = vld [vmem:[%s1 + $0x14b0] sm:$0xff]
    %v695 = vld [vmem:[%s1 + $0x14b8] sm:$0xff]
    %v696 = vld [vmem:[%s1 + $0x14c0] sm:$0xff]
    %v697 = vld [vmem:[%s1 + $0x14c8] sm:$0xff]
    %v698 = vld [vmem:[%s1 + $0x14d0] sm:$0xff]
    %v699 = vld [vmem:[%s1 + $0x14d8] sm:$0xff]
    %v700 = vld [vmem:[%s1 + $0x14e0] sm:$0xff]
    %v701 = vld [vmem:[%s1 + $0x14e8] sm:$0xff]
    %v702 = vld [vmem:[%s1 + $0x14f0] sm:$0xff]
    %v703 = vld [vmem:[%s1 + $0x14f8] sm:$0xff]
    %v704 = vld [vmem:[%s1 + $0x1500] sm:$0xff]
    %v705 = vld [vmem:[%s1 + $0x1508] sm:$0xff]
    %v706 = vld [vmem:[%s1 + $0x1510] sm:$0xff]
    %v707 = vld [vmem:[%s1 + $0x1518] sm:$0xff]
    %v708 = vld [vmem:[%s1 + $0x1520] sm:$0xff]
    %v709 = vld [vmem:[%s1 + $0x1528] sm:$0xff]
    %v710 = vld [vmem:[%s1 + $0x1530] sm:$0xff]
    %v711 = vld [vmem:[%s1 + $0x1538] sm:$0xff]
    %v712 = vld [vmem:[%s1 + $0x1540] sm:$0xff]
    %v713 = vld [vmem:[%s1 + $0x1548] sm:$0xff]
    %v714 = vld [vmem:[%s1 + $0x1550] sm:$0xff]
    %v715 = vld [vmem:[%s1 + $0x1558] sm:$0xff]
    %v716 = vld [vmem:[%s1 + $0x1560] sm:$0xff]
    %v717 = vld [vmem:[%s1 + $0x1568] sm:$0xff]
    %v718 = vld [vmem:[%s1 + $0x1570] sm:$0xff]
    %v719 = vld [vmem:[%s1 + $0x1578] sm:$0xff]
    %v720 = vld [vmem:[%s1 + $0x1580] sm:$0xff]
    %v721 = vld [vmem:[%s1 + $0x1588] sm:$0xff]
    %v722 = vld [vmem:[%s1 + $0x1590] sm:$0xff]
    %v723 = vld [vmem:[%s1 + $0x1598] sm:$0xff]
    %v724 = vld [vmem:[%s1 + $0x15a0] sm:$0xff]
    %v725 = vld [vmem:[%s1 + $0x15a8] sm:$0xff]
    %v726 = vld [vmem:[%s1 + $0x15b0] sm:$0xff]
    %v727 = vld [vmem:[%s1 + $0x15b8] sm:$0xff]
    %v728 = vld [vmem:[%s1 + $0x15c0] sm:$0xff]
    %v729 = vld [vmem:[%s1 + $0x15c8] sm:$0xff]
    %v730 = vld [vmem:[%s1 + $0x15d0] sm:$0xff]
    %v731 = vld [vmem:[%s1 + $0x15d8] sm:$0xff]
    %v732 = vld [vmem:[%s1 + $0x15e0] sm:$0xff]
    %v733 = vld [vmem:[%s1 + $0x15e8] sm:$0xff]
    %v734 = vld [vmem:[%s1 + $0x15f0] sm:$0xff]
    %v735 = vld [vmem:[%s1 + $0x15f8] sm:$0xff]
    %v736 = vld [vmem:[%s1 + $0x1600] sm:$0xff]
    %v737 = vld [vmem:[%s1 + $0x1608] sm:$0xff]
    %v738 = vld [vmem:[%s1 + $0x1610] sm:$0xff]
    %v739 = vld [vmem:[%s1 + $0x1618] sm:$0xff]
    %v740 = vld [vmem:[%s1 + $0x1620] sm:$0xff]
    %v741 = vld [vmem:[%s1 + $0x1628] sm:$0xff]
    %v742 = vld [vmem:[%s1 + $0x1630] sm:$0xff]
    %v743 = vld [vmem:[%s1 + $0x1638] sm:$0xff]
    %v744 = vld [vmem:[%s1 + $0x1640] sm:$0xff]
    %v745 = vld [vmem:[%s1 + $0x1648] sm:$0xff]
    %v746 = vld [vmem:[%s1 + $0x1650] sm:$0xff]
    %v747 = vld [vmem:[%s1 + $0x1658] sm:$0xff]
    %v748 = vld [vmem:[%s1 + $0x1660] sm:$0xff]
    %v749 = vld [vmem:[%s1 + $0x1668] sm:$0xff]
    %v750 = vld [vmem:[%s1 + $0x1670] sm:$0xff]
    %v751 = vld [vmem:[%s1 + $0x1678] sm:$0xff]
    %v752 = vld [vmem:[%s1 + $0x1680] sm:$0xff]
    %v753 = vld [vmem:[%s1 + $0x1688] sm:$0xff]
    %v754 = vld [vmem:[%s1 + $0x1690] sm:$0xff]
    %v755 = vld [vmem:[%s1 + $0x1698] sm:$0xff]
    %v756 = vld [vmem:[%s1 + $0x16a0] sm:$0xff]
    %v757 = vld [vmem:[%s1 + $0x16a8] sm:$0xff]
    %v758 = vld [vmem:[%s1 + $0x16b0] sm:$0xff]
    %v759 = vld [vmem:[%s1 + $0x16b8] sm:$0xff]
    %v760 = vld [vmem:[%s1 + $0x16c0] sm:$0xff]
    %v761 = vld [vmem:[%s1 + $0x16c8] sm:$0xff]
    %v762 = vld [vmem:[%s1 + $0x16d0] sm:$0xff]
    %v763 = vld [vmem:[%s1 + $0x16d8] sm:$0xff]
    %v764 = vld [vmem:[%s1 + $0x16e0] sm:$0xff]
    %v765 = vld [vmem:[%s1 + $0x16e8] sm:$0xff]
    %v766 = vld [vmem:[%s1 + $0x16f0] sm:$0xff]
    %v767 = vld [vmem:[%s1 + $0x16f8] sm:$0xff]
    %v768 = vld [vmem:[%s1 + $0x1700] sm:$0xff]
    %v769 = vld [vmem:[%s1 + $0x1708] sm:$0xff]
    %v770 = vld [vmem:[%s1 + $0x1710] sm:$0xff]
    %v771 = vld [vmem:[%s1 + $0x1718] sm:$0xff]
    %v772 = vld [vmem:[%s1 + $0x1720] sm:$0xff]
    %v773 = vld [vmem:[%s1 + $0x1728] sm:$0xff]
    %v774 = vld [vmem:[%s1 + $0x1730] sm:$0xff]
    %v775 = vld [vmem:[%s1 + $0x1738] sm:$0xff]
    %v776 = vld [vmem:[%s1 + $0x1740] sm:$0xff]
    %v777 = vld [vmem:[%s1 + $0x1748] sm:$0xff]
    %v778 = vld [vmem:[%s1 + $0x1750] sm:$0xff]
    %v779 = vld [vmem:[%s1 + $0x1758] sm:$0xff]
    %v780 = vld [vmem:[%s1 + $0x1760] sm:$0xff]
    %v781 = vld [vmem:[%s1 + $0x1768] sm:$0xff]
    %v782 = vld [vmem:[%s1 + $0x1770] sm:$0xff]
    %v783 = vld [vmem:[%s1 + $0x1778] sm:$0xff]
    %v784 = vld [vmem:[%s1 + $0x1780] sm:$0xff]
    %v785 = vld [vmem:[%s1 + $0x1788] sm:$0xff]
    %v786 = vld [vmem:[%s1 + $0x1790] sm:$0xff]
    %v787 = vld [vmem:[%s1 + $0x1798] sm:$0xff]
    %v788 = vld [vmem:[%s1 + $0x17a0] sm:$0xff]
    %v789 = vld [vmem:[%s1 + $0x17a8] sm:$0xff]
    %v790 = vld [vmem:[%s1 + $0x17b0] sm:$0xff]
    %v791 = vld [vmem:[%s1 + $0x17b8] sm:$0xff]
    %v792 = vld [vmem:[%s1 + $0x17c0] sm:$0xff]
    %v793 = vld [vmem:[%s1 + $0x17c8] sm:$0xff]
    %v794 = vld [vmem:[%s1 + $0x17d0] sm:$0xff]
    %v795 = vld [vmem:[%s1 + $0x17d8] sm:$0xff]
    %v796 = vld [vmem:[%s1 + $0x17e0] sm:$0xff]
    %v797 = vld [vmem:[%s1 + $0x17e8] sm:$0xff]
    %v798 = vld [vmem:[%s1 + $0x17f0] sm:$0xff]
    %v799 = vld [vmem:[%s1 + $0x17f8] sm:$0xff]
    %v800 = vld [vmem:[%s1 + $0x1800] sm:$0xff]
    %v801 = vld [vmem:[%s1 + $0x1808] sm:$0xff]
    %v802 = vld [vmem:[%s1 + $0x1810] sm:$0xff]
    %v803 = vld [vmem:[%s1 + $0x1818] sm:$0xff]
    %v804 = vld [vmem:[%s1 + $0x1820] sm:$0xff]
    %v805 = vld [vmem:[%s1 + $0x1828] sm:$0xff]
    %v806 = vld [vmem:[%s1 + $0x1830] sm:$0xff]
    %v807 = vld [vmem:[%s1 + $0x1838] sm:$0xff]
    %v808 = vld [vmem:[%s1 + $0x1840] sm:$0xff]
    %v809 = vld [vmem:[%s1 + $0x1848] sm:$0xff]
    %v810 = vld [vmem:[%s1 + $0x1850] sm:$0xff]
    %v811 = vld [vmem:[%s1 + $0x1858] sm:$0xff]
    %v812 = vld [vmem:[%s1 + $0x1860] sm:$0xff]
    %v813 = vld [vmem:[%s1 + $0x1868] sm:$0xff]
    %v814 = vld [vmem:[%s1 + $0x1870] sm:$0xff]
    %v815 = vld [vmem:[%s1 + $0x1878] sm:$0xff]
    %v816 = vld [vmem:[%s2] sm:$0xf]
    %v818 = vlaneseq
    %v819 = vshrl.u32 %v818, 7
    %v820 = vsub.s32 0, %v819
    %v821 = vrot.slane %v816, %v820
    %v822 = vlaneseq
    %v823 = vshrl.u32 %v822, 7
    %v824 = vsub.s32 1, %v823
    %v825 = vrot.slane %v816, %v824
    %v826 = vlaneseq
    %v827 = vshrl.u32 %v826, 7
    %v828 = vsub.s32 2, %v827
    %v829 = vrot.slane %v816, %v828
    %v830 = vlaneseq
    %v831 = vshrl.u32 %v830, 7
    %v832 = vsub.s32 3, %v831
    %v833 = vrot.slane %v816, %v832
    %v842 = vcombine.high %v28, %v28
    %v844 = vunpack.c.l.s4 1966171168
    %v845 = vunpack.c.0.s8 %v844
    %v846 = vlaneseq
    %v847 = vshrl.u32 %v846, 7
    %v848 = vsub.s32 %v845, %v847
    %v849 = vrot.slane %v28, %v848
    %v851 = vunpack.c.l.s4 1966171168
    %v852 = vunpack.c.0.s8 %v851
    %v853 = vlaneseq
    %v854 = vshrl.u32 %v853, 7
    %v855 = vsub.s32 %v852, %v854
    %v856 = vrot.slane %v842, %v855
    %v857 = vcombine.high %v849, %v849
    %v858 = vcombine.high %v856, %v856
    %v860 = vunpack.c.l.s4 1966171168
    %v861 = vunpack.c.0.s8 %v860
    %v862 = vlaneseq
    %v863 = vshrl.u32 %v862, 7
    %v864 = vsub.s32 %v861, %v863
    %v865 = vrot.slane %v849, %v864
    %v867 = vunpack.c.l.s4 1966171168
    %v868 = vunpack.c.0.s8 %v867
    %v869 = vlaneseq
    %v870 = vshrl.u32 %v869, 7
    %v871 = vsub.s32 %v868, %v870
    %v872 = vrot.slane %v856, %v871
    %v874 = vunpack.c.l.s4 1966171168
    %v875 = vunpack.c.0.s8 %v874
    %v876 = vlaneseq
    %v877 = vshrl.u32 %v876, 7
    %v878 = vsub.s32 %v875, %v877
    %v879 = vrot.slane %v857, %v878
    %v881 = vunpack.c.l.s4 1966171168
    %v882 = vunpack.c.0.s8 %v881
    %v883 = vlaneseq
    %v884 = vshrl.u32 %v883, 7
    %v885 = vsub.s32 %v882, %v884
    %v886 = vrot.slane %v858, %v885
    %v887 = vcombine.high %v865, %v865
    %v888 = vcombine.high %v872, %v872
    %v889 = vcombine.high %v879, %v879
    %v890 = vcombine.high %v886, %v886
    %v891 = vcombine.high %v29, %v29
    %v893 = vunpack.c.l.s4 1966171168
    %v894 = vunpack.c.0.s8 %v893
    %v895 = vlaneseq
    %v896 = vshrl.u32 %v895, 7
    %v897 = vsub.s32 %v894, %v896
    %v898 = vrot.slane %v29, %v897
    %v900 = vunpack.c.l.s4 1966171168
    %v901 = vunpack.c.0.s8 %v900
    %v902 = vlaneseq
    %v903 = vshrl.u32 %v902, 7
    %v904 = vsub.s32 %v901, %v903
    %v905 = vrot.slane %v891, %v904
    %v906 = vcombine.high %v898, %v898
    %v907 = vcombine.high %v905, %v905
    %v909 = vunpack.c.l.s4 1966171168
    %v910 = vunpack.c.0.s8 %v909
    %v911 = vlaneseq
    %v912 = vshrl.u32 %v911, 7
    %v913 = vsub.s32 %v910, %v912
    %v914 = vrot.slane %v898, %v913
    %v916 = vunpack.c.l.s4 1966171168
    %v917 = vunpack.c.0.s8 %v916
    %v918 = vlaneseq
    %v919 = vshrl.u32 %v918, 7
    %v920 = vsub.s32 %v917, %v919
    %v921 = vrot.slane %v905, %v920
    %v923 = vunpack.c.l.s4 1966171168
    %v924 = vunpack.c.0.s8 %v923
    %v925 = vlaneseq
    %v926 = vshrl.u32 %v925, 7
    %v927 = vsub.s32 %v924, %v926
    %v928 = vrot.slane %v906, %v927
    %v930 = vunpack.c.l.s4 1966171168
    %v931 = vunpack.c.0.s8 %v930
    %v932 = vlaneseq
    %v933 = vshrl.u32 %v932, 7
    %v934 = vsub.s32 %v931, %v933
    %v935 = vrot.slane %v907, %v934
    %v936 = vcombine.high %v914, %v914
    %v937 = vcombine.high %v921, %v921
    %v938 = vcombine.high %v928, %v928
    %v939 = vcombine.high %v935, %v935
    %v940 = vcombine.high %v30, %v30
    %v942 = vunpack.c.l.s4 1966171168
    %v943 = vunpack.c.0.s8 %v942
    %v944 = vlaneseq
    %v945 = vshrl.u32 %v944, 7
    %v946 = vsub.s32 %v943, %v945
    %v947 = vrot.slane %v30, %v946
    %v949 = vunpack.c.l.s4 1966171168
    %v950 = vunpack.c.0.s8 %v949
    %v951 = vlaneseq
    %v952 = vshrl.u32 %v951, 7
    %v953 = vsub.s32 %v950, %v952
    %v954 = vrot.slane %v940, %v953
    %v955 = vcombine.high %v947, %v947
    %v956 = vcombine.high %v954, %v954
    %v958 = vunpack.c.l.s4 1966171168
    %v959 = vunpack.c.0.s8 %v958
    %v960 = vlaneseq
    %v961 = vshrl.u32 %v960, 7
    %v962 = vsub.s32 %v959, %v961
    %v963 = vrot.slane %v947, %v962
    %v965 = vunpack.c.l.s4 1966171168
    %v966 = vunpack.c.0.s8 %v965
    %v967 = vlaneseq
    %v968 = vshrl.u32 %v967, 7
    %v969 = vsub.s32 %v966, %v968
    %v970 = vrot.slane %v954, %v969
    %v972 = vunpack.c.l.s4 1966171168
    %v973 = vunpack.c.0.s8 %v972
    %v974 = vlaneseq
    %v975 = vshrl.u32 %v974, 7
    %v976 = vsub.s32 %v973, %v975
    %v977 = vrot.slane %v955, %v976
    %v979 = vunpack.c.l.s4 1966171168
    %v980 = vunpack.c.0.s8 %v979
    %v981 = vlaneseq
    %v982 = vshrl.u32 %v981, 7
    %v983 = vsub.s32 %v980, %v982
    %v984 = vrot.slane %v956, %v983
    %v985 = vcombine.high %v963, %v963
    %v986 = vcombine.high %v970, %v970
    %v987 = vcombine.high %v977, %v977
    %v988 = vcombine.high %v984, %v984
    %v990 = vunpack.c.l.s4 1966171168
    %v991 = vunpack.c.0.s8 %v990
    %v992 = vlaneseq
    %v993 = vshrl.u32 %v992, 7
    %v994 = vsub.s32 %v991, %v993
    %v995 = vrot.slane %v31, %v994
    %v997 = vunpack.c.l.s4 1966171168
    %v998 = vunpack.c.0.s8 %v997
    %v999 = vlaneseq
    %v1000 = vshrl.u32 %v999, 7
    %v1001 = vsub.s32 %v998, %v1000
    %v1002 = vrot.slane %v995, %v1001
    %v1811 = vunpack.c.l.b16 %v32
    %v1812 = vunpack.c.h.b16 %v32
    %v1813 = vunpack.c.l.b16 %v33
    %v1814 = vunpack.c.h.b16 %v33
    %v1815 = vunpack.c.l.b16 %v34
    %v1816 = vunpack.c.h.b16 %v34
    %v1817 = vunpack.c.l.b16 %v35
    %v1818 = vunpack.c.h.b16 %v35
    %v1819 = vunpack.c.l.b16 %v36
    %v1820 = vunpack.c.h.b16 %v36
    %v1821 = vunpack.c.l.b16 %v37
    %v1822 = vunpack.c.h.b16 %v37
    %v1823 = vunpack.c.l.b16 %v38
    %v1824 = vunpack.c.h.b16 %v38
    %v1825 = vunpack.c.l.b16 %v39
    %v1826 = vunpack.c.h.b16 %v39
    %v1827 = vunpack.c.l.b16 %v40
    %v1828 = vunpack.c.h.b16 %v40
    %v1829 = vunpack.c.l.b16 %v41
    %v1830 = vunpack.c.h.b16 %v41
    %v1831 = vunpack.c.l.b16 %v42
    %v1832 = vunpack.c.h.b16 %v42
    %v1833 = vunpack.c.l.b16 %v43
    %v1834 = vunpack.c.h.b16 %v43
    %v1835 = vunpack.c.l.b16 %v44
    %v1836 = vunpack.c.h.b16 %v44
    %v1837 = vunpack.c.l.b16 %v45
    %v1838 = vunpack.c.h.b16 %v45
    %v1839 = vunpack.c.l.b16 %v46
    %v1840 = vunpack.c.h.b16 %v46
    %v1841 = vunpack.c.l.b16 %v47
    %v1842 = vunpack.c.h.b16 %v47
    %v1843 = vunpack.c.l.b16 %v48
    %v1844 = vunpack.c.h.b16 %v48
    %v1845 = vunpack.c.l.b16 %v49
    %v1846 = vunpack.c.h.b16 %v49
    %v1847 = vunpack.c.l.b16 %v50
    %v1848 = vunpack.c.h.b16 %v50
    %v1849 = vunpack.c.l.b16 %v51
    %v1850 = vunpack.c.h.b16 %v51
    %v1851 = vunpack.c.l.b16 %v52
    %v1852 = vunpack.c.h.b16 %v52
    %v1853 = vunpack.c.l.b16 %v53
    %v1854 = vunpack.c.h.b16 %v53
    %v1855 = vunpack.c.l.b16 %v54
    %v1856 = vunpack.c.h.b16 %v54
    %v1857 = vunpack.c.l.b16 %v55
    %v1858 = vunpack.c.h.b16 %v55
    %v1859 = vunpack.c.l.b16 %v56
    %v1860 = vunpack.c.h.b16 %v56
    %v1861 = vunpack.c.l.b16 %v57
    %v1862 = vunpack.c.h.b16 %v57
    %v1863 = vunpack.c.l.b16 %v58
    %v1864 = vunpack.c.h.b16 %v58
    %v1865 = vunpack.c.l.b16 %v59
    %v1866 = vunpack.c.h.b16 %v59
    %v1867 = vunpack.c.l.b16 %v60
    %v1868 = vunpack.c.h.b16 %v60
    %v1869 = vunpack.c.l.b16 %v61
    %v1870 = vunpack.c.h.b16 %v61
    %v1871 = vunpack.c.l.b16 %v62
    %v1872 = vunpack.c.h.b16 %v62
    %v1873 = vunpack.c.l.b16 %v63
    %v1874 = vunpack.c.h.b16 %v63
    %v1875 = vunpack.c.l.b16 %v64
    %v1876 = vunpack.c.h.b16 %v64
    %v1877 = vunpack.c.l.b16 %v65
    %v1878 = vunpack.c.h.b16 %v65
    %v1879 = vunpack.c.l.b16 %v66
    %v1880 = vunpack.c.h.b16 %v66
    %v1881 = vunpack.c.l.b16 %v67
    %v1882 = vunpack.c.h.b16 %v67
    %v1883 = vunpack.c.l.b16 %v68
    %v1884 = vunpack.c.h.b16 %v68
    %v1885 = vunpack.c.l.b16 %v69
    %v1886 = vunpack.c.h.b16 %v69
    %v1887 = vunpack.c.l.b16 %v70
    %v1888 = vunpack.c.h.b16 %v70
    %v1889 = vunpack.c.l.b16 %v71
    %v1890 = vunpack.c.h.b16 %v71
    %v1891 = vunpack.c.l.b16 %v72
    %v1892 = vunpack.c.h.b16 %v72
    %v1893 = vunpack.c.l.b16 %v73
    %v1894 = vunpack.c.h.b16 %v73
    %v1895 = vunpack.c.l.b16 %v74
    %v1896 = vunpack.c.h.b16 %v74
    %v1897 = vunpack.c.l.b16 %v75
    %v1898 = vunpack.c.h.b16 %v75
    %v1899 = vunpack.c.l.b16 %v76
    %v1900 = vunpack.c.h.b16 %v76
    %v1901 = vunpack.c.l.b16 %v77
    %v1902 = vunpack.c.h.b16 %v77
    %v1903 = vunpack.c.l.b16 %v78
    %v1904 = vunpack.c.h.b16 %v78
    %v1905 = vunpack.c.l.b16 %v79
    %v1906 = vunpack.c.h.b16 %v79
    %v1907 = vunpack.c.l.b16 %v80
    %v1908 = vunpack.c.h.b16 %v80
    %v1909 = vunpack.c.l.b16 %v81
    %v1910 = vunpack.c.h.b16 %v81
    %v1911 = vunpack.c.l.b16 %v82
    %v1912 = vunpack.c.h.b16 %v82
    %v1913 = vunpack.c.l.b16 %v83
    %v1914 = vunpack.c.h.b16 %v83
    %v1915 = vunpack.c.l.b16 %v84
    %v1916 = vunpack.c.h.b16 %v84
    %v1917 = vunpack.c.l.b16 %v85
    %v1918 = vunpack.c.h.b16 %v85
    %v1919 = vunpack.c.l.b16 %v86
    %v1920 = vunpack.c.h.b16 %v86
    %v1921 = vunpack.c.l.b16 %v87
    %v1922 = vunpack.c.h.b16 %v87
    %v1923 = vunpack.c.l.b16 %v88
    %v1924 = vunpack.c.h.b16 %v88
    %v1925 = vunpack.c.l.b16 %v89
    %v1926 = vunpack.c.h.b16 %v89
    %v1927 = vunpack.c.l.b16 %v90
    %v1928 = vunpack.c.h.b16 %v90
    %v1929 = vunpack.c.l.b16 %v91
    %v1930 = vunpack.c.h.b16 %v91
    %v1931 = vunpack.c.l.b16 %v92
    %v1932 = vunpack.c.h.b16 %v92
    %v1933 = vunpack.c.l.b16 %v93
    %v1934 = vunpack.c.h.b16 %v93
    %v1935 = vunpack.c.l.b16 %v94
    %v1936 = vunpack.c.h.b16 %v94
    %v1937 = vunpack.c.l.b16 %v95
    %v1938 = vunpack.c.h.b16 %v95
    %v1939 = vunpack.c.l.b16 %v96
    %v1940 = vunpack.c.h.b16 %v96
    %v1941 = vunpack.c.l.b16 %v97
    %v1942 = vunpack.c.h.b16 %v97
    %v1943 = vunpack.c.l.b16 %v98
    %v1944 = vunpack.c.h.b16 %v98
    %v1945 = vunpack.c.l.b16 %v99
    %v1946 = vunpack.c.h.b16 %v99
    %v1947 = vunpack.c.l.b16 %v100
    %v1948 = vunpack.c.h.b16 %v100
    %v1949 = vunpack.c.l.b16 %v101
    %v1950 = vunpack.c.h.b16 %v101
    %v1951 = vunpack.c.l.b16 %v102
    %v1952 = vunpack.c.h.b16 %v102
    %v1953 = vunpack.c.l.b16 %v103
    %v1954 = vunpack.c.h.b16 %v103
    %v1955 = vunpack.c.l.b16 %v104
    %v1956 = vunpack.c.h.b16 %v104
    %v1957 = vunpack.c.l.b16 %v105
    %v1958 = vunpack.c.h.b16 %v105
    %v1959 = vunpack.c.l.b16 %v106
    %v1960 = vunpack.c.h.b16 %v106
    %v1961 = vunpack.c.l.b16 %v107
    %v1962 = vunpack.c.h.b16 %v107
    %v1963 = vunpack.c.l.b16 %v108
    %v1964 = vunpack.c.h.b16 %v108
    %v1965 = vunpack.c.l.b16 %v109
    %v1966 = vunpack.c.h.b16 %v109
    %v1967 = vunpack.c.l.b16 %v110
    %v1968 = vunpack.c.h.b16 %v110
    %v1969 = vunpack.c.l.b16 %v111
    %v1970 = vunpack.c.h.b16 %v111
    %v1971 = vunpack.c.l.b16 %v112
    %v1972 = vunpack.c.h.b16 %v112
    %v1973 = vunpack.c.l.b16 %v113
    %v1974 = vunpack.c.h.b16 %v113
    %v1975 = vunpack.c.l.b16 %v114
    %v1976 = vunpack.c.h.b16 %v114
    %v1977 = vunpack.c.l.b16 %v115
    %v1978 = vunpack.c.h.b16 %v115
    %v1979 = vunpack.c.l.b16 %v116
    %v1980 = vunpack.c.h.b16 %v116
    %v1981 = vunpack.c.l.b16 %v117
    %v1982 = vunpack.c.h.b16 %v117
    %v1983 = vunpack.c.l.b16 %v118
    %v1984 = vunpack.c.h.b16 %v118
    %v1985 = vunpack.c.l.b16 %v119
    %v1986 = vunpack.c.h.b16 %v119
    %v1987 = vunpack.c.l.b16 %v120
    %v1988 = vunpack.c.h.b16 %v120
    %v1989 = vunpack.c.l.b16 %v121
    %v1990 = vunpack.c.h.b16 %v121
    %v1991 = vunpack.c.l.b16 %v122
    %v1992 = vunpack.c.h.b16 %v122
    %v1993 = vunpack.c.l.b16 %v123
    %v1994 = vunpack.c.h.b16 %v123
    %v1995 = vunpack.c.l.b16 %v124
    %v1996 = vunpack.c.h.b16 %v124
    %v1997 = vunpack.c.l.b16 %v125
    %v1998 = vunpack.c.h.b16 %v125
    %v1999 = vunpack.c.l.b16 %v126
    %v2000 = vunpack.c.h.b16 %v126
    %v2001 = vunpack.c.l.b16 %v127
    %v2002 = vunpack.c.h.b16 %v127
    %v2003 = vunpack.c.l.b16 %v128
    %v2004 = vunpack.c.h.b16 %v128
    %v2005 = vunpack.c.l.b16 %v129
    %v2006 = vunpack.c.h.b16 %v129
    %v2007 = vunpack.c.l.b16 %v130
    %v2008 = vunpack.c.h.b16 %v130
    %v2009 = vunpack.c.l.b16 %v131
    %v2010 = vunpack.c.h.b16 %v131
    %v2011 = vunpack.c.l.b16 %v132
    %v2012 = vunpack.c.h.b16 %v132
    %v2013 = vunpack.c.l.b16 %v133
    %v2014 = vunpack.c.h.b16 %v133
    %v2015 = vunpack.c.l.b16 %v134
    %v2016 = vunpack.c.h.b16 %v134
    %v2017 = vunpack.c.l.b16 %v135
    %v2018 = vunpack.c.h.b16 %v135
    %v2019 = vunpack.c.l.b16 %v136
    %v2020 = vunpack.c.h.b16 %v136
    %v2021 = vunpack.c.l.b16 %v137
    %v2022 = vunpack.c.h.b16 %v137
    %v2023 = vunpack.c.l.b16 %v138
    %v2024 = vunpack.c.h.b16 %v138
    %v2025 = vunpack.c.l.b16 %v139
    %v2026 = vunpack.c.h.b16 %v139
    %v2027 = vunpack.c.l.b16 %v140
    %v2028 = vunpack.c.h.b16 %v140
    %v2029 = vunpack.c.l.b16 %v141
    %v2030 = vunpack.c.h.b16 %v141
    %v2031 = vunpack.c.l.b16 %v142
    %v2032 = vunpack.c.h.b16 %v142
    %v2033 = vunpack.c.l.b16 %v143
    %v2034 = vunpack.c.h.b16 %v143
    %v2035 = vunpack.c.l.b16 %v144
    %v2036 = vunpack.c.h.b16 %v144
    %v2037 = vunpack.c.l.b16 %v145
    %v2038 = vunpack.c.h.b16 %v145
    %v2039 = vunpack.c.l.b16 %v146
    %v2040 = vunpack.c.h.b16 %v146
    %v2041 = vunpack.c.l.b16 %v147
    %v2042 = vunpack.c.h.b16 %v147
    %v2043 = vunpack.c.l.b16 %v148
    %v2044 = vunpack.c.h.b16 %v148
    %v2045 = vunpack.c.l.b16 %v149
    %v2046 = vunpack.c.h.b16 %v149
    %v2047 = vunpack.c.l.b16 %v150
    %v2048 = vunpack.c.h.b16 %v150
    %v2049 = vunpack.c.l.b16 %v151
    %v2050 = vunpack.c.h.b16 %v151
    %v2051 = vunpack.c.l.b16 %v152
    %v2052 = vunpack.c.h.b16 %v152
    %v2053 = vunpack.c.l.b16 %v153
    %v2054 = vunpack.c.h.b16 %v153
    %v2055 = vunpack.c.l.b16 %v154
    %v2056 = vunpack.c.h.b16 %v154
    %v2057 = vunpack.c.l.b16 %v155
    %v2058 = vunpack.c.h.b16 %v155
    %v2059 = vunpack.c.l.b16 %v156
    %v2060 = vunpack.c.h.b16 %v156
    %v2061 = vunpack.c.l.b16 %v157
    %v2062 = vunpack.c.h.b16 %v157
    %v2063 = vunpack.c.l.b16 %v158
    %v2064 = vunpack.c.h.b16 %v158
    %v2065 = vunpack.c.l.b16 %v159
    %v2066 = vunpack.c.h.b16 %v159
    %v2067 = vunpack.c.l.b16 %v160
    %v2068 = vunpack.c.h.b16 %v160
    %v2069 = vunpack.c.l.b16 %v161
    %v2070 = vunpack.c.h.b16 %v161
    %v2071 = vunpack.c.l.b16 %v162
    %v2072 = vunpack.c.h.b16 %v162
    %v2073 = vunpack.c.l.b16 %v163
    %v2074 = vunpack.c.h.b16 %v163
    %v2075 = vunpack.c.l.b16 %v164
    %v2076 = vunpack.c.h.b16 %v164
    %v2077 = vunpack.c.l.b16 %v165
    %v2078 = vunpack.c.h.b16 %v165
    %v2079 = vunpack.c.l.b16 %v166
    %v2080 = vunpack.c.h.b16 %v166
    %v2081 = vunpack.c.l.b16 %v167
    %v2082 = vunpack.c.h.b16 %v167
    %v2083 = vunpack.c.l.b16 %v168
    %v2084 = vunpack.c.h.b16 %v168
    %v2085 = vunpack.c.l.b16 %v169
    %v2086 = vunpack.c.h.b16 %v169
    %v2087 = vunpack.c.l.b16 %v170
    %v2088 = vunpack.c.h.b16 %v170
    %v2089 = vunpack.c.l.b16 %v171
    %v2090 = vunpack.c.h.b16 %v171
    %v2091 = vunpack.c.l.b16 %v172
    %v2092 = vunpack.c.h.b16 %v172
    %v2093 = vunpack.c.l.b16 %v173
    %v2094 = vunpack.c.h.b16 %v173
    %v2095 = vunpack.c.l.b16 %v174
    %v2096 = vunpack.c.h.b16 %v174
    %v2097 = vunpack.c.l.b16 %v175
    %v2098 = vunpack.c.h.b16 %v175
    %v2099 = vunpack.c.l.b16 %v176
    %v2100 = vunpack.c.h.b16 %v176
    %v2101 = vunpack.c.l.b16 %v177
    %v2102 = vunpack.c.h.b16 %v177
    %v2103 = vunpack.c.l.b16 %v178
    %v2104 = vunpack.c.h.b16 %v178
    %v2105 = vunpack.c.l.b16 %v179
    %v2106 = vunpack.c.h.b16 %v179
    %v2107 = vunpack.c.l.b16 %v180
    %v2108 = vunpack.c.h.b16 %v180
    %v2109 = vunpack.c.l.b16 %v181
    %v2110 = vunpack.c.h.b16 %v181
    %v2111 = vunpack.c.l.b16 %v182
    %v2112 = vunpack.c.h.b16 %v182
    %v2113 = vunpack.c.l.b16 %v183
    %v2114 = vunpack.c.h.b16 %v183
    %v2115 = vunpack.c.l.b16 %v184
    %v2116 = vunpack.c.h.b16 %v184
    %v2117 = vunpack.c.l.b16 %v185
    %v2118 = vunpack.c.h.b16 %v185
    %v2119 = vunpack.c.l.b16 %v186
    %v2120 = vunpack.c.h.b16 %v186
    %v2121 = vunpack.c.l.b16 %v187
    %v2122 = vunpack.c.h.b16 %v187
    %v2123 = vunpack.c.l.b16 %v188
    %v2124 = vunpack.c.h.b16 %v188
    %v2125 = vunpack.c.l.b16 %v189
    %v2126 = vunpack.c.h.b16 %v189
    %v2127 = vunpack.c.l.b16 %v190
    %v2128 = vunpack.c.h.b16 %v190
    %v2129 = vunpack.c.l.b16 %v191
    %v2130 = vunpack.c.h.b16 %v191
    %v2131 = vunpack.c.l.b16 %v192
    %v2132 = vunpack.c.h.b16 %v192
    %v2133 = vunpack.c.l.b16 %v193
    %v2134 = vunpack.c.h.b16 %v193
    %v2135 = vunpack.c.l.b16 %v194
    %v2136 = vunpack.c.h.b16 %v194
    %v2137 = vunpack.c.l.b16 %v195
    %v2138 = vunpack.c.h.b16 %v195
    %v2139 = vunpack.c.l.b16 %v196
    %v2140 = vunpack.c.h.b16 %v196
    %v2141 = vunpack.c.l.b16 %v197
    %v2142 = vunpack.c.h.b16 %v197
    %v2143 = vunpack.c.l.b16 %v198
    %v2144 = vunpack.c.h.b16 %v198
    %v2145 = vunpack.c.l.b16 %v199
    %v2146 = vunpack.c.h.b16 %v199
    %v2147 = vunpack.c.l.b16 %v200
    %v2148 = vunpack.c.h.b16 %v200
    %v2149 = vunpack.c.l.b16 %v201
    %v2150 = vunpack.c.h.b16 %v201
    %v2151 = vunpack.c.l.b16 %v202
    %v2152 = vunpack.c.h.b16 %v202
    %v2153 = vunpack.c.l.b16 %v203
    %v2154 = vunpack.c.h.b16 %v203
    %v2155 = vunpack.c.l.b16 %v204
    %v2156 = vunpack.c.h.b16 %v204
    %v2157 = vunpack.c.l.b16 %v205
    %v2158 = vunpack.c.h.b16 %v205
    %v2159 = vunpack.c.l.b16 %v206
    %v2160 = vunpack.c.h.b16 %v206
    %v2161 = vunpack.c.l.b16 %v207
    %v2162 = vunpack.c.h.b16 %v207
    %v2163 = vunpack.c.l.b16 %v208
    %v2164 = vunpack.c.h.b16 %v208
    %v2165 = vunpack.c.l.b16 %v209
    %v2166 = vunpack.c.h.b16 %v209
    %v2167 = vunpack.c.l.b16 %v210
    %v2168 = vunpack.c.h.b16 %v210
    %v2169 = vunpack.c.l.b16 %v211
    %v2170 = vunpack.c.h.b16 %v211
    %v2171 = vunpack.c.l.b16 %v212
    %v2172 = vunpack.c.h.b16 %v212
    %v2173 = vunpack.c.l.b16 %v213
    %v2174 = vunpack.c.h.b16 %v213
    %v2175 = vunpack.c.l.b16 %v214
    %v2176 = vunpack.c.h.b16 %v214
    %v2177 = vunpack.c.l.b16 %v215
    %v2178 = vunpack.c.h.b16 %v215
    %v2179 = vunpack.c.l.b16 %v216
    %v2180 = vunpack.c.h.b16 %v216
    %v2181 = vunpack.c.l.b16 %v217
    %v2182 = vunpack.c.h.b16 %v217
    %v2183 = vunpack.c.l.b16 %v218
    %v2184 = vunpack.c.h.b16 %v218
    %v2185 = vunpack.c.l.b16 %v219
    %v2186 = vunpack.c.h.b16 %v219
    %v2187 = vunpack.c.l.b16 %v220
    %v2188 = vunpack.c.h.b16 %v220
    %v2189 = vunpack.c.l.b16 %v221
    %v2190 = vunpack.c.h.b16 %v221
    %v2191 = vunpack.c.l.b16 %v222
    %v2192 = vunpack.c.h.b16 %v222
    %v2193 = vunpack.c.l.b16 %v223
    %v2194 = vunpack.c.h.b16 %v223
    %v2195 = vunpack.c.l.b16 %v224
    %v2196 = vunpack.c.h.b16 %v224
    %v2197 = vunpack.c.l.b16 %v225
    %v2198 = vunpack.c.h.b16 %v225
    %v2199 = vunpack.c.l.b16 %v226
    %v2200 = vunpack.c.h.b16 %v226
    %v2201 = vunpack.c.l.b16 %v227
    %v2202 = vunpack.c.h.b16 %v227
    %v2203 = vunpack.c.l.b16 %v228
    %v2204 = vunpack.c.h.b16 %v228
    %v2205 = vunpack.c.l.b16 %v229
    %v2206 = vunpack.c.h.b16 %v229
    %v2207 = vunpack.c.l.b16 %v230
    %v2208 = vunpack.c.h.b16 %v230
    %v2209 = vunpack.c.l.b16 %v231
    %v2210 = vunpack.c.h.b16 %v231
    %v2211 = vunpack.c.l.b16 %v232
    %v2212 = vunpack.c.h.b16 %v232
    %v2213 = vunpack.c.l.b16 %v233
    %v2214 = vunpack.c.h.b16 %v233
    %v2215 = vunpack.c.l.b16 %v234
    %v2216 = vunpack.c.h.b16 %v234
    %v2217 = vunpack.c.l.b16 %v235
    %v2218 = vunpack.c.h.b16 %v235
    %v2219 = vunpack.c.l.b16 %v236
    %v2220 = vunpack.c.h.b16 %v236
    %v2221 = vunpack.c.l.b16 %v237
    %v2222 = vunpack.c.h.b16 %v237
    %v2223 = vunpack.c.l.b16 %v238
    %v2224 = vunpack.c.h.b16 %v238
    %v2225 = vunpack.c.l.b16 %v239
    %v2226 = vunpack.c.h.b16 %v239
    %v2227 = vunpack.c.l.b16 %v240
    %v2228 = vunpack.c.h.b16 %v240
    %v2229 = vunpack.c.l.b16 %v241
    %v2230 = vunpack.c.h.b16 %v241
    %v2231 = vunpack.c.l.b16 %v242
    %v2232 = vunpack.c.h.b16 %v242
    %v2233 = vunpack.c.l.b16 %v243
    %v2234 = vunpack.c.h.b16 %v243
    %v2235 = vunpack.c.l.b16 %v244
    %v2236 = vunpack.c.h.b16 %v244
    %v2237 = vunpack.c.l.b16 %v245
    %v2238 = vunpack.c.h.b16 %v245
    %v2239 = vunpack.c.l.b16 %v246
    %v2240 = vunpack.c.h.b16 %v246
    %v2241 = vunpack.c.l.b16 %v247
    %v2242 = vunpack.c.h.b16 %v247
    %v2243 = vunpack.c.l.b16 %v248
    %v2244 = vunpack.c.h.b16 %v248
    %v2245 = vunpack.c.l.b16 %v249
    %v2246 = vunpack.c.h.b16 %v249
    %v2247 = vunpack.c.l.b16 %v250
    %v2248 = vunpack.c.h.b16 %v250
    %v2249 = vunpack.c.l.b16 %v251
    %v2250 = vunpack.c.h.b16 %v251
    %v2251 = vunpack.c.l.b16 %v252
    %v2252 = vunpack.c.h.b16 %v252
    %v2253 = vunpack.c.l.b16 %v253
    %v2254 = vunpack.c.h.b16 %v253
    %v2255 = vunpack.c.l.b16 %v254
    %v2256 = vunpack.c.h.b16 %v254
    %v2257 = vunpack.c.l.b16 %v255
    %v2258 = vunpack.c.h.b16 %v255
    %v2259 = vunpack.c.l.b16 %v256
    %v2260 = vunpack.c.h.b16 %v256
    %v2261 = vunpack.c.l.b16 %v257
    %v2262 = vunpack.c.h.b16 %v257
    %v2263 = vunpack.c.l.b16 %v258
    %v2264 = vunpack.c.h.b16 %v258
    %v2265 = vunpack.c.l.b16 %v259
    %v2266 = vunpack.c.h.b16 %v259
    %v2267 = vunpack.c.l.b16 %v260
    %v2268 = vunpack.c.h.b16 %v260
    %v2269 = vunpack.c.l.b16 %v261
    %v2270 = vunpack.c.h.b16 %v261
    %v2271 = vunpack.c.l.b16 %v262
    %v2272 = vunpack.c.h.b16 %v262
    %v2273 = vunpack.c.l.b16 %v263
    %v2274 = vunpack.c.h.b16 %v263
    %v2275 = vunpack.c.l.b16 %v264
    %v2276 = vunpack.c.h.b16 %v264
    %v2277 = vunpack.c.l.b16 %v265
    %v2278 = vunpack.c.h.b16 %v265
    %v2279 = vunpack.c.l.b16 %v266
    %v2280 = vunpack.c.h.b16 %v266
    %v2281 = vunpack.c.l.b16 %v267
    %v2282 = vunpack.c.h.b16 %v267
    %v2283 = vunpack.c.l.b16 %v268
    %v2284 = vunpack.c.h.b16 %v268
    %v2285 = vunpack.c.l.b16 %v269
    %v2286 = vunpack.c.h.b16 %v269
    %v2287 = vunpack.c.l.b16 %v270
    %v2288 = vunpack.c.h.b16 %v270
    %v2289 = vunpack.c.l.b16 %v271
    %v2290 = vunpack.c.h.b16 %v271
    %v2291 = vunpack.c.l.b16 %v272
    %v2292 = vunpack.c.h.b16 %v272
    %v2293 = vunpack.c.l.b16 %v273
    %v2294 = vunpack.c.h.b16 %v273
    %v2295 = vunpack.c.l.b16 %v274
    %v2296 = vunpack.c.h.b16 %v274
    %v2297 = vunpack.c.l.b16 %v275
    %v2298 = vunpack.c.h.b16 %v275
    %v2299 = vunpack.c.l.b16 %v276
    %v2300 = vunpack.c.h.b16 %v276
    %v2301 = vunpack.c.l.b16 %v277
    %v2302 = vunpack.c.h.b16 %v277
    %v2303 = vunpack.c.l.b16 %v278
    %v2304 = vunpack.c.h.b16 %v278
    %v2305 = vunpack.c.l.b16 %v279
    %v2306 = vunpack.c.h.b16 %v279
    %v2307 = vunpack.c.l.b16 %v280
    %v2308 = vunpack.c.h.b16 %v280
    %v2309 = vunpack.c.l.b16 %v281
    %v2310 = vunpack.c.h.b16 %v281
    %v2311 = vunpack.c.l.b16 %v282
    %v2312 = vunpack.c.h.b16 %v282
    %v2313 = vunpack.c.l.b16 %v283
    %v2314 = vunpack.c.h.b16 %v283
    %v2315 = vunpack.c.l.b16 %v284
    %v2316 = vunpack.c.h.b16 %v284
    %v2317 = vunpack.c.l.b16 %v285
    %v2318 = vunpack.c.h.b16 %v285
    %v2319 = vunpack.c.l.b16 %v286
    %v2320 = vunpack.c.h.b16 %v286
    %v2321 = vunpack.c.l.b16 %v287
    %v2322 = vunpack.c.h.b16 %v287
    %v2323 = vunpack.c.l.b16 %v288
    %v2324 = vunpack.c.h.b16 %v288
    %v2325 = vunpack.c.l.b16 %v289
    %v2326 = vunpack.c.h.b16 %v289
    %v2327 = vunpack.c.l.b16 %v290
    %v2328 = vunpack.c.h.b16 %v290
    %v2329 = vunpack.c.l.b16 %v291
    %v2330 = vunpack.c.h.b16 %v291
    %v2331 = vunpack.c.l.b16 %v292
    %v2332 = vunpack.c.h.b16 %v292
    %v2333 = vunpack.c.l.b16 %v293
    %v2334 = vunpack.c.h.b16 %v293
    %v2335 = vunpack.c.l.b16 %v294
    %v2336 = vunpack.c.h.b16 %v294
    %v2337 = vunpack.c.l.b16 %v295
    %v2338 = vunpack.c.h.b16 %v295
    %v2339 = vunpack.c.l.b16 %v296
    %v2340 = vunpack.c.h.b16 %v296
    %v2341 = vunpack.c.l.b16 %v297
    %v2342 = vunpack.c.h.b16 %v297
    %v2343 = vunpack.c.l.b16 %v298
    %v2344 = vunpack.c.h.b16 %v298
    %v2345 = vunpack.c.l.b16 %v299
    %v2346 = vunpack.c.h.b16 %v299
    %v2347 = vunpack.c.l.b16 %v300
    %v2348 = vunpack.c.h.b16 %v300
    %v2349 = vunpack.c.l.b16 %v301
    %v2350 = vunpack.c.h.b16 %v301
    %v2351 = vunpack.c.l.b16 %v302
    %v2352 = vunpack.c.h.b16 %v302
    %v2353 = vunpack.c.l.b16 %v303
    %v2354 = vunpack.c.h.b16 %v303
    %v2355 = vunpack.c.l.b16 %v304
    %v2356 = vunpack.c.h.b16 %v304
    %v2357 = vunpack.c.l.b16 %v305
    %v2358 = vunpack.c.h.b16 %v305
    %v2359 = vunpack.c.l.b16 %v306
    %v2360 = vunpack.c.h.b16 %v306
    %v2361 = vunpack.c.l.b16 %v307
    %v2362 = vunpack.c.h.b16 %v307
    %v2363 = vunpack.c.l.b16 %v308
    %v2364 = vunpack.c.h.b16 %v308
    %v2365 = vunpack.c.l.b16 %v309
    %v2366 = vunpack.c.h.b16 %v309
    %v2367 = vunpack.c.l.b16 %v310
    %v2368 = vunpack.c.h.b16 %v310
    %v2369 = vunpack.c.l.b16 %v311
    %v2370 = vunpack.c.h.b16 %v311
    %v2371 = vunpack.c.l.b16 %v312
    %v2372 = vunpack.c.h.b16 %v312
    %v2373 = vunpack.c.l.b16 %v313
    %v2374 = vunpack.c.h.b16 %v313
    %v2375 = vunpack.c.l.b16 %v314
    %v2376 = vunpack.c.h.b16 %v314
    %v2377 = vunpack.c.l.b16 %v315
    %v2378 = vunpack.c.h.b16 %v315
    %v2379 = vunpack.c.l.b16 %v316
    %v2380 = vunpack.c.h.b16 %v316
    %v2381 = vunpack.c.l.b16 %v317
    %v2382 = vunpack.c.h.b16 %v317
    %v2383 = vunpack.c.l.b16 %v318
    %v2384 = vunpack.c.h.b16 %v318
    %v2385 = vunpack.c.l.b16 %v319
    %v2386 = vunpack.c.h.b16 %v319
    %v2387 = vunpack.c.l.b16 %v320
    %v2388 = vunpack.c.h.b16 %v320
    %v2389 = vunpack.c.l.b16 %v321
    %v2390 = vunpack.c.h.b16 %v321
    %v2391 = vunpack.c.l.b16 %v322
    %v2392 = vunpack.c.h.b16 %v322
    %v2393 = vunpack.c.l.b16 %v323
    %v2394 = vunpack.c.h.b16 %v323
    %v2395 = vunpack.c.l.b16 %v324
    %v2396 = vunpack.c.h.b16 %v324
    %v2397 = vunpack.c.l.b16 %v325
    %v2398 = vunpack.c.h.b16 %v325
    %v2399 = vunpack.c.l.b16 %v326
    %v2400 = vunpack.c.h.b16 %v326
    %v2401 = vunpack.c.l.b16 %v327
    %v2402 = vunpack.c.h.b16 %v327
    %v2403 = vunpack.c.l.b16 %v328
    %v2404 = vunpack.c.h.b16 %v328
    %v2405 = vunpack.c.l.b16 %v329
    %v2406 = vunpack.c.h.b16 %v329
    %v2407 = vunpack.c.l.b16 %v330
    %v2408 = vunpack.c.h.b16 %v330
    %v2409 = vunpack.c.l.b16 %v331
    %v2410 = vunpack.c.h.b16 %v331
    %v2411 = vunpack.c.l.b16 %v332
    %v2412 = vunpack.c.h.b16 %v332
    %v2413 = vunpack.c.l.b16 %v333
    %v2414 = vunpack.c.h.b16 %v333
    %v2415 = vunpack.c.l.b16 %v334
    %v2416 = vunpack.c.h.b16 %v334
    %v2417 = vunpack.c.l.b16 %v335
    %v2418 = vunpack.c.h.b16 %v335
    %v2419 = vunpack.c.l.b16 %v336
    %v2420 = vunpack.c.h.b16 %v336
    %v2421 = vunpack.c.l.b16 %v337
    %v2422 = vunpack.c.h.b16 %v337
    %v2423 = vunpack.c.l.b16 %v338
    %v2424 = vunpack.c.h.b16 %v338
    %v2425 = vunpack.c.l.b16 %v339
    %v2426 = vunpack.c.h.b16 %v339
    %v2427 = vunpack.c.l.b16 %v340
    %v2428 = vunpack.c.h.b16 %v340
    %v2429 = vunpack.c.l.b16 %v341
    %v2430 = vunpack.c.h.b16 %v341
    %v2431 = vunpack.c.l.b16 %v342
    %v2432 = vunpack.c.h.b16 %v342
    %v2433 = vunpack.c.l.b16 %v343
    %v2434 = vunpack.c.h.b16 %v343
    %v2435 = vunpack.c.l.b16 %v344
    %v2436 = vunpack.c.h.b16 %v344
    %v2437 = vunpack.c.l.b16 %v345
    %v2438 = vunpack.c.h.b16 %v345
    %v2439 = vunpack.c.l.b16 %v346
    %v2440 = vunpack.c.h.b16 %v346
    %v2441 = vunpack.c.l.b16 %v347
    %v2442 = vunpack.c.h.b16 %v347
    %v2443 = vunpack.c.l.b16 %v348
    %v2444 = vunpack.c.h.b16 %v348
    %v2445 = vunpack.c.l.b16 %v349
    %v2446 = vunpack.c.h.b16 %v349
    %v2447 = vunpack.c.l.b16 %v350
    %v2448 = vunpack.c.h.b16 %v350
    %v2449 = vunpack.c.l.b16 %v351
    %v2450 = vunpack.c.h.b16 %v351
    %v2451 = vunpack.c.l.b16 %v352
    %v2452 = vunpack.c.h.b16 %v352
    %v2453 = vunpack.c.l.b16 %v353
    %v2454 = vunpack.c.h.b16 %v353
    %v2455 = vunpack.c.l.b16 %v354
    %v2456 = vunpack.c.h.b16 %v354
    %v2457 = vunpack.c.l.b16 %v355
    %v2458 = vunpack.c.h.b16 %v355
    %v2459 = vunpack.c.l.b16 %v356
    %v2460 = vunpack.c.h.b16 %v356
    %v2461 = vunpack.c.l.b16 %v357
    %v2462 = vunpack.c.h.b16 %v357
    %v2463 = vunpack.c.l.b16 %v358
    %v2464 = vunpack.c.h.b16 %v358
    %v2465 = vunpack.c.l.b16 %v359
    %v2466 = vunpack.c.h.b16 %v359
    %v2467 = vunpack.c.l.b16 %v360
    %v2468 = vunpack.c.h.b16 %v360
    %v2469 = vunpack.c.l.b16 %v361
    %v2470 = vunpack.c.h.b16 %v361
    %v2471 = vunpack.c.l.b16 %v362
    %v2472 = vunpack.c.h.b16 %v362
    %v2473 = vunpack.c.l.b16 %v363
    %v2474 = vunpack.c.h.b16 %v363
    %v2475 = vunpack.c.l.b16 %v364
    %v2476 = vunpack.c.h.b16 %v364
    %v2477 = vunpack.c.l.b16 %v365
    %v2478 = vunpack.c.h.b16 %v365
    %v2479 = vunpack.c.l.b16 %v366
    %v2480 = vunpack.c.h.b16 %v366
    %v2481 = vunpack.c.l.b16 %v367
    %v2482 = vunpack.c.h.b16 %v367
    %v2483 = vunpack.c.l.b16 %v368
    %v2484 = vunpack.c.h.b16 %v368
    %v2485 = vunpack.c.l.b16 %v369
    %v2486 = vunpack.c.h.b16 %v369
    %v2487 = vunpack.c.l.b16 %v370
    %v2488 = vunpack.c.h.b16 %v370
    %v2489 = vunpack.c.l.b16 %v371
    %v2490 = vunpack.c.h.b16 %v371
    %v2491 = vunpack.c.l.b16 %v372
    %v2492 = vunpack.c.h.b16 %v372
    %v2493 = vunpack.c.l.b16 %v373
    %v2494 = vunpack.c.h.b16 %v373
    %v2495 = vunpack.c.l.b16 %v374
    %v2496 = vunpack.c.h.b16 %v374
    %v2497 = vunpack.c.l.b16 %v375
    %v2498 = vunpack.c.h.b16 %v375
    %v2499 = vunpack.c.l.b16 %v376
    %v2500 = vunpack.c.h.b16 %v376
    %v2501 = vunpack.c.l.b16 %v377
    %v2502 = vunpack.c.h.b16 %v377
    %v2503 = vunpack.c.l.b16 %v378
    %v2504 = vunpack.c.h.b16 %v378
    %v2505 = vunpack.c.l.b16 %v379
    %v2506 = vunpack.c.h.b16 %v379
    %v2507 = vunpack.c.l.b16 %v380
    %v2508 = vunpack.c.h.b16 %v380
    %v2509 = vunpack.c.l.b16 %v381
    %v2510 = vunpack.c.h.b16 %v381
    %v2511 = vunpack.c.l.b16 %v382
    %v2512 = vunpack.c.h.b16 %v382
    %v2513 = vunpack.c.l.b16 %v383
    %v2514 = vunpack.c.h.b16 %v383
    %v2515 = vunpack.c.l.b16 %v384
    %v2516 = vunpack.c.h.b16 %v384
    %v2517 = vunpack.c.l.b16 %v385
    %v2518 = vunpack.c.h.b16 %v385
    %v2519 = vunpack.c.l.b16 %v386
    %v2520 = vunpack.c.h.b16 %v386
    %v2521 = vunpack.c.l.b16 %v387
    %v2522 = vunpack.c.h.b16 %v387
    %v2523 = vunpack.c.l.b16 %v388
    %v2524 = vunpack.c.h.b16 %v388
    %v2525 = vunpack.c.l.b16 %v389
    %v2526 = vunpack.c.h.b16 %v389
    %v2527 = vunpack.c.l.b16 %v390
    %v2528 = vunpack.c.h.b16 %v390
    %v2529 = vunpack.c.l.b16 %v391
    %v2530 = vunpack.c.h.b16 %v391
    %v2531 = vunpack.c.l.b16 %v392
    %v2532 = vunpack.c.h.b16 %v392
    %v2533 = vunpack.c.l.b16 %v393
    %v2534 = vunpack.c.h.b16 %v393
    %v2535 = vunpack.c.l.b16 %v394
    %v2536 = vunpack.c.h.b16 %v394
    %v2537 = vunpack.c.l.b16 %v395
    %v2538 = vunpack.c.h.b16 %v395
    %v2539 = vunpack.c.l.b16 %v396
    %v2540 = vunpack.c.h.b16 %v396
    %v2541 = vunpack.c.l.b16 %v397
    %v2542 = vunpack.c.h.b16 %v397
    %v2543 = vunpack.c.l.b16 %v398
    %v2544 = vunpack.c.h.b16 %v398
    %v2545 = vunpack.c.l.b16 %v399
    %v2546 = vunpack.c.h.b16 %v399
    %v2547 = vunpack.c.l.b16 %v400
    %v2548 = vunpack.c.h.b16 %v400
    %v2549 = vunpack.c.l.b16 %v401
    %v2550 = vunpack.c.h.b16 %v401
    %v2551 = vunpack.c.l.b16 %v402
    %v2552 = vunpack.c.h.b16 %v402
    %v2553 = vunpack.c.l.b16 %v403
    %v2554 = vunpack.c.h.b16 %v403
    %v2555 = vunpack.c.l.b16 %v404
    %v2556 = vunpack.c.h.b16 %v404
    %v2557 = vunpack.c.l.b16 %v405
    %v2558 = vunpack.c.h.b16 %v405
    %v2559 = vunpack.c.l.b16 %v406
    %v2560 = vunpack.c.h.b16 %v406
    %v2561 = vunpack.c.l.b16 %v407
    %v2562 = vunpack.c.h.b16 %v407
    %v2563 = vunpack.c.l.b16 %v408
    %v2564 = vunpack.c.h.b16 %v408
    %v2565 = vunpack.c.l.b16 %v409
    %v2566 = vunpack.c.h.b16 %v409
    %v2567 = vunpack.c.l.b16 %v410
    %v2568 = vunpack.c.h.b16 %v410
    %v2569 = vunpack.c.l.b16 %v411
    %v2570 = vunpack.c.h.b16 %v411
    %v2571 = vunpack.c.l.b16 %v412
    %v2572 = vunpack.c.h.b16 %v412
    %v2573 = vunpack.c.l.b16 %v413
    %v2574 = vunpack.c.h.b16 %v413
    %v2575 = vunpack.c.l.b16 %v414
    %v2576 = vunpack.c.h.b16 %v414
    %v2577 = vunpack.c.l.b16 %v415
    %v2578 = vunpack.c.h.b16 %v415
    %v2579 = vunpack.c.l.b16 %v416
    %v2580 = vunpack.c.h.b16 %v416
    %v2581 = vunpack.c.l.b16 %v417
    %v2582 = vunpack.c.h.b16 %v417
    %v2583 = vunpack.c.l.b16 %v418
    %v2584 = vunpack.c.h.b16 %v418
    %v2585 = vunpack.c.l.b16 %v419
    %v2586 = vunpack.c.h.b16 %v419
    %v2587 = vunpack.c.l.b16 %v420
    %v2588 = vunpack.c.h.b16 %v420
    %v2589 = vunpack.c.l.b16 %v421
    %v2590 = vunpack.c.h.b16 %v421
    %v2591 = vunpack.c.l.b16 %v422
    %v2592 = vunpack.c.h.b16 %v422
    %v2593 = vunpack.c.l.b16 %v423
    %v2594 = vunpack.c.h.b16 %v423
    %v2595 = vunpack.c.l.b16 %v424
    %v2596 = vunpack.c.h.b16 %v424
    %v2597 = vunpack.c.l.b16 %v425
    %v2598 = vunpack.c.h.b16 %v425
    %v2599 = vunpack.c.l.b16 %v426
    %v2600 = vunpack.c.h.b16 %v426
    %v2601 = vunpack.c.l.b16 %v427
    %v2602 = vunpack.c.h.b16 %v427
    %v2603 = vunpack.c.l.b16 %v428
    %v2604 = vunpack.c.h.b16 %v428
    %v2605 = vunpack.c.l.b16 %v429
    %v2606 = vunpack.c.h.b16 %v429
    %v2607 = vunpack.c.l.b16 %v430
    %v2608 = vunpack.c.h.b16 %v430
    %v2609 = vunpack.c.l.b16 %v431
    %v2610 = vunpack.c.h.b16 %v431
    %v2611 = vunpack.c.l.b16 %v432
    %v2612 = vunpack.c.h.b16 %v432
    %v2613 = vunpack.c.l.b16 %v433
    %v2614 = vunpack.c.h.b16 %v433
    %v2615 = vunpack.c.l.b16 %v434
    %v2616 = vunpack.c.h.b16 %v434
    %v2617 = vunpack.c.l.b16 %v435
    %v2618 = vunpack.c.h.b16 %v435
    %v2619 = vunpack.c.l.b16 %v436
    %v2620 = vunpack.c.h.b16 %v436
    %v2621 = vunpack.c.l.b16 %v437
    %v2622 = vunpack.c.h.b16 %v437
    %v2623 = vunpack.c.l.b16 %v438
    %v2624 = vunpack.c.h.b16 %v438
    %v2625 = vunpack.c.l.b16 %v439
    %v2626 = vunpack.c.h.b16 %v439
    %v2627 = vunpack.c.l.b16 %v440
    %v2628 = vunpack.c.h.b16 %v440
    %v2629 = vunpack.c.l.b16 %v441
    %v2630 = vunpack.c.h.b16 %v441
    %v2631 = vunpack.c.l.b16 %v442
    %v2632 = vunpack.c.h.b16 %v442
    %v2633 = vunpack.c.l.b16 %v443
    %v2634 = vunpack.c.h.b16 %v443
    %v2635 = vunpack.c.l.b16 %v444
    %v2636 = vunpack.c.h.b16 %v444
    %v2637 = vunpack.c.l.b16 %v445
    %v2638 = vunpack.c.h.b16 %v445
    %v2639 = vunpack.c.l.b16 %v446
    %v2640 = vunpack.c.h.b16 %v446
    %v2641 = vunpack.c.l.b16 %v447
    %v2642 = vunpack.c.h.b16 %v447
    %v2643 = vunpack.c.l.b16 %v448
    %v2644 = vunpack.c.h.b16 %v448
    %v2645 = vunpack.c.l.b16 %v449
    %v2646 = vunpack.c.h.b16 %v449
    %v2647 = vunpack.c.l.b16 %v450
    %v2648 = vunpack.c.h.b16 %v450
    %v2649 = vunpack.c.l.b16 %v451
    %v2650 = vunpack.c.h.b16 %v451
    %v2651 = vunpack.c.l.b16 %v452
    %v2652 = vunpack.c.h.b16 %v452
    %v2653 = vunpack.c.l.b16 %v453
    %v2654 = vunpack.c.h.b16 %v453
    %v2655 = vunpack.c.l.b16 %v454
    %v2656 = vunpack.c.h.b16 %v454
    %v2657 = vunpack.c.l.b16 %v455
    %v2658 = vunpack.c.h.b16 %v455
    %v2659 = vunpack.c.l.b16 %v456
    %v2660 = vunpack.c.h.b16 %v456
    %v2661 = vunpack.c.l.b16 %v457
    %v2662 = vunpack.c.h.b16 %v457
    %v2663 = vunpack.c.l.b16 %v458
    %v2664 = vunpack.c.h.b16 %v458
    %v2665 = vunpack.c.l.b16 %v459
    %v2666 = vunpack.c.h.b16 %v459
    %v2667 = vunpack.c.l.b16 %v460
    %v2668 = vunpack.c.h.b16 %v460
    %v2669 = vunpack.c.l.b16 %v461
    %v2670 = vunpack.c.h.b16 %v461
    %v2671 = vunpack.c.l.b16 %v462
    %v2672 = vunpack.c.h.b16 %v462
    %v2673 = vunpack.c.l.b16 %v463
    %v2674 = vunpack.c.h.b16 %v463
    %v2675 = vunpack.c.l.b16 %v464
    %v2676 = vunpack.c.h.b16 %v464
    %v2677 = vunpack.c.l.b16 %v465
    %v2678 = vunpack.c.h.b16 %v465
    %v2679 = vunpack.c.l.b16 %v466
    %v2680 = vunpack.c.h.b16 %v466
    %v2681 = vunpack.c.l.b16 %v467
    %v2682 = vunpack.c.h.b16 %v467
    %v2683 = vunpack.c.l.b16 %v468
    %v2684 = vunpack.c.h.b16 %v468
    %v2685 = vunpack.c.l.b16 %v469
    %v2686 = vunpack.c.h.b16 %v469
    %v2687 = vunpack.c.l.b16 %v470
    %v2688 = vunpack.c.h.b16 %v470
    %v2689 = vunpack.c.l.b16 %v471
    %v2690 = vunpack.c.h.b16 %v471
    %v2691 = vunpack.c.l.b16 %v472
    %v2692 = vunpack.c.h.b16 %v472
    %v2693 = vunpack.c.l.b16 %v473
    %v2694 = vunpack.c.h.b16 %v473
    %v2695 = vunpack.c.l.b16 %v474
    %v2696 = vunpack.c.h.b16 %v474
    %v2697 = vunpack.c.l.b16 %v475
    %v2698 = vunpack.c.h.b16 %v475
    %v2699 = vunpack.c.l.b16 %v476
    %v2700 = vunpack.c.h.b16 %v476
    %v2701 = vunpack.c.l.b16 %v477
    %v2702 = vunpack.c.h.b16 %v477
    %v2703 = vunpack.c.l.b16 %v478
    %v2704 = vunpack.c.h.b16 %v478
    %v2705 = vunpack.c.l.b16 %v479
    %v2706 = vunpack.c.h.b16 %v479
    %v2707 = vunpack.c.l.b16 %v480
    %v2708 = vunpack.c.h.b16 %v480
    %v2709 = vunpack.c.l.b16 %v481
    %v2710 = vunpack.c.h.b16 %v481
    %v2711 = vunpack.c.l.b16 %v482
    %v2712 = vunpack.c.h.b16 %v482
    %v2713 = vunpack.c.l.b16 %v483
    %v2714 = vunpack.c.h.b16 %v483
    %v2715 = vunpack.c.l.b16 %v484
    %v2716 = vunpack.c.h.b16 %v484
    %v2717 = vunpack.c.l.b16 %v485
    %v2718 = vunpack.c.h.b16 %v485
    %v2719 = vunpack.c.l.b16 %v486
    %v2720 = vunpack.c.h.b16 %v486
    %v2721 = vunpack.c.l.b16 %v487
    %v2722 = vunpack.c.h.b16 %v487
    %v2723 = vunpack.c.l.b16 %v488
    %v2724 = vunpack.c.h.b16 %v488
    %v2725 = vunpack.c.l.b16 %v489
    %v2726 = vunpack.c.h.b16 %v489
    %v2727 = vunpack.c.l.b16 %v490
    %v2728 = vunpack.c.h.b16 %v490
    %v2729 = vunpack.c.l.b16 %v491
    %v2730 = vunpack.c.h.b16 %v491
    %v2731 = vunpack.c.l.b16 %v492
    %v2732 = vunpack.c.h.b16 %v492
    %v2733 = vunpack.c.l.b16 %v493
    %v2734 = vunpack.c.h.b16 %v493
    %v2735 = vunpack.c.l.b16 %v494
    %v2736 = vunpack.c.h.b16 %v494
    %v2737 = vunpack.c.l.b16 %v495
    %v2738 = vunpack.c.h.b16 %v495
    %v2739 = vunpack.c.l.b16 %v496
    %v2740 = vunpack.c.h.b16 %v496
    %v2741 = vunpack.c.l.b16 %v497
    %v2742 = vunpack.c.h.b16 %v497
    %v2743 = vunpack.c.l.b16 %v498
    %v2744 = vunpack.c.h.b16 %v498
    %v2745 = vunpack.c.l.b16 %v499
    %v2746 = vunpack.c.h.b16 %v499
    %v2747 = vunpack.c.l.b16 %v500
    %v2748 = vunpack.c.h.b16 %v500
    %v2749 = vunpack.c.l.b16 %v501
    %v2750 = vunpack.c.h.b16 %v501
    %v2751 = vunpack.c.l.b16 %v502
    %v2752 = vunpack.c.h.b16 %v502
    %v2753 = vunpack.c.l.b16 %v503
    %v2754 = vunpack.c.h.b16 %v503
    %v2755 = vunpack.c.l.b16 %v504
    %v2756 = vunpack.c.h.b16 %v504
    %v2757 = vunpack.c.l.b16 %v505
    %v2758 = vunpack.c.h.b16 %v505
    %v2759 = vunpack.c.l.b16 %v506
    %v2760 = vunpack.c.h.b16 %v506
    %v2761 = vunpack.c.l.b16 %v507
    %v2762 = vunpack.c.h.b16 %v507
    %v2763 = vunpack.c.l.b16 %v508
    %v2764 = vunpack.c.h.b16 %v508
    %v2765 = vunpack.c.l.b16 %v509
    %v2766 = vunpack.c.h.b16 %v509
    %v2767 = vunpack.c.l.b16 %v510
    %v2768 = vunpack.c.h.b16 %v510
    %v2769 = vunpack.c.l.b16 %v511
    %v2770 = vunpack.c.h.b16 %v511
    %v2771 = vunpack.c.l.b16 %v512
    %v2772 = vunpack.c.h.b16 %v512
    %v2773 = vunpack.c.l.b16 %v513
    %v2774 = vunpack.c.h.b16 %v513
    %v2775 = vunpack.c.l.b16 %v514
    %v2776 = vunpack.c.h.b16 %v514
    %v2777 = vunpack.c.l.b16 %v515
    %v2778 = vunpack.c.h.b16 %v515
    %v2779 = vunpack.c.l.b16 %v516
    %v2780 = vunpack.c.h.b16 %v516
    %v2781 = vunpack.c.l.b16 %v517
    %v2782 = vunpack.c.h.b16 %v517
    %v2783 = vunpack.c.l.b16 %v518
    %v2784 = vunpack.c.h.b16 %v518
    %v2785 = vunpack.c.l.b16 %v519
    %v2786 = vunpack.c.h.b16 %v519
    %v2787 = vunpack.c.l.b16 %v520
    %v2788 = vunpack.c.h.b16 %v520
    %v2789 = vunpack.c.l.b16 %v521
    %v2790 = vunpack.c.h.b16 %v521
    %v2791 = vunpack.c.l.b16 %v522
    %v2792 = vunpack.c.h.b16 %v522
    %v2793 = vunpack.c.l.b16 %v523
    %v2794 = vunpack.c.h.b16 %v523
    %v2795 = vunpack.c.l.b16 %v524
    %v2796 = vunpack.c.h.b16 %v524
    %v2797 = vunpack.c.l.b16 %v525
    %v2798 = vunpack.c.h.b16 %v525
    %v2799 = vunpack.c.l.b16 %v526
    %v2800 = vunpack.c.h.b16 %v526
    %v2801 = vunpack.c.l.b16 %v527
    %v2802 = vunpack.c.h.b16 %v527
    %v2803 = vunpack.c.l.b16 %v528
    %v2804 = vunpack.c.h.b16 %v528
    %v2805 = vunpack.c.l.b16 %v529
    %v2806 = vunpack.c.h.b16 %v529
    %v2807 = vunpack.c.l.b16 %v530
    %v2808 = vunpack.c.h.b16 %v530
    %v2809 = vunpack.c.l.b16 %v531
    %v2810 = vunpack.c.h.b16 %v531
    %v2811 = vunpack.c.l.b16 %v532
    %v2812 = vunpack.c.h.b16 %v532
    %v2813 = vunpack.c.l.b16 %v533
    %v2814 = vunpack.c.h.b16 %v533
    %v2815 = vunpack.c.l.b16 %v534
    %v2816 = vunpack.c.h.b16 %v534
    %v2817 = vunpack.c.l.b16 %v535
    %v2818 = vunpack.c.h.b16 %v535
    %v2819 = vunpack.c.l.b16 %v536
    %v2820 = vunpack.c.h.b16 %v536
    %v2821 = vunpack.c.l.b16 %v537
    %v2822 = vunpack.c.h.b16 %v537
    %v2823 = vunpack.c.l.b16 %v538
    %v2824 = vunpack.c.h.b16 %v538
    %v2825 = vunpack.c.l.b16 %v539
    %v2826 = vunpack.c.h.b16 %v539
    %v2827 = vunpack.c.l.b16 %v540
    %v2828 = vunpack.c.h.b16 %v540
    %v2829 = vunpack.c.l.b16 %v541
    %v2830 = vunpack.c.h.b16 %v541
    %v2831 = vunpack.c.l.b16 %v542
    %v2832 = vunpack.c.h.b16 %v542
    %v2833 = vunpack.c.l.b16 %v543
    %v2834 = vunpack.c.h.b16 %v543
    %v2835 = vunpack.c.l.b16 %v544
    %v2836 = vunpack.c.h.b16 %v544
    %v2837 = vunpack.c.l.b16 %v545
    %v2838 = vunpack.c.h.b16 %v545
    %v2839 = vunpack.c.l.b16 %v546
    %v2840 = vunpack.c.h.b16 %v546
    %v2841 = vunpack.c.l.b16 %v547
    %v2842 = vunpack.c.h.b16 %v547
    %v2843 = vunpack.c.l.b16 %v548
    %v2844 = vunpack.c.h.b16 %v548
    %v2845 = vunpack.c.l.b16 %v549
    %v2846 = vunpack.c.h.b16 %v549
    %v2847 = vunpack.c.l.b16 %v550
    %v2848 = vunpack.c.h.b16 %v550
    %v2849 = vunpack.c.l.b16 %v551
    %v2850 = vunpack.c.h.b16 %v551
    %v2851 = vunpack.c.l.b16 %v552
    %v2852 = vunpack.c.h.b16 %v552
    %v2853 = vunpack.c.l.b16 %v553
    %v2854 = vunpack.c.h.b16 %v553
    %v2855 = vunpack.c.l.b16 %v554
    %v2856 = vunpack.c.h.b16 %v554
    %v2857 = vunpack.c.l.b16 %v555
    %v2858 = vunpack.c.h.b16 %v555
    %v2859 = vunpack.c.l.b16 %v556
    %v2860 = vunpack.c.h.b16 %v556
    %v2861 = vunpack.c.l.b16 %v557
    %v2862 = vunpack.c.h.b16 %v557
    %v2863 = vunpack.c.l.b16 %v558
    %v2864 = vunpack.c.h.b16 %v558
    %v2865 = vunpack.c.l.b16 %v559
    %v2866 = vunpack.c.h.b16 %v559
    %v2867 = vunpack.c.l.b16 %v560
    %v2868 = vunpack.c.h.b16 %v560
    %v2869 = vunpack.c.l.b16 %v561
    %v2870 = vunpack.c.h.b16 %v561
    %v2871 = vunpack.c.l.b16 %v562
    %v2872 = vunpack.c.h.b16 %v562
    %v2873 = vunpack.c.l.b16 %v563
    %v2874 = vunpack.c.h.b16 %v563
    %v2875 = vunpack.c.l.b16 %v564
    %v2876 = vunpack.c.h.b16 %v564
    %v2877 = vunpack.c.l.b16 %v565
    %v2878 = vunpack.c.h.b16 %v565
    %v2879 = vunpack.c.l.b16 %v566
    %v2880 = vunpack.c.h.b16 %v566
    %v2881 = vunpack.c.l.b16 %v567
    %v2882 = vunpack.c.h.b16 %v567
    %v2883 = vunpack.c.l.b16 %v568
    %v2884 = vunpack.c.h.b16 %v568
    %v2885 = vunpack.c.l.b16 %v569
    %v2886 = vunpack.c.h.b16 %v569
    %v2887 = vunpack.c.l.b16 %v570
    %v2888 = vunpack.c.h.b16 %v570
    %v2889 = vunpack.c.l.b16 %v571
    %v2890 = vunpack.c.h.b16 %v571
    %v2891 = vunpack.c.l.b16 %v572
    %v2892 = vunpack.c.h.b16 %v572
    %v2893 = vunpack.c.l.b16 %v573
    %v2894 = vunpack.c.h.b16 %v573
    %v2895 = vunpack.c.l.b16 %v574
    %v2896 = vunpack.c.h.b16 %v574
    %v2897 = vunpack.c.l.b16 %v575
    %v2898 = vunpack.c.h.b16 %v575
    %v2899 = vunpack.c.l.b16 %v576
    %v2900 = vunpack.c.h.b16 %v576
    %v2901 = vunpack.c.l.b16 %v577
    %v2902 = vunpack.c.h.b16 %v577
    %v2903 = vunpack.c.l.b16 %v578
    %v2904 = vunpack.c.h.b16 %v578
    %v2905 = vunpack.c.l.b16 %v579
    %v2906 = vunpack.c.h.b16 %v579
    %v2907 = vunpack.c.l.b16 %v580
    %v2908 = vunpack.c.h.b16 %v580
    %v2909 = vunpack.c.l.b16 %v581
    %v2910 = vunpack.c.h.b16 %v581
    %v2911 = vunpack.c.l.b16 %v582
    %v2912 = vunpack.c.h.b16 %v582
    %v2913 = vunpack.c.l.b16 %v583
    %v2914 = vunpack.c.h.b16 %v583
    %v2915 = vunpack.c.l.b16 %v584
    %v2916 = vunpack.c.h.b16 %v584
    %v2917 = vunpack.c.l.b16 %v585
    %v2918 = vunpack.c.h.b16 %v585
    %v2919 = vunpack.c.l.b16 %v586
    %v2920 = vunpack.c.h.b16 %v586
    %v2921 = vunpack.c.l.b16 %v587
    %v2922 = vunpack.c.h.b16 %v587
    %v2923 = vunpack.c.l.b16 %v588
    %v2924 = vunpack.c.h.b16 %v588
    %v2925 = vunpack.c.l.b16 %v589
    %v2926 = vunpack.c.h.b16 %v589
    %v2927 = vunpack.c.l.b16 %v590
    %v2928 = vunpack.c.h.b16 %v590
    %v2929 = vunpack.c.l.b16 %v591
    %v2930 = vunpack.c.h.b16 %v591
    %v2931 = vunpack.c.l.b16 %v592
    %v2932 = vunpack.c.h.b16 %v592
    %v2933 = vunpack.c.l.b16 %v593
    %v2934 = vunpack.c.h.b16 %v593
    %v2935 = vunpack.c.l.b16 %v594
    %v2936 = vunpack.c.h.b16 %v594
    %v2937 = vunpack.c.l.b16 %v595
    %v2938 = vunpack.c.h.b16 %v595
    %v2939 = vunpack.c.l.b16 %v596
    %v2940 = vunpack.c.h.b16 %v596
    %v2941 = vunpack.c.l.b16 %v597
    %v2942 = vunpack.c.h.b16 %v597
    %v2943 = vunpack.c.l.b16 %v598
    %v2944 = vunpack.c.h.b16 %v598
    %v2945 = vunpack.c.l.b16 %v599
    %v2946 = vunpack.c.h.b16 %v599
    %v2947 = vunpack.c.l.b16 %v600
    %v2948 = vunpack.c.h.b16 %v600
    %v2949 = vunpack.c.l.b16 %v601
    %v2950 = vunpack.c.h.b16 %v601
    %v2951 = vunpack.c.l.b16 %v602
    %v2952 = vunpack.c.h.b16 %v602
    %v2953 = vunpack.c.l.b16 %v603
    %v2954 = vunpack.c.h.b16 %v603
    %v2955 = vunpack.c.l.b16 %v604
    %v2956 = vunpack.c.h.b16 %v604
    %v2957 = vunpack.c.l.b16 %v605
    %v2958 = vunpack.c.h.b16 %v605
    %v2959 = vunpack.c.l.b16 %v606
    %v2960 = vunpack.c.h.b16 %v606
    %v2961 = vunpack.c.l.b16 %v607
    %v2962 = vunpack.c.h.b16 %v607
    %v2963 = vunpack.c.l.b16 %v608
    %v2964 = vunpack.c.h.b16 %v608
    %v2965 = vunpack.c.l.b16 %v609
    %v2966 = vunpack.c.h.b16 %v609
    %v2967 = vunpack.c.l.b16 %v610
    %v2968 = vunpack.c.h.b16 %v610
    %v2969 = vunpack.c.l.b16 %v611
    %v2970 = vunpack.c.h.b16 %v611
    %v2971 = vunpack.c.l.b16 %v612
    %v2972 = vunpack.c.h.b16 %v612
    %v2973 = vunpack.c.l.b16 %v613
    %v2974 = vunpack.c.h.b16 %v613
    %v2975 = vunpack.c.l.b16 %v614
    %v2976 = vunpack.c.h.b16 %v614
    %v2977 = vunpack.c.l.b16 %v615
    %v2978 = vunpack.c.h.b16 %v615
    %v2979 = vunpack.c.l.b16 %v616
    %v2980 = vunpack.c.h.b16 %v616
    %v2981 = vunpack.c.l.b16 %v617
    %v2982 = vunpack.c.h.b16 %v617
    %v2983 = vunpack.c.l.b16 %v618
    %v2984 = vunpack.c.h.b16 %v618
    %v2985 = vunpack.c.l.b16 %v619
    %v2986 = vunpack.c.h.b16 %v619
    %v2987 = vunpack.c.l.b16 %v620
    %v2988 = vunpack.c.h.b16 %v620
    %v2989 = vunpack.c.l.b16 %v621
    %v2990 = vunpack.c.h.b16 %v621
    %v2991 = vunpack.c.l.b16 %v622
    %v2992 = vunpack.c.h.b16 %v622
    %v2993 = vunpack.c.l.b16 %v623
    %v2994 = vunpack.c.h.b16 %v623
    %v2995 = vunpack.c.l.b16 %v624
    %v2996 = vunpack.c.h.b16 %v624
    %v2997 = vunpack.c.l.b16 %v625
    %v2998 = vunpack.c.h.b16 %v625
    %v2999 = vunpack.c.l.b16 %v626
    %v3000 = vunpack.c.h.b16 %v626
    %v3001 = vunpack.c.l.b16 %v627
    %v3002 = vunpack.c.h.b16 %v627
    %v3003 = vunpack.c.l.b16 %v628
    %v3004 = vunpack.c.h.b16 %v628
    %v3005 = vunpack.c.l.b16 %v629
    %v3006 = vunpack.c.h.b16 %v629
    %v3007 = vunpack.c.l.b16 %v630
    %v3008 = vunpack.c.h.b16 %v630
    %v3009 = vunpack.c.l.b16 %v631
    %v3010 = vunpack.c.h.b16 %v631
    %v3011 = vunpack.c.l.b16 %v632
    %v3012 = vunpack.c.h.b16 %v632
    %v3013 = vunpack.c.l.b16 %v633
    %v3014 = vunpack.c.h.b16 %v633
    %v3015 = vunpack.c.l.b16 %v634
    %v3016 = vunpack.c.h.b16 %v634
    %v3017 = vunpack.c.l.b16 %v635
    %v3018 = vunpack.c.h.b16 %v635
    %v3019 = vunpack.c.l.b16 %v636
    %v3020 = vunpack.c.h.b16 %v636
    %v3021 = vunpack.c.l.b16 %v637
    %v3022 = vunpack.c.h.b16 %v637
    %v3023 = vunpack.c.l.b16 %v638
    %v3024 = vunpack.c.h.b16 %v638
    %v3025 = vunpack.c.l.b16 %v639
    %v3026 = vunpack.c.h.b16 %v639
    %v3027 = vunpack.c.l.b16 %v640
    %v3028 = vunpack.c.h.b16 %v640
    %v3029 = vunpack.c.l.b16 %v641
    %v3030 = vunpack.c.h.b16 %v641
    %v3031 = vunpack.c.l.b16 %v642
    %v3032 = vunpack.c.h.b16 %v642
    %v3033 = vunpack.c.l.b16 %v643
    %v3034 = vunpack.c.h.b16 %v643
    %v3035 = vunpack.c.l.b16 %v644
    %v3036 = vunpack.c.h.b16 %v644
    %v3037 = vunpack.c.l.b16 %v645
    %v3038 = vunpack.c.h.b16 %v645
    %v3039 = vunpack.c.l.b16 %v646
    %v3040 = vunpack.c.h.b16 %v646
    %v3041 = vunpack.c.l.b16 %v647
    %v3042 = vunpack.c.h.b16 %v647
    %v3043 = vunpack.c.l.b16 %v648
    %v3044 = vunpack.c.h.b16 %v648
    %v3045 = vunpack.c.l.b16 %v649
    %v3046 = vunpack.c.h.b16 %v649
    %v3047 = vunpack.c.l.b16 %v650
    %v3048 = vunpack.c.h.b16 %v650
    %v3049 = vunpack.c.l.b16 %v651
    %v3050 = vunpack.c.h.b16 %v651
    %v3051 = vunpack.c.l.b16 %v652
    %v3052 = vunpack.c.h.b16 %v652
    %v3053 = vunpack.c.l.b16 %v653
    %v3054 = vunpack.c.h.b16 %v653
    %v3055 = vunpack.c.l.b16 %v654
    %v3056 = vunpack.c.h.b16 %v654
    %v3057 = vunpack.c.l.b16 %v655
    %v3058 = vunpack.c.h.b16 %v655
    %v3059 = vunpack.c.l.b16 %v656
    %v3060 = vunpack.c.h.b16 %v656
    %v3061 = vunpack.c.l.b16 %v657
    %v3062 = vunpack.c.h.b16 %v657
    %v3063 = vunpack.c.l.b16 %v658
    %v3064 = vunpack.c.h.b16 %v658
    %v3065 = vunpack.c.l.b16 %v659
    %v3066 = vunpack.c.h.b16 %v659
    %v3067 = vunpack.c.l.b16 %v660
    %v3068 = vunpack.c.h.b16 %v660
    %v3069 = vunpack.c.l.b16 %v661
    %v3070 = vunpack.c.h.b16 %v661
    %v3071 = vunpack.c.l.b16 %v662
    %v3072 = vunpack.c.h.b16 %v662
    %v3073 = vunpack.c.l.b16 %v663
    %v3074 = vunpack.c.h.b16 %v663
    %v3075 = vunpack.c.l.b16 %v664
    %v3076 = vunpack.c.h.b16 %v664
    %v3077 = vunpack.c.l.b16 %v665
    %v3078 = vunpack.c.h.b16 %v665
    %v3079 = vunpack.c.l.b16 %v666
    %v3080 = vunpack.c.h.b16 %v666
    %v3081 = vunpack.c.l.b16 %v667
    %v3082 = vunpack.c.h.b16 %v667
    %v3083 = vunpack.c.l.b16 %v668
    %v3084 = vunpack.c.h.b16 %v668
    %v3085 = vunpack.c.l.b16 %v669
    %v3086 = vunpack.c.h.b16 %v669
    %v3087 = vunpack.c.l.b16 %v670
    %v3088 = vunpack.c.h.b16 %v670
    %v3089 = vunpack.c.l.b16 %v671
    %v3090 = vunpack.c.h.b16 %v671
    %v3091 = vunpack.c.l.b16 %v672
    %v3092 = vunpack.c.h.b16 %v672
    %v3093 = vunpack.c.l.b16 %v673
    %v3094 = vunpack.c.h.b16 %v673
    %v3095 = vunpack.c.l.b16 %v674
    %v3096 = vunpack.c.h.b16 %v674
    %v3097 = vunpack.c.l.b16 %v675
    %v3098 = vunpack.c.h.b16 %v675
    %v3099 = vunpack.c.l.b16 %v676
    %v3100 = vunpack.c.h.b16 %v676
    %v3101 = vunpack.c.l.b16 %v677
    %v3102 = vunpack.c.h.b16 %v677
    %v3103 = vunpack.c.l.b16 %v678
    %v3104 = vunpack.c.h.b16 %v678
    %v3105 = vunpack.c.l.b16 %v679
    %v3106 = vunpack.c.h.b16 %v679
    %v3107 = vunpack.c.l.b16 %v680
    %v3108 = vunpack.c.h.b16 %v680
    %v3109 = vunpack.c.l.b16 %v681
    %v3110 = vunpack.c.h.b16 %v681
    %v3111 = vunpack.c.l.b16 %v682
    %v3112 = vunpack.c.h.b16 %v682
    %v3113 = vunpack.c.l.b16 %v683
    %v3114 = vunpack.c.h.b16 %v683
    %v3115 = vunpack.c.l.b16 %v684
    %v3116 = vunpack.c.h.b16 %v684
    %v3117 = vunpack.c.l.b16 %v685
    %v3118 = vunpack.c.h.b16 %v685
    %v3119 = vunpack.c.l.b16 %v686
    %v3120 = vunpack.c.h.b16 %v686
    %v3121 = vunpack.c.l.b16 %v687
    %v3122 = vunpack.c.h.b16 %v687
    %v3123 = vunpack.c.l.b16 %v688
    %v3124 = vunpack.c.h.b16 %v688
    %v3125 = vunpack.c.l.b16 %v689
    %v3126 = vunpack.c.h.b16 %v689
    %v3127 = vunpack.c.l.b16 %v690
    %v3128 = vunpack.c.h.b16 %v690
    %v3129 = vunpack.c.l.b16 %v691
    %v3130 = vunpack.c.h.b16 %v691
    %v3131 = vunpack.c.l.b16 %v692
    %v3132 = vunpack.c.h.b16 %v692
    %v3133 = vunpack.c.l.b16 %v693
    %v3134 = vunpack.c.h.b16 %v693
    %v3135 = vunpack.c.l.b16 %v694
    %v3136 = vunpack.c.h.b16 %v694
    %v3137 = vunpack.c.l.b16 %v695
    %v3138 = vunpack.c.h.b16 %v695
    %v3139 = vunpack.c.l.b16 %v696
    %v3140 = vunpack.c.h.b16 %v696
    %v3141 = vunpack.c.l.b16 %v697
    %v3142 = vunpack.c.h.b16 %v697
    %v3143 = vunpack.c.l.b16 %v698
    %v3144 = vunpack.c.h.b16 %v698
    %v3145 = vunpack.c.l.b16 %v699
    %v3146 = vunpack.c.h.b16 %v699
    %v3147 = vunpack.c.l.b16 %v700
    %v3148 = vunpack.c.h.b16 %v700
    %v3149 = vunpack.c.l.b16 %v701
    %v3150 = vunpack.c.h.b16 %v701
    %v3151 = vunpack.c.l.b16 %v702
    %v3152 = vunpack.c.h.b16 %v702
    %v3153 = vunpack.c.l.b16 %v703
    %v3154 = vunpack.c.h.b16 %v703
    %v3155 = vunpack.c.l.b16 %v704
    %v3156 = vunpack.c.h.b16 %v704
    %v3157 = vunpack.c.l.b16 %v705
    %v3158 = vunpack.c.h.b16 %v705
    %v3159 = vunpack.c.l.b16 %v706
    %v3160 = vunpack.c.h.b16 %v706
    %v3161 = vunpack.c.l.b16 %v707
    %v3162 = vunpack.c.h.b16 %v707
    %v3163 = vunpack.c.l.b16 %v708
    %v3164 = vunpack.c.h.b16 %v708
    %v3165 = vunpack.c.l.b16 %v709
    %v3166 = vunpack.c.h.b16 %v709
    %v3167 = vunpack.c.l.b16 %v710
    %v3168 = vunpack.c.h.b16 %v710
    %v3169 = vunpack.c.l.b16 %v711
    %v3170 = vunpack.c.h.b16 %v711
    %v3171 = vunpack.c.l.b16 %v712
    %v3172 = vunpack.c.h.b16 %v712
    %v3173 = vunpack.c.l.b16 %v713
    %v3174 = vunpack.c.h.b16 %v713
    %v3175 = vunpack.c.l.b16 %v714
    %v3176 = vunpack.c.h.b16 %v714
    %v3177 = vunpack.c.l.b16 %v715
    %v3178 = vunpack.c.h.b16 %v715
    %v3179 = vunpack.c.l.b16 %v716
    %v3180 = vunpack.c.h.b16 %v716
    %v3181 = vunpack.c.l.b16 %v717
    %v3182 = vunpack.c.h.b16 %v717
    %v3183 = vunpack.c.l.b16 %v718
    %v3184 = vunpack.c.h.b16 %v718
    %v3185 = vunpack.c.l.b16 %v719
    %v3186 = vunpack.c.h.b16 %v719
    %v3187 = vunpack.c.l.b16 %v720
    %v3188 = vunpack.c.h.b16 %v720
    %v3189 = vunpack.c.l.b16 %v721
    %v3190 = vunpack.c.h.b16 %v721
    %v3191 = vunpack.c.l.b16 %v722
    %v3192 = vunpack.c.h.b16 %v722
    %v3193 = vunpack.c.l.b16 %v723
    %v3194 = vunpack.c.h.b16 %v723
    %v3195 = vunpack.c.l.b16 %v724
    %v3196 = vunpack.c.h.b16 %v724
    %v3197 = vunpack.c.l.b16 %v725
    %v3198 = vunpack.c.h.b16 %v725
    %v3199 = vunpack.c.l.b16 %v726
    %v3200 = vunpack.c.h.b16 %v726
    %v3201 = vunpack.c.l.b16 %v727
    %v3202 = vunpack.c.h.b16 %v727
    %v3203 = vunpack.c.l.b16 %v728
    %v3204 = vunpack.c.h.b16 %v728
    %v3205 = vunpack.c.l.b16 %v729
    %v3206 = vunpack.c.h.b16 %v729
    %v3207 = vunpack.c.l.b16 %v730
    %v3208 = vunpack.c.h.b16 %v730
    %v3209 = vunpack.c.l.b16 %v731
    %v3210 = vunpack.c.h.b16 %v731
    %v3211 = vunpack.c.l.b16 %v732
    %v3212 = vunpack.c.h.b16 %v732
    %v3213 = vunpack.c.l.b16 %v733
    %v3214 = vunpack.c.h.b16 %v733
    %v3215 = vunpack.c.l.b16 %v734
    %v3216 = vunpack.c.h.b16 %v734
    %v3217 = vunpack.c.l.b16 %v735
    %v3218 = vunpack.c.h.b16 %v735
    %v3219 = vunpack.c.l.b16 %v736
    %v3220 = vunpack.c.h.b16 %v736
    %v3221 = vunpack.c.l.b16 %v737
    %v3222 = vunpack.c.h.b16 %v737
    %v3223 = vunpack.c.l.b16 %v738
    %v3224 = vunpack.c.h.b16 %v738
    %v3225 = vunpack.c.l.b16 %v739
    %v3226 = vunpack.c.h.b16 %v739
    %v3227 = vunpack.c.l.b16 %v740
    %v3228 = vunpack.c.h.b16 %v740
    %v3229 = vunpack.c.l.b16 %v741
    %v3230 = vunpack.c.h.b16 %v741
    %v3231 = vunpack.c.l.b16 %v742
    %v3232 = vunpack.c.h.b16 %v742
    %v3233 = vunpack.c.l.b16 %v743
    %v3234 = vunpack.c.h.b16 %v743
    %v3235 = vunpack.c.l.b16 %v744
    %v3236 = vunpack.c.h.b16 %v744
    %v3237 = vunpack.c.l.b16 %v745
    %v3238 = vunpack.c.h.b16 %v745
    %v3239 = vunpack.c.l.b16 %v746
    %v3240 = vunpack.c.h.b16 %v746
    %v3241 = vunpack.c.l.b16 %v747
    %v3242 = vunpack.c.h.b16 %v747
    %v3243 = vunpack.c.l.b16 %v748
    %v3244 = vunpack.c.h.b16 %v748
    %v3245 = vunpack.c.l.b16 %v749
    %v3246 = vunpack.c.h.b16 %v749
    %v3247 = vunpack.c.l.b16 %v750
    %v3248 = vunpack.c.h.b16 %v750
    %v3249 = vunpack.c.l.b16 %v751
    %v3250 = vunpack.c.h.b16 %v751
    %v3251 = vunpack.c.l.b16 %v752
    %v3252 = vunpack.c.h.b16 %v752
    %v3253 = vunpack.c.l.b16 %v753
    %v3254 = vunpack.c.h.b16 %v753
    %v3255 = vunpack.c.l.b16 %v754
    %v3256 = vunpack.c.h.b16 %v754
    %v3257 = vunpack.c.l.b16 %v755
    %v3258 = vunpack.c.h.b16 %v755
    %v3259 = vunpack.c.l.b16 %v756
    %v3260 = vunpack.c.h.b16 %v756
    %v3261 = vunpack.c.l.b16 %v757
    %v3262 = vunpack.c.h.b16 %v757
    %v3263 = vunpack.c.l.b16 %v758
    %v3264 = vunpack.c.h.b16 %v758
    %v3265 = vunpack.c.l.b16 %v759
    %v3266 = vunpack.c.h.b16 %v759
    %v3267 = vunpack.c.l.b16 %v760
    %v3268 = vunpack.c.h.b16 %v760
    %v3269 = vunpack.c.l.b16 %v761
    %v3270 = vunpack.c.h.b16 %v761
    %v3271 = vunpack.c.l.b16 %v762
    %v3272 = vunpack.c.h.b16 %v762
    %v3273 = vunpack.c.l.b16 %v763
    %v3274 = vunpack.c.h.b16 %v763
    %v3275 = vunpack.c.l.b16 %v764
    %v3276 = vunpack.c.h.b16 %v764
    %v3277 = vunpack.c.l.b16 %v765
    %v3278 = vunpack.c.h.b16 %v765
    %v3279 = vunpack.c.l.b16 %v766
    %v3280 = vunpack.c.h.b16 %v766
    %v3281 = vunpack.c.l.b16 %v767
    %v3282 = vunpack.c.h.b16 %v767
    %v3283 = vunpack.c.l.b16 %v768
    %v3284 = vunpack.c.h.b16 %v768
    %v3285 = vunpack.c.l.b16 %v769
    %v3286 = vunpack.c.h.b16 %v769
    %v3287 = vunpack.c.l.b16 %v770
    %v3288 = vunpack.c.h.b16 %v770
    %v3289 = vunpack.c.l.b16 %v771
    %v3290 = vunpack.c.h.b16 %v771
    %v3291 = vunpack.c.l.b16 %v772
    %v3292 = vunpack.c.h.b16 %v772
    %v3293 = vunpack.c.l.b16 %v773
    %v3294 = vunpack.c.h.b16 %v773
    %v3295 = vunpack.c.l.b16 %v774
    %v3296 = vunpack.c.h.b16 %v774
    %v3297 = vunpack.c.l.b16 %v775
    %v3298 = vunpack.c.h.b16 %v775
    %v3299 = vunpack.c.l.b16 %v776
    %v3300 = vunpack.c.h.b16 %v776
    %v3301 = vunpack.c.l.b16 %v777
    %v3302 = vunpack.c.h.b16 %v777
    %v3303 = vunpack.c.l.b16 %v778
    %v3304 = vunpack.c.h.b16 %v778
    %v3305 = vunpack.c.l.b16 %v779
    %v3306 = vunpack.c.h.b16 %v779
    %v3307 = vunpack.c.l.b16 %v780
    %v3308 = vunpack.c.h.b16 %v780
    %v3309 = vunpack.c.l.b16 %v781
    %v3310 = vunpack.c.h.b16 %v781
    %v3311 = vunpack.c.l.b16 %v782
    %v3312 = vunpack.c.h.b16 %v782
    %v3313 = vunpack.c.l.b16 %v783
    %v3314 = vunpack.c.h.b16 %v783
    %v3315 = vunpack.c.l.b16 %v784
    %v3316 = vunpack.c.h.b16 %v784
    %v3317 = vunpack.c.l.b16 %v785
    %v3318 = vunpack.c.h.b16 %v785
    %v3319 = vunpack.c.l.b16 %v786
    %v3320 = vunpack.c.h.b16 %v786
    %v3321 = vunpack.c.l.b16 %v787
    %v3322 = vunpack.c.h.b16 %v787
    %v3323 = vunpack.c.l.b16 %v788
    %v3324 = vunpack.c.h.b16 %v788
    %v3325 = vunpack.c.l.b16 %v789
    %v3326 = vunpack.c.h.b16 %v789
    %v3327 = vunpack.c.l.b16 %v790
    %v3328 = vunpack.c.h.b16 %v790
    %v3329 = vunpack.c.l.b16 %v791
    %v3330 = vunpack.c.h.b16 %v791
    %v3331 = vunpack.c.l.b16 %v792
    %v3332 = vunpack.c.h.b16 %v792
    %v3333 = vunpack.c.l.b16 %v793
    %v3334 = vunpack.c.h.b16 %v793
    %v3335 = vunpack.c.l.b16 %v794
    %v3336 = vunpack.c.h.b16 %v794
    %v3337 = vunpack.c.l.b16 %v795
    %v3338 = vunpack.c.h.b16 %v795
    %v3339 = vunpack.c.l.b16 %v796
    %v3340 = vunpack.c.h.b16 %v796
    %v3341 = vunpack.c.l.b16 %v797
    %v3342 = vunpack.c.h.b16 %v797
    %v3343 = vunpack.c.l.b16 %v798
    %v3344 = vunpack.c.h.b16 %v798
    %v3345 = vunpack.c.l.b16 %v799
    %v3346 = vunpack.c.h.b16 %v799
    %v3347 = vunpack.c.l.b16 %v800
    %v3348 = vunpack.c.h.b16 %v800
    %v3349 = vunpack.c.l.b16 %v801
    %v3350 = vunpack.c.h.b16 %v801
    %v3351 = vunpack.c.l.b16 %v802
    %v3352 = vunpack.c.h.b16 %v802
    %v3353 = vunpack.c.l.b16 %v803
    %v3354 = vunpack.c.h.b16 %v803
    %v3355 = vunpack.c.l.b16 %v804
    %v3356 = vunpack.c.h.b16 %v804
    %v3357 = vunpack.c.l.b16 %v805
    %v3358 = vunpack.c.h.b16 %v805
    %v3359 = vunpack.c.l.b16 %v806
    %v3360 = vunpack.c.h.b16 %v806
    %v3361 = vunpack.c.l.b16 %v807
    %v3362 = vunpack.c.h.b16 %v807
    %v3363 = vunpack.c.l.b16 %v808
    %v3364 = vunpack.c.h.b16 %v808
    %v3365 = vunpack.c.l.b16 %v809
    %v3366 = vunpack.c.h.b16 %v809
    %v3367 = vunpack.c.l.b16 %v810
    %v3368 = vunpack.c.h.b16 %v810
    %v3369 = vunpack.c.l.b16 %v811
    %v3370 = vunpack.c.h.b16 %v811
    %v3371 = vunpack.c.l.b16 %v812
    %v3372 = vunpack.c.h.b16 %v812
    %v3373 = vunpack.c.l.b16 %v813
    %v3374 = vunpack.c.h.b16 %v813
    %v3375 = vunpack.c.l.b16 %v814
    %v3376 = vunpack.c.h.b16 %v814
    %v3377 = vunpack.c.l.b16 %v815
    %v3378 = vunpack.c.h.b16 %v815
    %v3379 = vpack.c.b16 %v1815, %v1811
    %v3380 = vpack.c.b16 %v1816, %v1812
    %v3381 = vpack.c.b16 %v1817, %v1813
    %v3382 = vpack.c.b16 %v1818, %v1814
    %v3383 = vpack.c.b16 %v1823, %v1819
    %v3384 = vpack.c.b16 %v1824, %v1820
    %v3385 = vpack.c.b16 %v1825, %v1821
    %v3386 = vpack.c.b16 %v1826, %v1822
    %v3387 = vpack.c.b16 %v1831, %v1827
    %v3388 = vpack.c.b16 %v1832, %v1828
    %v3389 = vpack.c.b16 %v1833, %v1829
    %v3390 = vpack.c.b16 %v1834, %v1830
    %v3391 = vpack.c.b16 %v1839, %v1835
    %v3392 = vpack.c.b16 %v1840, %v1836
    %v3393 = vpack.c.b16 %v1841, %v1837
    %v3394 = vpack.c.b16 %v1842, %v1838
    %v3395 = vpack.c.b16 %v1847, %v1843
    %v3396 = vpack.c.b16 %v1848, %v1844
    %v3397 = vpack.c.b16 %v1849, %v1845
    %v3398 = vpack.c.b16 %v1850, %v1846
    %v3399 = vpack.c.b16 %v1855, %v1851
    %v3400 = vpack.c.b16 %v1856, %v1852
    %v3401 = vpack.c.b16 %v1857, %v1853
    %v3402 = vpack.c.b16 %v1858, %v1854
    %v3403 = vpack.c.b16 %v1863, %v1859
    %v3404 = vpack.c.b16 %v1864, %v1860
    %v3405 = vpack.c.b16 %v1865, %v1861
    %v3406 = vpack.c.b16 %v1866, %v1862
    %v3407 = vpack.c.b16 %v1871, %v1867
    %v3408 = vpack.c.b16 %v1872, %v1868
    %v3409 = vpack.c.b16 %v1873, %v1869
    %v3410 = vpack.c.b16 %v1874, %v1870
    %v3411 = vpack.c.b16 %v1879, %v1875
    %v3412 = vpack.c.b16 %v1880, %v1876
    %v3413 = vpack.c.b16 %v1881, %v1877
    %v3414 = vpack.c.b16 %v1882, %v1878
    %v3415 = vpack.c.b16 %v1887, %v1883
    %v3416 = vpack.c.b16 %v1888, %v1884
    %v3417 = vpack.c.b16 %v1889, %v1885
    %v3418 = vpack.c.b16 %v1890, %v1886
    %v3419 = vpack.c.b16 %v1895, %v1891
    %v3420 = vpack.c.b16 %v1896, %v1892
    %v3421 = vpack.c.b16 %v1897, %v1893
    %v3422 = vpack.c.b16 %v1898, %v1894
    %v3423 = vpack.c.b16 %v1903, %v1899
    %v3424 = vpack.c.b16 %v1904, %v1900
    %v3425 = vpack.c.b16 %v1905, %v1901
    %v3426 = vpack.c.b16 %v1906, %v1902
    %v3427 = vpack.c.b16 %v1911, %v1907
    %v3428 = vpack.c.b16 %v1912, %v1908
    %v3429 = vpack.c.b16 %v1913, %v1909
    %v3430 = vpack.c.b16 %v1914, %v1910
    %v3431 = vpack.c.b16 %v1919, %v1915
    %v3432 = vpack.c.b16 %v1920, %v1916
    %v3433 = vpack.c.b16 %v1921, %v1917
    %v3434 = vpack.c.b16 %v1922, %v1918
    %v3435 = vpack.c.b16 %v1927, %v1923
    %v3436 = vpack.c.b16 %v1928, %v1924
    %v3437 = vpack.c.b16 %v1929, %v1925
    %v3438 = vpack.c.b16 %v1930, %v1926
    %v3439 = vpack.c.b16 %v1935, %v1931
    %v3440 = vpack.c.b16 %v1936, %v1932
    %v3441 = vpack.c.b16 %v1937, %v1933
    %v3442 = vpack.c.b16 %v1938, %v1934
    %v3443 = vpack.c.b16 %v1943, %v1939
    %v3444 = vpack.c.b16 %v1944, %v1940
    %v3445 = vpack.c.b16 %v1945, %v1941
    %v3446 = vpack.c.b16 %v1946, %v1942
    %v3447 = vpack.c.b16 %v1951, %v1947
    %v3448 = vpack.c.b16 %v1952, %v1948
    %v3449 = vpack.c.b16 %v1953, %v1949
    %v3450 = vpack.c.b16 %v1954, %v1950
    %v3451 = vpack.c.b16 %v1959, %v1955
    %v3452 = vpack.c.b16 %v1960, %v1956
    %v3453 = vpack.c.b16 %v1961, %v1957
    %v3454 = vpack.c.b16 %v1962, %v1958
    %v3455 = vpack.c.b16 %v1967, %v1963
    %v3456 = vpack.c.b16 %v1968, %v1964
    %v3457 = vpack.c.b16 %v1969, %v1965
    %v3458 = vpack.c.b16 %v1970, %v1966
    %v3459 = vpack.c.b16 %v1975, %v1971
    %v3460 = vpack.c.b16 %v1976, %v1972
    %v3461 = vpack.c.b16 %v1977, %v1973
    %v3462 = vpack.c.b16 %v1978, %v1974
    %v3463 = vpack.c.b16 %v1983, %v1979
    %v3464 = vpack.c.b16 %v1984, %v1980
    %v3465 = vpack.c.b16 %v1985, %v1981
    %v3466 = vpack.c.b16 %v1986, %v1982
    %v3467 = vpack.c.b16 %v1991, %v1987
    %v3468 = vpack.c.b16 %v1992, %v1988
    %v3469 = vpack.c.b16 %v1993, %v1989
    %v3470 = vpack.c.b16 %v1994, %v1990
    %v3471 = vpack.c.b16 %v1999, %v1995
    %v3472 = vpack.c.b16 %v2000, %v1996
    %v3473 = vpack.c.b16 %v2001, %v1997
    %v3474 = vpack.c.b16 %v2002, %v1998
    %v3475 = vpack.c.b16 %v2007, %v2003
    %v3476 = vpack.c.b16 %v2008, %v2004
    %v3477 = vpack.c.b16 %v2009, %v2005
    %v3478 = vpack.c.b16 %v2010, %v2006
    %v3479 = vpack.c.b16 %v2015, %v2011
    %v3480 = vpack.c.b16 %v2016, %v2012
    %v3481 = vpack.c.b16 %v2017, %v2013
    %v3482 = vpack.c.b16 %v2018, %v2014
    %v3483 = vpack.c.b16 %v2023, %v2019
    %v3484 = vpack.c.b16 %v2024, %v2020
    %v3485 = vpack.c.b16 %v2025, %v2021
    %v3486 = vpack.c.b16 %v2026, %v2022
    %v3487 = vpack.c.b16 %v2031, %v2027
    %v3488 = vpack.c.b16 %v2032, %v2028
    %v3489 = vpack.c.b16 %v2033, %v2029
    %v3490 = vpack.c.b16 %v2034, %v2030
    %v3491 = vpack.c.b16 %v2039, %v2035
    %v3492 = vpack.c.b16 %v2040, %v2036
    %v3493 = vpack.c.b16 %v2041, %v2037
    %v3494 = vpack.c.b16 %v2042, %v2038
    %v3495 = vpack.c.b16 %v2047, %v2043
    %v3496 = vpack.c.b16 %v2048, %v2044
    %v3497 = vpack.c.b16 %v2049, %v2045
    %v3498 = vpack.c.b16 %v2050, %v2046
    %v3499 = vpack.c.b16 %v2055, %v2051
    %v3500 = vpack.c.b16 %v2056, %v2052
    %v3501 = vpack.c.b16 %v2057, %v2053
    %v3502 = vpack.c.b16 %v2058, %v2054
    %v3503 = vpack.c.b16 %v2063, %v2059
    %v3504 = vpack.c.b16 %v2064, %v2060
    %v3505 = vpack.c.b16 %v2065, %v2061
    %v3506 = vpack.c.b16 %v2066, %v2062
    %v3507 = vpack.c.b16 %v2071, %v2067
    %v3508 = vpack.c.b16 %v2072, %v2068
    %v3509 = vpack.c.b16 %v2073, %v2069
    %v3510 = vpack.c.b16 %v2074, %v2070
    %v3511 = vpack.c.b16 %v2079, %v2075
    %v3512 = vpack.c.b16 %v2080, %v2076
    %v3513 = vpack.c.b16 %v2081, %v2077
    %v3514 = vpack.c.b16 %v2082, %v2078
    %v3515 = vpack.c.b16 %v2087, %v2083
    %v3516 = vpack.c.b16 %v2088, %v2084
    %v3517 = vpack.c.b16 %v2089, %v2085
    %v3518 = vpack.c.b16 %v2090, %v2086
    %v3519 = vpack.c.b16 %v2095, %v2091
    %v3520 = vpack.c.b16 %v2096, %v2092
    %v3521 = vpack.c.b16 %v2097, %v2093
    %v3522 = vpack.c.b16 %v2098, %v2094
    %v3523 = vpack.c.b16 %v2103, %v2099
    %v3524 = vpack.c.b16 %v2104, %v2100
    %v3525 = vpack.c.b16 %v2105, %v2101
    %v3526 = vpack.c.b16 %v2106, %v2102
    %v3527 = vpack.c.b16 %v2111, %v2107
    %v3528 = vpack.c.b16 %v2112, %v2108
    %v3529 = vpack.c.b16 %v2113, %v2109
    %v3530 = vpack.c.b16 %v2114, %v2110
    %v3531 = vpack.c.b16 %v2119, %v2115
    %v3532 = vpack.c.b16 %v2120, %v2116
    %v3533 = vpack.c.b16 %v2121, %v2117
    %v3534 = vpack.c.b16 %v2122, %v2118
    %v3535 = vpack.c.b16 %v2127, %v2123
    %v3536 = vpack.c.b16 %v2128, %v2124
    %v3537 = vpack.c.b16 %v2129, %v2125
    %v3538 = vpack.c.b16 %v2130, %v2126
    %v3539 = vpack.c.b16 %v2135, %v2131
    %v3540 = vpack.c.b16 %v2136, %v2132
    %v3541 = vpack.c.b16 %v2137, %v2133
    %v3542 = vpack.c.b16 %v2138, %v2134
    %v3543 = vpack.c.b16 %v2143, %v2139
    %v3544 = vpack.c.b16 %v2144, %v2140
    %v3545 = vpack.c.b16 %v2145, %v2141
    %v3546 = vpack.c.b16 %v2146, %v2142
    %v3547 = vpack.c.b16 %v2151, %v2147
    %v3548 = vpack.c.b16 %v2152, %v2148
    %v3549 = vpack.c.b16 %v2153, %v2149
    %v3550 = vpack.c.b16 %v2154, %v2150
    %v3551 = vpack.c.b16 %v2159, %v2155
    %v3552 = vpack.c.b16 %v2160, %v2156
    %v3553 = vpack.c.b16 %v2161, %v2157
    %v3554 = vpack.c.b16 %v2162, %v2158
    %v3555 = vpack.c.b16 %v2167, %v2163
    %v3556 = vpack.c.b16 %v2168, %v2164
    %v3557 = vpack.c.b16 %v2169, %v2165
    %v3558 = vpack.c.b16 %v2170, %v2166
    %v3559 = vpack.c.b16 %v2175, %v2171
    %v3560 = vpack.c.b16 %v2176, %v2172
    %v3561 = vpack.c.b16 %v2177, %v2173
    %v3562 = vpack.c.b16 %v2178, %v2174
    %v3563 = vpack.c.b16 %v2183, %v2179
    %v3564 = vpack.c.b16 %v2184, %v2180
    %v3565 = vpack.c.b16 %v2185, %v2181
    %v3566 = vpack.c.b16 %v2186, %v2182
    %v3567 = vpack.c.b16 %v2191, %v2187
    %v3568 = vpack.c.b16 %v2192, %v2188
    %v3569 = vpack.c.b16 %v2193, %v2189
    %v3570 = vpack.c.b16 %v2194, %v2190
    %v3571 = vpack.c.b16 %v2199, %v2195
    %v3572 = vpack.c.b16 %v2200, %v2196
    %v3573 = vpack.c.b16 %v2201, %v2197
    %v3574 = vpack.c.b16 %v2202, %v2198
    %v3575 = vpack.c.b16 %v2207, %v2203
    %v3576 = vpack.c.b16 %v2208, %v2204
    %v3577 = vpack.c.b16 %v2209, %v2205
    %v3578 = vpack.c.b16 %v2210, %v2206
    %v3579 = vpack.c.b16 %v2215, %v2211
    %v3580 = vpack.c.b16 %v2216, %v2212
    %v3581 = vpack.c.b16 %v2217, %v2213
    %v3582 = vpack.c.b16 %v2218, %v2214
    %v3583 = vpack.c.b16 %v2223, %v2219
    %v3584 = vpack.c.b16 %v2224, %v2220
    %v3585 = vpack.c.b16 %v2225, %v2221
    %v3586 = vpack.c.b16 %v2226, %v2222
    %v3587 = vpack.c.b16 %v2231, %v2227
    %v3588 = vpack.c.b16 %v2232, %v2228
    %v3589 = vpack.c.b16 %v2233, %v2229
    %v3590 = vpack.c.b16 %v2234, %v2230
    %v3591 = vpack.c.b16 %v2239, %v2235
    %v3592 = vpack.c.b16 %v2240, %v2236
    %v3593 = vpack.c.b16 %v2241, %v2237
    %v3594 = vpack.c.b16 %v2242, %v2238
    %v3595 = vpack.c.b16 %v2247, %v2243
    %v3596 = vpack.c.b16 %v2248, %v2244
    %v3597 = vpack.c.b16 %v2249, %v2245
    %v3598 = vpack.c.b16 %v2250, %v2246
    %v3599 = vpack.c.b16 %v2255, %v2251
    %v3600 = vpack.c.b16 %v2256, %v2252
    %v3601 = vpack.c.b16 %v2257, %v2253
    %v3602 = vpack.c.b16 %v2258, %v2254
    %v3603 = vpack.c.b16 %v2263, %v2259
    %v3604 = vpack.c.b16 %v2264, %v2260
    %v3605 = vpack.c.b16 %v2265, %v2261
    %v3606 = vpack.c.b16 %v2266, %v2262
    %v3607 = vpack.c.b16 %v2271, %v2267
    %v3608 = vpack.c.b16 %v2272, %v2268
    %v3609 = vpack.c.b16 %v2273, %v2269
    %v3610 = vpack.c.b16 %v2274, %v2270
    %v3611 = vpack.c.b16 %v2279, %v2275
    %v3612 = vpack.c.b16 %v2280, %v2276
    %v3613 = vpack.c.b16 %v2281, %v2277
    %v3614 = vpack.c.b16 %v2282, %v2278
    %v3615 = vpack.c.b16 %v2287, %v2283
    %v3616 = vpack.c.b16 %v2288, %v2284
    %v3617 = vpack.c.b16 %v2289, %v2285
    %v3618 = vpack.c.b16 %v2290, %v2286
    %v3619 = vpack.c.b16 %v2295, %v2291
    %v3620 = vpack.c.b16 %v2296, %v2292
    %v3621 = vpack.c.b16 %v2297, %v2293
    %v3622 = vpack.c.b16 %v2298, %v2294
    %v3623 = vpack.c.b16 %v2303, %v2299
    %v3624 = vpack.c.b16 %v2304, %v2300
    %v3625 = vpack.c.b16 %v2305, %v2301
    %v3626 = vpack.c.b16 %v2306, %v2302
    %v3627 = vpack.c.b16 %v2311, %v2307
    %v3628 = vpack.c.b16 %v2312, %v2308
    %v3629 = vpack.c.b16 %v2313, %v2309
    %v3630 = vpack.c.b16 %v2314, %v2310
    %v3631 = vpack.c.b16 %v2319, %v2315
    %v3632 = vpack.c.b16 %v2320, %v2316
    %v3633 = vpack.c.b16 %v2321, %v2317
    %v3634 = vpack.c.b16 %v2322, %v2318
    %v3635 = vpack.c.b16 %v2327, %v2323
    %v3636 = vpack.c.b16 %v2328, %v2324
    %v3637 = vpack.c.b16 %v2329, %v2325
    %v3638 = vpack.c.b16 %v2330, %v2326
    %v3639 = vpack.c.b16 %v2335, %v2331
    %v3640 = vpack.c.b16 %v2336, %v2332
    %v3641 = vpack.c.b16 %v2337, %v2333
    %v3642 = vpack.c.b16 %v2338, %v2334
    %v3643 = vpack.c.b16 %v2343, %v2339
    %v3644 = vpack.c.b16 %v2344, %v2340
    %v3645 = vpack.c.b16 %v2345, %v2341
    %v3646 = vpack.c.b16 %v2346, %v2342
    %v3647 = vpack.c.b16 %v2351, %v2347
    %v3648 = vpack.c.b16 %v2352, %v2348
    %v3649 = vpack.c.b16 %v2353, %v2349
    %v3650 = vpack.c.b16 %v2354, %v2350
    %v3651 = vpack.c.b16 %v2359, %v2355
    %v3652 = vpack.c.b16 %v2360, %v2356
    %v3653 = vpack.c.b16 %v2361, %v2357
    %v3654 = vpack.c.b16 %v2362, %v2358
    %v3655 = vpack.c.b16 %v2367, %v2363
    %v3656 = vpack.c.b16 %v2368, %v2364
    %v3657 = vpack.c.b16 %v2369, %v2365
    %v3658 = vpack.c.b16 %v2370, %v2366
    %v3659 = vpack.c.b16 %v2375, %v2371
    %v3660 = vpack.c.b16 %v2376, %v2372
    %v3661 = vpack.c.b16 %v2377, %v2373
    %v3662 = vpack.c.b16 %v2378, %v2374
    %v3663 = vpack.c.b16 %v2383, %v2379
    %v3664 = vpack.c.b16 %v2384, %v2380
    %v3665 = vpack.c.b16 %v2385, %v2381
    %v3666 = vpack.c.b16 %v2386, %v2382
    %v3667 = vpack.c.b16 %v2391, %v2387
    %v3668 = vpack.c.b16 %v2392, %v2388
    %v3669 = vpack.c.b16 %v2393, %v2389
    %v3670 = vpack.c.b16 %v2394, %v2390
    %v3671 = vpack.c.b16 %v2399, %v2395
    %v3672 = vpack.c.b16 %v2400, %v2396
    %v3673 = vpack.c.b16 %v2401, %v2397
    %v3674 = vpack.c.b16 %v2402, %v2398
    %v3675 = vpack.c.b16 %v2407, %v2403
    %v3676 = vpack.c.b16 %v2408, %v2404
    %v3677 = vpack.c.b16 %v2409, %v2405
    %v3678 = vpack.c.b16 %v2410, %v2406
    %v3679 = vpack.c.b16 %v2415, %v2411
    %v3680 = vpack.c.b16 %v2416, %v2412
    %v3681 = vpack.c.b16 %v2417, %v2413
    %v3682 = vpack.c.b16 %v2418, %v2414
    %v3683 = vpack.c.b16 %v2423, %v2419
    %v3684 = vpack.c.b16 %v2424, %v2420
    %v3685 = vpack.c.b16 %v2425, %v2421
    %v3686 = vpack.c.b16 %v2426, %v2422
    %v3687 = vpack.c.b16 %v2431, %v2427
    %v3688 = vpack.c.b16 %v2432, %v2428
    %v3689 = vpack.c.b16 %v2433, %v2429
    %v3690 = vpack.c.b16 %v2434, %v2430
    %v3691 = vpack.c.b16 %v2439, %v2435
    %v3692 = vpack.c.b16 %v2440, %v2436
    %v3693 = vpack.c.b16 %v2441, %v2437
    %v3694 = vpack.c.b16 %v2442, %v2438
    %v3695 = vpack.c.b16 %v2447, %v2443
    %v3696 = vpack.c.b16 %v2448, %v2444
    %v3697 = vpack.c.b16 %v2449, %v2445
    %v3698 = vpack.c.b16 %v2450, %v2446
    %v3699 = vpack.c.b16 %v2455, %v2451
    %v3700 = vpack.c.b16 %v2456, %v2452
    %v3701 = vpack.c.b16 %v2457, %v2453
    %v3702 = vpack.c.b16 %v2458, %v2454
    %v3703 = vpack.c.b16 %v2463, %v2459
    %v3704 = vpack.c.b16 %v2464, %v2460
    %v3705 = vpack.c.b16 %v2465, %v2461
    %v3706 = vpack.c.b16 %v2466, %v2462
    %v3707 = vpack.c.b16 %v2471, %v2467
    %v3708 = vpack.c.b16 %v2472, %v2468
    %v3709 = vpack.c.b16 %v2473, %v2469
    %v3710 = vpack.c.b16 %v2474, %v2470
    %v3711 = vpack.c.b16 %v2479, %v2475
    %v3712 = vpack.c.b16 %v2480, %v2476
    %v3713 = vpack.c.b16 %v2481, %v2477
    %v3714 = vpack.c.b16 %v2482, %v2478
    %v3715 = vpack.c.b16 %v2487, %v2483
    %v3716 = vpack.c.b16 %v2488, %v2484
    %v3717 = vpack.c.b16 %v2489, %v2485
    %v3718 = vpack.c.b16 %v2490, %v2486
    %v3719 = vpack.c.b16 %v2495, %v2491
    %v3720 = vpack.c.b16 %v2496, %v2492
    %v3721 = vpack.c.b16 %v2497, %v2493
    %v3722 = vpack.c.b16 %v2498, %v2494
    %v3723 = vpack.c.b16 %v2503, %v2499
    %v3724 = vpack.c.b16 %v2504, %v2500
    %v3725 = vpack.c.b16 %v2505, %v2501
    %v3726 = vpack.c.b16 %v2506, %v2502
    %v3727 = vpack.c.b16 %v2511, %v2507
    %v3728 = vpack.c.b16 %v2512, %v2508
    %v3729 = vpack.c.b16 %v2513, %v2509
    %v3730 = vpack.c.b16 %v2514, %v2510
    %v3731 = vpack.c.b16 %v2519, %v2515
    %v3732 = vpack.c.b16 %v2520, %v2516
    %v3733 = vpack.c.b16 %v2521, %v2517
    %v3734 = vpack.c.b16 %v2522, %v2518
    %v3735 = vpack.c.b16 %v2527, %v2523
    %v3736 = vpack.c.b16 %v2528, %v2524
    %v3737 = vpack.c.b16 %v2529, %v2525
    %v3738 = vpack.c.b16 %v2530, %v2526
    %v3739 = vpack.c.b16 %v2535, %v2531
    %v3740 = vpack.c.b16 %v2536, %v2532
    %v3741 = vpack.c.b16 %v2537, %v2533
    %v3742 = vpack.c.b16 %v2538, %v2534
    %v3743 = vpack.c.b16 %v2543, %v2539
    %v3744 = vpack.c.b16 %v2544, %v2540
    %v3745 = vpack.c.b16 %v2545, %v2541
    %v3746 = vpack.c.b16 %v2546, %v2542
    %v3747 = vpack.c.b16 %v2551, %v2547
    %v3748 = vpack.c.b16 %v2552, %v2548
    %v3749 = vpack.c.b16 %v2553, %v2549
    %v3750 = vpack.c.b16 %v2554, %v2550
    %v3751 = vpack.c.b16 %v2559, %v2555
    %v3752 = vpack.c.b16 %v2560, %v2556
    %v3753 = vpack.c.b16 %v2561, %v2557
    %v3754 = vpack.c.b16 %v2562, %v2558
    %v3755 = vpack.c.b16 %v2567, %v2563
    %v3756 = vpack.c.b16 %v2568, %v2564
    %v3757 = vpack.c.b16 %v2569, %v2565
    %v3758 = vpack.c.b16 %v2570, %v2566
    %v3759 = vpack.c.b16 %v2575, %v2571
    %v3760 = vpack.c.b16 %v2576, %v2572
    %v3761 = vpack.c.b16 %v2577, %v2573
    %v3762 = vpack.c.b16 %v2578, %v2574
    %v3763 = vpack.c.b16 %v2583, %v2579
    %v3764 = vpack.c.b16 %v2584, %v2580
    %v3765 = vpack.c.b16 %v2585, %v2581
    %v3766 = vpack.c.b16 %v2586, %v2582
    %v3767 = vpack.c.b16 %v2591, %v2587
    %v3768 = vpack.c.b16 %v2592, %v2588
    %v3769 = vpack.c.b16 %v2593, %v2589
    %v3770 = vpack.c.b16 %v2594, %v2590
    %v3771 = vpack.c.b16 %v2599, %v2595
    %v3772 = vpack.c.b16 %v2600, %v2596
    %v3773 = vpack.c.b16 %v2601, %v2597
    %v3774 = vpack.c.b16 %v2602, %v2598
    %v3775 = vpack.c.b16 %v2607, %v2603
    %v3776 = vpack.c.b16 %v2608, %v2604
    %v3777 = vpack.c.b16 %v2609, %v2605
    %v3778 = vpack.c.b16 %v2610, %v2606
    %v3779 = vpack.c.b16 %v2615, %v2611
    %v3780 = vpack.c.b16 %v2616, %v2612
    %v3781 = vpack.c.b16 %v2617, %v2613
    %v3782 = vpack.c.b16 %v2618, %v2614
    %v3783 = vpack.c.b16 %v2623, %v2619
    %v3784 = vpack.c.b16 %v2624, %v2620
    %v3785 = vpack.c.b16 %v2625, %v2621
    %v3786 = vpack.c.b16 %v2626, %v2622
    %v3787 = vpack.c.b16 %v2631, %v2627
    %v3788 = vpack.c.b16 %v2632, %v2628
    %v3789 = vpack.c.b16 %v2633, %v2629
    %v3790 = vpack.c.b16 %v2634, %v2630
    %v3791 = vpack.c.b16 %v2639, %v2635
    %v3792 = vpack.c.b16 %v2640, %v2636
    %v3793 = vpack.c.b16 %v2641, %v2637
    %v3794 = vpack.c.b16 %v2642, %v2638
    %v3795 = vpack.c.b16 %v2647, %v2643
    %v3796 = vpack.c.b16 %v2648, %v2644
    %v3797 = vpack.c.b16 %v2649, %v2645
    %v3798 = vpack.c.b16 %v2650, %v2646
    %v3799 = vpack.c.b16 %v2655, %v2651
    %v3800 = vpack.c.b16 %v2656, %v2652
    %v3801 = vpack.c.b16 %v2657, %v2653
    %v3802 = vpack.c.b16 %v2658, %v2654
    %v3803 = vpack.c.b16 %v2663, %v2659
    %v3804 = vpack.c.b16 %v2664, %v2660
    %v3805 = vpack.c.b16 %v2665, %v2661
    %v3806 = vpack.c.b16 %v2666, %v2662
    %v3807 = vpack.c.b16 %v2671, %v2667
    %v3808 = vpack.c.b16 %v2672, %v2668
    %v3809 = vpack.c.b16 %v2673, %v2669
    %v3810 = vpack.c.b16 %v2674, %v2670
    %v3811 = vpack.c.b16 %v2679, %v2675
    %v3812 = vpack.c.b16 %v2680, %v2676
    %v3813 = vpack.c.b16 %v2681, %v2677
    %v3814 = vpack.c.b16 %v2682, %v2678
    %v3815 = vpack.c.b16 %v2687, %v2683
    %v3816 = vpack.c.b16 %v2688, %v2684
    %v3817 = vpack.c.b16 %v2689, %v2685
    %v3818 = vpack.c.b16 %v2690, %v2686
    %v3819 = vpack.c.b16 %v2695, %v2691
    %v3820 = vpack.c.b16 %v2696, %v2692
    %v3821 = vpack.c.b16 %v2697, %v2693
    %v3822 = vpack.c.b16 %v2698, %v2694
    %v3823 = vpack.c.b16 %v2703, %v2699
    %v3824 = vpack.c.b16 %v2704, %v2700
    %v3825 = vpack.c.b16 %v2705, %v2701
    %v3826 = vpack.c.b16 %v2706, %v2702
    %v3827 = vpack.c.b16 %v2711, %v2707
    %v3828 = vpack.c.b16 %v2712, %v2708
    %v3829 = vpack.c.b16 %v2713, %v2709
    %v3830 = vpack.c.b16 %v2714, %v2710
    %v3831 = vpack.c.b16 %v2719, %v2715
    %v3832 = vpack.c.b16 %v2720, %v2716
    %v3833 = vpack.c.b16 %v2721, %v2717
    %v3834 = vpack.c.b16 %v2722, %v2718
    %v3835 = vpack.c.b16 %v2727, %v2723
    %v3836 = vpack.c.b16 %v2728, %v2724
    %v3837 = vpack.c.b16 %v2729, %v2725
    %v3838 = vpack.c.b16 %v2730, %v2726
    %v3839 = vpack.c.b16 %v2735, %v2731
    %v3840 = vpack.c.b16 %v2736, %v2732
    %v3841 = vpack.c.b16 %v2737, %v2733
    %v3842 = vpack.c.b16 %v2738, %v2734
    %v3843 = vpack.c.b16 %v2743, %v2739
    %v3844 = vpack.c.b16 %v2744, %v2740
    %v3845 = vpack.c.b16 %v2745, %v2741
    %v3846 = vpack.c.b16 %v2746, %v2742
    %v3847 = vpack.c.b16 %v2751, %v2747
    %v3848 = vpack.c.b16 %v2752, %v2748
    %v3849 = vpack.c.b16 %v2753, %v2749
    %v3850 = vpack.c.b16 %v2754, %v2750
    %v3851 = vpack.c.b16 %v2759, %v2755
    %v3852 = vpack.c.b16 %v2760, %v2756
    %v3853 = vpack.c.b16 %v2761, %v2757
    %v3854 = vpack.c.b16 %v2762, %v2758
    %v3855 = vpack.c.b16 %v2767, %v2763
    %v3856 = vpack.c.b16 %v2768, %v2764
    %v3857 = vpack.c.b16 %v2769, %v2765
    %v3858 = vpack.c.b16 %v2770, %v2766
    %v3859 = vpack.c.b16 %v2775, %v2771
    %v3860 = vpack.c.b16 %v2776, %v2772
    %v3861 = vpack.c.b16 %v2777, %v2773
    %v3862 = vpack.c.b16 %v2778, %v2774
    %v3863 = vpack.c.b16 %v2783, %v2779
    %v3864 = vpack.c.b16 %v2784, %v2780
    %v3865 = vpack.c.b16 %v2785, %v2781
    %v3866 = vpack.c.b16 %v2786, %v2782
    %v3867 = vpack.c.b16 %v2791, %v2787
    %v3868 = vpack.c.b16 %v2792, %v2788
    %v3869 = vpack.c.b16 %v2793, %v2789
    %v3870 = vpack.c.b16 %v2794, %v2790
    %v3871 = vpack.c.b16 %v2799, %v2795
    %v3872 = vpack.c.b16 %v2800, %v2796
    %v3873 = vpack.c.b16 %v2801, %v2797
    %v3874 = vpack.c.b16 %v2802, %v2798
    %v3875 = vpack.c.b16 %v2807, %v2803
    %v3876 = vpack.c.b16 %v2808, %v2804
    %v3877 = vpack.c.b16 %v2809, %v2805
    %v3878 = vpack.c.b16 %v2810, %v2806
    %v3879 = vpack.c.b16 %v2815, %v2811
    %v3880 = vpack.c.b16 %v2816, %v2812
    %v3881 = vpack.c.b16 %v2817, %v2813
    %v3882 = vpack.c.b16 %v2818, %v2814
    %v3883 = vpack.c.b16 %v2823, %v2819
    %v3884 = vpack.c.b16 %v2824, %v2820
    %v3885 = vpack.c.b16 %v2825, %v2821
    %v3886 = vpack.c.b16 %v2826, %v2822
    %v3887 = vpack.c.b16 %v2831, %v2827
    %v3888 = vpack.c.b16 %v2832, %v2828
    %v3889 = vpack.c.b16 %v2833, %v2829
    %v3890 = vpack.c.b16 %v2834, %v2830
    %v3891 = vpack.c.b16 %v2839, %v2835
    %v3892 = vpack.c.b16 %v2840, %v2836
    %v3893 = vpack.c.b16 %v2841, %v2837
    %v3894 = vpack.c.b16 %v2842, %v2838
    %v3895 = vpack.c.b16 %v2847, %v2843
    %v3896 = vpack.c.b16 %v2848, %v2844
    %v3897 = vpack.c.b16 %v2849, %v2845
    %v3898 = vpack.c.b16 %v2850, %v2846
    %v3899 = vpack.c.b16 %v2855, %v2851
    %v3900 = vpack.c.b16 %v2856, %v2852
    %v3901 = vpack.c.b16 %v2857, %v2853
    %v3902 = vpack.c.b16 %v2858, %v2854
    %v3903 = vpack.c.b16 %v2863, %v2859
    %v3904 = vpack.c.b16 %v2864, %v2860
    %v3905 = vpack.c.b16 %v2865, %v2861
    %v3906 = vpack.c.b16 %v2866, %v2862
    %v3907 = vpack.c.b16 %v2871, %v2867
    %v3908 = vpack.c.b16 %v2872, %v2868
    %v3909 = vpack.c.b16 %v2873, %v2869
    %v3910 = vpack.c.b16 %v2874, %v2870
    %v3911 = vpack.c.b16 %v2879, %v2875
    %v3912 = vpack.c.b16 %v2880, %v2876
    %v3913 = vpack.c.b16 %v2881, %v2877
    %v3914 = vpack.c.b16 %v2882, %v2878
    %v3915 = vpack.c.b16 %v2887, %v2883
    %v3916 = vpack.c.b16 %v2888, %v2884
    %v3917 = vpack.c.b16 %v2889, %v2885
    %v3918 = vpack.c.b16 %v2890, %v2886
    %v3919 = vpack.c.b16 %v2895, %v2891
    %v3920 = vpack.c.b16 %v2896, %v2892
    %v3921 = vpack.c.b16 %v2897, %v2893
    %v3922 = vpack.c.b16 %v2898, %v2894
    %v3923 = vpack.c.b16 %v2903, %v2899
    %v3924 = vpack.c.b16 %v2904, %v2900
    %v3925 = vpack.c.b16 %v2905, %v2901
    %v3926 = vpack.c.b16 %v2906, %v2902
    %v3927 = vpack.c.b16 %v2911, %v2907
    %v3928 = vpack.c.b16 %v2912, %v2908
    %v3929 = vpack.c.b16 %v2913, %v2909
    %v3930 = vpack.c.b16 %v2914, %v2910
    %v3931 = vpack.c.b16 %v2919, %v2915
    %v3932 = vpack.c.b16 %v2920, %v2916
    %v3933 = vpack.c.b16 %v2921, %v2917
    %v3934 = vpack.c.b16 %v2922, %v2918
    %v3935 = vpack.c.b16 %v2927, %v2923
    %v3936 = vpack.c.b16 %v2928, %v2924
    %v3937 = vpack.c.b16 %v2929, %v2925
    %v3938 = vpack.c.b16 %v2930, %v2926
    %v3939 = vpack.c.b16 %v2935, %v2931
    %v3940 = vpack.c.b16 %v2936, %v2932
    %v3941 = vpack.c.b16 %v2937, %v2933
    %v3942 = vpack.c.b16 %v2938, %v2934
    %v3943 = vpack.c.b16 %v2943, %v2939
    %v3944 = vpack.c.b16 %v2944, %v2940
    %v3945 = vpack.c.b16 %v2945, %v2941
    %v3946 = vpack.c.b16 %v2946, %v2942
    %v3947 = vpack.c.b16 %v2951, %v2947
    %v3948 = vpack.c.b16 %v2952, %v2948
    %v3949 = vpack.c.b16 %v2953, %v2949
    %v3950 = vpack.c.b16 %v2954, %v2950
    %v3951 = vpack.c.b16 %v2959, %v2955
    %v3952 = vpack.c.b16 %v2960, %v2956
    %v3953 = vpack.c.b16 %v2961, %v2957
    %v3954 = vpack.c.b16 %v2962, %v2958
    %v3955 = vpack.c.b16 %v2967, %v2963
    %v3956 = vpack.c.b16 %v2968, %v2964
    %v3957 = vpack.c.b16 %v2969, %v2965
    %v3958 = vpack.c.b16 %v2970, %v2966
    %v3959 = vpack.c.b16 %v2975, %v2971
    %v3960 = vpack.c.b16 %v2976, %v2972
    %v3961 = vpack.c.b16 %v2977, %v2973
    %v3962 = vpack.c.b16 %v2978, %v2974
    %v3963 = vpack.c.b16 %v2983, %v2979
    %v3964 = vpack.c.b16 %v2984, %v2980
    %v3965 = vpack.c.b16 %v2985, %v2981
    %v3966 = vpack.c.b16 %v2986, %v2982
    %v3967 = vpack.c.b16 %v2991, %v2987
    %v3968 = vpack.c.b16 %v2992, %v2988
    %v3969 = vpack.c.b16 %v2993, %v2989
    %v3970 = vpack.c.b16 %v2994, %v2990
    %v3971 = vpack.c.b16 %v2999, %v2995
    %v3972 = vpack.c.b16 %v3000, %v2996
    %v3973 = vpack.c.b16 %v3001, %v2997
    %v3974 = vpack.c.b16 %v3002, %v2998
    %v3975 = vpack.c.b16 %v3007, %v3003
    %v3976 = vpack.c.b16 %v3008, %v3004
    %v3977 = vpack.c.b16 %v3009, %v3005
    %v3978 = vpack.c.b16 %v3010, %v3006
    %v3979 = vpack.c.b16 %v3015, %v3011
    %v3980 = vpack.c.b16 %v3016, %v3012
    %v3981 = vpack.c.b16 %v3017, %v3013
    %v3982 = vpack.c.b16 %v3018, %v3014
    %v3983 = vpack.c.b16 %v3023, %v3019
    %v3984 = vpack.c.b16 %v3024, %v3020
    %v3985 = vpack.c.b16 %v3025, %v3021
    %v3986 = vpack.c.b16 %v3026, %v3022
    %v3987 = vpack.c.b16 %v3031, %v3027
    %v3988 = vpack.c.b16 %v3032, %v3028
    %v3989 = vpack.c.b16 %v3033, %v3029
    %v3990 = vpack.c.b16 %v3034, %v3030
    %v3991 = vpack.c.b16 %v3039, %v3035
    %v3992 = vpack.c.b16 %v3040, %v3036
    %v3993 = vpack.c.b16 %v3041, %v3037
    %v3994 = vpack.c.b16 %v3042, %v3038
    %v3995 = vpack.c.b16 %v3047, %v3043
    %v3996 = vpack.c.b16 %v3048, %v3044
    %v3997 = vpack.c.b16 %v3049, %v3045
    %v3998 = vpack.c.b16 %v3050, %v3046
    %v3999 = vpack.c.b16 %v3055, %v3051
    %v4000 = vpack.c.b16 %v3056, %v3052
    %v4001 = vpack.c.b16 %v3057, %v3053
    %v4002 = vpack.c.b16 %v3058, %v3054
    %v4003 = vpack.c.b16 %v3063, %v3059
    %v4004 = vpack.c.b16 %v3064, %v3060
    %v4005 = vpack.c.b16 %v3065, %v3061
    %v4006 = vpack.c.b16 %v3066, %v3062
    %v4007 = vpack.c.b16 %v3071, %v3067
    %v4008 = vpack.c.b16 %v3072, %v3068
    %v4009 = vpack.c.b16 %v3073, %v3069
    %v4010 = vpack.c.b16 %v3074, %v3070
    %v4011 = vpack.c.b16 %v3079, %v3075
    %v4012 = vpack.c.b16 %v3080, %v3076
    %v4013 = vpack.c.b16 %v3081, %v3077
    %v4014 = vpack.c.b16 %v3082, %v3078
    %v4015 = vpack.c.b16 %v3087, %v3083
    %v4016 = vpack.c.b16 %v3088, %v3084
    %v4017 = vpack.c.b16 %v3089, %v3085
    %v4018 = vpack.c.b16 %v3090, %v3086
    %v4019 = vpack.c.b16 %v3095, %v3091
    %v4020 = vpack.c.b16 %v3096, %v3092
    %v4021 = vpack.c.b16 %v3097, %v3093
    %v4022 = vpack.c.b16 %v3098, %v3094
    %v4023 = vpack.c.b16 %v3103, %v3099
    %v4024 = vpack.c.b16 %v3104, %v3100
    %v4025 = vpack.c.b16 %v3105, %v3101
    %v4026 = vpack.c.b16 %v3106, %v3102
    %v4027 = vpack.c.b16 %v3111, %v3107
    %v4028 = vpack.c.b16 %v3112, %v3108
    %v4029 = vpack.c.b16 %v3113, %v3109
    %v4030 = vpack.c.b16 %v3114, %v3110
    %v4031 = vpack.c.b16 %v3119, %v3115
    %v4032 = vpack.c.b16 %v3120, %v3116
    %v4033 = vpack.c.b16 %v3121, %v3117
    %v4034 = vpack.c.b16 %v3122, %v3118
    %v4035 = vpack.c.b16 %v3127, %v3123
    %v4036 = vpack.c.b16 %v3128, %v3124
    %v4037 = vpack.c.b16 %v3129, %v3125
    %v4038 = vpack.c.b16 %v3130, %v3126
    %v4039 = vpack.c.b16 %v3135, %v3131
    %v4040 = vpack.c.b16 %v3136, %v3132
    %v4041 = vpack.c.b16 %v3137, %v3133
    %v4042 = vpack.c.b16 %v3138, %v3134
    %v4043 = vpack.c.b16 %v3143, %v3139
    %v4044 = vpack.c.b16 %v3144, %v3140
    %v4045 = vpack.c.b16 %v3145, %v3141
    %v4046 = vpack.c.b16 %v3146, %v3142
    %v4047 = vpack.c.b16 %v3151, %v3147
    %v4048 = vpack.c.b16 %v3152, %v3148
    %v4049 = vpack.c.b16 %v3153, %v3149
    %v4050 = vpack.c.b16 %v3154, %v3150
    %v4051 = vpack.c.b16 %v3159, %v3155
    %v4052 = vpack.c.b16 %v3160, %v3156
    %v4053 = vpack.c.b16 %v3161, %v3157
    %v4054 = vpack.c.b16 %v3162, %v3158
    %v4055 = vpack.c.b16 %v3167, %v3163
    %v4056 = vpack.c.b16 %v3168, %v3164
    %v4057 = vpack.c.b16 %v3169, %v3165
    %v4058 = vpack.c.b16 %v3170, %v3166
    %v4059 = vpack.c.b16 %v3175, %v3171
    %v4060 = vpack.c.b16 %v3176, %v3172
    %v4061 = vpack.c.b16 %v3177, %v3173
    %v4062 = vpack.c.b16 %v3178, %v3174
    %v4063 = vpack.c.b16 %v3183, %v3179
    %v4064 = vpack.c.b16 %v3184, %v3180
    %v4065 = vpack.c.b16 %v3185, %v3181
    %v4066 = vpack.c.b16 %v3186, %v3182
    %v4067 = vpack.c.b16 %v3191, %v3187
    %v4068 = vpack.c.b16 %v3192, %v3188
    %v4069 = vpack.c.b16 %v3193, %v3189
    %v4070 = vpack.c.b16 %v3194, %v3190
    %v4071 = vpack.c.b16 %v3199, %v3195
    %v4072 = vpack.c.b16 %v3200, %v3196
    %v4073 = vpack.c.b16 %v3201, %v3197
    %v4074 = vpack.c.b16 %v3202, %v3198
    %v4075 = vpack.c.b16 %v3207, %v3203
    %v4076 = vpack.c.b16 %v3208, %v3204
    %v4077 = vpack.c.b16 %v3209, %v3205
    %v4078 = vpack.c.b16 %v3210, %v3206
    %v4079 = vpack.c.b16 %v3215, %v3211
    %v4080 = vpack.c.b16 %v3216, %v3212
    %v4081 = vpack.c.b16 %v3217, %v3213
    %v4082 = vpack.c.b16 %v3218, %v3214
    %v4083 = vpack.c.b16 %v3223, %v3219
    %v4084 = vpack.c.b16 %v3224, %v3220
    %v4085 = vpack.c.b16 %v3225, %v3221
    %v4086 = vpack.c.b16 %v3226, %v3222
    %v4087 = vpack.c.b16 %v3231, %v3227
    %v4088 = vpack.c.b16 %v3232, %v3228
    %v4089 = vpack.c.b16 %v3233, %v3229
    %v4090 = vpack.c.b16 %v3234, %v3230
    %v4091 = vpack.c.b16 %v3239, %v3235
    %v4092 = vpack.c.b16 %v3240, %v3236
    %v4093 = vpack.c.b16 %v3241, %v3237
    %v4094 = vpack.c.b16 %v3242, %v3238
    %v4095 = vpack.c.b16 %v3247, %v3243
    %v4096 = vpack.c.b16 %v3248, %v3244
    %v4097 = vpack.c.b16 %v3249, %v3245
    %v4098 = vpack.c.b16 %v3250, %v3246
    %v4099 = vpack.c.b16 %v3255, %v3251
    %v4100 = vpack.c.b16 %v3256, %v3252
    %v4101 = vpack.c.b16 %v3257, %v3253
    %v4102 = vpack.c.b16 %v3258, %v3254
    %v4103 = vpack.c.b16 %v3263, %v3259
    %v4104 = vpack.c.b16 %v3264, %v3260
    %v4105 = vpack.c.b16 %v3265, %v3261
    %v4106 = vpack.c.b16 %v3266, %v3262
    %v4107 = vpack.c.b16 %v3271, %v3267
    %v4108 = vpack.c.b16 %v3272, %v3268
    %v4109 = vpack.c.b16 %v3273, %v3269
    %v4110 = vpack.c.b16 %v3274, %v3270
    %v4111 = vpack.c.b16 %v3279, %v3275
    %v4112 = vpack.c.b16 %v3280, %v3276
    %v4113 = vpack.c.b16 %v3281, %v3277
    %v4114 = vpack.c.b16 %v3282, %v3278
    %v4115 = vpack.c.b16 %v3287, %v3283
    %v4116 = vpack.c.b16 %v3288, %v3284
    %v4117 = vpack.c.b16 %v3289, %v3285
    %v4118 = vpack.c.b16 %v3290, %v3286
    %v4119 = vpack.c.b16 %v3295, %v3291
    %v4120 = vpack.c.b16 %v3296, %v3292
    %v4121 = vpack.c.b16 %v3297, %v3293
    %v4122 = vpack.c.b16 %v3298, %v3294
    %v4123 = vpack.c.b16 %v3303, %v3299
    %v4124 = vpack.c.b16 %v3304, %v3300
    %v4125 = vpack.c.b16 %v3305, %v3301
    %v4126 = vpack.c.b16 %v3306, %v3302
    %v4127 = vpack.c.b16 %v3311, %v3307
    %v4128 = vpack.c.b16 %v3312, %v3308
    %v4129 = vpack.c.b16 %v3313, %v3309
    %v4130 = vpack.c.b16 %v3314, %v3310
    %v4131 = vpack.c.b16 %v3319, %v3315
    %v4132 = vpack.c.b16 %v3320, %v3316
    %v4133 = vpack.c.b16 %v3321, %v3317
    %v4134 = vpack.c.b16 %v3322, %v3318
    %v4135 = vpack.c.b16 %v3327, %v3323
    %v4136 = vpack.c.b16 %v3328, %v3324
    %v4137 = vpack.c.b16 %v3329, %v3325
    %v4138 = vpack.c.b16 %v3330, %v3326
    %v4139 = vpack.c.b16 %v3335, %v3331
    %v4140 = vpack.c.b16 %v3336, %v3332
    %v4141 = vpack.c.b16 %v3337, %v3333
    %v4142 = vpack.c.b16 %v3338, %v3334
    %v4143 = vpack.c.b16 %v3343, %v3339
    %v4144 = vpack.c.b16 %v3344, %v3340
    %v4145 = vpack.c.b16 %v3345, %v3341
    %v4146 = vpack.c.b16 %v3346, %v3342
    %v4147 = vpack.c.b16 %v3351, %v3347
    %v4148 = vpack.c.b16 %v3352, %v3348
    %v4149 = vpack.c.b16 %v3353, %v3349
    %v4150 = vpack.c.b16 %v3354, %v3350
    %v4151 = vpack.c.b16 %v3359, %v3355
    %v4152 = vpack.c.b16 %v3360, %v3356
    %v4153 = vpack.c.b16 %v3361, %v3357
    %v4154 = vpack.c.b16 %v3362, %v3358
    %v4155 = vpack.c.b16 %v3367, %v3363
    %v4156 = vpack.c.b16 %v3368, %v3364
    %v4157 = vpack.c.b16 %v3369, %v3365
    %v4158 = vpack.c.b16 %v3370, %v3366
    %v4159 = vpack.c.b16 %v3375, %v3371
    %v4160 = vpack.c.b16 %v3376, %v3372
    %v4161 = vpack.c.b16 %v3377, %v3373
    %v4162 = vpack.c.b16 %v3378, %v3374
    %vm4947 = vcmask 523264
    %v4949 = vsel %vm4947, %v1002, 0
    %4951 = vmatprep.subr.bf16.mxu0 %v3408
    %4952 = vmatpush1.bf16.msra.mxu0 %v3407
    %4953 = vmatprep.subr.bf16.mxu0 %v3404
    %4954 = vmatpush1.bf16.msra.mxu0 %v3403
    %4955 = vmatprep.subr.bf16.mxu0 %v3400
    %4956 = vmatpush1.bf16.msra.mxu0 %v3399
    %4957 = vmatprep.subr.bf16.mxu0 %v3396
    %4958 = vmatpush1.bf16.msra.mxu0 %v3395
    %4959 = vmatprep.subr.bf16.mxu0 %v3392
    %4960 = vmatpush1.bf16.msra.mxu0 %v3391
    %4961 = vmatprep.subr.bf16.mxu0 %v3388
    %4962 = vmatpush1.bf16.msra.mxu0 %v3387
    %4963 = vmatprep.subr.bf16.mxu0 %v3384
    %4964 = vmatpush1.bf16.msra.mxu0 %v3383
    %4965 = vmatprep.subr.bf16.mxu0 %v3380
    %4966 = vmatpush1.bf16.msra.mxu0 %v3379
    %4967 = vmatprep.subr.bf16.mxu0 %v3440
    %4968 = vmatpush2.bf16.msra.mxu0 %v3439
    %4969 = vmatprep.subr.bf16.mxu0 %v3436
    %4970 = vmatpush2.bf16.msra.mxu0 %v3435
    %4971 = vmatprep.subr.bf16.mxu0 %v3432
    %4972 = vmatpush2.bf16.msra.mxu0 %v3431
    %4973 = vmatprep.subr.bf16.mxu0 %v3428
    %4974 = vmatpush2.bf16.msra.mxu0 %v3427
    %4975 = vmatprep.subr.bf16.mxu0 %v3424
    %4976 = vmatpush2.bf16.msra.mxu0 %v3423
    %4977 = vmatprep.subr.bf16.mxu0 %v3420
    %4978 = vmatpush2.bf16.msra.mxu0 %v3419
    %4979 = vmatprep.subr.bf16.mxu0 %v3416
    %4980 = vmatpush2.bf16.msra.mxu0 %v3415
    %4981 = vmatprep.subr.bf16.mxu0 %v3412
    %4982 = vmatpush2.bf16.msra.mxu0 %v3411
    %4983 = vmatprep.mubr.bf16.mxu0 %v879
    %4984 = vmatmul.mubr.bf16.gmra.mxu0 %v865
    %v4985 = vpop.f32.mrf.mxu0
    %v4986 = vadd.f32 %v821, %v4985
    %v4987 = vpop.f32.mrf.mxu0
    %v4988 = vadd.f32 %v825, %v4987
    %v4989 = vpop.f32.mrf.mxu0
    %v4990 = vpop.f32.mrf.mxu0
    %4991 = vdwg.mxu0
    %4992 = vmatprep.subr.bf16.mxu0 %v3472
    %4993 = vmatpush1.bf16.msra.mxu0 %v3471
    %4994 = vmatprep.subr.bf16.mxu0 %v3468
    %4995 = vmatpush1.bf16.msra.mxu0 %v3467
    %4996 = vmatprep.subr.bf16.mxu0 %v3464
    %4997 = vmatpush1.bf16.msra.mxu0 %v3463
    %4998 = vmatprep.subr.bf16.mxu0 %v3460
    %4999 = vmatpush1.bf16.msra.mxu0 %v3459
    %5000 = vmatprep.subr.bf16.mxu0 %v3456
    %5001 = vmatpush1.bf16.msra.mxu0 %v3455
    %5002 = vmatprep.subr.bf16.mxu0 %v3452
    %5003 = vmatpush1.bf16.msra.mxu0 %v3451
    %5004 = vmatprep.subr.bf16.mxu0 %v3448
    %5005 = vmatpush1.bf16.msra.mxu0 %v3447
    %5006 = vmatprep.subr.bf16.mxu0 %v3444
    %5007 = vmatpush1.bf16.msra.mxu0 %v3443
    %5008 = vmatprep.subr.bf16.mxu0 %v3504
    %5009 = vmatpush2.bf16.msra.mxu0 %v3503
    %5010 = vmatprep.subr.bf16.mxu0 %v3500
    %5011 = vmatpush2.bf16.msra.mxu0 %v3499
    %5012 = vmatprep.subr.bf16.mxu0 %v3496
    %5013 = vmatpush2.bf16.msra.mxu0 %v3495
    %5014 = vmatprep.subr.bf16.mxu0 %v3492
    %5015 = vmatpush2.bf16.msra.mxu0 %v3491
    %5016 = vmatprep.subr.bf16.mxu0 %v3488
    %5017 = vmatpush2.bf16.msra.mxu0 %v3487
    %5018 = vmatprep.subr.bf16.mxu0 %v3484
    %5019 = vmatpush2.bf16.msra.mxu0 %v3483
    %5020 = vmatprep.subr.bf16.mxu0 %v3480
    %5021 = vmatpush2.bf16.msra.mxu0 %v3479
    %5022 = vmatprep.subr.bf16.mxu0 %v3476
    %5023 = vmatpush2.bf16.msra.mxu0 %v3475
    %5024 = vmatprep.mubr.bf16.mxu0 %v889
    %5025 = vmatmul.mubr.bf16.gmra.mxu0 %v887
    %v5026 = vpop.f32.mrf.mxu0
    %v5027 = vadd.f32 %v4986, %v5026
    %v5028 = vpop.f32.mrf.mxu0
    %v5029 = vadd.f32 %v4988, %v5028
    %v5030 = vpop.f32.mrf.mxu0
    %v5031 = vpop.f32.mrf.mxu0
    %5032 = vdwg.mxu0
    %5033 = vmatprep.subr.bf16.mxu0 %v3536
    %5034 = vmatpush1.bf16.msra.mxu0 %v3535
    %5035 = vmatprep.subr.bf16.mxu0 %v3532
    %5036 = vmatpush1.bf16.msra.mxu0 %v3531
    %5037 = vmatprep.subr.bf16.mxu0 %v3528
    %5038 = vmatpush1.bf16.msra.mxu0 %v3527
    %5039 = vmatprep.subr.bf16.mxu0 %v3524
    %5040 = vmatpush1.bf16.msra.mxu0 %v3523
    %5041 = vmatprep.subr.bf16.mxu0 %v3520
    %5042 = vmatpush1.bf16.msra.mxu0 %v3519
    %5043 = vmatprep.subr.bf16.mxu0 %v3516
    %5044 = vmatpush1.bf16.msra.mxu0 %v3515
    %5045 = vmatprep.subr.bf16.mxu0 %v3512
    %5046 = vmatpush1.bf16.msra.mxu0 %v3511
    %5047 = vmatprep.subr.bf16.mxu0 %v3508
    %5048 = vmatpush1.bf16.msra.mxu0 %v3507
    %5049 = vmatprep.subr.bf16.mxu0 %v3568
    %5050 = vmatpush2.bf16.msra.mxu0 %v3567
    %5051 = vmatprep.subr.bf16.mxu0 %v3564
    %5052 = vmatpush2.bf16.msra.mxu0 %v3563
    %5053 = vmatprep.subr.bf16.mxu0 %v3560
    %5054 = vmatpush2.bf16.msra.mxu0 %v3559
    %5055 = vmatprep.subr.bf16.mxu0 %v3556
    %5056 = vmatpush2.bf16.msra.mxu0 %v3555
    %5057 = vmatprep.subr.bf16.mxu0 %v3552
    %5058 = vmatpush2.bf16.msra.mxu0 %v3551
    %5059 = vmatprep.subr.bf16.mxu0 %v3548
    %5060 = vmatpush2.bf16.msra.mxu0 %v3547
    %5061 = vmatprep.subr.bf16.mxu0 %v3544
    %5062 = vmatpush2.bf16.msra.mxu0 %v3543
    %5063 = vmatprep.subr.bf16.mxu0 %v3540
    %5064 = vmatpush2.bf16.msra.mxu0 %v3539
    %5065 = vmatprep.mubr.bf16.mxu0 %v886
    %5066 = vmatmul.mubr.bf16.gmra.mxu0 %v872
    %v5067 = vpop.f32.mrf.mxu0
    %v5068 = vadd.f32 %v5027, %v5067
    %v5069 = vpop.f32.mrf.mxu0
    %v5070 = vadd.f32 %v5029, %v5069
    %v5071 = vpop.f32.mrf.mxu0
    %v5072 = vpop.f32.mrf.mxu0
    %5073 = vdwg.mxu0
    %5074 = vmatprep.subr.bf16.mxu0 %v3600
    %5075 = vmatpush1.bf16.msra.mxu0 %v3599
    %5076 = vmatprep.subr.bf16.mxu0 %v3596
    %5077 = vmatpush1.bf16.msra.mxu0 %v3595
    %5078 = vmatprep.subr.bf16.mxu0 %v3592
    %5079 = vmatpush1.bf16.msra.mxu0 %v3591
    %5080 = vmatprep.subr.bf16.mxu0 %v3588
    %5081 = vmatpush1.bf16.msra.mxu0 %v3587
    %5082 = vmatprep.subr.bf16.mxu0 %v3584
    %5083 = vmatpush1.bf16.msra.mxu0 %v3583
    %5084 = vmatprep.subr.bf16.mxu0 %v3580
    %5085 = vmatpush1.bf16.msra.mxu0 %v3579
    %5086 = vmatprep.subr.bf16.mxu0 %v3576
    %5087 = vmatpush1.bf16.msra.mxu0 %v3575
    %5088 = vmatprep.subr.bf16.mxu0 %v3572
    %5089 = vmatpush1.bf16.msra.mxu0 %v3571
    %5090 = vmatprep.subr.bf16.mxu0 %v3632
    %5091 = vmatpush2.bf16.msra.mxu0 %v3631
    %5092 = vmatprep.subr.bf16.mxu0 %v3628
    %5093 = vmatpush2.bf16.msra.mxu0 %v3627
    %5094 = vmatprep.subr.bf16.mxu0 %v3624
    %5095 = vmatpush2.bf16.msra.mxu0 %v3623
    %5096 = vmatprep.subr.bf16.mxu0 %v3620
    %5097 = vmatpush2.bf16.msra.mxu0 %v3619
    %5098 = vmatprep.subr.bf16.mxu0 %v3616
    %5099 = vmatpush2.bf16.msra.mxu0 %v3615
    %5100 = vmatprep.subr.bf16.mxu0 %v3612
    %5101 = vmatpush2.bf16.msra.mxu0 %v3611
    %5102 = vmatprep.subr.bf16.mxu0 %v3608
    %5103 = vmatpush2.bf16.msra.mxu0 %v3607
    %5104 = vmatprep.subr.bf16.mxu0 %v3604
    %5105 = vmatpush2.bf16.msra.mxu0 %v3603
    %5106 = vmatprep.mubr.bf16.mxu0 %v890
    %5107 = vmatmul.mubr.bf16.gmra.mxu0 %v888
    %v5108 = vpop.f32.mrf.mxu0
    %v5109 = vadd.f32 %v5068, %v5108
    %v5110 = vpop.f32.mrf.mxu0
    %v5111 = vadd.f32 %v5070, %v5110
    %v5112 = vpop.f32.mrf.mxu0
    %v5113 = vpop.f32.mrf.mxu0
    %5114 = vdwg.mxu0
    %5115 = vmatprep.subr.bf16.mxu0 %v3664
    %5116 = vmatpush1.bf16.msra.mxu0 %v3663
    %5117 = vmatprep.subr.bf16.mxu0 %v3660
    %5118 = vmatpush1.bf16.msra.mxu0 %v3659
    %5119 = vmatprep.subr.bf16.mxu0 %v3656
    %5120 = vmatpush1.bf16.msra.mxu0 %v3655
    %5121 = vmatprep.subr.bf16.mxu0 %v3652
    %5122 = vmatpush1.bf16.msra.mxu0 %v3651
    %5123 = vmatprep.subr.bf16.mxu0 %v3648
    %5124 = vmatpush1.bf16.msra.mxu0 %v3647
    %5125 = vmatprep.subr.bf16.mxu0 %v3644
    %5126 = vmatpush1.bf16.msra.mxu0 %v3643
    %5127 = vmatprep.subr.bf16.mxu0 %v3640
    %5128 = vmatpush1.bf16.msra.mxu0 %v3639
    %5129 = vmatprep.subr.bf16.mxu0 %v3636
    %5130 = vmatpush1.bf16.msra.mxu0 %v3635
    %5131 = vmatprep.subr.bf16.mxu0 %v3696
    %5132 = vmatpush2.bf16.msra.mxu0 %v3695
    %5133 = vmatprep.subr.bf16.mxu0 %v3692
    %5134 = vmatpush2.bf16.msra.mxu0 %v3691
    %5135 = vmatprep.subr.bf16.mxu0 %v3688
    %5136 = vmatpush2.bf16.msra.mxu0 %v3687
    %5137 = vmatprep.subr.bf16.mxu0 %v3684
    %5138 = vmatpush2.bf16.msra.mxu0 %v3683
    %5139 = vmatprep.subr.bf16.mxu0 %v3680
    %5140 = vmatpush2.bf16.msra.mxu0 %v3679
    %5141 = vmatprep.subr.bf16.mxu0 %v3676
    %5142 = vmatpush2.bf16.msra.mxu0 %v3675
    %5143 = vmatprep.subr.bf16.mxu0 %v3672
    %5144 = vmatpush2.bf16.msra.mxu0 %v3671
    %5145 = vmatprep.subr.bf16.mxu0 %v3668
    %5146 = vmatpush2.bf16.msra.mxu0 %v3667
    %5147 = vmatprep.mubr.bf16.mxu0 %v928
    %5148 = vmatmul.mubr.bf16.gmra.mxu0 %v914
    %v5149 = vpop.f32.mrf.mxu0
    %v5150 = vadd.f32 %v5109, %v5149
    %v5151 = vpop.f32.mrf.mxu0
    %v5152 = vadd.f32 %v5111, %v5151
    %v5153 = vpop.f32.mrf.mxu0
    %v5154 = vpop.f32.mrf.mxu0
    %5155 = vdwg.mxu0
    %5156 = vmatprep.subr.bf16.mxu0 %v3728
    %5157 = vmatpush1.bf16.msra.mxu0 %v3727
    %5158 = vmatprep.subr.bf16.mxu0 %v3724
    %5159 = vmatpush1.bf16.msra.mxu0 %v3723
    %5160 = vmatprep.subr.bf16.mxu0 %v3720
    %5161 = vmatpush1.bf16.msra.mxu0 %v3719
    %5162 = vmatprep.subr.bf16.mxu0 %v3716
    %5163 = vmatpush1.bf16.msra.mxu0 %v3715
    %5164 = vmatprep.subr.bf16.mxu0 %v3712
    %5165 = vmatpush1.bf16.msra.mxu0 %v3711
    %5166 = vmatprep.subr.bf16.mxu0 %v3708
    %5167 = vmatpush1.bf16.msra.mxu0 %v3707
    %5168 = vmatprep.subr.bf16.mxu0 %v3704
    %5169 = vmatpush1.bf16.msra.mxu0 %v3703
    %5170 = vmatprep.subr.bf16.mxu0 %v3700
    %5171 = vmatpush1.bf16.msra.mxu0 %v3699
    %5172 = vmatprep.subr.bf16.mxu0 %v3760
    %5173 = vmatpush2.bf16.msra.mxu0 %v3759
    %5174 = vmatprep.subr.bf16.mxu0 %v3756
    %5175 = vmatpush2.bf16.msra.mxu0 %v3755
    %5176 = vmatprep.subr.bf16.mxu0 %v3752
    %5177 = vmatpush2.bf16.msra.mxu0 %v3751
    %5178 = vmatprep.subr.bf16.mxu0 %v3748
    %5179 = vmatpush2.bf16.msra.mxu0 %v3747
    %5180 = vmatprep.subr.bf16.mxu0 %v3744
    %5181 = vmatpush2.bf16.msra.mxu0 %v3743
    %5182 = vmatprep.subr.bf16.mxu0 %v3740
    %5183 = vmatpush2.bf16.msra.mxu0 %v3739
    %5184 = vmatprep.subr.bf16.mxu0 %v3736
    %5185 = vmatpush2.bf16.msra.mxu0 %v3735
    %5186 = vmatprep.subr.bf16.mxu0 %v3732
    %5187 = vmatpush2.bf16.msra.mxu0 %v3731
    %5188 = vmatprep.mubr.bf16.mxu0 %v938
    %5189 = vmatmul.mubr.bf16.gmra.mxu0 %v936
    %v5190 = vpop.f32.mrf.mxu0
    %v5191 = vadd.f32 %v5150, %v5190
    %v5192 = vpop.f32.mrf.mxu0
    %v5193 = vadd.f32 %v5152, %v5192
    %v5194 = vpop.f32.mrf.mxu0
    %v5195 = vpop.f32.mrf.mxu0
    %5196 = vdwg.mxu0
    %5197 = vmatprep.subr.bf16.mxu0 %v3792
    %5198 = vmatpush1.bf16.msra.mxu0 %v3791
    %5199 = vmatprep.subr.bf16.mxu0 %v3788
    %5200 = vmatpush1.bf16.msra.mxu0 %v3787
    %5201 = vmatprep.subr.bf16.mxu0 %v3784
    %5202 = vmatpush1.bf16.msra.mxu0 %v3783
    %5203 = vmatprep.subr.bf16.mxu0 %v3780
    %5204 = vmatpush1.bf16.msra.mxu0 %v3779
    %5205 = vmatprep.subr.bf16.mxu0 %v3776
    %5206 = vmatpush1.bf16.msra.mxu0 %v3775
    %5207 = vmatprep.subr.bf16.mxu0 %v3772
    %5208 = vmatpush1.bf16.msra.mxu0 %v3771
    %5209 = vmatprep.subr.bf16.mxu0 %v3768
    %5210 = vmatpush1.bf16.msra.mxu0 %v3767
    %5211 = vmatprep.subr.bf16.mxu0 %v3764
    %5212 = vmatpush1.bf16.msra.mxu0 %v3763
    %5213 = vmatprep.subr.bf16.mxu0 %v3824
    %5214 = vmatpush2.bf16.msra.mxu0 %v3823
    %5215 = vmatprep.subr.bf16.mxu0 %v3820
    %5216 = vmatpush2.bf16.msra.mxu0 %v3819
    %5217 = vmatprep.subr.bf16.mxu0 %v3816
    %5218 = vmatpush2.bf16.msra.mxu0 %v3815
    %5219 = vmatprep.subr.bf16.mxu0 %v3812
    %5220 = vmatpush2.bf16.msra.mxu0 %v3811
    %5221 = vmatprep.subr.bf16.mxu0 %v3808
    %5222 = vmatpush2.bf16.msra.mxu0 %v3807
    %5223 = vmatprep.subr.bf16.mxu0 %v3804
    %5224 = vmatpush2.bf16.msra.mxu0 %v3803
    %5225 = vmatprep.subr.bf16.mxu0 %v3800
    %5226 = vmatpush2.bf16.msra.mxu0 %v3799
    %5227 = vmatprep.subr.bf16.mxu0 %v3796
    %5228 = vmatpush2.bf16.msra.mxu0 %v3795
    %5229 = vmatprep.mubr.bf16.mxu0 %v935
    %5230 = vmatmul.mubr.bf16.gmra.mxu0 %v921
    %v5231 = vpop.f32.mrf.mxu0
    %v5232 = vadd.f32 %v5191, %v5231
    %v5233 = vpop.f32.mrf.mxu0
    %v5234 = vadd.f32 %v5193, %v5233
    %v5235 = vpop.f32.mrf.mxu0
    %v5236 = vpop.f32.mrf.mxu0
    %5237 = vdwg.mxu0
    %5238 = vmatprep.subr.bf16.mxu0 %v3856
    %5239 = vmatpush1.bf16.msra.mxu0 %v3855
    %5240 = vmatprep.subr.bf16.mxu0 %v3852
    %5241 = vmatpush1.bf16.msra.mxu0 %v3851
    %5242 = vmatprep.subr.bf16.mxu0 %v3848
    %5243 = vmatpush1.bf16.msra.mxu0 %v3847
    %5244 = vmatprep.subr.bf16.mxu0 %v3844
    %5245 = vmatpush1.bf16.msra.mxu0 %v3843
    %5246 = vmatprep.subr.bf16.mxu0 %v3840
    %5247 = vmatpush1.bf16.msra.mxu0 %v3839
    %5248 = vmatprep.subr.bf16.mxu0 %v3836
    %5249 = vmatpush1.bf16.msra.mxu0 %v3835
    %5250 = vmatprep.subr.bf16.mxu0 %v3832
    %5251 = vmatpush1.bf16.msra.mxu0 %v3831
    %5252 = vmatprep.subr.bf16.mxu0 %v3828
    %5253 = vmatpush1.bf16.msra.mxu0 %v3827
    %5254 = vmatprep.subr.bf16.mxu0 %v3888
    %5255 = vmatpush2.bf16.msra.mxu0 %v3887
    %5256 = vmatprep.subr.bf16.mxu0 %v3884
    %5257 = vmatpush2.bf16.msra.mxu0 %v3883
    %5258 = vmatprep.subr.bf16.mxu0 %v3880
    %5259 = vmatpush2.bf16.msra.mxu0 %v3879
    %5260 = vmatprep.subr.bf16.mxu0 %v3876
    %5261 = vmatpush2.bf16.msra.mxu0 %v3875
    %5262 = vmatprep.subr.bf16.mxu0 %v3872
    %5263 = vmatpush2.bf16.msra.mxu0 %v3871
    %5264 = vmatprep.subr.bf16.mxu0 %v3868
    %5265 = vmatpush2.bf16.msra.mxu0 %v3867
    %5266 = vmatprep.subr.bf16.mxu0 %v3864
    %5267 = vmatpush2.bf16.msra.mxu0 %v3863
    %5268 = vmatprep.subr.bf16.mxu0 %v3860
    %5269 = vmatpush2.bf16.msra.mxu0 %v3859
    %5270 = vmatprep.mubr.bf16.mxu0 %v939
    %5271 = vmatmul.mubr.bf16.gmra.mxu0 %v937
    %v5272 = vpop.f32.mrf.mxu0
    %v5273 = vadd.f32 %v5232, %v5272
    %v5274 = vpop.f32.mrf.mxu0
    %v5275 = vadd.f32 %v5234, %v5274
    %v5276 = vpop.f32.mrf.mxu0
    %v5277 = vpop.f32.mrf.mxu0
    %5278 = vdwg.mxu0
    %5279 = vmatprep.subr.bf16.mxu0 %v3920
    %5280 = vmatpush1.bf16.msra.mxu0 %v3919
    %5281 = vmatprep.subr.bf16.mxu0 %v3916
    %5282 = vmatpush1.bf16.msra.mxu0 %v3915
    %5283 = vmatprep.subr.bf16.mxu0 %v3912
    %5284 = vmatpush1.bf16.msra.mxu0 %v3911
    %5285 = vmatprep.subr.bf16.mxu0 %v3908
    %5286 = vmatpush1.bf16.msra.mxu0 %v3907
    %5287 = vmatprep.subr.bf16.mxu0 %v3904
    %5288 = vmatpush1.bf16.msra.mxu0 %v3903
    %5289 = vmatprep.subr.bf16.mxu0 %v3900
    %5290 = vmatpush1.bf16.msra.mxu0 %v3899
    %5291 = vmatprep.subr.bf16.mxu0 %v3896
    %5292 = vmatpush1.bf16.msra.mxu0 %v3895
    %5293 = vmatprep.subr.bf16.mxu0 %v3892
    %5294 = vmatpush1.bf16.msra.mxu0 %v3891
    %5295 = vmatprep.subr.bf16.mxu0 %v3952
    %5296 = vmatpush2.bf16.msra.mxu0 %v3951
    %5297 = vmatprep.subr.bf16.mxu0 %v3948
    %5298 = vmatpush2.bf16.msra.mxu0 %v3947
    %5299 = vmatprep.subr.bf16.mxu0 %v3944
    %5300 = vmatpush2.bf16.msra.mxu0 %v3943
    %5301 = vmatprep.subr.bf16.mxu0 %v3940
    %5302 = vmatpush2.bf16.msra.mxu0 %v3939
    %5303 = vmatprep.subr.bf16.mxu0 %v3936
    %5304 = vmatpush2.bf16.msra.mxu0 %v3935
    %5305 = vmatprep.subr.bf16.mxu0 %v3932
    %5306 = vmatpush2.bf16.msra.mxu0 %v3931
    %5307 = vmatprep.subr.bf16.mxu0 %v3928
    %5308 = vmatpush2.bf16.msra.mxu0 %v3927
    %5309 = vmatprep.subr.bf16.mxu0 %v3924
    %5310 = vmatpush2.bf16.msra.mxu0 %v3923
    %5311 = vmatprep.mubr.bf16.mxu0 %v977
    %5312 = vmatmul.mubr.bf16.gmra.mxu0 %v963
    %v5313 = vpop.f32.mrf.mxu0
    %v5314 = vadd.f32 %v5273, %v5313
    %v5315 = vpop.f32.mrf.mxu0
    %v5316 = vadd.f32 %v5275, %v5315
    %v5317 = vpop.f32.mrf.mxu0
    %v5318 = vpop.f32.mrf.mxu0
    %5319 = vdwg.mxu0
    %5320 = vmatprep.subr.bf16.mxu0 %v3984
    %5321 = vmatpush1.bf16.msra.mxu0 %v3983
    %5322 = vmatprep.subr.bf16.mxu0 %v3980
    %5323 = vmatpush1.bf16.msra.mxu0 %v3979
    %5324 = vmatprep.subr.bf16.mxu0 %v3976
    %5325 = vmatpush1.bf16.msra.mxu0 %v3975
    %5326 = vmatprep.subr.bf16.mxu0 %v3972
    %5327 = vmatpush1.bf16.msra.mxu0 %v3971
    %5328 = vmatprep.subr.bf16.mxu0 %v3968
    %5329 = vmatpush1.bf16.msra.mxu0 %v3967
    %5330 = vmatprep.subr.bf16.mxu0 %v3964
    %5331 = vmatpush1.bf16.msra.mxu0 %v3963
    %5332 = vmatprep.subr.bf16.mxu0 %v3960
    %5333 = vmatpush1.bf16.msra.mxu0 %v3959
    %5334 = vmatprep.subr.bf16.mxu0 %v3956
    %5335 = vmatpush1.bf16.msra.mxu0 %v3955
    %5336 = vmatprep.subr.bf16.mxu0 %v4016
    %5337 = vmatpush2.bf16.msra.mxu0 %v4015
    %5338 = vmatprep.subr.bf16.mxu0 %v4012
    %5339 = vmatpush2.bf16.msra.mxu0 %v4011
    %5340 = vmatprep.subr.bf16.mxu0 %v4008
    %5341 = vmatpush2.bf16.msra.mxu0 %v4007
    %5342 = vmatprep.subr.bf16.mxu0 %v4004
    %5343 = vmatpush2.bf16.msra.mxu0 %v4003
    %5344 = vmatprep.subr.bf16.mxu0 %v4000
    %5345 = vmatpush2.bf16.msra.mxu0 %v3999
    %5346 = vmatprep.subr.bf16.mxu0 %v3996
    %5347 = vmatpush2.bf16.msra.mxu0 %v3995
    %5348 = vmatprep.subr.bf16.mxu0 %v3992
    %5349 = vmatpush2.bf16.msra.mxu0 %v3991
    %5350 = vmatprep.subr.bf16.mxu0 %v3988
    %5351 = vmatpush2.bf16.msra.mxu0 %v3987
    %5352 = vmatprep.mubr.bf16.mxu0 %v987
    %5353 = vmatmul.mubr.bf16.gmra.mxu0 %v985
    %v5354 = vpop.f32.mrf.mxu0
    %v5355 = vadd.f32 %v5314, %v5354
    %v5356 = vpop.f32.mrf.mxu0
    %v5357 = vadd.f32 %v5316, %v5356
    %v5358 = vpop.f32.mrf.mxu0
    %v5359 = vpop.f32.mrf.mxu0
    %5360 = vdwg.mxu0
    %5361 = vmatprep.subr.bf16.mxu0 %v4048
    %5362 = vmatpush1.bf16.msra.mxu0 %v4047
    %5363 = vmatprep.subr.bf16.mxu0 %v4044
    %5364 = vmatpush1.bf16.msra.mxu0 %v4043
    %5365 = vmatprep.subr.bf16.mxu0 %v4040
    %5366 = vmatpush1.bf16.msra.mxu0 %v4039
    %5367 = vmatprep.subr.bf16.mxu0 %v4036
    %5368 = vmatpush1.bf16.msra.mxu0 %v4035
    %5369 = vmatprep.subr.bf16.mxu0 %v4032
    %5370 = vmatpush1.bf16.msra.mxu0 %v4031
    %5371 = vmatprep.subr.bf16.mxu0 %v4028
    %5372 = vmatpush1.bf16.msra.mxu0 %v4027
    %5373 = vmatprep.subr.bf16.mxu0 %v4024
    %5374 = vmatpush1.bf16.msra.mxu0 %v4023
    %5375 = vmatprep.subr.bf16.mxu0 %v4020
    %5376 = vmatpush1.bf16.msra.mxu0 %v4019
    %5377 = vmatprep.subr.bf16.mxu0 %v4080
    %5378 = vmatpush2.bf16.msra.mxu0 %v4079
    %5379 = vmatprep.subr.bf16.mxu0 %v4076
    %5380 = vmatpush2.bf16.msra.mxu0 %v4075
    %5381 = vmatprep.subr.bf16.mxu0 %v4072
    %5382 = vmatpush2.bf16.msra.mxu0 %v4071
    %5383 = vmatprep.subr.bf16.mxu0 %v4068
    %5384 = vmatpush2.bf16.msra.mxu0 %v4067
    %5385 = vmatprep.subr.bf16.mxu0 %v4064
    %5386 = vmatpush2.bf16.msra.mxu0 %v4063
    %5387 = vmatprep.subr.bf16.mxu0 %v4060
    %5388 = vmatpush2.bf16.msra.mxu0 %v4059
    %5389 = vmatprep.subr.bf16.mxu0 %v4056
    %5390 = vmatpush2.bf16.msra.mxu0 %v4055
    %5391 = vmatprep.subr.bf16.mxu0 %v4052
    %5392 = vmatpush2.bf16.msra.mxu0 %v4051
    %5393 = vmatprep.mubr.bf16.mxu0 %v984
    %5394 = vmatmul.mubr.bf16.gmra.mxu0 %v970
    %v5395 = vpop.f32.mrf.mxu0
    %v5396 = vadd.f32 %v5355, %v5395
    %v5397 = vpop.f32.mrf.mxu0
    %v5398 = vadd.f32 %v5357, %v5397
    %v5399 = vpop.f32.mrf.mxu0
    %v5400 = vpop.f32.mrf.mxu0
    %5401 = vdwg.mxu0
    %5402 = vmatprep.subr.bf16.mxu0 %v4112
    %5403 = vmatpush1.bf16.msra.mxu0 %v4111
    %5404 = vmatprep.subr.bf16.mxu0 %v4108
    %5405 = vmatpush1.bf16.msra.mxu0 %v4107
    %5406 = vmatprep.subr.bf16.mxu0 %v4104
    %5407 = vmatpush1.bf16.msra.mxu0 %v4103
    %5408 = vmatprep.subr.bf16.mxu0 %v4100
    %5409 = vmatpush1.bf16.msra.mxu0 %v4099
    %5410 = vmatprep.subr.bf16.mxu0 %v4096
    %5411 = vmatpush1.bf16.msra.mxu0 %v4095
    %5412 = vmatprep.subr.bf16.mxu0 %v4092
    %5413 = vmatpush1.bf16.msra.mxu0 %v4091
    %5414 = vmatprep.subr.bf16.mxu0 %v4088
    %5415 = vmatpush1.bf16.msra.mxu0 %v4087
    %5416 = vmatprep.subr.bf16.mxu0 %v4084
    %5417 = vmatpush1.bf16.msra.mxu0 %v4083
    %5418 = vmatprep.subr.bf16.mxu0 %v4144
    %5419 = vmatpush2.bf16.msra.mxu0 %v4143
    %5420 = vmatprep.subr.bf16.mxu0 %v4140
    %5421 = vmatpush2.bf16.msra.mxu0 %v4139
    %5422 = vmatprep.subr.bf16.mxu0 %v4136
    %5423 = vmatpush2.bf16.msra.mxu0 %v4135
    %5424 = vmatprep.subr.bf16.mxu0 %v4132
    %5425 = vmatpush2.bf16.msra.mxu0 %v4131
    %5426 = vmatprep.subr.bf16.mxu0 %v4128
    %5427 = vmatpush2.bf16.msra.mxu0 %v4127
    %5428 = vmatprep.subr.bf16.mxu0 %v4124
    %5429 = vmatpush2.bf16.msra.mxu0 %v4123
    %5430 = vmatprep.subr.bf16.mxu0 %v4120
    %5431 = vmatpush2.bf16.msra.mxu0 %v4119
    %5432 = vmatprep.subr.bf16.mxu0 %v4116
    %5433 = vmatpush2.bf16.msra.mxu0 %v4115
    %5434 = vmatprep.mubr.bf16.mxu0 %v988
    %5435 = vmatmul.mubr.bf16.gmra.mxu0 %v986
    %v5436 = vpop.f32.mrf.mxu0
    %v5437 = vadd.f32 %v5396, %v5436
    %v5438 = vpop.f32.mrf.mxu0
    %v5439 = vadd.f32 %v5398, %v5438
    %v5440 = vpop.f32.mrf.mxu0
    %v5441 = vpop.f32.mrf.mxu0
    %5442 = vdwg.mxu0
    %5443 = vmatprep.subr.bf16.mxu0 0
    %5444 = vmatpush1.bf16.msra.mxu0 0
    %5445 = vmatprep.subr.bf16.mxu0 0
    %5446 = vmatpush1.bf16.msra.mxu0 0
    %5447 = vmatprep.subr.bf16.mxu0 0
    %5448 = vmatpush1.bf16.msra.mxu0 0
    %5449 = vmatprep.subr.bf16.mxu0 0
    %5450 = vmatpush1.bf16.msra.mxu0 0
    %5451 = vmatprep.subr.bf16.mxu0 %v4160
    %5452 = vmatpush1.bf16.msra.mxu0 %v4159
    %5453 = vmatprep.subr.bf16.mxu0 %v4156
    %5454 = vmatpush1.bf16.msra.mxu0 %v4155
    %5455 = vmatprep.subr.bf16.mxu0 %v4152
    %5456 = vmatpush1.bf16.msra.mxu0 %v4151
    %5457 = vmatprep.subr.bf16.mxu0 %v4148
    %5458 = vmatpush1.bf16.msra.mxu0 %v4147
    %5459 = vmatprep.subr.bf16.mxu0 0
    %5460 = vmatpush2.bf16.msra.mxu0 0
    %5461 = vmatprep.subr.bf16.mxu0 0
    %5462 = vmatpush2.bf16.msra.mxu0 0
    %5463 = vmatprep.subr.bf16.mxu0 0
    %5464 = vmatpush2.bf16.msra.mxu0 0
    %5465 = vmatprep.subr.bf16.mxu0 0
    %5466 = vmatpush2.bf16.msra.mxu0 0
    %5467 = vmatprep.subr.bf16.mxu0 0
    %5468 = vmatpush2.bf16.msra.mxu0 0
    %5469 = vmatprep.subr.bf16.mxu0 0
    %5470 = vmatpush2.bf16.msra.mxu0 0
    %5471 = vmatprep.subr.bf16.mxu0 0
    %5472 = vmatpush2.bf16.msra.mxu0 0
    %5473 = vmatprep.subr.bf16.mxu0 0
    %5474 = vmatpush2.bf16.msra.mxu0 0
    %5475 = vmatprep.mubr.bf16.mxu0 0
    %5476 = vmatmul.mubr.bf16.gmra.mxu0 %v4949
    %v5477 = vpop.f32.mrf.mxu0
    %v5478 = vadd.f32 %v5437, %v5477
    %v5479 = vpop.f32.mrf.mxu0
    %v5480 = vadd.f32 %v5439, %v5479
    %v5481 = vpop.f32.mrf.mxu0
    %v5482 = vpop.f32.mrf.mxu0
    %5483 = vdwg.mxu0
    %5484 = vmatprep.subr.bf16.mxu0 %v3410
    %5485 = vmatpush1.bf16.msra.mxu0 %v3409
    %5486 = vmatprep.subr.bf16.mxu0 %v3406
    %5487 = vmatpush1.bf16.msra.mxu0 %v3405
    %5488 = vmatprep.subr.bf16.mxu0 %v3402
    %5489 = vmatpush1.bf16.msra.mxu0 %v3401
    %5490 = vmatprep.subr.bf16.mxu0 %v3398
    %5491 = vmatpush1.bf16.msra.mxu0 %v3397
    %5492 = vmatprep.subr.bf16.mxu0 %v3394
    %5493 = vmatpush1.bf16.msra.mxu0 %v3393
    %5494 = vmatprep.subr.bf16.mxu0 %v3390
    %5495 = vmatpush1.bf16.msra.mxu0 %v3389
    %5496 = vmatprep.subr.bf16.mxu0 %v3386
    %5497 = vmatpush1.bf16.msra.mxu0 %v3385
    %5498 = vmatprep.subr.bf16.mxu0 %v3382
    %5499 = vmatpush1.bf16.msra.mxu0 %v3381
    %5500 = vmatprep.subr.bf16.mxu0 %v3442
    %5501 = vmatpush2.bf16.msra.mxu0 %v3441
    %5502 = vmatprep.subr.bf16.mxu0 %v3438
    %5503 = vmatpush2.bf16.msra.mxu0 %v3437
    %5504 = vmatprep.subr.bf16.mxu0 %v3434
    %5505 = vmatpush2.bf16.msra.mxu0 %v3433
    %5506 = vmatprep.subr.bf16.mxu0 %v3430
    %5507 = vmatpush2.bf16.msra.mxu0 %v3429
    %5508 = vmatprep.subr.bf16.mxu0 %v3426
    %5509 = vmatpush2.bf16.msra.mxu0 %v3425
    %5510 = vmatprep.subr.bf16.mxu0 %v3422
    %5511 = vmatpush2.bf16.msra.mxu0 %v3421
    %5512 = vmatprep.subr.bf16.mxu0 %v3418
    %5513 = vmatpush2.bf16.msra.mxu0 %v3417
    %5514 = vmatprep.subr.bf16.mxu0 %v3414
    %5515 = vmatpush2.bf16.msra.mxu0 %v3413
    %5516 = vmatprep.mubr.bf16.mxu0 %v879
    %5517 = vmatmul.mubr.bf16.gmra.mxu0 %v865
    %v5518 = vpop.f32.mrf.mxu0
    %v5519 = vadd.f32 %v829, %v5518
    %v5520 = vpop.f32.mrf.mxu0
    %v5521 = vadd.f32 %v833, %v5520
    %v5522 = vpop.f32.mrf.mxu0
    %v5523 = vpop.f32.mrf.mxu0
    %5524 = vdwg.mxu0
    %5525 = vmatprep.subr.bf16.mxu0 %v3474
    %5526 = vmatpush1.bf16.msra.mxu0 %v3473
    %5527 = vmatprep.subr.bf16.mxu0 %v3470
    %5528 = vmatpush1.bf16.msra.mxu0 %v3469
    %5529 = vmatprep.subr.bf16.mxu0 %v3466
    %5530 = vmatpush1.bf16.msra.mxu0 %v3465
    %5531 = vmatprep.subr.bf16.mxu0 %v3462
    %5532 = vmatpush1.bf16.msra.mxu0 %v3461
    %5533 = vmatprep.subr.bf16.mxu0 %v3458
    %5534 = vmatpush1.bf16.msra.mxu0 %v3457
    %5535 = vmatprep.subr.bf16.mxu0 %v3454
    %5536 = vmatpush1.bf16.msra.mxu0 %v3453
    %5537 = vmatprep.subr.bf16.mxu0 %v3450
    %5538 = vmatpush1.bf16.msra.mxu0 %v3449
    %5539 = vmatprep.subr.bf16.mxu0 %v3446
    %5540 = vmatpush1.bf16.msra.mxu0 %v3445
    %5541 = vmatprep.subr.bf16.mxu0 %v3506
    %5542 = vmatpush2.bf16.msra.mxu0 %v3505
    %5543 = vmatprep.subr.bf16.mxu0 %v3502
    %5544 = vmatpush2.bf16.msra.mxu0 %v3501
    %5545 = vmatprep.subr.bf16.mxu0 %v3498
    %5546 = vmatpush2.bf16.msra.mxu0 %v3497
    %5547 = vmatprep.subr.bf16.mxu0 %v3494
    %5548 = vmatpush2.bf16.msra.mxu0 %v3493
    %5549 = vmatprep.subr.bf16.mxu0 %v3490
    %5550 = vmatpush2.bf16.msra.mxu0 %v3489
    %5551 = vmatprep.subr.bf16.mxu0 %v3486
    %5552 = vmatpush2.bf16.msra.mxu0 %v3485
    %5553 = vmatprep.subr.bf16.mxu0 %v3482
    %5554 = vmatpush2.bf16.msra.mxu0 %v3481
    %5555 = vmatprep.subr.bf16.mxu0 %v3478
    %5556 = vmatpush2.bf16.msra.mxu0 %v3477
    %5557 = vmatprep.mubr.bf16.mxu0 %v889
    %5558 = vmatmul.mubr.bf16.gmra.mxu0 %v887
    %v5559 = vpop.f32.mrf.mxu0
    %v5560 = vadd.f32 %v5519, %v5559
    %v5561 = vpop.f32.mrf.mxu0
    %v5562 = vadd.f32 %v5521, %v5561
    %v5563 = vpop.f32.mrf.mxu0
    %v5564 = vpop.f32.mrf.mxu0
    %5565 = vdwg.mxu0
    %5566 = vmatprep.subr.bf16.mxu0 %v3538
    %5567 = vmatpush1.bf16.msra.mxu0 %v3537
    %5568 = vmatprep.subr.bf16.mxu0 %v3534
    %5569 = vmatpush1.bf16.msra.mxu0 %v3533
    %5570 = vmatprep.subr.bf16.mxu0 %v3530
    %5571 = vmatpush1.bf16.msra.mxu0 %v3529
    %5572 = vmatprep.subr.bf16.mxu0 %v3526
    %5573 = vmatpush1.bf16.msra.mxu0 %v3525
    %5574 = vmatprep.subr.bf16.mxu0 %v3522
    %5575 = vmatpush1.bf16.msra.mxu0 %v3521
    %5576 = vmatprep.subr.bf16.mxu0 %v3518
    %5577 = vmatpush1.bf16.msra.mxu0 %v3517
    %5578 = vmatprep.subr.bf16.mxu0 %v3514
    %5579 = vmatpush1.bf16.msra.mxu0 %v3513
    %5580 = vmatprep.subr.bf16.mxu0 %v3510
    %5581 = vmatpush1.bf16.msra.mxu0 %v3509
    %5582 = vmatprep.subr.bf16.mxu0 %v3570
    %5583 = vmatpush2.bf16.msra.mxu0 %v3569
    %5584 = vmatprep.subr.bf16.mxu0 %v3566
    %5585 = vmatpush2.bf16.msra.mxu0 %v3565
    %5586 = vmatprep.subr.bf16.mxu0 %v3562
    %5587 = vmatpush2.bf16.msra.mxu0 %v3561
    %5588 = vmatprep.subr.bf16.mxu0 %v3558
    %5589 = vmatpush2.bf16.msra.mxu0 %v3557
    %5590 = vmatprep.subr.bf16.mxu0 %v3554
    %5591 = vmatpush2.bf16.msra.mxu0 %v3553
    %5592 = vmatprep.subr.bf16.mxu0 %v3550
    %5593 = vmatpush2.bf16.msra.mxu0 %v3549
    %5594 = vmatprep.subr.bf16.mxu0 %v3546
    %5595 = vmatpush2.bf16.msra.mxu0 %v3545
    %5596 = vmatprep.subr.bf16.mxu0 %v3542
    %5597 = vmatpush2.bf16.msra.mxu0 %v3541
    %5598 = vmatprep.mubr.bf16.mxu0 %v886
    %5599 = vmatmul.mubr.bf16.gmra.mxu0 %v872
    %v5600 = vpop.f32.mrf.mxu0
    %v5601 = vadd.f32 %v5560, %v5600
    %v5602 = vpop.f32.mrf.mxu0
    %v5603 = vadd.f32 %v5562, %v5602
    %v5604 = vpop.f32.mrf.mxu0
    %v5605 = vpop.f32.mrf.mxu0
    %5606 = vdwg.mxu0
    %5607 = vmatprep.subr.bf16.mxu0 %v3602
    %5608 = vmatpush1.bf16.msra.mxu0 %v3601
    %5609 = vmatprep.subr.bf16.mxu0 %v3598
    %5610 = vmatpush1.bf16.msra.mxu0 %v3597
    %5611 = vmatprep.subr.bf16.mxu0 %v3594
    %5612 = vmatpush1.bf16.msra.mxu0 %v3593
    %5613 = vmatprep.subr.bf16.mxu0 %v3590
    %5614 = vmatpush1.bf16.msra.mxu0 %v3589
    %5615 = vmatprep.subr.bf16.mxu0 %v3586
    %5616 = vmatpush1.bf16.msra.mxu0 %v3585
    %5617 = vmatprep.subr.bf16.mxu0 %v3582
    %5618 = vmatpush1.bf16.msra.mxu0 %v3581
    %5619 = vmatprep.subr.bf16.mxu0 %v3578
    %5620 = vmatpush1.bf16.msra.mxu0 %v3577
    %5621 = vmatprep.subr.bf16.mxu0 %v3574
    %5622 = vmatpush1.bf16.msra.mxu0 %v3573
    %5623 = vmatprep.subr.bf16.mxu0 %v3634
    %5624 = vmatpush2.bf16.msra.mxu0 %v3633
    %5625 = vmatprep.subr.bf16.mxu0 %v3630
    %5626 = vmatpush2.bf16.msra.mxu0 %v3629
    %5627 = vmatprep.subr.bf16.mxu0 %v3626
    %5628 = vmatpush2.bf16.msra.mxu0 %v3625
    %5629 = vmatprep.subr.bf16.mxu0 %v3622
    %5630 = vmatpush2.bf16.msra.mxu0 %v3621
    %5631 = vmatprep.subr.bf16.mxu0 %v3618
    %5632 = vmatpush2.bf16.msra.mxu0 %v3617
    %5633 = vmatprep.subr.bf16.mxu0 %v3614
    %5634 = vmatpush2.bf16.msra.mxu0 %v3613
    %5635 = vmatprep.subr.bf16.mxu0 %v3610
    %5636 = vmatpush2.bf16.msra.mxu0 %v3609
    %5637 = vmatprep.subr.bf16.mxu0 %v3606
    %5638 = vmatpush2.bf16.msra.mxu0 %v3605
    %5639 = vmatprep.mubr.bf16.mxu0 %v890
    %5640 = vmatmul.mubr.bf16.gmra.mxu0 %v888
    %v5641 = vpop.f32.mrf.mxu0
    %v5642 = vadd.f32 %v5601, %v5641
    %v5643 = vpop.f32.mrf.mxu0
    %v5644 = vadd.f32 %v5603, %v5643
    %v5645 = vpop.f32.mrf.mxu0
    %v5646 = vpop.f32.mrf.mxu0
    %5647 = vdwg.mxu0
    %5648 = vmatprep.subr.bf16.mxu0 %v3666
    %5649 = vmatpush1.bf16.msra.mxu0 %v3665
    %5650 = vmatprep.subr.bf16.mxu0 %v3662
    %5651 = vmatpush1.bf16.msra.mxu0 %v3661
    %5652 = vmatprep.subr.bf16.mxu0 %v3658
    %5653 = vmatpush1.bf16.msra.mxu0 %v3657
    %5654 = vmatprep.subr.bf16.mxu0 %v3654
    %5655 = vmatpush1.bf16.msra.mxu0 %v3653
    %5656 = vmatprep.subr.bf16.mxu0 %v3650
    %5657 = vmatpush1.bf16.msra.mxu0 %v3649
    %5658 = vmatprep.subr.bf16.mxu0 %v3646
    %5659 = vmatpush1.bf16.msra.mxu0 %v3645
    %5660 = vmatprep.subr.bf16.mxu0 %v3642
    %5661 = vmatpush1.bf16.msra.mxu0 %v3641
    %5662 = vmatprep.subr.bf16.mxu0 %v3638
    %5663 = vmatpush1.bf16.msra.mxu0 %v3637
    %5664 = vmatprep.subr.bf16.mxu0 %v3698
    %5665 = vmatpush2.bf16.msra.mxu0 %v3697
    %5666 = vmatprep.subr.bf16.mxu0 %v3694
    %5667 = vmatpush2.bf16.msra.mxu0 %v3693
    %5668 = vmatprep.subr.bf16.mxu0 %v3690
    %5669 = vmatpush2.bf16.msra.mxu0 %v3689
    %5670 = vmatprep.subr.bf16.mxu0 %v3686
    %5671 = vmatpush2.bf16.msra.mxu0 %v3685
    %5672 = vmatprep.subr.bf16.mxu0 %v3682
    %5673 = vmatpush2.bf16.msra.mxu0 %v3681
    %5674 = vmatprep.subr.bf16.mxu0 %v3678
    %5675 = vmatpush2.bf16.msra.mxu0 %v3677
    %5676 = vmatprep.subr.bf16.mxu0 %v3674
    %5677 = vmatpush2.bf16.msra.mxu0 %v3673
    %5678 = vmatprep.subr.bf16.mxu0 %v3670
    %5679 = vmatpush2.bf16.msra.mxu0 %v3669
    %5680 = vmatprep.mubr.bf16.mxu0 %v928
    %5681 = vmatmul.mubr.bf16.gmra.mxu0 %v914
    %v5682 = vpop.f32.mrf.mxu0
    %v5683 = vadd.f32 %v5642, %v5682
    %v5684 = vpop.f32.mrf.mxu0
    %v5685 = vadd.f32 %v5644, %v5684
    %v5686 = vpop.f32.mrf.mxu0
    %v5687 = vpop.f32.mrf.mxu0
    %5688 = vdwg.mxu0
    %5689 = vmatprep.subr.bf16.mxu0 %v3730
    %5690 = vmatpush1.bf16.msra.mxu0 %v3729
    %5691 = vmatprep.subr.bf16.mxu0 %v3726
    %5692 = vmatpush1.bf16.msra.mxu0 %v3725
    %5693 = vmatprep.subr.bf16.mxu0 %v3722
    %5694 = vmatpush1.bf16.msra.mxu0 %v3721
    %5695 = vmatprep.subr.bf16.mxu0 %v3718
    %5696 = vmatpush1.bf16.msra.mxu0 %v3717
    %5697 = vmatprep.subr.bf16.mxu0 %v3714
    %5698 = vmatpush1.bf16.msra.mxu0 %v3713
    %5699 = vmatprep.subr.bf16.mxu0 %v3710
    %5700 = vmatpush1.bf16.msra.mxu0 %v3709
    %5701 = vmatprep.subr.bf16.mxu0 %v3706
    %5702 = vmatpush1.bf16.msra.mxu0 %v3705
    %5703 = vmatprep.subr.bf16.mxu0 %v3702
    %5704 = vmatpush1.bf16.msra.mxu0 %v3701
    %5705 = vmatprep.subr.bf16.mxu0 %v3762
    %5706 = vmatpush2.bf16.msra.mxu0 %v3761
    %5707 = vmatprep.subr.bf16.mxu0 %v3758
    %5708 = vmatpush2.bf16.msra.mxu0 %v3757
    %5709 = vmatprep.subr.bf16.mxu0 %v3754
    %5710 = vmatpush2.bf16.msra.mxu0 %v3753
    %5711 = vmatprep.subr.bf16.mxu0 %v3750
    %5712 = vmatpush2.bf16.msra.mxu0 %v3749
    %5713 = vmatprep.subr.bf16.mxu0 %v3746
    %5714 = vmatpush2.bf16.msra.mxu0 %v3745
    %5715 = vmatprep.subr.bf16.mxu0 %v3742
    %5716 = vmatpush2.bf16.msra.mxu0 %v3741
    %5717 = vmatprep.subr.bf16.mxu0 %v3738
    %5718 = vmatpush2.bf16.msra.mxu0 %v3737
    %5719 = vmatprep.subr.bf16.mxu0 %v3734
    %5720 = vmatpush2.bf16.msra.mxu0 %v3733
    %5721 = vmatprep.mubr.bf16.mxu0 %v938
    %5722 = vmatmul.mubr.bf16.gmra.mxu0 %v936
    %v5723 = vpop.f32.mrf.mxu0
    %v5724 = vadd.f32 %v5683, %v5723
    %v5725 = vpop.f32.mrf.mxu0
    %v5726 = vadd.f32 %v5685, %v5725
    %v5727 = vpop.f32.mrf.mxu0
    %v5728 = vpop.f32.mrf.mxu0
    %5729 = vdwg.mxu0
    %5730 = vmatprep.subr.bf16.mxu0 %v3794
    %5731 = vmatpush1.bf16.msra.mxu0 %v3793
    %5732 = vmatprep.subr.bf16.mxu0 %v3790
    %5733 = vmatpush1.bf16.msra.mxu0 %v3789
    %5734 = vmatprep.subr.bf16.mxu0 %v3786
    %5735 = vmatpush1.bf16.msra.mxu0 %v3785
    %5736 = vmatprep.subr.bf16.mxu0 %v3782
    %5737 = vmatpush1.bf16.msra.mxu0 %v3781
    %5738 = vmatprep.subr.bf16.mxu0 %v3778
    %5739 = vmatpush1.bf16.msra.mxu0 %v3777
    %5740 = vmatprep.subr.bf16.mxu0 %v3774
    %5741 = vmatpush1.bf16.msra.mxu0 %v3773
    %5742 = vmatprep.subr.bf16.mxu0 %v3770
    %5743 = vmatpush1.bf16.msra.mxu0 %v3769
    %5744 = vmatprep.subr.bf16.mxu0 %v3766
    %5745 = vmatpush1.bf16.msra.mxu0 %v3765
    %5746 = vmatprep.subr.bf16.mxu0 %v3826
    %5747 = vmatpush2.bf16.msra.mxu0 %v3825
    %5748 = vmatprep.subr.bf16.mxu0 %v3822
    %5749 = vmatpush2.bf16.msra.mxu0 %v3821
    %5750 = vmatprep.subr.bf16.mxu0 %v3818
    %5751 = vmatpush2.bf16.msra.mxu0 %v3817
    %5752 = vmatprep.subr.bf16.mxu0 %v3814
    %5753 = vmatpush2.bf16.msra.mxu0 %v3813
    %5754 = vmatprep.subr.bf16.mxu0 %v3810
    %5755 = vmatpush2.bf16.msra.mxu0 %v3809
    %5756 = vmatprep.subr.bf16.mxu0 %v3806
    %5757 = vmatpush2.bf16.msra.mxu0 %v3805
    %5758 = vmatprep.subr.bf16.mxu0 %v3802
    %5759 = vmatpush2.bf16.msra.mxu0 %v3801
    %5760 = vmatprep.subr.bf16.mxu0 %v3798
    %5761 = vmatpush2.bf16.msra.mxu0 %v3797
    %5762 = vmatprep.mubr.bf16.mxu0 %v935
    %5763 = vmatmul.mubr.bf16.gmra.mxu0 %v921
    %v5764 = vpop.f32.mrf.mxu0
    %v5765 = vadd.f32 %v5724, %v5764
    %v5766 = vpop.f32.mrf.mxu0
    %v5767 = vadd.f32 %v5726, %v5766
    %v5768 = vpop.f32.mrf.mxu0
    %v5769 = vpop.f32.mrf.mxu0
    %5770 = vdwg.mxu0
    %5771 = vmatprep.subr.bf16.mxu0 %v3858
    %5772 = vmatpush1.bf16.msra.mxu0 %v3857
    %5773 = vmatprep.subr.bf16.mxu0 %v3854
    %5774 = vmatpush1.bf16.msra.mxu0 %v3853
    %5775 = vmatprep.subr.bf16.mxu0 %v3850
    %5776 = vmatpush1.bf16.msra.mxu0 %v3849
    %5777 = vmatprep.subr.bf16.mxu0 %v3846
    %5778 = vmatpush1.bf16.msra.mxu0 %v3845
    %5779 = vmatprep.subr.bf16.mxu0 %v3842
    %5780 = vmatpush1.bf16.msra.mxu0 %v3841
    %5781 = vmatprep.subr.bf16.mxu0 %v3838
    %5782 = vmatpush1.bf16.msra.mxu0 %v3837
    %5783 = vmatprep.subr.bf16.mxu0 %v3834
    %5784 = vmatpush1.bf16.msra.mxu0 %v3833
    %5785 = vmatprep.subr.bf16.mxu0 %v3830
    %5786 = vmatpush1.bf16.msra.mxu0 %v3829
    %5787 = vmatprep.subr.bf16.mxu0 %v3890
    %5788 = vmatpush2.bf16.msra.mxu0 %v3889
    %5789 = vmatprep.subr.bf16.mxu0 %v3886
    %5790 = vmatpush2.bf16.msra.mxu0 %v3885
    %5791 = vmatprep.subr.bf16.mxu0 %v3882
    %5792 = vmatpush2.bf16.msra.mxu0 %v3881
    %5793 = vmatprep.subr.bf16.mxu0 %v3878
    %5794 = vmatpush2.bf16.msra.mxu0 %v3877
    %5795 = vmatprep.subr.bf16.mxu0 %v3874
    %5796 = vmatpush2.bf16.msra.mxu0 %v3873
    %5797 = vmatprep.subr.bf16.mxu0 %v3870
    %5798 = vmatpush2.bf16.msra.mxu0 %v3869
    %5799 = vmatprep.subr.bf16.mxu0 %v3866
    %5800 = vmatpush2.bf16.msra.mxu0 %v3865
    %5801 = vmatprep.subr.bf16.mxu0 %v3862
    %5802 = vmatpush2.bf16.msra.mxu0 %v3861
    %5803 = vmatprep.mubr.bf16.mxu0 %v939
    %5804 = vmatmul.mubr.bf16.gmra.mxu0 %v937
    %v5805 = vpop.f32.mrf.mxu0
    %v5806 = vadd.f32 %v5765, %v5805
    %v5807 = vpop.f32.mrf.mxu0
    %v5808 = vadd.f32 %v5767, %v5807
    %v5809 = vpop.f32.mrf.mxu0
    %v5810 = vpop.f32.mrf.mxu0
    %5811 = vdwg.mxu0
    %5812 = vmatprep.subr.bf16.mxu0 %v3922
    %5813 = vmatpush1.bf16.msra.mxu0 %v3921
    %5814 = vmatprep.subr.bf16.mxu0 %v3918
    %5815 = vmatpush1.bf16.msra.mxu0 %v3917
    %5816 = vmatprep.subr.bf16.mxu0 %v3914
    %5817 = vmatpush1.bf16.msra.mxu0 %v3913
    %5818 = vmatprep.subr.bf16.mxu0 %v3910
    %5819 = vmatpush1.bf16.msra.mxu0 %v3909
    %5820 = vmatprep.subr.bf16.mxu0 %v3906
    %5821 = vmatpush1.bf16.msra.mxu0 %v3905
    %5822 = vmatprep.subr.bf16.mxu0 %v3902
    %5823 = vmatpush1.bf16.msra.mxu0 %v3901
    %5824 = vmatprep.subr.bf16.mxu0 %v3898
    %5825 = vmatpush1.bf16.msra.mxu0 %v3897
    %5826 = vmatprep.subr.bf16.mxu0 %v3894
    %5827 = vmatpush1.bf16.msra.mxu0 %v3893
    %5828 = vmatprep.subr.bf16.mxu0 %v3954
    %5829 = vmatpush2.bf16.msra.mxu0 %v3953
    %5830 = vmatprep.subr.bf16.mxu0 %v3950
    %5831 = vmatpush2.bf16.msra.mxu0 %v3949
    %5832 = vmatprep.subr.bf16.mxu0 %v3946
    %5833 = vmatpush2.bf16.msra.mxu0 %v3945
    %5834 = vmatprep.subr.bf16.mxu0 %v3942
    %5835 = vmatpush2.bf16.msra.mxu0 %v3941
    %5836 = vmatprep.subr.bf16.mxu0 %v3938
    %5837 = vmatpush2.bf16.msra.mxu0 %v3937
    %5838 = vmatprep.subr.bf16.mxu0 %v3934
    %5839 = vmatpush2.bf16.msra.mxu0 %v3933
    %5840 = vmatprep.subr.bf16.mxu0 %v3930
    %5841 = vmatpush2.bf16.msra.mxu0 %v3929
    %5842 = vmatprep.subr.bf16.mxu0 %v3926
    %5843 = vmatpush2.bf16.msra.mxu0 %v3925
    %5844 = vmatprep.mubr.bf16.mxu0 %v977
    %5845 = vmatmul.mubr.bf16.gmra.mxu0 %v963
    %v5846 = vpop.f32.mrf.mxu0
    %v5847 = vadd.f32 %v5806, %v5846
    %v5848 = vpop.f32.mrf.mxu0
    %v5849 = vadd.f32 %v5808, %v5848
    %v5850 = vpop.f32.mrf.mxu0
    %v5851 = vpop.f32.mrf.mxu0
    %5852 = vdwg.mxu0
    %5853 = vmatprep.subr.bf16.mxu0 %v3986
    %5854 = vmatpush1.bf16.msra.mxu0 %v3985
    %5855 = vmatprep.subr.bf16.mxu0 %v3982
    %5856 = vmatpush1.bf16.msra.mxu0 %v3981
    %5857 = vmatprep.subr.bf16.mxu0 %v3978
    %5858 = vmatpush1.bf16.msra.mxu0 %v3977
    %5859 = vmatprep.subr.bf16.mxu0 %v3974
    %5860 = vmatpush1.bf16.msra.mxu0 %v3973
    %5861 = vmatprep.subr.bf16.mxu0 %v3970
    %5862 = vmatpush1.bf16.msra.mxu0 %v3969
    %5863 = vmatprep.subr.bf16.mxu0 %v3966
    %5864 = vmatpush1.bf16.msra.mxu0 %v3965
    %5865 = vmatprep.subr.bf16.mxu0 %v3962
    %5866 = vmatpush1.bf16.msra.mxu0 %v3961
    %5867 = vmatprep.subr.bf16.mxu0 %v3958
    %5868 = vmatpush1.bf16.msra.mxu0 %v3957
    %5869 = vmatprep.subr.bf16.mxu0 %v4018
    %5870 = vmatpush2.bf16.msra.mxu0 %v4017
    %5871 = vmatprep.subr.bf16.mxu0 %v4014
    %5872 = vmatpush2.bf16.msra.mxu0 %v4013
    %5873 = vmatprep.subr.bf16.mxu0 %v4010
    %5874 = vmatpush2.bf16.msra.mxu0 %v4009
    %5875 = vmatprep.subr.bf16.mxu0 %v4006
    %5876 = vmatpush2.bf16.msra.mxu0 %v4005
    %5877 = vmatprep.subr.bf16.mxu0 %v4002
    %5878 = vmatpush2.bf16.msra.mxu0 %v4001
    %5879 = vmatprep.subr.bf16.mxu0 %v3998
    %5880 = vmatpush2.bf16.msra.mxu0 %v3997
    %5881 = vmatprep.subr.bf16.mxu0 %v3994
    %5882 = vmatpush2.bf16.msra.mxu0 %v3993
    %5883 = vmatprep.subr.bf16.mxu0 %v3990
    %5884 = vmatpush2.bf16.msra.mxu0 %v3989
    %5885 = vmatprep.mubr.bf16.mxu0 %v987
    %5886 = vmatmul.mubr.bf16.gmra.mxu0 %v985
    %v5887 = vpop.f32.mrf.mxu0
    %v5888 = vadd.f32 %v5847, %v5887
    %v5889 = vpop.f32.mrf.mxu0
    %v5890 = vadd.f32 %v5849, %v5889
    %v5891 = vpop.f32.mrf.mxu0
    %v5892 = vpop.f32.mrf.mxu0
    %5893 = vdwg.mxu0
    %5894 = vmatprep.subr.bf16.mxu0 %v4050
    %5895 = vmatpush1.bf16.msra.mxu0 %v4049
    %5896 = vmatprep.subr.bf16.mxu0 %v4046
    %5897 = vmatpush1.bf16.msra.mxu0 %v4045
    %5898 = vmatprep.subr.bf16.mxu0 %v4042
    %5899 = vmatpush1.bf16.msra.mxu0 %v4041
    %5900 = vmatprep.subr.bf16.mxu0 %v4038
    %5901 = vmatpush1.bf16.msra.mxu0 %v4037
    %5902 = vmatprep.subr.bf16.mxu0 %v4034
    %5903 = vmatpush1.bf16.msra.mxu0 %v4033
    %5904 = vmatprep.subr.bf16.mxu0 %v4030
    %5905 = vmatpush1.bf16.msra.mxu0 %v4029
    %5906 = vmatprep.subr.bf16.mxu0 %v4026
    %5907 = vmatpush1.bf16.msra.mxu0 %v4025
    %5908 = vmatprep.subr.bf16.mxu0 %v4022
    %5909 = vmatpush1.bf16.msra.mxu0 %v4021
    %5910 = vmatprep.subr.bf16.mxu0 %v4082
    %5911 = vmatpush2.bf16.msra.mxu0 %v4081
    %5912 = vmatprep.subr.bf16.mxu0 %v4078
    %5913 = vmatpush2.bf16.msra.mxu0 %v4077
    %5914 = vmatprep.subr.bf16.mxu0 %v4074
    %5915 = vmatpush2.bf16.msra.mxu0 %v4073
    %5916 = vmatprep.subr.bf16.mxu0 %v4070
    %5917 = vmatpush2.bf16.msra.mxu0 %v4069
    %5918 = vmatprep.subr.bf16.mxu0 %v4066
    %5919 = vmatpush2.bf16.msra.mxu0 %v4065
    %5920 = vmatprep.subr.bf16.mxu0 %v4062
    %5921 = vmatpush2.bf16.msra.mxu0 %v4061
    %5922 = vmatprep.subr.bf16.mxu0 %v4058
    %5923 = vmatpush2.bf16.msra.mxu0 %v4057
    %5924 = vmatprep.subr.bf16.mxu0 %v4054
    %5925 = vmatpush2.bf16.msra.mxu0 %v4053
    %5926 = vmatprep.mubr.bf16.mxu0 %v984
    %5927 = vmatmul.mubr.bf16.gmra.mxu0 %v970
    %v5928 = vpop.f32.mrf.mxu0
    %v5929 = vadd.f32 %v5888, %v5928
    %v5930 = vpop.f32.mrf.mxu0
    %v5931 = vadd.f32 %v5890, %v5930
    %v5932 = vpop.f32.mrf.mxu0
    %v5933 = vpop.f32.mrf.mxu0
    %5934 = vdwg.mxu0
    %5935 = vmatprep.subr.bf16.mxu0 %v4114
    %5936 = vmatpush1.bf16.msra.mxu0 %v4113
    %5937 = vmatprep.subr.bf16.mxu0 %v4110
    %5938 = vmatpush1.bf16.msra.mxu0 %v4109
    %5939 = vmatprep.subr.bf16.mxu0 %v4106
    %5940 = vmatpush1.bf16.msra.mxu0 %v4105
    %5941 = vmatprep.subr.bf16.mxu0 %v4102
    %5942 = vmatpush1.bf16.msra.mxu0 %v4101
    %5943 = vmatprep.subr.bf16.mxu0 %v4098
    %5944 = vmatpush1.bf16.msra.mxu0 %v4097
    %5945 = vmatprep.subr.bf16.mxu0 %v4094
    %5946 = vmatpush1.bf16.msra.mxu0 %v4093
    %5947 = vmatprep.subr.bf16.mxu0 %v4090
    %5948 = vmatpush1.bf16.msra.mxu0 %v4089
    %5949 = vmatprep.subr.bf16.mxu0 %v4086
    %5950 = vmatpush1.bf16.msra.mxu0 %v4085
    %5951 = vmatprep.subr.bf16.mxu0 %v4146
    %5952 = vmatpush2.bf16.msra.mxu0 %v4145
    %5953 = vmatprep.subr.bf16.mxu0 %v4142
    %5954 = vmatpush2.bf16.msra.mxu0 %v4141
    %5955 = vmatprep.subr.bf16.mxu0 %v4138
    %5956 = vmatpush2.bf16.msra.mxu0 %v4137
    %5957 = vmatprep.subr.bf16.mxu0 %v4134
    %5958 = vmatpush2.bf16.msra.mxu0 %v4133
    %5959 = vmatprep.subr.bf16.mxu0 %v4130
    %5960 = vmatpush2.bf16.msra.mxu0 %v4129
    %5961 = vmatprep.subr.bf16.mxu0 %v4126
    %5962 = vmatpush2.bf16.msra.mxu0 %v4125
    %5963 = vmatprep.subr.bf16.mxu0 %v4122
    %5964 = vmatpush2.bf16.msra.mxu0 %v4121
    %5965 = vmatprep.subr.bf16.mxu0 %v4118
    %5966 = vmatpush2.bf16.msra.mxu0 %v4117
    %5967 = vmatprep.mubr.bf16.mxu0 %v988
    %5968 = vmatmul.mubr.bf16.gmra.mxu0 %v986
    %v5969 = vpop.f32.mrf.mxu0
    %v5970 = vadd.f32 %v5929, %v5969
    %v5971 = vpop.f32.mrf.mxu0
    %v5972 = vadd.f32 %v5931, %v5971
    %v5973 = vpop.f32.mrf.mxu0
    %v5974 = vpop.f32.mrf.mxu0
    %5975 = vdwg.mxu0
    %5976 = vmatprep.subr.bf16.mxu0 0
    %5977 = vmatpush1.bf16.msra.mxu0 0
    %5978 = vmatprep.subr.bf16.mxu0 0
    %5979 = vmatpush1.bf16.msra.mxu0 0
    %5980 = vmatprep.subr.bf16.mxu0 0
    %5981 = vmatpush1.bf16.msra.mxu0 0
    %5982 = vmatprep.subr.bf16.mxu0 0
    %5983 = vmatpush1.bf16.msra.mxu0 0
    %5984 = vmatprep.subr.bf16.mxu0 %v4162
    %5985 = vmatpush1.bf16.msra.mxu0 %v4161
    %5986 = vmatprep.subr.bf16.mxu0 %v4158
    %5987 = vmatpush1.bf16.msra.mxu0 %v4157
    %5988 = vmatprep.subr.bf16.mxu0 %v4154
    %5989 = vmatpush1.bf16.msra.mxu0 %v4153
    %5990 = vmatprep.subr.bf16.mxu0 %v4150
    %5991 = vmatpush1.bf16.msra.mxu0 %v4149
    %5992 = vmatprep.subr.bf16.mxu0 0
    %5993 = vmatpush2.bf16.msra.mxu0 0
    %5994 = vmatprep.subr.bf16.mxu0 0
    %5995 = vmatpush2.bf16.msra.mxu0 0
    %5996 = vmatprep.subr.bf16.mxu0 0
    %5997 = vmatpush2.bf16.msra.mxu0 0
    %5998 = vmatprep.subr.bf16.mxu0 0
    %5999 = vmatpush2.bf16.msra.mxu0 0
    %6000 = vmatprep.subr.bf16.mxu0 0
    %6001 = vmatpush2.bf16.msra.mxu0 0
    %6002 = vmatprep.subr.bf16.mxu0 0
    %6003 = vmatpush2.bf16.msra.mxu0 0
    %6004 = vmatprep.subr.bf16.mxu0 0
    %6005 = vmatpush2.bf16.msra.mxu0 0
    %6006 = vmatprep.subr.bf16.mxu0 0
    %6007 = vmatpush2.bf16.msra.mxu0 0
    %6008 = vmatprep.mubr.bf16.mxu0 0
    %6009 = vmatmul.mubr.bf16.gmra.mxu0 %v4949
    %v6010 = vpop.f32.mrf.mxu0
    %v6011 = vadd.f32 %v5970, %v6010
    %v6012 = vpop.f32.mrf.mxu0
    %v6013 = vadd.f32 %v5972, %v6012
    %v6014 = vpop.f32.mrf.mxu0
    %v6015 = vpop.f32.mrf.mxu0
    %6016 = vdwg.mxu0
    %v6017 = vmax.f32 %v5478, 0.0
    %v6018 = vmax.f32 %v5480, 0.0
    %v6019 = vmax.f32 %v6011, 0.0
    %v6020 = vmax.f32 %v6013, 0.0
    %v6021 = vpack.c.bf16 %v6017, %v6017
    %v6022 = vpack.c.bf16 %v6018, %v6018
    %v6023 = vpack.c.bf16 %v6019, %v6019
    %v6024 = vpack.c.bf16 %v6020, %v6020
    %v6025 = vld [vmem:[%s3] sm:$0xff]
    %v6026 = vld [vmem:[%s3 + $0x8] sm:$0xff]
    %v6027 = vld [vmem:[%s3 + $0x10] sm:$0xff]
    %v6028 = vld [vmem:[%s3 + $0x18] sm:$0xff]
    %v6029 = vld [vmem:[%s3 + $0x20] sm:$0xff]
    %v6030 = vld [vmem:[%s3 + $0x28] sm:$0xff]
    %v6031 = vld [vmem:[%s3 + $0x30] sm:$0xff]
    %v6032 = vld [vmem:[%s3 + $0x38] sm:$0xff]
    %v6033 = vld [vmem:[%s3 + $0x40] sm:$0xff]
    %v6034 = vld [vmem:[%s3 + $0x48] sm:$0xff]
    %v6035 = vld [vmem:[%s3 + $0x50] sm:$0xff]
    %v6036 = vld [vmem:[%s3 + $0x58] sm:$0xff]
    %v6037 = vld [vmem:[%s3 + $0x60] sm:$0xff]
    %v6038 = vld [vmem:[%s3 + $0x68] sm:$0xff]
    %v6039 = vld [vmem:[%s3 + $0x70] sm:$0xff]
    %v6040 = vld [vmem:[%s3 + $0x78] sm:$0xff]
    %v6041 = vld [vmem:[%s3 + $0x80] sm:$0xff]
    %v6042 = vld [vmem:[%s3 + $0x88] sm:$0xff]
    %v6043 = vld [vmem:[%s3 + $0x90] sm:$0xff]
    %v6044 = vld [vmem:[%s3 + $0x98] sm:$0xff]
    %v6045 = vld [vmem:[%s3 + $0xa0] sm:$0xff]
    %v6046 = vld [vmem:[%s3 + $0xa8] sm:$0xff]
    %v6047 = vld [vmem:[%s3 + $0xb0] sm:$0xff]
    %v6048 = vld [vmem:[%s3 + $0xb8] sm:$0xff]
    %v6049 = vld [vmem:[%s3 + $0xc0] sm:$0xff]
    %v6050 = vld [vmem:[%s3 + $0xc8] sm:$0xff]
    %v6051 = vld [vmem:[%s3 + $0xd0] sm:$0xff]
    %v6052 = vld [vmem:[%s3 + $0xd8] sm:$0xff]
    %v6053 = vld [vmem:[%s3 + $0xe0] sm:$0xff]
    %v6054 = vld [vmem:[%s3 + $0xe8] sm:$0xff]
    %v6055 = vld [vmem:[%s3 + $0xf0] sm:$0xff]
    %v6056 = vld [vmem:[%s3 + $0xf8] sm:$0xff]
    %v6057 = vld [vmem:[%s3 + $0x100] sm:$0xff]
    %v6058 = vld [vmem:[%s3 + $0x108] sm:$0xff]
    %v6059 = vld [vmem:[%s3 + $0x110] sm:$0xff]
    %v6060 = vld [vmem:[%s3 + $0x118] sm:$0xff]
    %v6061 = vld [vmem:[%s3 + $0x120] sm:$0xff]
    %v6062 = vld [vmem:[%s3 + $0x128] sm:$0xff]
    %v6063 = vld [vmem:[%s3 + $0x130] sm:$0xff]
    %v6064 = vld [vmem:[%s3 + $0x138] sm:$0xff]
    %v6065 = vld [vmem:[%s3 + $0x140] sm:$0xff]
    %v6066 = vld [vmem:[%s3 + $0x148] sm:$0xff]
    %v6067 = vld [vmem:[%s3 + $0x150] sm:$0xff]
    %v6068 = vld [vmem:[%s3 + $0x158] sm:$0xff]
    %v6069 = vld [vmem:[%s3 + $0x160] sm:$0xff]
    %v6070 = vld [vmem:[%s3 + $0x168] sm:$0xff]
    %v6071 = vld [vmem:[%s3 + $0x170] sm:$0xff]
    %v6072 = vld [vmem:[%s3 + $0x178] sm:$0xff]
    %v6073 = vld [vmem:[%s3 + $0x180] sm:$0xff]
    %v6074 = vld [vmem:[%s3 + $0x188] sm:$0xff]
    %v6075 = vld [vmem:[%s3 + $0x190] sm:$0xff]
    %v6076 = vld [vmem:[%s3 + $0x198] sm:$0xff]
    %v6077 = vld [vmem:[%s3 + $0x1a0] sm:$0xff]
    %v6078 = vld [vmem:[%s3 + $0x1a8] sm:$0xff]
    %v6079 = vld [vmem:[%s3 + $0x1b0] sm:$0xff]
    %v6080 = vld [vmem:[%s3 + $0x1b8] sm:$0xff]
    %v6081 = vld [vmem:[%s3 + $0x1c0] sm:$0xff]
    %v6082 = vld [vmem:[%s3 + $0x1c8] sm:$0xff]
    %v6083 = vld [vmem:[%s3 + $0x1d0] sm:$0xff]
    %v6084 = vld [vmem:[%s3 + $0x1d8] sm:$0xff]
    %v6085 = vld [vmem:[%s3 + $0x1e0] sm:$0xff]
    %v6086 = vld [vmem:[%s3 + $0x1e8] sm:$0xff]
    %v6087 = vld [vmem:[%s3 + $0x1f0] sm:$0xff]
    %v6088 = vld [vmem:[%s3 + $0x1f8] sm:$0xff]
    %v6089 = vld [vmem:[%s4] sm:$0x3]
    %v6091 = vlaneseq
    %v6092 = vshrl.u32 %v6091, 7
    %v6093 = vsub.s32 0, %v6092
    %v6094 = vrot.slane %v6089, %v6093
    %v6095 = vlaneseq
    %v6096 = vshrl.u32 %v6095, 7
    %v6097 = vsub.s32 1, %v6096
    %v6098 = vrot.slane %v6089, %v6097
    %v6165 = vunpack.c.l.b16 %v6025
    %v6166 = vunpack.c.h.b16 %v6025
    %v6167 = vunpack.c.l.b16 %v6026
    %v6168 = vunpack.c.h.b16 %v6026
    %v6169 = vunpack.c.l.b16 %v6027
    %v6170 = vunpack.c.h.b16 %v6027
    %v6171 = vunpack.c.l.b16 %v6028
    %v6172 = vunpack.c.h.b16 %v6028
    %v6173 = vunpack.c.l.b16 %v6029
    %v6174 = vunpack.c.h.b16 %v6029
    %v6175 = vunpack.c.l.b16 %v6030
    %v6176 = vunpack.c.h.b16 %v6030
    %v6177 = vunpack.c.l.b16 %v6031
    %v6178 = vunpack.c.h.b16 %v6031
    %v6179 = vunpack.c.l.b16 %v6032
    %v6180 = vunpack.c.h.b16 %v6032
    %v6181 = vunpack.c.l.b16 %v6033
    %v6182 = vunpack.c.h.b16 %v6033
    %v6183 = vunpack.c.l.b16 %v6034
    %v6184 = vunpack.c.h.b16 %v6034
    %v6185 = vunpack.c.l.b16 %v6035
    %v6186 = vunpack.c.h.b16 %v6035
    %v6187 = vunpack.c.l.b16 %v6036
    %v6188 = vunpack.c.h.b16 %v6036
    %v6189 = vunpack.c.l.b16 %v6037
    %v6190 = vunpack.c.h.b16 %v6037
    %v6191 = vunpack.c.l.b16 %v6038
    %v6192 = vunpack.c.h.b16 %v6038
    %v6193 = vunpack.c.l.b16 %v6039
    %v6194 = vunpack.c.h.b16 %v6039
    %v6195 = vunpack.c.l.b16 %v6040
    %v6196 = vunpack.c.h.b16 %v6040
    %v6197 = vunpack.c.l.b16 %v6041
    %v6198 = vunpack.c.h.b16 %v6041
    %v6199 = vunpack.c.l.b16 %v6042
    %v6200 = vunpack.c.h.b16 %v6042
    %v6201 = vunpack.c.l.b16 %v6043
    %v6202 = vunpack.c.h.b16 %v6043
    %v6203 = vunpack.c.l.b16 %v6044
    %v6204 = vunpack.c.h.b16 %v6044
    %v6205 = vunpack.c.l.b16 %v6045
    %v6206 = vunpack.c.h.b16 %v6045
    %v6207 = vunpack.c.l.b16 %v6046
    %v6208 = vunpack.c.h.b16 %v6046
    %v6209 = vunpack.c.l.b16 %v6047
    %v6210 = vunpack.c.h.b16 %v6047
    %v6211 = vunpack.c.l.b16 %v6048
    %v6212 = vunpack.c.h.b16 %v6048
    %v6213 = vunpack.c.l.b16 %v6049
    %v6214 = vunpack.c.h.b16 %v6049
    %v6215 = vunpack.c.l.b16 %v6050
    %v6216 = vunpack.c.h.b16 %v6050
    %v6217 = vunpack.c.l.b16 %v6051
    %v6218 = vunpack.c.h.b16 %v6051
    %v6219 = vunpack.c.l.b16 %v6052
    %v6220 = vunpack.c.h.b16 %v6052
    %v6221 = vunpack.c.l.b16 %v6053
    %v6222 = vunpack.c.h.b16 %v6053
    %v6223 = vunpack.c.l.b16 %v6054
    %v6224 = vunpack.c.h.b16 %v6054
    %v6225 = vunpack.c.l.b16 %v6055
    %v6226 = vunpack.c.h.b16 %v6055
    %v6227 = vunpack.c.l.b16 %v6056
    %v6228 = vunpack.c.h.b16 %v6056
    %v6229 = vunpack.c.l.b16 %v6057
    %v6230 = vunpack.c.h.b16 %v6057
    %v6231 = vunpack.c.l.b16 %v6058
    %v6232 = vunpack.c.h.b16 %v6058
    %v6233 = vunpack.c.l.b16 %v6059
    %v6234 = vunpack.c.h.b16 %v6059
    %v6235 = vunpack.c.l.b16 %v6060
    %v6236 = vunpack.c.h.b16 %v6060
    %v6237 = vunpack.c.l.b16 %v6061
    %v6238 = vunpack.c.h.b16 %v6061
    %v6239 = vunpack.c.l.b16 %v6062
    %v6240 = vunpack.c.h.b16 %v6062
    %v6241 = vunpack.c.l.b16 %v6063
    %v6242 = vunpack.c.h.b16 %v6063
    %v6243 = vunpack.c.l.b16 %v6064
    %v6244 = vunpack.c.h.b16 %v6064
    %v6245 = vunpack.c.l.b16 %v6065
    %v6246 = vunpack.c.h.b16 %v6065
    %v6247 = vunpack.c.l.b16 %v6066
    %v6248 = vunpack.c.h.b16 %v6066
    %v6249 = vunpack.c.l.b16 %v6067
    %v6250 = vunpack.c.h.b16 %v6067
    %v6251 = vunpack.c.l.b16 %v6068
    %v6252 = vunpack.c.h.b16 %v6068
    %v6253 = vunpack.c.l.b16 %v6069
    %v6254 = vunpack.c.h.b16 %v6069
    %v6255 = vunpack.c.l.b16 %v6070
    %v6256 = vunpack.c.h.b16 %v6070
    %v6257 = vunpack.c.l.b16 %v6071
    %v6258 = vunpack.c.h.b16 %v6071
    %v6259 = vunpack.c.l.b16 %v6072
    %v6260 = vunpack.c.h.b16 %v6072
    %v6261 = vunpack.c.l.b16 %v6073
    %v6262 = vunpack.c.h.b16 %v6073
    %v6263 = vunpack.c.l.b16 %v6074
    %v6264 = vunpack.c.h.b16 %v6074
    %v6265 = vunpack.c.l.b16 %v6075
    %v6266 = vunpack.c.h.b16 %v6075
    %v6267 = vunpack.c.l.b16 %v6076
    %v6268 = vunpack.c.h.b16 %v6076
    %v6269 = vunpack.c.l.b16 %v6077
    %v6270 = vunpack.c.h.b16 %v6077
    %v6271 = vunpack.c.l.b16 %v6078
    %v6272 = vunpack.c.h.b16 %v6078
    %v6273 = vunpack.c.l.b16 %v6079
    %v6274 = vunpack.c.h.b16 %v6079
    %v6275 = vunpack.c.l.b16 %v6080
    %v6276 = vunpack.c.h.b16 %v6080
    %v6277 = vunpack.c.l.b16 %v6081
    %v6278 = vunpack.c.h.b16 %v6081
    %v6279 = vunpack.c.l.b16 %v6082
    %v6280 = vunpack.c.h.b16 %v6082
    %v6281 = vunpack.c.l.b16 %v6083
    %v6282 = vunpack.c.h.b16 %v6083
    %v6283 = vunpack.c.l.b16 %v6084
    %v6284 = vunpack.c.h.b16 %v6084
    %v6285 = vunpack.c.l.b16 %v6085
    %v6286 = vunpack.c.h.b16 %v6085
    %v6287 = vunpack.c.l.b16 %v6086
    %v6288 = vunpack.c.h.b16 %v6086
    %v6289 = vunpack.c.l.b16 %v6087
    %v6290 = vunpack.c.h.b16 %v6087
    %v6291 = vunpack.c.l.b16 %v6088
    %v6292 = vunpack.c.h.b16 %v6088
    %v6293 = vpack.c.b16 %v6167, %v6165
    %v6294 = vpack.c.b16 %v6168, %v6166
    %v6295 = vpack.c.b16 %v6171, %v6169
    %v6296 = vpack.c.b16 %v6172, %v6170
    %v6297 = vpack.c.b16 %v6175, %v6173
    %v6298 = vpack.c.b16 %v6176, %v6174
    %v6299 = vpack.c.b16 %v6179, %v6177
    %v6300 = vpack.c.b16 %v6180, %v6178
    %v6301 = vpack.c.b16 %v6183, %v6181
    %v6302 = vpack.c.b16 %v6184, %v6182
    %v6303 = vpack.c.b16 %v6187, %v6185
    %v6304 = vpack.c.b16 %v6188, %v6186
    %v6305 = vpack.c.b16 %v6191, %v6189
    %v6306 = vpack.c.b16 %v6192, %v6190
    %v6307 = vpack.c.b16 %v6195, %v6193
    %v6308 = vpack.c.b16 %v6196, %v6194
    %v6309 = vpack.c.b16 %v6199, %v6197
    %v6310 = vpack.c.b16 %v6200, %v6198
    %v6311 = vpack.c.b16 %v6203, %v6201
    %v6312 = vpack.c.b16 %v6204, %v6202
    %v6313 = vpack.c.b16 %v6207, %v6205
    %v6314 = vpack.c.b16 %v6208, %v6206
    %v6315 = vpack.c.b16 %v6211, %v6209
    %v6316 = vpack.c.b16 %v6212, %v6210
    %v6317 = vpack.c.b16 %v6215, %v6213
    %v6318 = vpack.c.b16 %v6216, %v6214
    %v6319 = vpack.c.b16 %v6219, %v6217
    %v6320 = vpack.c.b16 %v6220, %v6218
    %v6321 = vpack.c.b16 %v6223, %v6221
    %v6322 = vpack.c.b16 %v6224, %v6222
    %v6323 = vpack.c.b16 %v6227, %v6225
    %v6324 = vpack.c.b16 %v6228, %v6226
    %v6325 = vpack.c.b16 %v6231, %v6229
    %v6326 = vpack.c.b16 %v6232, %v6230
    %v6327 = vpack.c.b16 %v6235, %v6233
    %v6328 = vpack.c.b16 %v6236, %v6234
    %v6329 = vpack.c.b16 %v6239, %v6237
    %v6330 = vpack.c.b16 %v6240, %v6238
    %v6331 = vpack.c.b16 %v6243, %v6241
    %v6332 = vpack.c.b16 %v6244, %v6242
    %v6333 = vpack.c.b16 %v6247, %v6245
    %v6334 = vpack.c.b16 %v6248, %v6246
    %v6335 = vpack.c.b16 %v6251, %v6249
    %v6336 = vpack.c.b16 %v6252, %v6250
    %v6337 = vpack.c.b16 %v6255, %v6253
    %v6338 = vpack.c.b16 %v6256, %v6254
    %v6339 = vpack.c.b16 %v6259, %v6257
    %v6340 = vpack.c.b16 %v6260, %v6258
    %v6341 = vpack.c.b16 %v6263, %v6261
    %v6342 = vpack.c.b16 %v6264, %v6262
    %v6343 = vpack.c.b16 %v6267, %v6265
    %v6344 = vpack.c.b16 %v6268, %v6266
    %v6345 = vpack.c.b16 %v6271, %v6269
    %v6346 = vpack.c.b16 %v6272, %v6270
    %v6347 = vpack.c.b16 %v6275, %v6273
    %v6348 = vpack.c.b16 %v6276, %v6274
    %v6349 = vpack.c.b16 %v6279, %v6277
    %v6350 = vpack.c.b16 %v6280, %v6278
    %v6351 = vpack.c.b16 %v6283, %v6281
    %v6352 = vpack.c.b16 %v6284, %v6282
    %v6353 = vpack.c.b16 %v6287, %v6285
    %v6354 = vpack.c.b16 %v6288, %v6286
    %v6355 = vpack.c.b16 %v6291, %v6289
    %v6356 = vpack.c.b16 %v6292, %v6290
    %6421 = vmatprep.subr.bf16.mxu0 %v6308
    %6422 = vmatpush1.bf16.msra.mxu0 %v6307
    %6423 = vmatprep.subr.bf16.mxu0 %v6306
    %6424 = vmatpush1.bf16.msra.mxu0 %v6305
    %6425 = vmatprep.subr.bf16.mxu0 %v6304
    %6426 = vmatpush1.bf16.msra.mxu0 %v6303
    %6427 = vmatprep.subr.bf16.mxu0 %v6302
    %6428 = vmatpush1.bf16.msra.mxu0 %v6301
    %6429 = vmatprep.subr.bf16.mxu0 %v6300
    %6430 = vmatpush1.bf16.msra.mxu0 %v6299
    %6431 = vmatprep.subr.bf16.mxu0 %v6298
    %6432 = vmatpush1.bf16.msra.mxu0 %v6297
    %6433 = vmatprep.subr.bf16.mxu0 %v6296
    %6434 = vmatpush1.bf16.msra.mxu0 %v6295
    %6435 = vmatprep.subr.bf16.mxu0 %v6294
    %6436 = vmatpush1.bf16.msra.mxu0 %v6293
    %6437 = vmatprep.subr.bf16.mxu0 %v6324
    %6438 = vmatpush2.bf16.msra.mxu0 %v6323
    %6439 = vmatprep.subr.bf16.mxu0 %v6322
    %6440 = vmatpush2.bf16.msra.mxu0 %v6321
    %6441 = vmatprep.subr.bf16.mxu0 %v6320
    %6442 = vmatpush2.bf16.msra.mxu0 %v6319
    %6443 = vmatprep.subr.bf16.mxu0 %v6318
    %6444 = vmatpush2.bf16.msra.mxu0 %v6317
    %6445 = vmatprep.subr.bf16.mxu0 %v6316
    %6446 = vmatpush2.bf16.msra.mxu0 %v6315
    %6447 = vmatprep.subr.bf16.mxu0 %v6314
    %6448 = vmatpush2.bf16.msra.mxu0 %v6313
    %6449 = vmatprep.subr.bf16.mxu0 %v6312
    %6450 = vmatpush2.bf16.msra.mxu0 %v6311
    %6451 = vmatprep.subr.bf16.mxu0 %v6310
    %6452 = vmatpush2.bf16.msra.mxu0 %v6309
    %6453 = vmatprep.mubr.bf16.mxu0 %v6022
    %6454 = vmatmul.mubr.bf16.gmra.mxu0 %v6021
    %v6455 = vpop.f32.mrf.mxu0
    %v6456 = vadd.f32 %v6094, %v6455
    %v6457 = vpop.f32.mrf.mxu0
    %v6458 = vadd.f32 %v6098, %v6457
    %v6459 = vpop.f32.mrf.mxu0
    %v6460 = vpop.f32.mrf.mxu0
    %6461 = vdwg.mxu0
    %6462 = vmatprep.subr.bf16.mxu0 %v6340
    %6463 = vmatpush1.bf16.msra.mxu0 %v6339
    %6464 = vmatprep.subr.bf16.mxu0 %v6338
    %6465 = vmatpush1.bf16.msra.mxu0 %v6337
    %6466 = vmatprep.subr.bf16.mxu0 %v6336
    %6467 = vmatpush1.bf16.msra.mxu0 %v6335
    %6468 = vmatprep.subr.bf16.mxu0 %v6334
    %6469 = vmatpush1.bf16.msra.mxu0 %v6333
    %6470 = vmatprep.subr.bf16.mxu0 %v6332
    %6471 = vmatpush1.bf16.msra.mxu0 %v6331
    %6472 = vmatprep.subr.bf16.mxu0 %v6330
    %6473 = vmatpush1.bf16.msra.mxu0 %v6329
    %6474 = vmatprep.subr.bf16.mxu0 %v6328
    %6475 = vmatpush1.bf16.msra.mxu0 %v6327
    %6476 = vmatprep.subr.bf16.mxu0 %v6326
    %6477 = vmatpush1.bf16.msra.mxu0 %v6325
    %6478 = vmatprep.subr.bf16.mxu0 %v6356
    %6479 = vmatpush2.bf16.msra.mxu0 %v6355
    %6480 = vmatprep.subr.bf16.mxu0 %v6354
    %6481 = vmatpush2.bf16.msra.mxu0 %v6353
    %6482 = vmatprep.subr.bf16.mxu0 %v6352
    %6483 = vmatpush2.bf16.msra.mxu0 %v6351
    %6484 = vmatprep.subr.bf16.mxu0 %v6350
    %6485 = vmatpush2.bf16.msra.mxu0 %v6349
    %6486 = vmatprep.subr.bf16.mxu0 %v6348
    %6487 = vmatpush2.bf16.msra.mxu0 %v6347
    %6488 = vmatprep.subr.bf16.mxu0 %v6346
    %6489 = vmatpush2.bf16.msra.mxu0 %v6345
    %6490 = vmatprep.subr.bf16.mxu0 %v6344
    %6491 = vmatpush2.bf16.msra.mxu0 %v6343
    %6492 = vmatprep.subr.bf16.mxu0 %v6342
    %6493 = vmatpush2.bf16.msra.mxu0 %v6341
    %6494 = vmatprep.mubr.bf16.mxu0 %v6024
    %6495 = vmatmul.mubr.bf16.gmra.mxu0 %v6023
    %v6496 = vpop.f32.mrf.mxu0
    %v6497 = vadd.f32 %v6456, %v6496
    %v6498 = vpop.f32.mrf.mxu0
    %v6499 = vadd.f32 %v6458, %v6498
    %v6500 = vpop.f32.mrf.mxu0
    %v6501 = vpop.f32.mrf.mxu0
    %6502 = vdwg.mxu0
    %v6503 = vmax.f32 %v6497, 0.0
    %v6504 = vmax.f32 %v6499, 0.0
    %v6505 = vpack.c.bf16 %v6503, %v6503
    %v6506 = vpack.c.bf16 %v6504, %v6504
    %v6507 = vld [vmem:[%s5] sm:$0xf]
    %v6508 = vld [vmem:[%s5 + $0x4] sm:$0xf]
    %v6509 = vld [vmem:[%s5 + $0x8] sm:$0xf]
    %v6510 = vld [vmem:[%s5 + $0xc] sm:$0xf]
    %v6511 = vld [vmem:[%s5 + $0x10] sm:$0xf]
    %v6512 = vld [vmem:[%s5 + $0x14] sm:$0xf]
    %v6513 = vld [vmem:[%s5 + $0x18] sm:$0xf]
    %v6514 = vld [vmem:[%s5 + $0x1c] sm:$0xf]
    %v6515 = vld [vmem:[%s5 + $0x20] sm:$0xf]
    %v6516 = vld [vmem:[%s5 + $0x24] sm:$0xf]
    %v6517 = vld [vmem:[%s5 + $0x28] sm:$0xf]
    %v6518 = vld [vmem:[%s5 + $0x2c] sm:$0xf]
    %v6519 = vld [vmem:[%s5 + $0x30] sm:$0xf]
    %v6520 = vld [vmem:[%s5 + $0x34] sm:$0xf]
    %v6521 = vld [vmem:[%s5 + $0x38] sm:$0xf]
    %v6522 = vld [vmem:[%s5 + $0x3c] sm:$0xf]
    %v6523 = vld [vmem:[%s5 + $0x40] sm:$0xf]
    %v6524 = vld [vmem:[%s5 + $0x44] sm:$0xf]
    %v6525 = vld [vmem:[%s5 + $0x48] sm:$0xf]
    %v6526 = vld [vmem:[%s5 + $0x4c] sm:$0xf]
    %v6527 = vld [vmem:[%s5 + $0x50] sm:$0xf]
    %v6528 = vld [vmem:[%s5 + $0x54] sm:$0xf]
    %v6529 = vld [vmem:[%s5 + $0x58] sm:$0xf]
    %v6530 = vld [vmem:[%s5 + $0x5c] sm:$0xf]
    %v6531 = vld [vmem:[%s5 + $0x60] sm:$0xf]
    %v6532 = vld [vmem:[%s5 + $0x64] sm:$0xf]
    %v6533 = vld [vmem:[%s5 + $0x68] sm:$0xf]
    %v6534 = vld [vmem:[%s5 + $0x6c] sm:$0xf]
    %v6535 = vld [vmem:[%s5 + $0x70] sm:$0xf]
    %v6536 = vld [vmem:[%s5 + $0x74] sm:$0xf]
    %v6537 = vld [vmem:[%s5 + $0x78] sm:$0xf]
    %v6538 = vld [vmem:[%s5 + $0x7c] sm:$0xf]
    %v6539 = vld [vmem:[%s6] sm:$0x1]
    %v6541 = vlaneseq
    %v6542 = vshrl.u32 %v6541, 7
    %v6543 = vsub.s32 0, %v6542
    %v6544 = vrot.slane %v6539, %v6543
    %v6578 = vunpack.c.l.b16 %v6507
    %v6579 = vunpack.c.l.b16 %v6508
    %v6580 = vunpack.c.l.b16 %v6509
    %v6581 = vunpack.c.l.b16 %v6510
    %v6582 = vunpack.c.l.b16 %v6511
    %v6583 = vunpack.c.l.b16 %v6512
    %v6584 = vunpack.c.l.b16 %v6513
    %v6585 = vunpack.c.l.b16 %v6514
    %v6586 = vunpack.c.l.b16 %v6515
    %v6587 = vunpack.c.l.b16 %v6516
    %v6588 = vunpack.c.l.b16 %v6517
    %v6589 = vunpack.c.l.b16 %v6518
    %v6590 = vunpack.c.l.b16 %v6519
    %v6591 = vunpack.c.l.b16 %v6520
    %v6592 = vunpack.c.l.b16 %v6521
    %v6593 = vunpack.c.l.b16 %v6522
    %v6594 = vunpack.c.l.b16 %v6523
    %v6595 = vunpack.c.l.b16 %v6524
    %v6596 = vunpack.c.l.b16 %v6525
    %v6597 = vunpack.c.l.b16 %v6526
    %v6598 = vunpack.c.l.b16 %v6527
    %v6599 = vunpack.c.l.b16 %v6528
    %v6600 = vunpack.c.l.b16 %v6529
    %v6601 = vunpack.c.l.b16 %v6530
    %v6602 = vunpack.c.l.b16 %v6531
    %v6603 = vunpack.c.l.b16 %v6532
    %v6604 = vunpack.c.l.b16 %v6533
    %v6605 = vunpack.c.l.b16 %v6534
    %v6606 = vunpack.c.l.b16 %v6535
    %v6607 = vunpack.c.l.b16 %v6536
    %v6608 = vunpack.c.l.b16 %v6537
    %v6609 = vunpack.c.l.b16 %v6538
    %v6610 = vpack.c.b16 %v6579, %v6578
    %v6611 = vpack.c.b16 %v6581, %v6580
    %v6612 = vpack.c.b16 %v6583, %v6582
    %v6613 = vpack.c.b16 %v6585, %v6584
    %v6614 = vpack.c.b16 %v6587, %v6586
    %v6615 = vpack.c.b16 %v6589, %v6588
    %v6616 = vpack.c.b16 %v6591, %v6590
    %v6617 = vpack.c.b16 %v6593, %v6592
    %v6618 = vpack.c.b16 %v6595, %v6594
    %v6619 = vpack.c.b16 %v6597, %v6596
    %v6620 = vpack.c.b16 %v6599, %v6598
    %v6621 = vpack.c.b16 %v6601, %v6600
    %v6622 = vpack.c.b16 %v6603, %v6602
    %v6623 = vpack.c.b16 %v6605, %v6604
    %v6624 = vpack.c.b16 %v6607, %v6606
    %v6625 = vpack.c.b16 %v6609, %v6608
    %6642 = vmatprep.subr.bf16.mxu0 0
    %6643 = vmatpush1.bf16.msra.mxu0 %v6617
    %6644 = vmatprep.subr.bf16.mxu0 0
    %6645 = vmatpush1.bf16.msra.mxu0 %v6616
    %6646 = vmatprep.subr.bf16.mxu0 0
    %6647 = vmatpush1.bf16.msra.mxu0 %v6615
    %6648 = vmatprep.subr.bf16.mxu0 0
    %6649 = vmatpush1.bf16.msra.mxu0 %v6614
    %6650 = vmatprep.subr.bf16.mxu0 0
    %6651 = vmatpush1.bf16.msra.mxu0 %v6613
    %6652 = vmatprep.subr.bf16.mxu0 0
    %6653 = vmatpush1.bf16.msra.mxu0 %v6612
    %6654 = vmatprep.subr.bf16.mxu0 0
    %6655 = vmatpush1.bf16.msra.mxu0 %v6611
    %6656 = vmatprep.subr.bf16.mxu0 0
    %6657 = vmatpush1.bf16.msra.mxu0 %v6610
    %6658 = vmatprep.subr.bf16.mxu0 0
    %6659 = vmatpush2.bf16.msra.mxu0 %v6625
    %6660 = vmatprep.subr.bf16.mxu0 0
    %6661 = vmatpush2.bf16.msra.mxu0 %v6624
    %6662 = vmatprep.subr.bf16.mxu0 0
    %6663 = vmatpush2.bf16.msra.mxu0 %v6623
    %6664 = vmatprep.subr.bf16.mxu0 0
    %6665 = vmatpush2.bf16.msra.mxu0 %v6622
    %6666 = vmatprep.subr.bf16.mxu0 0
    %6667 = vmatpush2.bf16.msra.mxu0 %v6621
    %6668 = vmatprep.subr.bf16.mxu0 0
    %6669 = vmatpush2.bf16.msra.mxu0 %v6620
    %6670 = vmatprep.subr.bf16.mxu0 0
    %6671 = vmatpush2.bf16.msra.mxu0 %v6619
    %6672 = vmatprep.subr.bf16.mxu0 0
    %6673 = vmatpush2.bf16.msra.mxu0 %v6618
    %6674 = vmatprep.mubr.bf16.mxu0 %v6506
    %6675 = vmatmul.mubr.bf16.gmra.mxu0 %v6505
    %v6676 = vpop.f32.mrf.mxu0
    %v6677 = vadd.f32 %v6544, %v6676
    %v6678 = vpop.f32.mrf.mxu0
    %v6679 = vpop.f32.mrf.mxu0
    %v6680 = vpop.f32.mrf.mxu0
    %6681 = vdwg.mxu0
    %6682 = vst [vmem:[#allocation2] sm:$0x3] %v6677
    // Predicated region
    $region30: #{ddqn_forward.7} parent=1 // pred_check
      _
    $region31: #{ddqn_forward.7} parent=1 // pred_check_branch
      %6684 = sbr.rel (0) target = $region33
    $region32: #{ddqn_forward.7} parent=1 // pred_region
      %s6686 = ssub.s32 32, 32
      %6687 = vsyncadd [#allocation3], %s6686
      %s6689 = sshll.u32 [#allocation2], 4
      %s6690 = int_to_ptr.vmem [resolvable:$true] %s6689
      %6692 = dma.vmem_to_hbm [thread:$0]  %s6690, 32, %s7, [#allocation3]
    $region33: #{ddqn_forward.7} parent=1 // pred_fallthru
      _
    // Predicated region
    $region34: #{ddqn_forward.7} parent=1 // pred_check
      _
    $region35: #{ddqn_forward.7} parent=1 // pred_check_branch
      %6694 = sbr.rel (0) target = $region37
    $region36: #{ddqn_forward.7} parent=1 // pred_region
      %6695 = dma.done [#allocation3], 32
    $region37: #{ddqn_forward.7} parent=1 // pred_fallthru
      _
    %6696 = vsyncpa [#allocation3], 1

</llo_original>
